<compile_context>
chip_gen: v5e
topology: v5e:2x2
jax: 0.10.0
libtpu: 0.0.40
codegen_flags: <defaults>
</compile_context>

<pallas_src>
import functools

import jax
import jax.numpy as jnp
from jax.experimental import pallas as pl
from jax.experimental.pallas import tpu as pltpu

EPS = 1e-5
CP = 128                       # padded channel width (lane-dense, MXU-shaped)
PAIR_TAPS = ((0, 1), (2, 3), (5, 6), (7, 8))   # 3x3 taps packed to K=256
CENTER_TAP = 4                                 # remaining K=128 matmul


# ----------------------------------------------------------------------------
# Fused Pallas kernel
# ----------------------------------------------------------------------------
def _bottleneck_kernel(x_ref, w1_ref, w2p_ref, w2c_ref, w3_ref, gb_ref, o_ref,
                       y_ref, apad_ref, stat_ref, coef_ref,
                       *, H, W, MB, LPAD, count):
    """grid = (phase, image).  Phases (outer, strictly sequential):
         0: conv1, accumulate bn1 sum/sumsq
         1: bn1+relu, 3x3 conv (paired-K matmuls), accumulate bn2 stats
         2: bn2+relu, conv3, accumulate bn3 stats
         3: bn3 + residual add + relu, write output
       The raw (pre-BN) conv output lives in the single y_ref scratch and is
       overwritten in place by the next phase once consumed."""
    HW = H * W
    n_chunks = HW // MB
    p = pl.program_id(0)
    n = pl.program_id(1)

    def scale_shift(layer):
        return (coef_ref[2 * layer:2 * layer + 1, :],
                coef_ref[2 * layer + 1:2 * layer + 2, :])

    def finalize_bn(layer):
        # scale = gamma * rsqrt(var + eps) ; shift = beta - scale * mean
        # TODO(synk): E[x^2]-E[x]^2 in f32 is fine here; use shifted/Welford
        #             stats if reused with large-magnitude activations.
        s = stat_ref[2 * layer:2 * layer + 1, :]
        sq = stat_ref[2 * layer + 1:2 * layer + 2, :]
        mean = s * (1.0 / count)
        var = jnp.maximum(sq * (1.0 / count) - mean * mean, 0.0)
        scale = gb_ref[2 * layer:2 * layer + 1, :] * jax.lax.rsqrt(var + EPS)
        coef_ref[2 * layer:2 * layer + 1, :] = scale
        coef_ref[2 * layer + 1:2 * layer + 2, :] = (
            gb_ref[2 * layer + 1:2 * layer + 2, :] - scale * mean)

    def acc_stats(layer, v):
        stat_ref[2 * layer:2 * layer + 1, :] += jnp.sum(v, axis=0, keepdims=True)
        stat_ref[2 * layer + 1:2 * layer + 2, :] += jnp.sum(v * v, axis=0,
                                                            keepdims=True)

    # ------------------------- one-time initialization -----------------------
    @pl.when(jnp.logical_and(p == 0, n == 0))
    def _():
        stat_ref[...] = jnp.zeros_like(stat_ref)
        # Halo strips are never overwritten, so one zero-fill suffices.
        apad_ref[...] = jnp.zeros_like(apad_ref)

    # ---------------- phase 0: conv1 (1x1) + bn1 stats ------------------------
    @pl.when(p == 0)
    def _():
        for m in range(n_chunks):
            m0 = m * MB
            xc = x_ref[0, pl.ds(m0, MB), :].astype(jnp.bfloat16)
            y = jnp.dot(xc, w1_ref[...], preferred_element_type=jnp.float32)
            acc_stats(0, y)
            y_ref[n, pl.ds(m0, MB), :] = y

    # ------ phase 1: bn1+relu, conv2 (3x3, pad=1) via paired-K matmuls --------
    @pl.when(p == 1)
    def _():
        @pl.when(n == 0)
        def _():
            finalize_bn(0)
        sc1, sh1 = scale_shift(0)

        # Fill the halo'd bf16 copy (interior only; strips stay zero).
        for m in range(n_chunks):
            m0 = m * MB
            a1 = jnp.maximum(y_ref[n, pl.ds(m0, MB), :] * sc1 + sh1, 0.0)
            apad_ref[pl.ds(LPAD + m0, MB), :] = a1.astype(jnp.bfloat16)

        # Column-wrap masks only (vertical OOB already reads halo zeros).
        # Chunk-invariant because MB % W == 0; tiny one-off (MB,1) int op.
        wpos = jax.lax.broadcasted_iota(jnp.int32, (MB, 1), 0) % W
        left_ok = wpos > 0           # tap ox = -1
        right_ok = wpos < (W - 1)    # tap ox = +1

        def tap_window(t, m0):
            ky, kx = t // 3, t % 3
            start = LPAD + m0 + (ky - 1) * W + (kx - 1)
            win = apad_ref[pl.ds(start, MB), :]
            if kx == 0:
                win = jnp.where(left_ok, win, jnp.zeros_like(win))
            elif kx == 2:
                win = jnp.where(right_ok, win, jnp.zeros_like(win))
            return win

        for m in range(n_chunks):
            m0 = m * MB
            acc = jnp.dot(tap_window(CENTER_TAP, m0), w2c_ref[...],
                          preferred_element_type=jnp.float32)
            for i, (ta, tb) in enumerate(PAIR_TAPS):
                win = jnp.concatenate([tap_window(ta, m0), tap_window(tb, m0)],
                                      axis=1)                      # (MB, 2*CP)
                acc = acc + jnp.dot(win, w2p_ref[i],
                                    preferred_element_type=jnp.float32)
            acc_stats(1, acc)
            y_ref[n, pl.ds(m0, MB), :] = acc       # overwrite consumed conv1

    # ---------------- phase 2: bn2+relu, conv3 (1x1) + bn3 stats --------------
    @pl.when(p == 2)
    def _():
        @pl.when(n == 0)
        def _():
            finalize_bn(1)
        sc2, sh2 = scale_shift(1)
        for m in range(n_chunks):
            m0 = m * MB
            a2 = jnp.maximum(y_ref[n, pl.ds(m0, MB), :] * sc2 + sh2, 0.0)
            y = jnp.dot(a2.astype(jnp.bfloat16), w3_ref[...],
                        preferred_element_type=jnp.float32)
            acc_stats(2, y)
            y_ref[n, pl.ds(m0, MB), :] = y         # overwrite consumed conv2

    # ------------- phase 3: bn3 + residual add + relu, write out --------------
    @pl.when(p == 3)
    def _():
        @pl.when(n == 0)
        def _():
            finalize_bn(2)
        sc3, sh3 = scale_shift(2)
        for m in range(n_chunks):
            m0 = m * MB
            out = (y_ref[n, pl.ds(m0, MB), :] * sc3 + sh3
                   + x_ref[0, pl.ds(m0, MB), :])
            o_ref[0, pl.ds(m0, MB), :] = jnp.maximum(out, 0.0).astype(o_ref.dtype)


# ----------------------------------------------------------------------------
# Host wrapper
# ----------------------------------------------------------------------------
def _vmem_limit_bytes():
    """Per-generation VMEM budget: ~96 MiB on v5e/v6e (128 MiB physical),
       ~48 MiB on v7x (64 MiB physical)."""
    try:
        cap = int(pltpu.get_tpu_info().vmem_capacity_bytes)
    except Exception:
        cap = 64 * 1024 * 1024
    return int(max(min(cap * 3 // 4, 96 * 1024 * 1024), 32 * 1024 * 1024))


@jax.jit
def bottleneck_forward(x_nchw, params):
    N, Cin, H, W = x_nchw.shape
    HW = H * W

    # NCHW -> (N, H*W, C), zero-pad channels to 128 (lane-dense stores).
    x_flat = jnp.transpose(x_nchw, (0, 2, 3, 1)).reshape(N, HW, Cin)
    xp = jnp.zeros((N, HW, CP), jnp.float32).at[:, :, :Cin].set(x_flat)

    # Spatial chunking: keeps the matmul accumulator at ~16 vregs.
    MB = 128 if (HW % 128 == 0 and 128 % W == 0) else HW
    # Leading halo rounded to the bf16 sublane packing so apad stores stay
    # aligned (tap loads are +-1 row off; Mosaic handles those).
    LPAD = ((W + 1 + 15) // 16) * 16

    kernel = functools.partial(_bottleneck_kernel, H=H, W=W, MB=MB, LPAD=LPAD,
                               count=float(N * HW))

    flops = 2 * N * HW * CP * CP * 11                 # conv1 + 9 taps + conv3
    bytes_accessed = ((2 * N + 1) * HW * CP * 4       # x: phases 0 and 3 only
                      + N * HW * CP * 4               # out: once per image
                      + (params["w1"].size + params["w2p"].size
                         + params["w2c"].size + params["w3"].size) * 2
                      + params["gb"].size * 4)

    # x is only needed in phases 0 (conv1 input) and 3 (residual); out is only
    # written in phase 3 -> clamp both maps so other phases neither re-DMA x
    # nor write back an untouched output block.
    x_map = lambda p, n: (jnp.where(jnp.logical_or(p == 0, p == 3), n, 0), 0, 0)
    o_map = lambda p, n: (jnp.where(p == 3, n, 0), 0, 0)

    out = pl.pallas_call(
        kernel,
        out_shape=jax.ShapeDtypeStruct((N, HW, CP), jnp.float32),
        grid=(4, N),
        in_specs=[
            pl.BlockSpec((1, HW, CP), x_map),                     # x (streamed)
            pl.BlockSpec((CP, CP), lambda p, n: (0, 0)),          # w1 (resident)
            pl.BlockSpec((4, 2 * CP, CP), lambda p, n: (0, 0, 0)),  # w2 pairs
            pl.BlockSpec((CP, CP), lambda p, n: (0, 0)),          # w2 center tap
            pl.BlockSpec((CP, CP), lambda p, n: (0, 0)),          # w3 (resident)
            pl.BlockSpec((8, CP), lambda p, n: (0, 0)),           # gamma/beta
        ],
        out_specs=pl.BlockSpec((1, HW, CP), o_map),
        scratch_shapes=[
            pltpu.VMEM((N, HW, CP), jnp.float32),             # single raw-act buf
            pltpu.VMEM((2 * LPAD + HW, CP), jnp.bfloat16),    # halo'd activation
            pltpu.VMEM((8, CP), jnp.float32),                 # per-ch sum/sumsq
            pltpu.VMEM((8, CP), jnp.float32),                 # per-ch scale/shift
        ],
        compiler_params=pltpu.CompilerParams(
            dimension_semantics=("arbitrary", "arbitrary"),
            vmem_limit_bytes=_vmem_limit_bytes()),
        cost_estimate=pl.CostEstimate(flops=flops, transcendentals=3 * CP,
                                      bytes_accessed=bytes_accessed),
    )(xp, params["w1"], params["w2p"], params["w2c"], params["w3"], params["gb"])

    out = out[:, :, :Cin].reshape(N, H, W, Cin)
    return jnp.transpose(out, (0, 3, 1, 2))              # back to NCHW


def _prepare_params(w1_t, w2_t, w3_t):
    """PyTorch OIHW conv weights -> padded bf16 matmul weights + BN params."""
    width = w1_t.shape[0]
    inplanes = w1_t.shape[1]
    outplanes = w3_t.shape[0]

    w1 = jnp.transpose(w1_t[:, :, 0, 0], (1, 0))                     # (Cin, w)
    w3 = jnp.transpose(w3_t[:, :, 0, 0], (1, 0))                     # (w, Cout)
    taps = jnp.transpose(w2_t, (2, 3, 1, 0)).reshape(9, width, width)  # (t,ci,co)

    w1p = jnp.zeros((CP, CP), jnp.float32).at[:inplanes, :width].set(w1)
    w3p = jnp.zeros((CP, CP), jnp.float32).at[:width, :outplanes].set(w3)
    w2pad = jnp.zeros((9, CP, CP), jnp.float32).at[:, :width, :width].set(taps)

    # Pack taps in pairs along K (K=256) for the 256-deep v6e/v7x MXU;
    # the center tap stays a single K=128 matmul.
    w2p = jnp.stack([jnp.concatenate([w2pad[a], w2pad[b]], axis=0)
                     for a, b in PAIR_TAPS])                     # (4, 2*CP, CP)
    w2c = w2pad[CENTER_TAP]                                      # (CP, CP)

    # rows: [g1, b1, g2, b2, g3, b3, unused, unused]; fresh BN: gamma=1, beta=0
    gb = (jnp.zeros((8, CP), jnp.float32)
          .at[0].set(1.0).at[2].set(1.0).at[4].set(1.0))

    return {"w1": w1p.astype(jnp.bfloat16),
            "w2p": w2p.astype(jnp.bfloat16),
            "w2c": w2c.astype(jnp.bfloat16),
            "w3": w3p.astype(jnp.bfloat16),
            "gb": gb}


# ----------------------------------------------------------------------------
# Pure-JAX reference (lax convs, NCHW).  cast_bf16=True mirrors the kernel's
# bf16 matmul inputs (f32 accumulation, f32 BN) for a tight check.
# ----------------------------------------------------------------------------
def bottleneck_reference(x, w1_t, w2_t, w3_t, cast_bf16=False):
    def conv(a, w, pad):
        if cast_bf16:
            a = a.astype(jnp.bfloat16)
            w = w.astype(jnp.bfloat16)
        return jax.lax.conv_general_dilated(
            a, w, window_strides=(1, 1), padding=[(pad, pad), (pad, pad)],
            dimension_numbers=("NCHW", "OIHW", "NCHW"),
            preferred_element_type=jnp.float32)

    def bn(y):  # gamma=1, beta=0, training-mode (biased) batch statistics
        mean = y.mean(axis=(0, 2, 3), keepdims=True)
        var = ((y - mean) ** 2).mean(axis=(0, 2, 3), keepdims=True)
        return (y - mean) * jax.lax.rsqrt(var + EPS)

    identity = x
    y = jnp.maximum(bn(conv(x, w1_t, 0)), 0.0)
    y = jnp.maximum(bn(conv(y, w2_t, 1)), 0.0)
    y = bn(conv(y, w3_t, 0)) + identity
    return jnp.maximum(y, 0.0)


# ----------------------------------------------------------------------------
if __name__ == "__main__":
    planes = 4
    expansion = 4
    inplanes = planes * expansion          # 16 -> downsample=None is valid
    width = int(planes * (64 / 64.0)) * 1  # 4
    N, H, W = 2, 16, 16

    key = jax.random.PRNGKey(0)
    k_x, k1, k2, k3 = jax.random.split(key, 4)

    # PyTorch conv-weight layout: OIHW.
    w1_t = 0.1 * jax.random.normal(k1, (width, inplanes, 1, 1), jnp.float32)
    w2_t = 0.1 * jax.random.normal(k2, (width, width, 3, 3), jnp.float32)
    w3_t = 0.1 * jax.random.normal(k3, (planes * expansion, width, 1, 1),
                                   jnp.float32)
    x = jax.random.normal(k_x, (N, inplanes, H, W), jnp.float32)   # NCHW

    params = _prepare_params(w1_t, w2_t, w3_t)

    out = jax.block_until_ready(bottleneck_forward(x, params))
    assert out.shape == (N, planes * expansion, H, W)

    # Tight check: reference with the same bf16 matmul-input quantization.
    ref_bf16 = jax.block_until_ready(
        bottleneck_reference(x, w1_t, w2_t, w3_t, cast_bf16=True))
    assert jnp.allclose(out, ref_bf16, atol=2e-2, rtol=2e-2), \
        "mismatch vs bf16-matmul reference"

    # Loose sanity check vs the full-f32 module semantics (gap is purely the
    # bf16 matmul inputs; any structural bug would be O(1)).
    ref_f32 = jax.block_until_ready(
        bottleneck_reference(x, w1_t, w2_t, w3_t, cast_bf16=False))
    assert float(jnp.max(jnp.abs(out - ref_f32))) < 0.5, \
        "gross mismatch vs f32 reference"

    print("KERNEL_OK")
</pallas_src>

<mosaic_0001>
module attributes {stable_mosaic.version = 11 : i64} {
  func.func @_bottleneck_kernel(%arg0: i32, %arg1: i32, %arg2: memref<1x256x128xf32, #tpu.memory_space<vmem>>, %arg3: memref<128x128xbf16, #tpu.memory_space<vmem>>, %arg4: memref<4x256x128xbf16, #tpu.memory_space<vmem>>, %arg5: memref<128x128xbf16, #tpu.memory_space<vmem>>, %arg6: memref<128x128xbf16, #tpu.memory_space<vmem>>, %arg7: memref<8x128xf32, #tpu.memory_space<vmem>>, %arg8: memref<1x256x128xf32, #tpu.memory_space<vmem>>, %arg9: memref<2x256x128xf32, #tpu.memory_space<vmem>>, %arg10: memref<320x128xbf16, #tpu.memory_space<vmem>>, %arg11: memref<8x128xf32, #tpu.memory_space<vmem>>, %arg12: memref<8x128xf32, #tpu.memory_space<vmem>>) attributes {dimension_semantics = [#tpu.dimension_semantics<arbitrary>, #tpu.dimension_semantics<arbitrary>], iteration_bounds = array<i64: 4, 2>, scalar_prefetch = 0 : i64, scratch_operands = 4 : i64, tpu.core_type = #tpu.core_type<tc>, window_params = [{transform_indices = @transform_0, window_bounds = array<i64: 1, 256, 128>}, {pipeline_mode = #tpu.pipeline_mode<synchronous>, transform_indices = @transform_1, window_bounds = array<i64: 128, 128>}, {pipeline_mode = #tpu.pipeline_mode<synchronous>, transform_indices = @transform_2, window_bounds = array<i64: 4, 256, 128>}, {pipeline_mode = #tpu.pipeline_mode<synchronous>, transform_indices = @transform_3, window_bounds = array<i64: 128, 128>}, {pipeline_mode = #tpu.pipeline_mode<synchronous>, transform_indices = @transform_4, window_bounds = array<i64: 128, 128>}, {pipeline_mode = #tpu.pipeline_mode<synchronous>, transform_indices = @transform_5, window_bounds = array<i64: 8, 128>}, {transform_indices = @transform_6, window_bounds = array<i64: 1, 256, 128>}]} {
    %c0_i32 = arith.constant 0 : i32
    %0 = arith.cmpi eq, %arg0, %c0_i32 : i32
    %c0_i32_0 = arith.constant 0 : i32
    %1 = arith.cmpi eq, %arg1, %c0_i32_0 : i32
    %2 = arith.andi %0, %1 : i1
    %3 = arith.extui %2 : i1 to i32
    %c0_i32_1 = arith.constant 0 : i32
    %4 = arith.cmpi ne, %3, %c0_i32_1 : i32
    scf.if %4 {
      %cst = arith.constant 0.000000e+00 : f32
      %17 = vector.broadcast %cst : f32 to vector<8x128xf32>
      %c0 = arith.constant 0 : index
      %c0_7 = arith.constant 0 : index
      %18 = vector.load %arg11[%c0, %c0_7] : memref<8x128xf32, #tpu.memory_space<vmem>>, vector<8x128xf32>
      tpu.vector_store %arg11[%c0, %c0_7], %17 {strides = array<i32>} : memref<8x128xf32, #tpu.memory_space<vmem>>, vector<8x128xf32>,
      %cst_8 = arith.constant 0.000000e+00 : bf16
      %19 = vector.broadcast %cst_8 : bf16 to vector<320x128xbf16>
      %c0_9 = arith.constant 0 : index
      %c0_10 = arith.constant 0 : index
      %20 = vector.load %arg10[%c0_9, %c0_10] : memref<320x128xbf16, #tpu.memory_space<vmem>>, vector<320x128xbf16>
      tpu.vector_store %arg10[%c0_9, %c0_10], %19 {strides = array<i32>} : memref<320x128xbf16, #tpu.memory_space<vmem>>, vector<320x128xbf16>,
    } else {
    }
    %c0_i32_2 = arith.constant 0 : i32
    %5 = arith.cmpi eq, %arg0, %c0_i32_2 : i32
    %6 = arith.extui %5 : i1 to i32
    %c0_i32_3 = arith.constant 0 : i32
    %7 = arith.cmpi ne, %6, %c0_i32_3 : i32
    scf.if %7 {
      %c0 = arith.constant 0 : index
      %c0_7 = arith.constant 0 : index
      %c0_8 = arith.constant 0 : index
      %17 = vector.load %arg2[%c0, %c0_7, %c0_8] : memref<1x256x128xf32, #tpu.memory_space<vmem>>, vector<1x128x128xf32>
      %18 = vector.shape_cast %17 : vector<1x128x128xf32> to vector<128x128xf32>
      %19 = arith.truncf %18 : vector<128x128xf32> to vector<128x128xbf16>
      %c0_9 = arith.constant 0 : index
      %c0_10 = arith.constant 0 : index
      %20 = vector.load %arg3[%c0_9, %c0_10] : memref<128x128xbf16, #tpu.memory_space<vmem>>, vector<128x128xbf16>
      %cst = arith.constant dense<0.000000e+00> : vector<128x128xf32>
      %21 = tpu.matmul %19, %20, %cst {dimension_numbers = #tpu.dot_dimension_numbers<[1], [0], [0], [1], [0, 0, 1, 1], [], []>} : vector<128x128xbf16>, vector<128x128xbf16>, vector<128x128xf32> -> vector<128x128xf32>
      %c0_11 = arith.constant 0 : index
      %c0_12 = arith.constant 0 : index
      %22 = vector.load %arg11[%c0_11, %c0_12] : memref<8x128xf32, #tpu.memory_space<vmem>>, vector<1x128xf32>
      %cst_13 = arith.constant dense<0.000000e+00> : vector<128xf32>
      %23 = vector.multi_reduction <add>, %21, %cst_13 [0] : vector<128x128xf32> to vector<128xf32>
      %24 = vector.shape_cast %23 : vector<128xf32> to vector<1x128xf32>
      %25 = arith.addf %22, %24 : vector<1x128xf32>
      %c0_14 = arith.constant 0 : index
      %c0_15 = arith.constant 0 : index
      %26 = vector.load %arg11[%c0_14, %c0_15] : memref<8x128xf32, #tpu.memory_space<vmem>>, vector<1x128xf32>
      tpu.vector_store %arg11[%c0_14, %c0_15], %25 {strides = array<i32>} : memref<8x128xf32, #tpu.memory_space<vmem>>, vector<1x128xf32>,
      %c1 = arith.constant 1 : index
      %c0_16 = arith.constant 0 : index
      %27 = vector.load %arg11[%c1, %c0_16] : memref<8x128xf32, #tpu.memory_space<vmem>>, vector<1x128xf32>
      %28 = arith.mulf %21, %21 : vector<128x128xf32>
      %cst_17 = arith.constant dense<0.000000e+00> : vector<128xf32>
      %29 = vector.multi_reduction <add>, %28, %cst_17 [0] : vector<128x128xf32> to vector<128xf32>
      %30 = vector.shape_cast %29 : vector<128xf32> to vector<1x128xf32>
      %31 = arith.addf %27, %30 : vector<1x128xf32>
      %c1_18 = arith.constant 1 : index
      %c0_19 = arith.constant 0 : index
      %32 = vector.load %arg11[%c1_18, %c0_19] : memref<8x128xf32, #tpu.memory_space<vmem>>, vector<1x128xf32>
      tpu.vector_store %arg11[%c1_18, %c0_19], %31 {strides = array<i32>} : memref<8x128xf32, #tpu.memory_space<vmem>>, vector<1x128xf32>,
      %33 = arith.index_cast %arg1 : i32 to index
      %c0_20 = arith.constant 0 : index
      %c0_21 = arith.constant 0 : index
      %34 = vector.load %arg9[%33, %c0_20, %c0_21] : memref<2x256x128xf32, #tpu.memory_space<vmem>>, vector<1x128x128xf32>
      %35 = vector.shape_cast %34 : vector<1x128x128xf32> to vector<128x128xf32>
      %36 = vector.shape_cast %21 : vector<128x128xf32> to vector<1x128x128xf32>
      tpu.vector_store %arg9[%33, %c0_20, %c0_21], %36 {strides = array<i32>} : memref<2x256x128xf32, #tpu.memory_space<vmem>>, vector<1x128x128xf32>,
      %c0_22 = arith.constant 0 : index
      %c128 = arith.constant 128 : index
      %c0_23 = arith.constant 0 : index
      %37 = vector.load %arg2[%c0_22, %c128, %c0_23] : memref<1x256x128xf32, #tpu.memory_space<vmem>>, vector<1x128x128xf32>
      %38 = vector.shape_cast %37 : vector<1x128x128xf32> to vector<128x128xf32>
      %39 = arith.truncf %38 : vector<128x128xf32> to vector<128x128xbf16>
      %c0_24 = arith.constant 0 : index
      %c0_25 = arith.constant 0 : index
      %40 = vector.load %arg3[%c0_24, %c0_25] : memref<128x128xbf16, #tpu.memory_space<vmem>>, vector<128x128xbf16>
      %cst_26 = arith.constant dense<0.000000e+00> : vector<128x128xf32>
      %41 = tpu.matmul %39, %40, %cst_26 {dimension_numbers = #tpu.dot_dimension_numbers<[1], [0], [0], [1], [0, 0, 1, 1], [], []>} : vector<128x128xbf16>, vector<128x128xbf16>, vector<128x128xf32> -> vector<128x128xf32>
      %c0_27 = arith.constant 0 : index
      %c0_28 = arith.constant 0 : index
      %42 = vector.load %arg11[%c0_27, %c0_28] : memref<8x128xf32, #tpu.memory_space<vmem>>, vector<1x128xf32>
      %cst_29 = arith.constant dense<0.000000e+00> : vector<128xf32>
      %43 = vector.multi_reduction <add>, %41, %cst_29 [0] : vector<128x128xf32> to vector<128xf32>
      %44 = vector.shape_cast %43 : vector<128xf32> to vector<1x128xf32>
      %45 = arith.addf %42, %44 : vector<1x128xf32>
      %c0_30 = arith.constant 0 : index
      %c0_31 = arith.constant 0 : index
      %46 = vector.load %arg11[%c0_30, %c0_31] : memref<8x128xf32, #tpu.memory_space<vmem>>, vector<1x128xf32>
      tpu.vector_store %arg11[%c0_30, %c0_31], %45 {strides = array<i32>} : memref<8x128xf32, #tpu.memory_space<vmem>>, vector<1x128xf32>,
      %c1_32 = arith.constant 1 : index
      %c0_33 = arith.constant 0 : index
      %47 = vector.load %arg11[%c1_32, %c0_33] : memref<8x128xf32, #tpu.memory_space<vmem>>, vector<1x128xf32>
      %48 = arith.mulf %41, %41 : vector<128x128xf32>
      %cst_34 = arith.constant dense<0.000000e+00> : vector<128xf32>
      %49 = vector.multi_reduction <add>, %48, %cst_34 [0] : vector<128x128xf32> to vector<128xf32>
      %50 = vector.shape_cast %49 : vector<128xf32> to vector<1x128xf32>
      %51 = arith.addf %47, %50 : vector<1x128xf32>
      %c1_35 = arith.constant 1 : index
      %c0_36 = arith.constant 0 : index
      %52 = vector.load %arg11[%c1_35, %c0_36] : memref<8x128xf32, #tpu.memory_space<vmem>>, vector<1x128xf32>
      tpu.vector_store %arg11[%c1_35, %c0_36], %51 {strides = array<i32>} : memref<8x128xf32, #tpu.memory_space<vmem>>, vector<1x128xf32>,
      %53 = arith.index_cast %arg1 : i32 to index
      %c128_37 = arith.constant 128 : index
      %c0_38 = arith.constant 0 : index
      %54 = vector.load %arg9[%53, %c128_37, %c0_38] : memref<2x256x128xf32, #tpu.memory_space<vmem>>, vector<1x128x128xf32>
      %55 = vector.shape_cast %54 : vector<1x128x128xf32> to vector<128x128xf32>
      %56 = vector.shape_cast %41 : vector<128x128xf32> to vector<1x128x128xf32>
      tpu.vector_store %arg9[%53, %c128_37, %c0_38], %56 {strides = array<i32>} : memref<2x256x128xf32, #tpu.memory_space<vmem>>, vector<1x128x128xf32>,
    } else {
    }
    %c1_i32 = arith.constant 1 : i32
    %8 = arith.cmpi eq, %arg0, %c1_i32 : i32
    %9 = arith.extui %8 : i1 to i32
    %c0_i32_4 = arith.constant 0 : i32
    %10 = arith.cmpi ne, %9, %c0_i32_4 : i32
    scf.if %10 {
      %c0_i32_7 = arith.constant 0 : i32
      %17 = arith.cmpi eq, %arg1, %c0_i32_7 : i32
      %18 = arith.extui %17 : i1 to i32
      %c0_i32_8 = arith.constant 0 : i32
      %19 = arith.cmpi ne, %18, %c0_i32_8 : i32
      scf.if %19 {
        %c0_115 = arith.constant 0 : index
        %c0_116 = arith.constant 0 : index
        %205 = vector.load %arg11[%c0_115, %c0_116] : memref<8x128xf32, #tpu.memory_space<vmem>>, vector<1x128xf32>
        %c1_117 = arith.constant 1 : index
        %c0_118 = arith.constant 0 : index
        %206 = vector.load %arg11[%c1_117, %c0_118] : memref<8x128xf32, #tpu.memory_space<vmem>>, vector<1x128xf32>
        %cst_119 = arith.constant 0.001953125 : f32
        %207 = vector.broadcast %cst_119 : f32 to vector<1x128xf32>
        %208 = arith.mulf %205, %207 : vector<1x128xf32>
        %cst_120 = arith.constant 0.001953125 : f32
        %209 = vector.broadcast %cst_120 : f32 to vector<1x128xf32>
        %210 = arith.mulf %206, %209 : vector<1x128xf32>
        %211 = arith.mulf %208, %208 : vector<1x128xf32>
        %212 = arith.subf %210, %211 : vector<1x128xf32>
        %cst_121 = arith.constant 0.000000e+00 : f32
        %213 = vector.broadcast %cst_121 : f32 to vector<1x128xf32>
        %214 = arith.maximumf %212, %213 : vector<1x128xf32>
        %c0_122 = arith.constant 0 : index
        %c0_123 = arith.constant 0 : index
        %215 = vector.load %arg7[%c0_122, %c0_123] : memref<8x128xf32, #tpu.memory_space<vmem>>, vector<1x128xf32>
        %cst_124 = arith.constant 9.99999974E-6 : f32
        %216 = vector.broadcast %cst_124 : f32 to vector<1x128xf32>
        %217 = arith.addf %214, %216 : vector<1x128xf32>
        %218 = math.rsqrt %217 : vector<1x128xf32>
        %219 = arith.mulf %215, %218 : vector<1x128xf32>
        %c0_125 = arith.constant 0 : index
        %c0_126 = arith.constant 0 : index
        %220 = vector.load %arg12[%c0_125, %c0_126] : memref<8x128xf32, #tpu.memory_space<vmem>>, vector<1x128xf32>
        tpu.vector_store %arg12[%c0_125, %c0_126], %219 {strides = array<i32>} : memref<8x128xf32, #tpu.memory_space<vmem>>, vector<1x128xf32>,
        %c1_127 = arith.constant 1 : index
        %c0_128 = arith.constant 0 : index
        %221 = vector.load %arg7[%c1_127, %c0_128] : memref<8x128xf32, #tpu.memory_space<vmem>>, vector<1x128xf32>
        %222 = arith.mulf %219, %208 : vector<1x128xf32>
        %223 = arith.subf %221, %222 : vector<1x128xf32>
        %c1_129 = arith.constant 1 : index
        %c0_130 = arith.constant 0 : index
        %224 = vector.load %arg12[%c1_129, %c0_130] : memref<8x128xf32, #tpu.memory_space<vmem>>, vector<1x128xf32>
        tpu.vector_store %arg12[%c1_129, %c0_130], %223 {strides = array<i32>} : memref<8x128xf32, #tpu.memory_space<vmem>>, vector<1x128xf32>,
      } else {
      }
      %c0 = arith.constant 0 : index
      %c0_9 = arith.constant 0 : index
      %20 = vector.load %arg12[%c0, %c0_9] : memref<8x128xf32, #tpu.memory_space<vmem>>, vector<1x128xf32>
      %c1 = arith.constant 1 : index
      %c0_10 = arith.constant 0 : index
      %21 = vector.load %arg12[%c1, %c0_10] : memref<8x128xf32, #tpu.memory_space<vmem>>, vector<1x128xf32>
      %22 = arith.index_cast %arg1 : i32 to index
      %c0_11 = arith.constant 0 : index
      %c0_12 = arith.constant 0 : index
      %23 = vector.load %arg9[%22, %c0_11, %c0_12] : memref<2x256x128xf32, #tpu.memory_space<vmem>>, vector<1x128x128xf32>
      %24 = vector.shape_cast %23 : vector<1x128x128xf32> to vector<128x128xf32>
      %25 = vector.broadcast %20 : vector<1x128xf32> to vector<128x128xf32>
      %26 = arith.mulf %24, %25 : vector<128x128xf32>
      %27 = vector.broadcast %21 : vector<1x128xf32> to vector<128x128xf32>
      %28 = arith.addf %26, %27 : vector<128x128xf32>
      %cst = arith.constant 0.000000e+00 : f32
      %29 = vector.broadcast %cst : f32 to vector<128x128xf32>
      %30 = arith.maximumf %28, %29 : vector<128x128xf32>
      %31 = arith.truncf %30 : vector<128x128xf32> to vector<128x128xbf16>
      %c32 = arith.constant 32 : index
      %c0_13 = arith.constant 0 : index
      %32 = vector.load %arg10[%c32, %c0_13] : memref<320x128xbf16, #tpu.memory_space<vmem>>, vector<128x128xbf16>
      tpu.vector_store %arg10[%c32, %c0_13], %31 {strides = array<i32>} : memref<320x128xbf16, #tpu.memory_space<vmem>>, vector<128x128xbf16>,
      %33 = arith.index_cast %arg1 : i32 to index
      %c128 = arith.constant 128 : index
      %c0_14 = arith.constant 0 : index
      %34 = vector.load %arg9[%33, %c128, %c0_14] : memref<2x256x128xf32, #tpu.memory_space<vmem>>, vector<1x128x128xf32>
      %35 = vector.shape_cast %34 : vector<1x128x128xf32> to vector<128x128xf32>
      %36 = vector.broadcast %20 : vector<1x128xf32> to vector<128x128xf32>
      %37 = arith.mulf %35, %36 : vector<128x128xf32>
      %38 = vector.broadcast %21 : vector<1x128xf32> to vector<128x128xf32>
      %39 = arith.addf %37, %38 : vector<128x128xf32>
      %cst_15 = arith.constant 0.000000e+00 : f32
      %40 = vector.broadcast %cst_15 : f32 to vector<128x128xf32>
      %41 = arith.maximumf %39, %40 : vector<128x128xf32>
      %42 = arith.truncf %41 : vector<128x128xf32> to vector<128x128xbf16>
      %c160 = arith.constant 160 : index
      %c0_16 = arith.constant 0 : index
      %43 = vector.load %arg10[%c160, %c0_16] : memref<320x128xbf16, #tpu.memory_space<vmem>>, vector<128x128xbf16>
      tpu.vector_store %arg10[%c160, %c0_16], %42 {strides = array<i32>} : memref<320x128xbf16, #tpu.memory_space<vmem>>, vector<128x128xbf16>,
      %44 = tpu.iota {dimensions = array<i32: 0>} : vector<128x1xi32>
      %c16_i32 = arith.constant 16 : i32
      %c0_i32_17 = arith.constant 0 : i32
      %45 = arith.cmpi eq, %c16_i32, %c0_i32_17 : i32
      %c1_i32_18 = arith.constant 1 : i32
      %46 = arith.select %45, %c1_i32_18, %c16_i32 : i32
      %47 = vector.broadcast %46 : i32 to vector<128x1xi32>
      %48 = arith.remsi %44, %47 : vector<128x1xi32>
      %c0_i32_19 = arith.constant 0 : i32
      %49 = vector.broadcast %c0_i32_19 : i32 to vector<128x1xi32>
      %50 = arith.cmpi ne, %48, %49 : vector<128x1xi32>
      %c0_i32_20 = arith.constant 0 : i32
      %51 = vector.broadcast %c0_i32_20 : i32 to vector<128x1xi32>
      %52 = arith.cmpi slt, %48, %51 : vector<128x1xi32>
      %c0_i32_21 = arith.constant 0 : i32
      %53 = arith.cmpi slt, %46, %c0_i32_21 : i32
      %54 = vector.broadcast %53 : i1 to vector<128x1xi1>
      %55 = vector.broadcast %54 : vector<128x1xi1> to vector<128x1xi1>
      %56 = arith.xori %52, %55 : vector<128x1xi1>
      %57 = arith.andi %56, %50 : vector<128x1xi1>
      %58 = vector.broadcast %46 : i32 to vector<128x1xi32>
      %59 = arith.addi %48, %58 : vector<128x1xi32>
      %60 = arith.select %57, %59, %48 : vector<128x1xi1>, vector<128x1xi32>
      %c0_i32_22 = arith.constant 0 : i32
      %61 = vector.broadcast %c0_i32_22 : i32 to vector<128x1xi32>
      %62 = arith.cmpi sgt, %60, %61 : vector<128x1xi32>
      %c15_i32 = arith.constant 15 : i32
      %63 = vector.broadcast %c15_i32 : i32 to vector<128x1xi32>
      %64 = arith.cmpi slt, %60, %63 : vector<128x1xi32>
      %c32_23 = arith.constant 32 : index
      %c0_24 = arith.constant 0 : index
      %65 = vector.load %arg10[%c32_23, %c0_24] : memref<320x128xbf16, #tpu.memory_space<vmem>>, vector<128x128xbf16>
      %c0_25 = arith.constant 0 : index
      %c0_26 = arith.constant 0 : index
      %66 = vector.load %arg5[%c0_25, %c0_26] : memref<128x128xbf16, #tpu.memory_space<vmem>>, vector<128x128xbf16>
      %cst_27 = arith.constant dense<0.000000e+00> : vector<128x128xf32>
      %67 = tpu.matmul %65, %66, %cst_27 {dimension_numbers = #tpu.dot_dimension_numbers<[1], [0], [0], [1], [0, 0, 1, 1], [], []>} : vector<128x128xbf16>, vector<128x128xbf16>, vector<128x128xf32> -> vector<128x128xf32>
      %c15 = arith.constant 15 : index
      %c0_28 = arith.constant 0 : index
      %68 = vector.load %arg10[%c15, %c0_28] : memref<320x128xbf16, #tpu.memory_space<vmem>>, vector<128x128xbf16>
      %cst_29 = arith.constant 0.000000e+00 : bf16
      %69 = vector.broadcast %cst_29 : bf16 to vector<128x128xbf16>
      %70 = vector.shape_cast %62 : vector<128x1xi1> to vector<128x1xi1>
      %71 = vector.broadcast %70 : vector<128x1xi1> to vector<128x128xi1>
      %72 = arith.select %71, %68, %69 : vector<128x128xi1>, vector<128x128xbf16>
      %c16 = arith.constant 16 : index
      %c0_30 = arith.constant 0 : index
      %73 = vector.load %arg10[%c16, %c0_30] : memref<320x128xbf16, #tpu.memory_space<vmem>>, vector<128x128xbf16>
      %74 = tpu.concatenate %72, %73 in 1 : vector<128x128xbf16>, vector<128x128xbf16> -> vector<128x256xbf16>
      %c0_31 = arith.constant 0 : index
      %c0_32 = arith.constant 0 : index
      %c0_33 = arith.constant 0 : index
      %75 = vector.load %arg4[%c0_31, %c0_32, %c0_33] : memref<4x256x128xbf16, #tpu.memory_space<vmem>>, vector<1x256x128xbf16>
      %76 = vector.shape_cast %75 : vector<1x256x128xbf16> to vector<256x128xbf16>
      %cst_34 = arith.constant dense<0.000000e+00> : vector<128x128xf32>
      %77 = tpu.matmul %74, %76, %cst_34 {dimension_numbers = #tpu.dot_dimension_numbers<[1], [0], [0], [1], [0, 0, 1, 1], [], []>} : vector<128x256xbf16>, vector<256x128xbf16>, vector<128x128xf32> -> vector<128x128xf32>
      %78 = arith.addf %67, %77 : vector<128x128xf32>
      %c17 = arith.constant 17 : index
      %c0_35 = arith.constant 0 : index
      %79 = vector.load %arg10[%c17, %c0_35] : memref<320x128xbf16, #tpu.memory_space<vmem>>, vector<128x128xbf16>
      %cst_36 = arith.constant 0.000000e+00 : bf16
      %80 = vector.broadcast %cst_36 : bf16 to vector<128x128xbf16>
      %81 = vector.shape_cast %64 : vector<128x1xi1> to vector<128x1xi1>
      %82 = vector.broadcast %81 : vector<128x1xi1> to vector<128x128xi1>
      %83 = arith.select %82, %79, %80 : vector<128x128xi1>, vector<128x128xbf16>
      %c31 = arith.constant 31 : index
      %c0_37 = arith.constant 0 : index
      %84 = vector.load %arg10[%c31, %c0_37] : memref<320x128xbf16, #tpu.memory_space<vmem>>, vector<128x128xbf16>
      %cst_38 = arith.constant 0.000000e+00 : bf16
      %85 = vector.broadcast %cst_38 : bf16 to vector<128x128xbf16>
      %86 = vector.shape_cast %62 : vector<128x1xi1> to vector<128x1xi1>
      %87 = vector.broadcast %86 : vector<128x1xi1> to vector<128x128xi1>
      %88 = arith.select %87, %84, %85 : vector<128x128xi1>, vector<128x128xbf16>
      %89 = tpu.concatenate %83, %88 in 1 : vector<128x128xbf16>, vector<128x128xbf16> -> vector<128x256xbf16>
      %c1_39 = arith.constant 1 : index
      %c0_40 = arith.constant 0 : index
      %c0_41 = arith.constant 0 : index
      %90 = vector.load %arg4[%c1_39, %c0_40, %c0_41] : memref<4x256x128xbf16, #tpu.memory_space<vmem>>, vector<1x256x128xbf16>
      %91 = vector.shape_cast %90 : vector<1x256x128xbf16> to vector<256x128xbf16>
      %cst_42 = arith.constant dense<0.000000e+00> : vector<128x128xf32>
      %92 = tpu.matmul %89, %91, %cst_42 {dimension_numbers = #tpu.dot_dimension_numbers<[1], [0], [0], [1], [0, 0, 1, 1], [], []>} : vector<128x256xbf16>, vector<256x128xbf16>, vector<128x128xf32> -> vector<128x128xf32>
      %93 = arith.addf %78, %92 : vector<128x128xf32>
      %c33 = arith.constant 33 : index
      %c0_43 = arith.constant 0 : index
      %94 = vector.load %arg10[%c33, %c0_43] : memref<320x128xbf16, #tpu.memory_space<vmem>>, vector<128x128xbf16>
      %cst_44 = arith.constant 0.000000e+00 : bf16
      %95 = vector.broadcast %cst_44 : bf16 to vector<128x128xbf16>
      %96 = vector.shape_cast %64 : vector<128x1xi1> to vector<128x1xi1>
      %97 = vector.broadcast %96 : vector<128x1xi1> to vector<128x128xi1>
      %98 = arith.select %97, %94, %95 : vector<128x128xi1>, vector<128x128xbf16>
      %c47 = arith.constant 47 : index
      %c0_45 = arith.constant 0 : index
      %99 = vector.load %arg10[%c47, %c0_45] : memref<320x128xbf16, #tpu.memory_space<vmem>>, vector<128x128xbf16>
      %cst_46 = arith.constant 0.000000e+00 : bf16
      %100 = vector.broadcast %cst_46 : bf16 to vector<128x128xbf16>
      %101 = vector.shape_cast %62 : vector<128x1xi1> to vector<128x1xi1>
      %102 = vector.broadcast %101 : vector<128x1xi1> to vector<128x128xi1>
      %103 = arith.select %102, %99, %100 : vector<128x128xi1>, vector<128x128xbf16>
      %104 = tpu.concatenate %98, %103 in 1 : vector<128x128xbf16>, vector<128x128xbf16> -> vector<128x256xbf16>
      %c2 = arith.constant 2 : index
      %c0_47 = arith.constant 0 : index
      %c0_48 = arith.constant 0 : index
      %105 = vector.load %arg4[%c2, %c0_47, %c0_48] : memref<4x256x128xbf16, #tpu.memory_space<vmem>>, vector<1x256x128xbf16>
      %106 = vector.shape_cast %105 : vector<1x256x128xbf16> to vector<256x128xbf16>
      %cst_49 = arith.constant dense<0.000000e+00> : vector<128x128xf32>
      %107 = tpu.matmul %104, %106, %cst_49 {dimension_numbers = #tpu.dot_dimension_numbers<[1], [0], [0], [1], [0, 0, 1, 1], [], []>} : vector<128x256xbf16>, vector<256x128xbf16>, vector<128x128xf32> -> vector<128x128xf32>
      %108 = arith.addf %93, %107 : vector<128x128xf32>
      %c48 = arith.constant 48 : index
      %c0_50 = arith.constant 0 : index
      %109 = vector.load %arg10[%c48, %c0_50] : memref<320x128xbf16, #tpu.memory_space<vmem>>, vector<128x128xbf16>
      %c49 = arith.constant 49 : index
      %c0_51 = arith.constant 0 : index
      %110 = vector.load %arg10[%c49, %c0_51] : memref<320x128xbf16, #tpu.memory_space<vmem>>, vector<128x128xbf16>
      %cst_52 = arith.constant 0.000000e+00 : bf16
      %111 = vector.broadcast %cst_52 : bf16 to vector<128x128xbf16>
      %112 = vector.shape_cast %64 : vector<128x1xi1> to vector<128x1xi1>
      %113 = vector.broadcast %112 : vector<128x1xi1> to vector<128x128xi1>
      %114 = arith.select %113, %110, %111 : vector<128x128xi1>, vector<128x128xbf16>
      %115 = tpu.concatenate %109, %114 in 1 : vector<128x128xbf16>, vector<128x128xbf16> -> vector<128x256xbf16>
      %c3 = arith.constant 3 : index
      %c0_53 = arith.constant 0 : index
      %c0_54 = arith.constant 0 : index
      %116 = vector.load %arg4[%c3, %c0_53, %c0_54] : memref<4x256x128xbf16, #tpu.memory_space<vmem>>, vector<1x256x128xbf16>
      %117 = vector.shape_cast %116 : vector<1x256x128xbf16> to vector<256x128xbf16>
      %cst_55 = arith.constant dense<0.000000e+00> : vector<128x128xf32>
      %118 = tpu.matmul %115, %117, %cst_55 {dimension_numbers = #tpu.dot_dimension_numbers<[1], [0], [0], [1], [0, 0, 1, 1], [], []>} : vector<128x256xbf16>, vector<256x128xbf16>, vector<128x128xf32> -> vector<128x128xf32>
      %119 = arith.addf %108, %118 : vector<128x128xf32>
      %c2_56 = arith.constant 2 : index
      %c0_57 = arith.constant 0 : index
      %120 = vector.load %arg11[%c2_56, %c0_57] : memref<8x128xf32, #tpu.memory_space<vmem>>, vector<1x128xf32>
      %cst_58 = arith.constant dense<0.000000e+00> : vector<128xf32>
      %121 = vector.multi_reduction <add>, %119, %cst_58 [0] : vector<128x128xf32> to vector<128xf32>
      %122 = vector.shape_cast %121 : vector<128xf32> to vector<1x128xf32>
      %123 = arith.addf %120, %122 : vector<1x128xf32>
      %c2_59 = arith.constant 2 : index
      %c0_60 = arith.constant 0 : index
      %124 = vector.load %arg11[%c2_59, %c0_60] : memref<8x128xf32, #tpu.memory_space<vmem>>, vector<1x128xf32>
      tpu.vector_store %arg11[%c2_59, %c0_60], %123 {strides = array<i32>} : memref<8x128xf32, #tpu.memory_space<vmem>>, vector<1x128xf32>,
      %c3_61 = arith.constant 3 : index
      %c0_62 = arith.constant 0 : index
      %125 = vector.load %arg11[%c3_61, %c0_62] : memref<8x128xf32, #tpu.memory_space<vmem>>, vector<1x128xf32>
      %126 = arith.mulf %119, %119 : vector<128x128xf32>
      %cst_63 = arith.constant dense<0.000000e+00> : vector<128xf32>
      %127 = vector.multi_reduction <add>, %126, %cst_63 [0] : vector<128x128xf32> to vector<128xf32>
      %128 = vector.shape_cast %127 : vector<128xf32> to vector<1x128xf32>
      %129 = arith.addf %125, %128 : vector<1x128xf32>
      %c3_64 = arith.constant 3 : index
      %c0_65 = arith.constant 0 : index
      %130 = vector.load %arg11[%c3_64, %c0_65] : memref<8x128xf32, #tpu.memory_space<vmem>>, vector<1x128xf32>
      tpu.vector_store %arg11[%c3_64, %c0_65], %129 {strides = array<i32>} : memref<8x128xf32, #tpu.memory_space<vmem>>, vector<1x128xf32>,
      %131 = arith.index_cast %arg1 : i32 to index
      %c0_66 = arith.constant 0 : index
      %c0_67 = arith.constant 0 : index
      %132 = vector.load %arg9[%131, %c0_66, %c0_67] : memref<2x256x128xf32, #tpu.memory_space<vmem>>, vector<1x128x128xf32>
      %133 = vector.shape_cast %132 : vector<1x128x128xf32> to vector<128x128xf32>
      %134 = vector.shape_cast %119 : vector<128x128xf32> to vector<1x128x128xf32>
      tpu.vector_store %arg9[%131, %c0_66, %c0_67], %134 {strides = array<i32>} : memref<2x256x128xf32, #tpu.memory_space<vmem>>, vector<1x128x128xf32>,
      %c160_68 = arith.constant 160 : index
      %c0_69 = arith.constant 0 : index
      %135 = vector.load %arg10[%c160_68, %c0_69] : memref<320x128xbf16, #tpu.memory_space<vmem>>, vector<128x128xbf16>
      %c0_70 = arith.constant 0 : index
      %c0_71 = arith.constant 0 : index
      %136 = vector.load %arg5[%c0_70, %c0_71] : memref<128x128xbf16, #tpu.memory_space<vmem>>, vector<128x128xbf16>
      %cst_72 = arith.constant dense<0.000000e+00> : vector<128x128xf32>
      %137 = tpu.matmul %135, %136, %cst_72 {dimension_numbers = #tpu.dot_dimension_numbers<[1], [0], [0], [1], [0, 0, 1, 1], [], []>} : vector<128x128xbf16>, vector<128x128xbf16>, vector<128x128xf32> -> vector<128x128xf32>
      %c143 = arith.constant 143 : index
      %c0_73 = arith.constant 0 : index
      %138 = vector.load %arg10[%c143, %c0_73] : memref<320x128xbf16, #tpu.memory_space<vmem>>, vector<128x128xbf16>
      %cst_74 = arith.constant 0.000000e+00 : bf16
      %139 = vector.broadcast %cst_74 : bf16 to vector<128x128xbf16>
      %140 = vector.shape_cast %62 : vector<128x1xi1> to vector<128x1xi1>
      %141 = vector.broadcast %140 : vector<128x1xi1> to vector<128x128xi1>
      %142 = arith.select %141, %138, %139 : vector<128x128xi1>, vector<128x128xbf16>
      %c144 = arith.constant 144 : index
      %c0_75 = arith.constant 0 : index
      %143 = vector.load %arg10[%c144, %c0_75] : memref<320x128xbf16, #tpu.memory_space<vmem>>, vector<128x128xbf16>
      %144 = tpu.concatenate %142, %143 in 1 : vector<128x128xbf16>, vector<128x128xbf16> -> vector<128x256xbf16>
      %c0_76 = arith.constant 0 : index
      %c0_77 = arith.constant 0 : index
      %c0_78 = arith.constant 0 : index
      %145 = vector.load %arg4[%c0_76, %c0_77, %c0_78] : memref<4x256x128xbf16, #tpu.memory_space<vmem>>, vector<1x256x128xbf16>
      %146 = vector.shape_cast %145 : vector<1x256x128xbf16> to vector<256x128xbf16>
      %cst_79 = arith.constant dense<0.000000e+00> : vector<128x128xf32>
      %147 = tpu.matmul %144, %146, %cst_79 {dimension_numbers = #tpu.dot_dimension_numbers<[1], [0], [0], [1], [0, 0, 1, 1], [], []>} : vector<128x256xbf16>, vector<256x128xbf16>, vector<128x128xf32> -> vector<128x128xf32>
      %148 = arith.addf %137, %147 : vector<128x128xf32>
      %c145 = arith.constant 145 : index
      %c0_80 = arith.constant 0 : index
      %149 = vector.load %arg10[%c145, %c0_80] : memref<320x128xbf16, #tpu.memory_space<vmem>>, vector<128x128xbf16>
      %cst_81 = arith.constant 0.000000e+00 : bf16
      %150 = vector.broadcast %cst_81 : bf16 to vector<128x128xbf16>
      %151 = vector.shape_cast %64 : vector<128x1xi1> to vector<128x1xi1>
      %152 = vector.broadcast %151 : vector<128x1xi1> to vector<128x128xi1>
      %153 = arith.select %152, %149, %150 : vector<128x128xi1>, vector<128x128xbf16>
      %c159 = arith.constant 159 : index
      %c0_82 = arith.constant 0 : index
      %154 = vector.load %arg10[%c159, %c0_82] : memref<320x128xbf16, #tpu.memory_space<vmem>>, vector<128x128xbf16>
      %cst_83 = arith.constant 0.000000e+00 : bf16
      %155 = vector.broadcast %cst_83 : bf16 to vector<128x128xbf16>
      %156 = vector.shape_cast %62 : vector<128x1xi1> to vector<128x1xi1>
      %157 = vector.broadcast %156 : vector<128x1xi1> to vector<128x128xi1>
      %158 = arith.select %157, %154, %155 : vector<128x128xi1>, vector<128x128xbf16>
      %159 = tpu.concatenate %153, %158 in 1 : vector<128x128xbf16>, vector<128x128xbf16> -> vector<128x256xbf16>
      %c1_84 = arith.constant 1 : index
      %c0_85 = arith.constant 0 : index
      %c0_86 = arith.constant 0 : index
      %160 = vector.load %arg4[%c1_84, %c0_85, %c0_86] : memref<4x256x128xbf16, #tpu.memory_space<vmem>>, vector<1x256x128xbf16>
      %161 = vector.shape_cast %160 : vector<1x256x128xbf16> to vector<256x128xbf16>
      %cst_87 = arith.constant dense<0.000000e+00> : vector<128x128xf32>
      %162 = tpu.matmul %159, %161, %cst_87 {dimension_numbers = #tpu.dot_dimension_numbers<[1], [0], [0], [1], [0, 0, 1, 1], [], []>} : vector<128x256xbf16>, vector<256x128xbf16>, vector<128x128xf32> -> vector<128x128xf32>
      %163 = arith.addf %148, %162 : vector<128x128xf32>
      %c161 = arith.constant 161 : index
      %c0_88 = arith.constant 0 : index
      %164 = vector.load %arg10[%c161, %c0_88] : memref<320x128xbf16, #tpu.memory_space<vmem>>, vector<128x128xbf16>
      %cst_89 = arith.constant 0.000000e+00 : bf16
      %165 = vector.broadcast %cst_89 : bf16 to vector<128x128xbf16>
      %166 = vector.shape_cast %64 : vector<128x1xi1> to vector<128x1xi1>
      %167 = vector.broadcast %166 : vector<128x1xi1> to vector<128x128xi1>
      %168 = arith.select %167, %164, %165 : vector<128x128xi1>, vector<128x128xbf16>
      %c175 = arith.constant 175 : index
      %c0_90 = arith.constant 0 : index
      %169 = vector.load %arg10[%c175, %c0_90] : memref<320x128xbf16, #tpu.memory_space<vmem>>, vector<128x128xbf16>
      %cst_91 = arith.constant 0.000000e+00 : bf16
      %170 = vector.broadcast %cst_91 : bf16 to vector<128x128xbf16>
      %171 = vector.shape_cast %62 : vector<128x1xi1> to vector<128x1xi1>
      %172 = vector.broadcast %171 : vector<128x1xi1> to vector<128x128xi1>
      %173 = arith.select %172, %169, %170 : vector<128x128xi1>, vector<128x128xbf16>
      %174 = tpu.concatenate %168, %173 in 1 : vector<128x128xbf16>, vector<128x128xbf16> -> vector<128x256xbf16>
      %c2_92 = arith.constant 2 : index
      %c0_93 = arith.constant 0 : index
      %c0_94 = arith.constant 0 : index
      %175 = vector.load %arg4[%c2_92, %c0_93, %c0_94] : memref<4x256x128xbf16, #tpu.memory_space<vmem>>, vector<1x256x128xbf16>
      %176 = vector.shape_cast %175 : vector<1x256x128xbf16> to vector<256x128xbf16>
      %cst_95 = arith.constant dense<0.000000e+00> : vector<128x128xf32>
      %177 = tpu.matmul %174, %176, %cst_95 {dimension_numbers = #tpu.dot_dimension_numbers<[1], [0], [0], [1], [0, 0, 1, 1], [], []>} : vector<128x256xbf16>, vector<256x128xbf16>, vector<128x128xf32> -> vector<128x128xf32>
      %178 = arith.addf %163, %177 : vector<128x128xf32>
      %c176 = arith.constant 176 : index
      %c0_96 = arith.constant 0 : index
      %179 = vector.load %arg10[%c176, %c0_96] : memref<320x128xbf16, #tpu.memory_space<vmem>>, vector<128x128xbf16>
      %c177 = arith.constant 177 : index
      %c0_97 = arith.constant 0 : index
      %180 = vector.load %arg10[%c177, %c0_97] : memref<320x128xbf16, #tpu.memory_space<vmem>>, vector<128x128xbf16>
      %cst_98 = arith.constant 0.000000e+00 : bf16
      %181 = vector.broadcast %cst_98 : bf16 to vector<128x128xbf16>
      %182 = vector.shape_cast %64 : vector<128x1xi1> to vector<128x1xi1>
      %183 = vector.broadcast %182 : vector<128x1xi1> to vector<128x128xi1>
      %184 = arith.select %183, %180, %181 : vector<128x128xi1>, vector<128x128xbf16>
      %185 = tpu.concatenate %179, %184 in 1 : vector<128x128xbf16>, vector<128x128xbf16> -> vector<128x256xbf16>
      %c3_99 = arith.constant 3 : index
      %c0_100 = arith.constant 0 : index
      %c0_101 = arith.constant 0 : index
      %186 = vector.load %arg4[%c3_99, %c0_100, %c0_101] : memref<4x256x128xbf16, #tpu.memory_space<vmem>>, vector<1x256x128xbf16>
      %187 = vector.shape_cast %186 : vector<1x256x128xbf16> to vector<256x128xbf16>
      %cst_102 = arith.constant dense<0.000000e+00> : vector<128x128xf32>
      %188 = tpu.matmul %185, %187, %cst_102 {dimension_numbers = #tpu.dot_dimension_numbers<[1], [0], [0], [1], [0, 0, 1, 1], [], []>} : vector<128x256xbf16>, vector<256x128xbf16>, vector<128x128xf32> -> vector<128x128xf32>
      %189 = arith.addf %178, %188 : vector<128x128xf32>
      %c2_103 = arith.constant 2 : index
      %c0_104 = arith.constant 0 : index
      %190 = vector.load %arg11[%c2_103, %c0_104] : memref<8x128xf32, #tpu.memory_space<vmem>>, vector<1x128xf32>
      %cst_105 = arith.constant dense<0.000000e+00> : vector<128xf32>
      %191 = vector.multi_reduction <add>, %189, %cst_105 [0] : vector<128x128xf32> to vector<128xf32>
      %192 = vector.shape_cast %191 : vector<128xf32> to vector<1x128xf32>
      %193 = arith.addf %190, %192 : vector<1x128xf32>
      %c2_106 = arith.constant 2 : index
      %c0_107 = arith.constant 0 : index
      %194 = vector.load %arg11[%c2_106, %c0_107] : memref<8x128xf32, #tpu.memory_space<vmem>>, vector<1x128xf32>
      tpu.vector_store %arg11[%c2_106, %c0_107], %193 {strides = array<i32>} : memref<8x128xf32, #tpu.memory_space<vmem>>, vector<1x128xf32>,
      %c3_108 = arith.constant 3 : index
      %c0_109 = arith.constant 0 : index
      %195 = vector.load %arg11[%c3_108, %c0_109] : memref<8x128xf32, #tpu.memory_space<vmem>>, vector<1x128xf32>
      %196 = arith.mulf %189, %189 : vector<128x128xf32>
      %cst_110 = arith.constant dense<0.000000e+00> : vector<128xf32>
      %197 = vector.multi_reduction <add>, %196, %cst_110 [0] : vector<128x128xf32> to vector<128xf32>
      %198 = vector.shape_cast %197 : vector<128xf32> to vector<1x128xf32>
      %199 = arith.addf %195, %198 : vector<1x128xf32>
      %c3_111 = arith.constant 3 : index
      %c0_112 = arith.constant 0 : index
      %200 = vector.load %arg11[%c3_111, %c0_112] : memref<8x128xf32, #tpu.memory_space<vmem>>, vector<1x128xf32>
      tpu.vector_store %arg11[%c3_111, %c0_112], %199 {strides = array<i32>} : memref<8x128xf32, #tpu.memory_space<vmem>>, vector<1x128xf32>,
      %201 = arith.index_cast %arg1 : i32 to index
      %c128_113 = arith.constant 128 : index
      %c0_114 = arith.constant 0 : index
      %202 = vector.load %arg9[%201, %c128_113, %c0_114] : memref<2x256x128xf32, #tpu.memory_space<vmem>>, vector<1x128x128xf32>
      %203 = vector.shape_cast %202 : vector<1x128x128xf32> to vector<128x128xf32>
      %204 = vector.shape_cast %189 : vector<128x128xf32> to vector<1x128x128xf32>
      tpu.vector_store %arg9[%201, %c128_113, %c0_114], %204 {strides = array<i32>} : memref<2x256x128xf32, #tpu.memory_space<vmem>>, vector<1x128x128xf32>,
    } else {
    }
    %c2_i32 = arith.constant 2 : i32
    %11 = arith.cmpi eq, %arg0, %c2_i32 : i32
    %12 = arith.extui %11 : i1 to i32
    %c0_i32_5 = arith.constant 0 : i32
    %13 = arith.cmpi ne, %12, %c0_i32_5 : i32
    scf.if %13 {
      %c0_i32_7 = arith.constant 0 : i32
      %17 = arith.cmpi eq, %arg1, %c0_i32_7 : i32
      %18 = arith.extui %17 : i1 to i32
      %c0_i32_8 = arith.constant 0 : i32
      %19 = arith.cmpi ne, %18, %c0_i32_8 : i32
      scf.if %19 {
        %c2_42 = arith.constant 2 : index
        %c0_43 = arith.constant 0 : index
        %76 = vector.load %arg11[%c2_42, %c0_43] : memref<8x128xf32, #tpu.memory_space<vmem>>, vector<1x128xf32>
        %c3_44 = arith.constant 3 : index
        %c0_45 = arith.constant 0 : index
        %77 = vector.load %arg11[%c3_44, %c0_45] : memref<8x128xf32, #tpu.memory_space<vmem>>, vector<1x128xf32>
        %cst_46 = arith.constant 0.001953125 : f32
        %78 = vector.broadcast %cst_46 : f32 to vector<1x128xf32>
        %79 = arith.mulf %76, %78 : vector<1x128xf32>
        %cst_47 = arith.constant 0.001953125 : f32
        %80 = vector.broadcast %cst_47 : f32 to vector<1x128xf32>
        %81 = arith.mulf %77, %80 : vector<1x128xf32>
        %82 = arith.mulf %79, %79 : vector<1x128xf32>
        %83 = arith.subf %81, %82 : vector<1x128xf32>
        %cst_48 = arith.constant 0.000000e+00 : f32
        %84 = vector.broadcast %cst_48 : f32 to vector<1x128xf32>
        %85 = arith.maximumf %83, %84 : vector<1x128xf32>
        %c2_49 = arith.constant 2 : index
        %c0_50 = arith.constant 0 : index
        %86 = vector.load %arg7[%c2_49, %c0_50] : memref<8x128xf32, #tpu.memory_space<vmem>>, vector<1x128xf32>
        %cst_51 = arith.constant 9.99999974E-6 : f32
        %87 = vector.broadcast %cst_51 : f32 to vector<1x128xf32>
        %88 = arith.addf %85, %87 : vector<1x128xf32>
        %89 = math.rsqrt %88 : vector<1x128xf32>
        %90 = arith.mulf %86, %89 : vector<1x128xf32>
        %c2_52 = arith.constant 2 : index
        %c0_53 = arith.constant 0 : index
        %91 = vector.load %arg12[%c2_52, %c0_53] : memref<8x128xf32, #tpu.memory_space<vmem>>, vector<1x128xf32>
        tpu.vector_store %arg12[%c2_52, %c0_53], %90 {strides = array<i32>} : memref<8x128xf32, #tpu.memory_space<vmem>>, vector<1x128xf32>,
        %c3_54 = arith.constant 3 : index
        %c0_55 = arith.constant 0 : index
        %92 = vector.load %arg7[%c3_54, %c0_55] : memref<8x128xf32, #tpu.memory_space<vmem>>, vector<1x128xf32>
        %93 = arith.mulf %90, %79 : vector<1x128xf32>
        %94 = arith.subf %92, %93 : vector<1x128xf32>
        %c3_56 = arith.constant 3 : index
        %c0_57 = arith.constant 0 : index
        %95 = vector.load %arg12[%c3_56, %c0_57] : memref<8x128xf32, #tpu.memory_space<vmem>>, vector<1x128xf32>
        tpu.vector_store %arg12[%c3_56, %c0_57], %94 {strides = array<i32>} : memref<8x128xf32, #tpu.memory_space<vmem>>, vector<1x128xf32>,
      } else {
      }
      %c2 = arith.constant 2 : index
      %c0 = arith.constant 0 : index
      %20 = vector.load %arg12[%c2, %c0] : memref<8x128xf32, #tpu.memory_space<vmem>>, vector<1x128xf32>
      %c3 = arith.constant 3 : index
      %c0_9 = arith.constant 0 : index
      %21 = vector.load %arg12[%c3, %c0_9] : memref<8x128xf32, #tpu.memory_space<vmem>>, vector<1x128xf32>
      %22 = arith.index_cast %arg1 : i32 to index
      %c0_10 = arith.constant 0 : index
      %c0_11 = arith.constant 0 : index
      %23 = vector.load %arg9[%22, %c0_10, %c0_11] : memref<2x256x128xf32, #tpu.memory_space<vmem>>, vector<1x128x128xf32>
      %24 = vector.shape_cast %23 : vector<1x128x128xf32> to vector<128x128xf32>
      %25 = vector.broadcast %20 : vector<1x128xf32> to vector<128x128xf32>
      %26 = arith.mulf %24, %25 : vector<128x128xf32>
      %27 = vector.broadcast %21 : vector<1x128xf32> to vector<128x128xf32>
      %28 = arith.addf %26, %27 : vector<128x128xf32>
      %cst = arith.constant 0.000000e+00 : f32
      %29 = vector.broadcast %cst : f32 to vector<128x128xf32>
      %30 = arith.maximumf %28, %29 : vector<128x128xf32>
      %31 = arith.truncf %30 : vector<128x128xf32> to vector<128x128xbf16>
      %c0_12 = arith.constant 0 : index
      %c0_13 = arith.constant 0 : index
      %32 = vector.load %arg6[%c0_12, %c0_13] : memref<128x128xbf16, #tpu.memory_space<vmem>>, vector<128x128xbf16>
      %cst_14 = arith.constant dense<0.000000e+00> : vector<128x128xf32>
      %33 = tpu.matmul %31, %32, %cst_14 {dimension_numbers = #tpu.dot_dimension_numbers<[1], [0], [0], [1], [0, 0, 1, 1], [], []>} : vector<128x128xbf16>, vector<128x128xbf16>, vector<128x128xf32> -> vector<128x128xf32>
      %c4 = arith.constant 4 : index
      %c0_15 = arith.constant 0 : index
      %34 = vector.load %arg11[%c4, %c0_15] : memref<8x128xf32, #tpu.memory_space<vmem>>, vector<1x128xf32>
      %cst_16 = arith.constant dense<0.000000e+00> : vector<128xf32>
      %35 = vector.multi_reduction <add>, %33, %cst_16 [0] : vector<128x128xf32> to vector<128xf32>
      %36 = vector.shape_cast %35 : vector<128xf32> to vector<1x128xf32>
      %37 = arith.addf %34, %36 : vector<1x128xf32>
      %c4_17 = arith.constant 4 : index
      %c0_18 = arith.constant 0 : index
      %38 = vector.load %arg11[%c4_17, %c0_18] : memref<8x128xf32, #tpu.memory_space<vmem>>, vector<1x128xf32>
      tpu.vector_store %arg11[%c4_17, %c0_18], %37 {strides = array<i32>} : memref<8x128xf32, #tpu.memory_space<vmem>>, vector<1x128xf32>,
      %c5 = arith.constant 5 : index
      %c0_19 = arith.constant 0 : index
      %39 = vector.load %arg11[%c5, %c0_19] : memref<8x128xf32, #tpu.memory_space<vmem>>, vector<1x128xf32>
      %40 = arith.mulf %33, %33 : vector<128x128xf32>
      %cst_20 = arith.constant dense<0.000000e+00> : vector<128xf32>
      %41 = vector.multi_reduction <add>, %40, %cst_20 [0] : vector<128x128xf32> to vector<128xf32>
      %42 = vector.shape_cast %41 : vector<128xf32> to vector<1x128xf32>
      %43 = arith.addf %39, %42 : vector<1x128xf32>
      %c5_21 = arith.constant 5 : index
      %c0_22 = arith.constant 0 : index
      %44 = vector.load %arg11[%c5_21, %c0_22] : memref<8x128xf32, #tpu.memory_space<vmem>>, vector<1x128xf32>
      tpu.vector_store %arg11[%c5_21, %c0_22], %43 {strides = array<i32>} : memref<8x128xf32, #tpu.memory_space<vmem>>, vector<1x128xf32>,
      %45 = arith.index_cast %arg1 : i32 to index
      %c0_23 = arith.constant 0 : index
      %c0_24 = arith.constant 0 : index
      %46 = vector.load %arg9[%45, %c0_23, %c0_24] : memref<2x256x128xf32, #tpu.memory_space<vmem>>, vector<1x128x128xf32>
      %47 = vector.shape_cast %46 : vector<1x128x128xf32> to vector<128x128xf32>
      %48 = vector.shape_cast %33 : vector<128x128xf32> to vector<1x128x128xf32>
      tpu.vector_store %arg9[%45, %c0_23, %c0_24], %48 {strides = array<i32>} : memref<2x256x128xf32, #tpu.memory_space<vmem>>, vector<1x128x128xf32>,
      %49 = arith.index_cast %arg1 : i32 to index
      %c128 = arith.constant 128 : index
      %c0_25 = arith.constant 0 : index
      %50 = vector.load %arg9[%49, %c128, %c0_25] : memref<2x256x128xf32, #tpu.memory_space<vmem>>, vector<1x128x128xf32>
      %51 = vector.shape_cast %50 : vector<1x128x128xf32> to vector<128x128xf32>
      %52 = vector.broadcast %20 : vector<1x128xf32> to vector<128x128xf32>
      %53 = arith.mulf %51, %52 : vector<128x128xf32>
      %54 = vector.broadcast %21 : vector<1x128xf32> to vector<128x128xf32>
      %55 = arith.addf %53, %54 : vector<128x128xf32>
      %cst_26 = arith.constant 0.000000e+00 : f32
      %56 = vector.broadcast %cst_26 : f32 to vector<128x128xf32>
      %57 = arith.maximumf %55, %56 : vector<128x128xf32>
      %58 = arith.truncf %57 : vector<128x128xf32> to vector<128x128xbf16>
      %c0_27 = arith.constant 0 : index
      %c0_28 = arith.constant 0 : index
      %59 = vector.load %arg6[%c0_27, %c0_28] : memref<128x128xbf16, #tpu.memory_space<vmem>>, vector<128x128xbf16>
      %cst_29 = arith.constant dense<0.000000e+00> : vector<128x128xf32>
      %60 = tpu.matmul %58, %59, %cst_29 {dimension_numbers = #tpu.dot_dimension_numbers<[1], [0], [0], [1], [0, 0, 1, 1], [], []>} : vector<128x128xbf16>, vector<128x128xbf16>, vector<128x128xf32> -> vector<128x128xf32>
      %c4_30 = arith.constant 4 : index
      %c0_31 = arith.constant 0 : index
      %61 = vector.load %arg11[%c4_30, %c0_31] : memref<8x128xf32, #tpu.memory_space<vmem>>, vector<1x128xf32>
      %cst_32 = arith.constant dense<0.000000e+00> : vector<128xf32>
      %62 = vector.multi_reduction <add>, %60, %cst_32 [0] : vector<128x128xf32> to vector<128xf32>
      %63 = vector.shape_cast %62 : vector<128xf32> to vector<1x128xf32>
      %64 = arith.addf %61, %63 : vector<1x128xf32>
      %c4_33 = arith.constant 4 : index
      %c0_34 = arith.constant 0 : index
      %65 = vector.load %arg11[%c4_33, %c0_34] : memref<8x128xf32, #tpu.memory_space<vmem>>, vector<1x128xf32>
      tpu.vector_store %arg11[%c4_33, %c0_34], %64 {strides = array<i32>} : memref<8x128xf32, #tpu.memory_space<vmem>>, vector<1x128xf32>,
      %c5_35 = arith.constant 5 : index
      %c0_36 = arith.constant 0 : index
      %66 = vector.load %arg11[%c5_35, %c0_36] : memref<8x128xf32, #tpu.memory_space<vmem>>, vector<1x128xf32>
      %67 = arith.mulf %60, %60 : vector<128x128xf32>
      %cst_37 = arith.constant dense<0.000000e+00> : vector<128xf32>
      %68 = vector.multi_reduction <add>, %67, %cst_37 [0] : vector<128x128xf32> to vector<128xf32>
      %69 = vector.shape_cast %68 : vector<128xf32> to vector<1x128xf32>
      %70 = arith.addf %66, %69 : vector<1x128xf32>
      %c5_38 = arith.constant 5 : index
      %c0_39 = arith.constant 0 : index
      %71 = vector.load %arg11[%c5_38, %c0_39] : memref<8x128xf32, #tpu.memory_space<vmem>>, vector<1x128xf32>
      tpu.vector_store %arg11[%c5_38, %c0_39], %70 {strides = array<i32>} : memref<8x128xf32, #tpu.memory_space<vmem>>, vector<1x128xf32>,
      %72 = arith.index_cast %arg1 : i32 to index
      %c128_40 = arith.constant 128 : index
      %c0_41 = arith.constant 0 : index
      %73 = vector.load %arg9[%72, %c128_40, %c0_41] : memref<2x256x128xf32, #tpu.memory_space<vmem>>, vector<1x128x128xf32>
      %74 = vector.shape_cast %73 : vector<1x128x128xf32> to vector<128x128xf32>
      %75 = vector.shape_cast %60 : vector<128x128xf32> to vector<1x128x128xf32>
      tpu.vector_store %arg9[%72, %c128_40, %c0_41], %75 {strides = array<i32>} : memref<2x256x128xf32, #tpu.memory_space<vmem>>, vector<1x128x128xf32>,
    } else {
    }
    %c3_i32 = arith.constant 3 : i32
    %14 = arith.cmpi eq, %arg0, %c3_i32 : i32
    %15 = arith.extui %14 : i1 to i32
    %c0_i32_6 = arith.constant 0 : i32
    %16 = arith.cmpi ne, %15, %c0_i32_6 : i32
    scf.if %16 {
      %c0_i32_7 = arith.constant 0 : i32
      %17 = arith.cmpi eq, %arg1, %c0_i32_7 : i32
      %18 = arith.extui %17 : i1 to i32
      %c0_i32_8 = arith.constant 0 : i32
      %19 = arith.cmpi ne, %18, %c0_i32_8 : i32
      scf.if %19 {
        %c4_26 = arith.constant 4 : index
        %c0_27 = arith.constant 0 : index
        %52 = vector.load %arg11[%c4_26, %c0_27] : memref<8x128xf32, #tpu.memory_space<vmem>>, vector<1x128xf32>
        %c5_28 = arith.constant 5 : index
        %c0_29 = arith.constant 0 : index
        %53 = vector.load %arg11[%c5_28, %c0_29] : memref<8x128xf32, #tpu.memory_space<vmem>>, vector<1x128xf32>
        %cst_30 = arith.constant 0.001953125 : f32
        %54 = vector.broadcast %cst_30 : f32 to vector<1x128xf32>
        %55 = arith.mulf %52, %54 : vector<1x128xf32>
        %cst_31 = arith.constant 0.001953125 : f32
        %56 = vector.broadcast %cst_31 : f32 to vector<1x128xf32>
        %57 = arith.mulf %53, %56 : vector<1x128xf32>
        %58 = arith.mulf %55, %55 : vector<1x128xf32>
        %59 = arith.subf %57, %58 : vector<1x128xf32>
        %cst_32 = arith.constant 0.000000e+00 : f32
        %60 = vector.broadcast %cst_32 : f32 to vector<1x128xf32>
        %61 = arith.maximumf %59, %60 : vector<1x128xf32>
        %c4_33 = arith.constant 4 : index
        %c0_34 = arith.constant 0 : index
        %62 = vector.load %arg7[%c4_33, %c0_34] : memref<8x128xf32, #tpu.memory_space<vmem>>, vector<1x128xf32>
        %cst_35 = arith.constant 9.99999974E-6 : f32
        %63 = vector.broadcast %cst_35 : f32 to vector<1x128xf32>
        %64 = arith.addf %61, %63 : vector<1x128xf32>
        %65 = math.rsqrt %64 : vector<1x128xf32>
        %66 = arith.mulf %62, %65 : vector<1x128xf32>
        %c4_36 = arith.constant 4 : index
        %c0_37 = arith.constant 0 : index
        %67 = vector.load %arg12[%c4_36, %c0_37] : memref<8x128xf32, #tpu.memory_space<vmem>>, vector<1x128xf32>
        tpu.vector_store %arg12[%c4_36, %c0_37], %66 {strides = array<i32>} : memref<8x128xf32, #tpu.memory_space<vmem>>, vector<1x128xf32>,
        %c5_38 = arith.constant 5 : index
        %c0_39 = arith.constant 0 : index
        %68 = vector.load %arg7[%c5_38, %c0_39] : memref<8x128xf32, #tpu.memory_space<vmem>>, vector<1x128xf32>
        %69 = arith.mulf %66, %55 : vector<1x128xf32>
        %70 = arith.subf %68, %69 : vector<1x128xf32>
        %c5_40 = arith.constant 5 : index
        %c0_41 = arith.constant 0 : index
        %71 = vector.load %arg12[%c5_40, %c0_41] : memref<8x128xf32, #tpu.memory_space<vmem>>, vector<1x128xf32>
        tpu.vector_store %arg12[%c5_40, %c0_41], %70 {strides = array<i32>} : memref<8x128xf32, #tpu.memory_space<vmem>>, vector<1x128xf32>,
      } else {
      }
      %c4 = arith.constant 4 : index
      %c0 = arith.constant 0 : index
      %20 = vector.load %arg12[%c4, %c0] : memref<8x128xf32, #tpu.memory_space<vmem>>, vector<1x128xf32>
      %c5 = arith.constant 5 : index
      %c0_9 = arith.constant 0 : index
      %21 = vector.load %arg12[%c5, %c0_9] : memref<8x128xf32, #tpu.memory_space<vmem>>, vector<1x128xf32>
      %22 = arith.index_cast %arg1 : i32 to index
      %c0_10 = arith.constant 0 : index
      %c0_11 = arith.constant 0 : index
      %23 = vector.load %arg9[%22, %c0_10, %c0_11] : memref<2x256x128xf32, #tpu.memory_space<vmem>>, vector<1x128x128xf32>
      %24 = vector.shape_cast %23 : vector<1x128x128xf32> to vector<128x128xf32>
      %25 = vector.broadcast %20 : vector<1x128xf32> to vector<128x128xf32>
      %26 = arith.mulf %24, %25 : vector<128x128xf32>
      %27 = vector.broadcast %21 : vector<1x128xf32> to vector<128x128xf32>
      %28 = arith.addf %26, %27 : vector<128x128xf32>
      %c0_12 = arith.constant 0 : index
      %c0_13 = arith.constant 0 : index
      %c0_14 = arith.constant 0 : index
      %29 = vector.load %arg2[%c0_12, %c0_13, %c0_14] : memref<1x256x128xf32, #tpu.memory_space<vmem>>, vector<1x128x128xf32>
      %30 = vector.shape_cast %29 : vector<1x128x128xf32> to vector<128x128xf32>
      %31 = arith.addf %28, %30 : vector<128x128xf32>
      %cst = arith.constant 0.000000e+00 : f32
      %32 = vector.broadcast %cst : f32 to vector<128x128xf32>
      %33 = arith.maximumf %31, %32 : vector<128x128xf32>
      %c0_15 = arith.constant 0 : index
      %c0_16 = arith.constant 0 : index
      %c0_17 = arith.constant 0 : index
      %34 = vector.load %arg8[%c0_15, %c0_16, %c0_17] : memref<1x256x128xf32, #tpu.memory_space<vmem>>, vector<1x128x128xf32>
      %35 = vector.shape_cast %34 : vector<1x128x128xf32> to vector<128x128xf32>
      %36 = vector.shape_cast %33 : vector<128x128xf32> to vector<1x128x128xf32>
      tpu.vector_store %arg8[%c0_15, %c0_16, %c0_17], %36 {strides = array<i32>} : memref<1x256x128xf32, #tpu.memory_space<vmem>>, vector<1x128x128xf32>,
      %37 = arith.index_cast %arg1 : i32 to index
      %c128 = arith.constant 128 : index
      %c0_18 = arith.constant 0 : index
      %38 = vector.load %arg9[%37, %c128, %c0_18] : memref<2x256x128xf32, #tpu.memory_space<vmem>>, vector<1x128x128xf32>
      %39 = vector.shape_cast %38 : vector<1x128x128xf32> to vector<128x128xf32>
      %40 = vector.broadcast %20 : vector<1x128xf32> to vector<128x128xf32>
      %41 = arith.mulf %39, %40 : vector<128x128xf32>
      %42 = vector.broadcast %21 : vector<1x128xf32> to vector<128x128xf32>
      %43 = arith.addf %41, %42 : vector<128x128xf32>
      %c0_19 = arith.constant 0 : index
      %c128_20 = arith.constant 128 : index
      %c0_21 = arith.constant 0 : index
      %44 = vector.load %arg2[%c0_19, %c128_20, %c0_21] : memref<1x256x128xf32, #tpu.memory_space<vmem>>, vector<1x128x128xf32>
      %45 = vector.shape_cast %44 : vector<1x128x128xf32> to vector<128x128xf32>
      %46 = arith.addf %43, %45 : vector<128x128xf32>
      %cst_22 = arith.constant 0.000000e+00 : f32
      %47 = vector.broadcast %cst_22 : f32 to vector<128x128xf32>
      %48 = arith.maximumf %46, %47 : vector<128x128xf32>
      %c0_23 = arith.constant 0 : index
      %c128_24 = arith.constant 128 : index
      %c0_25 = arith.constant 0 : index
      %49 = vector.load %arg8[%c0_23, %c128_24, %c0_25] : memref<1x256x128xf32, #tpu.memory_space<vmem>>, vector<1x128x128xf32>
      %50 = vector.shape_cast %49 : vector<1x128x128xf32> to vector<128x128xf32>
      %51 = vector.shape_cast %48 : vector<128x128xf32> to vector<1x128x128xf32>
      tpu.vector_store %arg8[%c0_23, %c128_24, %c0_25], %51 {strides = array<i32>} : memref<1x256x128xf32, #tpu.memory_space<vmem>>, vector<1x128x128xf32>,
    } else {
    }
    return
  }
  func.func @transform_0(%arg0: i32, %arg1: i32) -> (i32, i32, i32) {
    %c0_i32 = arith.constant 0 : i32
    %0 = arith.cmpi eq, %arg0, %c0_i32 : i32
    %c3_i32 = arith.constant 3 : i32
    %1 = arith.cmpi eq, %arg0, %c3_i32 : i32
    %2 = arith.ori %0, %1 : i1
    %c0_i32_0 = arith.constant 0 : i32
    %3 = arith.select %2, %arg1, %c0_i32_0 : i32
    %c0_i32_1 = arith.constant 0 : i32
    %c0_i32_2 = arith.constant 0 : i32
    %c0_i32_3 = arith.constant 0 : i32
    return %3, %c0_i32_1, %c0_i32_2 : i32, i32, i32
  }
  func.func @transform_1(%arg0: i32, %arg1: i32) -> (i32, i32) {
    %c0_i32 = arith.constant 0 : i32
    %c0_i32_0 = arith.constant 0 : i32
    %c0_i32_1 = arith.constant 0 : i32
    return %c0_i32, %c0_i32_0 : i32, i32
  }
  func.func @transform_2(%arg0: i32, %arg1: i32) -> (i32, i32, i32) {
    %c0_i32 = arith.constant 0 : i32
    %c0_i32_0 = arith.constant 0 : i32
    %c0_i32_1 = arith.constant 0 : i32
    %c0_i32_2 = arith.constant 0 : i32
    return %c0_i32, %c0_i32_0, %c0_i32_1 : i32, i32, i32
  }
  func.func @transform_3(%arg0: i32, %arg1: i32) -> (i32, i32) {
    %c0_i32 = arith.constant 0 : i32
    %c0_i32_0 = arith.constant 0 : i32
    %c0_i32_1 = arith.constant 0 : i32
    return %c0_i32, %c0_i32_0 : i32, i32
  }
  func.func @transform_4(%arg0: i32, %arg1: i32) -> (i32, i32) {
    %c0_i32 = arith.constant 0 : i32
    %c0_i32_0 = arith.constant 0 : i32
    %c0_i32_1 = arith.constant 0 : i32
    return %c0_i32, %c0_i32_0 : i32, i32
  }
  func.func @transform_5(%arg0: i32, %arg1: i32) -> (i32, i32) {
    %c0_i32 = arith.constant 0 : i32
    %c0_i32_0 = arith.constant 0 : i32
    %c0_i32_1 = arith.constant 0 : i32
    return %c0_i32, %c0_i32_0 : i32, i32
  }
  func.func @transform_6(%arg0: i32, %arg1: i32) -> (i32, i32, i32) {
    %c3_i32 = arith.constant 3 : i32
    %0 = arith.cmpi eq, %arg0, %c3_i32 : i32
    %c0_i32 = arith.constant 0 : i32
    %1 = arith.select %0, %arg1, %c0_i32 : i32
    %c0_i32_0 = arith.constant 0 : i32
    %c0_i32_1 = arith.constant 0 : i32
    %c0_i32_2 = arith.constant 0 : i32
    return %1, %c0_i32_0, %c0_i32_1 : i32, i32, i32
  }
}

</mosaic_0001>

<llo_original>
// kernel: bottleneck_forward.1
$region0: #{bottleneck_forward.1}
  #allocation0 [shape = 'u32[]', space=smem, size = 0x4, offset = 0x4, fixed_abs, tag = 'smem constant byte address 0x4 - core index']
  #allocation1 [shape = 'u32[72,128]{1,0:T(1,128)}', space=vmem, size = 0x9000, scoped, tag = 'internal scratch']
  #allocation2 [shape = 'f32[2,256,128]{2,1,0:T(8,128)}', space=vmem, size = 0x40000, scoped, tag = 'scratch operand']
  #allocation3 [shape = 'bf16[320,128]{1,0:T(8,128)(2,1)}', space=vmem, size = 0x14000, scoped, tag = 'scratch operand']
  #allocation4 [shape = 'f32[8,128]{1,0:T(8,128)}', space=vmem, size = 0x1000, scoped, tag = 'scratch operand']
  #allocation5 [shape = 'f32[8,128]{1,0:T(8,128)}', space=vmem, size = 0x1000, scoped, tag = 'scratch operand']
  %s0 = inlined_call_operand.vmem [shape: f32[2,256,128], index: 0, kind: input, shape index: {}]
  %s1 = inlined_call_operand.vmem [shape: bf16[128,128], index: 1, kind: input, shape index: {}]
  %s2 = inlined_call_operand.vmem [shape: bf16[4,256,128], index: 2, kind: input, shape index: {}]
  %s3 = inlined_call_operand.vmem [shape: bf16[128,128], index: 3, kind: input, shape index: {}]
  %s4 = inlined_call_operand.vmem [shape: bf16[128,128], index: 4, kind: input, shape index: {}]
  %s5 = inlined_call_operand.vmem [shape: f32[8,128], index: 5, kind: input, shape index: {}]
  %s6 = inlined_call_operand.vmem [shape: f32[2,256,128], index: 6, kind: output, shape index: {}]
  %s7 = sld [smem:[#allocation0]]
  $region89: #{bottleneck_forward.1} parent=0
    _
  %s9 = ssub.s32 1, %s7
  %s10 = scalar_select 0, %s9, %s7
  loop: start=0, step=1, limit=10
  $region2: #{bottleneck_forward.1} parent=0 // loop_pre_header
    _
  $region3: #{bottleneck_forward.1} parent=0 // loop_header
    %s12 = sphi 0, %s16
    %p13 = scmp.ge.s32.totalorder %s12, 10
    %s19 = sphi 0, %s31
    %s20 = sphi 0, %s27
    %s21 = sphi 0, %s19
    %s22 = sphi 0, %s20
    %s23 = sphi 0, %s21
    %s24 = sphi 0, %s22
    %s42 = sphi 0, %s44
    %s45 = sphi 0, %s42
    %s46 = sphi 0, %s45
    %s62 = sphi 0, %s46
    %s66 = sphi 0, %s66
    %s68 = sphi 0, %s66
    %s69 = sphi 0, %s68
    %s83 = sphi 0, %s69
    %s87 = sphi 0, %s87
    %s89 = sphi 0, %s87
    %s90 = sphi 0, %s89
    %s104 = sphi 0, %s90
    %s108 = sphi 0, %s108
    %s110 = sphi 0, %s108
    %s111 = sphi 0, %s110
    %s125 = sphi 0, %s111
    %s129 = sphi 0, %s129
    %s131 = sphi 0, %s129
    %s132 = sphi 0, %s131
    %s146 = sphi 0, %s132
    %s150 = sphi 0, %s150
    %s152 = sphi 0, %s150
    %s153 = sphi 0, %s152
    %s167 = sphi 0, %s153
    %s177 = sphi 0, %s179
    %s180 = sphi 0, %s177
    %s181 = sphi 0, %s180
    %s197 = sphi 0, %s181
  $region4: #{bottleneck_forward.1} parent=0 // loop_header_branch
    %15 = sbr.rel (%p13) target = $region8
  $region5: #{bottleneck_forward.1} parent=0 // loop_body
    %s17 = ssub.s32 %s12, 1
    %s18 = ssub.s32 %s12, 2
    %s25 = sadd.s32 1, %s20
    %p26 = scmp.ge.s32.totalorder %s25, 2
    %s27 = scalar_select %p26, 0, %s25
    %s28 = sadd.s32 1, %s19
    %s29 = scalar_select %p26, %s28, %s19
    %p30 = scmp.ge.s32.totalorder %s29, 4
    %s31 = scalar_select %p30, 0, %s29
    %p32 = scmp.eq.s32.totalorder %s19, 0
    %p33 = scmp.eq.s32.totalorder %s19, 3
    %p34 = por %p32, %p33
    %s35 = scalar_select %p34, %s20, 0
    %p36 = scmp.eq.s32.totalorder %s31, 0
    %p37 = scmp.eq.s32.totalorder %s31, 3
    %p38 = por %p36, %p37
    %s39 = scalar_select %p38, %s27, 0
    %s40 = ssub.s32 %s35, %s39
    %p41 = scmp.eq.s32.totalorder %s40, 0
    %s43 = sadd.s32 %s42, 1
    %s44 = scalar_select %p41, %s42, %s43
    %p47 = pneg %p41
    %p48 = scmp.eq.s32.totalorder %s12, 7
    %p49 = por %p47, %p48
    %p50 = scmp.ne.s32.totalorder %s42, %s45
    %p51 = scmp.eq.s32.totalorder %s12, 0
    %p52 = por %p50, %p51
    %p53 = scmp.ne.s32.totalorder %s42, %s45
    %p54 = scmp.eq.s32.totalorder %s17, 7
    %p55 = por %p53, %p54
    %p56 = scmp.ne.s32.totalorder %s45, %s46
    %p57 = scmp.eq.s32.totalorder %s17, 0
    %p58 = por %p56, %p57
    %p59 = scmp.ne.s32.totalorder %s45, %s46
    %p60 = scmp.eq.s32.totalorder %s18, 7
    %p61 = por %p59, %p60
    %p63 = scmp.ne.s32.totalorder %s46, %s62
    %p64 = scmp.eq.s32.totalorder %s18, 0
    %p65 = por %p63, %p64
    %s67 = sadd.s32 %s66, 1
    %p70 = scmp.eq.s32.totalorder %s12, 7
    %p71 = scmp.ne.s32.totalorder %s66, %s68
    %p72 = scmp.eq.s32.totalorder %s12, 0
    %p73 = por %p71, %p72
    %p74 = scmp.ne.s32.totalorder %s66, %s68
    %p75 = scmp.eq.s32.totalorder %s17, 7
    %p76 = por %p74, %p75
    %p77 = scmp.ne.s32.totalorder %s68, %s69
    %p78 = scmp.eq.s32.totalorder %s17, 0
    %p79 = por %p77, %p78
    %p80 = scmp.ne.s32.totalorder %s68, %s69
    %p81 = scmp.eq.s32.totalorder %s18, 7
    %p82 = por %p80, %p81
    %p84 = scmp.ne.s32.totalorder %s69, %s83
    %p85 = scmp.eq.s32.totalorder %s18, 0
    %p86 = por %p84, %p85
    %s88 = sadd.s32 %s87, 1
    %p91 = scmp.eq.s32.totalorder %s12, 7
    %p92 = scmp.ne.s32.totalorder %s87, %s89
    %p93 = scmp.eq.s32.totalorder %s12, 0
    %p94 = por %p92, %p93
    %p95 = scmp.ne.s32.totalorder %s87, %s89
    %p96 = scmp.eq.s32.totalorder %s17, 7
    %p97 = por %p95, %p96
    %p98 = scmp.ne.s32.totalorder %s89, %s90
    %p99 = scmp.eq.s32.totalorder %s17, 0
    %p100 = por %p98, %p99
    %p101 = scmp.ne.s32.totalorder %s89, %s90
    %p102 = scmp.eq.s32.totalorder %s18, 7
    %p103 = por %p101, %p102
    %p105 = scmp.ne.s32.totalorder %s90, %s104
    %p106 = scmp.eq.s32.totalorder %s18, 0
    %p107 = por %p105, %p106
    %s109 = sadd.s32 %s108, 1
    %p112 = scmp.eq.s32.totalorder %s12, 7
    %p113 = scmp.ne.s32.totalorder %s108, %s110
    %p114 = scmp.eq.s32.totalorder %s12, 0
    %p115 = por %p113, %p114
    %p116 = scmp.ne.s32.totalorder %s108, %s110
    %p117 = scmp.eq.s32.totalorder %s17, 7
    %p118 = por %p116, %p117
    %p119 = scmp.ne.s32.totalorder %s110, %s111
    %p120 = scmp.eq.s32.totalorder %s17, 0
    %p121 = por %p119, %p120
    %p122 = scmp.ne.s32.totalorder %s110, %s111
    %p123 = scmp.eq.s32.totalorder %s18, 7
    %p124 = por %p122, %p123
    %p126 = scmp.ne.s32.totalorder %s111, %s125
    %p127 = scmp.eq.s32.totalorder %s18, 0
    %p128 = por %p126, %p127
    %s130 = sadd.s32 %s129, 1
    %p133 = scmp.eq.s32.totalorder %s12, 7
    %p134 = scmp.ne.s32.totalorder %s129, %s131
    %p135 = scmp.eq.s32.totalorder %s12, 0
    %p136 = por %p134, %p135
    %p137 = scmp.ne.s32.totalorder %s129, %s131
    %p138 = scmp.eq.s32.totalorder %s17, 7
    %p139 = por %p137, %p138
    %p140 = scmp.ne.s32.totalorder %s131, %s132
    %p141 = scmp.eq.s32.totalorder %s17, 0
    %p142 = por %p140, %p141
    %p143 = scmp.ne.s32.totalorder %s131, %s132
    %p144 = scmp.eq.s32.totalorder %s18, 7
    %p145 = por %p143, %p144
    %p147 = scmp.ne.s32.totalorder %s132, %s146
    %p148 = scmp.eq.s32.totalorder %s18, 0
    %p149 = por %p147, %p148
    %s151 = sadd.s32 %s150, 1
    %p154 = scmp.eq.s32.totalorder %s12, 7
    %p155 = scmp.ne.s32.totalorder %s150, %s152
    %p156 = scmp.eq.s32.totalorder %s12, 0
    %p157 = por %p155, %p156
    %p158 = scmp.ne.s32.totalorder %s150, %s152
    %p159 = scmp.eq.s32.totalorder %s17, 7
    %p160 = por %p158, %p159
    %p161 = scmp.ne.s32.totalorder %s152, %s153
    %p162 = scmp.eq.s32.totalorder %s17, 0
    %p163 = por %p161, %p162
    %p164 = scmp.ne.s32.totalorder %s152, %s153
    %p165 = scmp.eq.s32.totalorder %s18, 7
    %p166 = por %p164, %p165
    %p168 = scmp.ne.s32.totalorder %s153, %s167
    %p169 = scmp.eq.s32.totalorder %s18, 0
    %p170 = por %p168, %p169
    %p171 = scmp.eq.s32.totalorder %s19, 3
    %s172 = scalar_select %p171, %s20, 0
    %p173 = scmp.eq.s32.totalorder %s31, 3
    %s174 = scalar_select %p173, %s27, 0
    %s175 = ssub.s32 %s172, %s174
    %p176 = scmp.eq.s32.totalorder %s175, 0
    %s178 = sadd.s32 %s177, 1
    %s179 = scalar_select %p176, %s177, %s178
    %p182 = pneg %p176
    %p183 = scmp.eq.s32.totalorder %s12, 7
    %p184 = por %p182, %p183
    %p185 = scmp.ne.s32.totalorder %s177, %s180
    %p186 = scmp.eq.s32.totalorder %s12, 0
    %p187 = por %p185, %p186
    %p188 = scmp.ne.s32.totalorder %s177, %s180
    %p189 = scmp.eq.s32.totalorder %s17, 7
    %p190 = por %p188, %p189
    %p191 = scmp.ne.s32.totalorder %s180, %s181
    %p192 = scmp.eq.s32.totalorder %s17, 0
    %p193 = por %p191, %p192
    %p194 = scmp.ne.s32.totalorder %s180, %s181
    %p195 = scmp.eq.s32.totalorder %s18, 7
    %p196 = por %p194, %p195
    %p198 = scmp.ne.s32.totalorder %s181, %s197
    %p199 = scmp.eq.s32.totalorder %s18, 0
    %p200 = por %p198, %p199
    %p201 = scmp.le.s32.totalorder 1, %s12
    %p202 = scmp.lt.s32.totalorder %s12, 9
    %p203 = pnand %p201, %p202
    %p204 = pneg %p203
    // Predicated region
    $region9: #{bottleneck_forward.1} parent=5 // pred_check
      _
    $region10: #{bottleneck_forward.1} parent=5 // pred_check_branch
      %206 = sbr.rel (%p203) target = $region12
    $region11: #{bottleneck_forward.1} parent=5 // pred_region
      %s207 = ssub.s32 %s12, 1
      // Predicated region
      $region13: #{bottleneck_forward.1} parent=11 // pred_check
        %p208 = pneg %p79
      $region14: #{bottleneck_forward.1} parent=11 // pred_check_branch
        %210 = sbr.rel (%p208) target = $region16
      $region15: #{bottleneck_forward.1} parent=11 // pred_region
        _
      $region16: #{bottleneck_forward.1} parent=11 // pred_fallthru
        _
      // Predicated region
      $region17: #{bottleneck_forward.1} parent=11 // pred_check
        %p211 = pneg %p100
      $region18: #{bottleneck_forward.1} parent=11 // pred_check_branch
        %213 = sbr.rel (%p211) target = $region20
      $region19: #{bottleneck_forward.1} parent=11 // pred_region
        _
      $region20: #{bottleneck_forward.1} parent=11 // pred_fallthru
        _
      // Predicated region
      $region21: #{bottleneck_forward.1} parent=11 // pred_check
        %p214 = pneg %p121
      $region22: #{bottleneck_forward.1} parent=11 // pred_check_branch
        %216 = sbr.rel (%p214) target = $region24
      $region23: #{bottleneck_forward.1} parent=11 // pred_region
        _
      $region24: #{bottleneck_forward.1} parent=11 // pred_fallthru
        _
      // Predicated region
      $region25: #{bottleneck_forward.1} parent=11 // pred_check
        %p217 = pneg %p142
      $region26: #{bottleneck_forward.1} parent=11 // pred_check_branch
        %219 = sbr.rel (%p217) target = $region28
      $region27: #{bottleneck_forward.1} parent=11 // pred_region
        _
      $region28: #{bottleneck_forward.1} parent=11 // pred_fallthru
        _
      // Predicated region
      $region29: #{bottleneck_forward.1} parent=11 // pred_check
        %p220 = pneg %p163
      $region30: #{bottleneck_forward.1} parent=11 // pred_check_branch
        %222 = sbr.rel (%p220) target = $region32
      $region31: #{bottleneck_forward.1} parent=11 // pred_region
        _
      $region32: #{bottleneck_forward.1} parent=11 // pred_fallthru
        _
    $region12: #{bottleneck_forward.1} parent=5 // pred_fallthru
      _
    %p223 = scmp.lt.s32.totalorder %s12, 8
    // Predicated region
    $region33: #{bottleneck_forward.1} parent=5 // pred_check
      %p224 = pneg %p223
    $region34: #{bottleneck_forward.1} parent=5 // pred_check_branch
      %226 = sbr.rel (%p224) target = $region36
    $region35: #{bottleneck_forward.1} parent=5 // pred_region
      // Predicated region
      $region37: #{bottleneck_forward.1} parent=35 // pred_check
        %p227 = pneg %p52
      $region38: #{bottleneck_forward.1} parent=35 // pred_check_branch
        %229 = sbr.rel (%p227) target = $region40
      $region39: #{bottleneck_forward.1} parent=35 // pred_region
        %p230 = scmp.eq.s32.totalorder %s19, 0
        %p231 = scmp.eq.s32.totalorder %s19, 3
        %p232 = por %p230, %p231
        %s233 = scalar_select %p232, %s20, 0
        %p234 = scmp.lt.s32.totalorder %s233, 1
        %s235 = scalar_select %p234, %s233, 1
        %s236 = smul.addr %s235, 32
        %s237 = smul.addr %s236, 8
        %s238 = scalar_lea.vmem %s0, %s237
        %p239 = scmp.eq.s32.totalorder %s19, 0
        %p240 = scmp.eq.s32.totalorder %s19, 3
        %p241 = por %p239, %p240
        %s242 = scalar_select %p241, %s20, 0
      $region40: #{bottleneck_forward.1} parent=35 // pred_fallthru
        _
    $region36: #{bottleneck_forward.1} parent=5 // pred_fallthru
      _
    %p243 = scmp.le.s32.totalorder 1, %s12
    %p244 = scmp.lt.s32.totalorder %s12, 9
    %p245 = pnand %p243, %p244
    %p246 = pneg %p245
    // Predicated region
    $region41: #{bottleneck_forward.1} parent=5 // pred_check
      _
    $region42: #{bottleneck_forward.1} parent=5 // pred_check_branch
      %248 = sbr.rel (%p245) target = $region44
    $region43: #{bottleneck_forward.1} parent=5 // pred_region
      %s249 = ssub.s32 %s12, 1
      %p250 = scmp.eq.s32.totalorder %s21, 0
      %p251 = scmp.eq.s32.totalorder %s21, 3
      %p252 = por %p250, %p251
      %s253 = scalar_select %p252, %s22, 0
      %p254 = scmp.lt.s32.totalorder %s253, 1
      %s255 = scalar_select %p254, %s253, 1
      %s256 = smul.addr %s255, 32
      %s257 = smul.addr %s256, 8
      %s258 = scalar_lea.vmem %s0, %s257
      %p259 = pneg %p58
      %p260 = pneg %p55
      %p261 = pneg %p79
      %p262 = pneg %p76
      %p263 = pneg %p100
      %p264 = pneg %p97
      %p265 = pneg %p121
      %p266 = pneg %p118
      %p267 = pneg %p142
      %p268 = pneg %p139
      %p269 = pneg %p163
      %p270 = pneg %p160
      %p271 = pneg %p193
      %p272 = pneg %p190
      %p273 = scmp.eq.s32.totalorder %s21, 3
      %s274 = scalar_select %p273, %s22, 0
      %p275 = scmp.lt.s32.totalorder %s274, 1
      %s276 = scalar_select %p275, %s274, 1
      %s277 = smul.addr %s276, 32
      %s278 = smul.addr %s277, 8
      %s279 = scalar_lea.vmem %s6, %s278
      %p280 = scmp.eq.s32.totalorder %s21, 0
      %p281 = scmp.eq.s32.totalorder %s21, 3
      %p282 = por %p280, %p281
      %s283 = scalar_select %p282, %s22, 0
      %p284 = scmp.lt.s32.totalorder %s283, 1
      %s285 = scalar_select %p284, %s283, 1
      %s286 = smul.addr %s285, 32
      %s287 = smul.addr %s286, 8
      %s288 = scalar_lea.vmem %s0, %s287
      %p289 = scmp.eq.s32.totalorder %s21, 0
      %p290 = scmp.eq.s32.totalorder %s21, 3
      %p291 = por %p289, %p290
      %s292 = scalar_select %p291, %s22, 0
      %p293 = scmp.eq.s32.totalorder %s21, 3
      %s294 = scalar_select %p293, %s22, 0
      %p295 = scmp.lt.s32.totalorder %s294, 1
      %s296 = scalar_select %p295, %s294, 1
      %s297 = smul.addr %s296, 32
      %s298 = smul.addr %s297, 8
      %s299 = scalar_lea.vmem %s6, %s298
      %p300 = scmp.eq.s32.totalorder %s21, 3
      %s301 = scalar_select %p300, %s22, 0
      %p305 = scmp.eq.s32.totalorder %s21, 0
      %p306 = scmp.eq.s32.totalorder %s22, 0
      %p307 = pnand %p305, %p306
      %p308 = pneg %p307
      // Predicated region
      $region45: #{bottleneck_forward.1} parent=43 // pred_check
        _
      $region46: #{bottleneck_forward.1} parent=43 // pred_check_branch
        %310 = sbr.rel (%p307) target = $region48
      $region47: #{bottleneck_forward.1} parent=43 // pred_region
        %311 = vst [vmem:[#allocation4] sm:$0xff] 0.0
        %312 = vst [vmem:[#allocation3] sm:$0xf] 0
        %313 = vst [vmem:[#allocation3 + $0x4] sm:$0xf] 0
        %314 = vst [vmem:[#allocation3 + $0x8] sm:$0xf] 0
        %315 = vst [vmem:[#allocation3 + $0xc] sm:$0xf] 0
        %316 = vst [vmem:[#allocation3 + $0x10] sm:$0xf] 0
        %317 = vst [vmem:[#allocation3 + $0x14] sm:$0xf] 0
        %318 = vst [vmem:[#allocation3 + $0x18] sm:$0xf] 0
        %319 = vst [vmem:[#allocation3 + $0x1c] sm:$0xf] 0
        %320 = vst [vmem:[#allocation3 + $0x20] sm:$0xf] 0
        %321 = vst [vmem:[#allocation3 + $0x24] sm:$0xf] 0
        %322 = vst [vmem:[#allocation3 + $0x28] sm:$0xf] 0
        %323 = vst [vmem:[#allocation3 + $0x2c] sm:$0xf] 0
        %324 = vst [vmem:[#allocation3 + $0x30] sm:$0xf] 0
        %325 = vst [vmem:[#allocation3 + $0x34] sm:$0xf] 0
        %326 = vst [vmem:[#allocation3 + $0x38] sm:$0xf] 0
        %327 = vst [vmem:[#allocation3 + $0x3c] sm:$0xf] 0
        %328 = vst [vmem:[#allocation3 + $0x40] sm:$0xf] 0
        %329 = vst [vmem:[#allocation3 + $0x44] sm:$0xf] 0
        %330 = vst [vmem:[#allocation3 + $0x48] sm:$0xf] 0
        %331 = vst [vmem:[#allocation3 + $0x4c] sm:$0xf] 0
        %332 = vst [vmem:[#allocation3 + $0x50] sm:$0xf] 0
        %333 = vst [vmem:[#allocation3 + $0x54] sm:$0xf] 0
        %334 = vst [vmem:[#allocation3 + $0x58] sm:$0xf] 0
        %335 = vst [vmem:[#allocation3 + $0x5c] sm:$0xf] 0
        %336 = vst [vmem:[#allocation3 + $0x60] sm:$0xf] 0
        %337 = vst [vmem:[#allocation3 + $0x64] sm:$0xf] 0
        %338 = vst [vmem:[#allocation3 + $0x68] sm:$0xf] 0
        %339 = vst [vmem:[#allocation3 + $0x6c] sm:$0xf] 0
        %340 = vst [vmem:[#allocation3 + $0x70] sm:$0xf] 0
        %341 = vst [vmem:[#allocation3 + $0x74] sm:$0xf] 0
        %342 = vst [vmem:[#allocation3 + $0x78] sm:$0xf] 0
        %343 = vst [vmem:[#allocation3 + $0x7c] sm:$0xf] 0
        %344 = vst [vmem:[#allocation3 + $0x80] sm:$0xf] 0
        %345 = vst [vmem:[#allocation3 + $0x84] sm:$0xf] 0
        %346 = vst [vmem:[#allocation3 + $0x88] sm:$0xf] 0
        %347 = vst [vmem:[#allocation3 + $0x8c] sm:$0xf] 0
        %348 = vst [vmem:[#allocation3 + $0x90] sm:$0xf] 0
        %349 = vst [vmem:[#allocation3 + $0x94] sm:$0xf] 0
        %350 = vst [vmem:[#allocation3 + $0x98] sm:$0xf] 0
        %351 = vst [vmem:[#allocation3 + $0x9c] sm:$0xf] 0
      $region48: #{bottleneck_forward.1} parent=43 // pred_fallthru
        _
      // Predicated region
      $region49: #{bottleneck_forward.1} parent=43 // pred_check
        %p352 = pneg %p305
      $region50: #{bottleneck_forward.1} parent=43 // pred_check_branch
        %354 = sbr.rel (%p352) target = $region52
      $region51: #{bottleneck_forward.1} parent=43 // pred_region
        %v355 = vld [vmem:[%s288] sm:$0xff]
        %v356 = vld [vmem:[%s288 + $0x8] sm:$0xff]
        %v357 = vld [vmem:[%s288 + $0x10] sm:$0xff]
        %v358 = vld [vmem:[%s288 + $0x18] sm:$0xff]
        %v359 = vld [vmem:[%s288 + $0x20] sm:$0xff]
        %v360 = vld [vmem:[%s288 + $0x28] sm:$0xff]
        %v361 = vld [vmem:[%s288 + $0x30] sm:$0xff]
        %v362 = vld [vmem:[%s288 + $0x38] sm:$0xff]
        %v363 = vld [vmem:[%s288 + $0x40] sm:$0xff]
        %v364 = vld [vmem:[%s288 + $0x48] sm:$0xff]
        %v365 = vld [vmem:[%s288 + $0x50] sm:$0xff]
        %v366 = vld [vmem:[%s288 + $0x58] sm:$0xff]
        %v367 = vld [vmem:[%s288 + $0x60] sm:$0xff]
        %v368 = vld [vmem:[%s288 + $0x68] sm:$0xff]
        %v369 = vld [vmem:[%s288 + $0x70] sm:$0xff]
        %v370 = vld [vmem:[%s288 + $0x78] sm:$0xff]
        %v371 = vpack.c.bf16 %v356, %v355
        %v372 = vpack.c.bf16 %v358, %v357
        %v373 = vpack.c.bf16 %v360, %v359
        %v374 = vpack.c.bf16 %v362, %v361
        %v375 = vpack.c.bf16 %v364, %v363
        %v376 = vpack.c.bf16 %v366, %v365
        %v377 = vpack.c.bf16 %v368, %v367
        %v378 = vpack.c.bf16 %v370, %v369
        %v379 = vld [vmem:[%s1] sm:$0xf]
        %v380 = vld [vmem:[%s1 + $0x4] sm:$0xf]
        %v381 = vld [vmem:[%s1 + $0x8] sm:$0xf]
        %v382 = vld [vmem:[%s1 + $0xc] sm:$0xf]
        %v383 = vld [vmem:[%s1 + $0x10] sm:$0xf]
        %v384 = vld [vmem:[%s1 + $0x14] sm:$0xf]
        %v385 = vld [vmem:[%s1 + $0x18] sm:$0xf]
        %v386 = vld [vmem:[%s1 + $0x1c] sm:$0xf]
        %v387 = vld [vmem:[%s1 + $0x20] sm:$0xf]
        %v388 = vld [vmem:[%s1 + $0x24] sm:$0xf]
        %v389 = vld [vmem:[%s1 + $0x28] sm:$0xf]
        %v390 = vld [vmem:[%s1 + $0x2c] sm:$0xf]
        %v391 = vld [vmem:[%s1 + $0x30] sm:$0xf]
        %v392 = vld [vmem:[%s1 + $0x34] sm:$0xf]
        %v393 = vld [vmem:[%s1 + $0x38] sm:$0xf]
        %v394 = vld [vmem:[%s1 + $0x3c] sm:$0xf]
        %v411 = vunpack.c.l.b16 %v379
        %v412 = vunpack.c.l.b16 %v380
        %v413 = vunpack.c.l.b16 %v381
        %v414 = vunpack.c.l.b16 %v382
        %v415 = vunpack.c.l.b16 %v383
        %v416 = vunpack.c.l.b16 %v384
        %v417 = vunpack.c.l.b16 %v385
        %v418 = vunpack.c.l.b16 %v386
        %v419 = vunpack.c.l.b16 %v387
        %v420 = vunpack.c.l.b16 %v388
        %v421 = vunpack.c.l.b16 %v389
        %v422 = vunpack.c.l.b16 %v390
        %v423 = vunpack.c.l.b16 %v391
        %v424 = vunpack.c.l.b16 %v392
        %v425 = vunpack.c.l.b16 %v393
        %v426 = vunpack.c.l.b16 %v394
        %v427 = vpack.c.b16 %v412, %v411
        %v428 = vpack.c.b16 %v414, %v413
        %v429 = vpack.c.b16 %v416, %v415
        %v430 = vpack.c.b16 %v418, %v417
        %v431 = vpack.c.b16 %v420, %v419
        %v432 = vpack.c.b16 %v422, %v421
        %v433 = vpack.c.b16 %v424, %v423
        %v434 = vpack.c.b16 %v426, %v425
        %443 = vmatpush.bf16.msra.mxu0 %v434
        %444 = vmatpush.bf16.msra.mxu0 %v433
        %445 = vmatpush.bf16.msra.mxu0 %v432
        %446 = vmatpush.bf16.msra.mxu0 %v431
        %447 = vmatpush.bf16.msra.mxu0 %v430
        %448 = vmatpush.bf16.msra.mxu0 %v429
        %449 = vmatpush.bf16.msra.mxu0 %v428
        %450 = vmatpush.bf16.msra.mxu0 %v427
        %451 = vmatmul.bf16.gmra.mxu0 %v371
        %v452 = vpop.f32.mrf.mxu0
        %v453 = vadd.f32 0.0, %v452
        %v454 = vpop.f32.mrf.mxu0
        %v455 = vadd.f32 0.0, %v454
        %456 = vmatmul.bf16.gmra.mxu0 %v372
        %v457 = vpop.f32.mrf.mxu0
        %v458 = vadd.f32 0.0, %v457
        %v459 = vpop.f32.mrf.mxu0
        %v460 = vadd.f32 0.0, %v459
        %461 = vmatmul.bf16.gmra.mxu0 %v373
        %v462 = vpop.f32.mrf.mxu0
        %v463 = vadd.f32 0.0, %v462
        %v464 = vpop.f32.mrf.mxu0
        %v465 = vadd.f32 0.0, %v464
        %466 = vmatmul.bf16.gmra.mxu0 %v374
        %v467 = vpop.f32.mrf.mxu0
        %v468 = vadd.f32 0.0, %v467
        %v469 = vpop.f32.mrf.mxu0
        %v470 = vadd.f32 0.0, %v469
        %471 = vmatmul.bf16.gmra.mxu0 %v375
        %v472 = vpop.f32.mrf.mxu0
        %v473 = vadd.f32 0.0, %v472
        %v474 = vpop.f32.mrf.mxu0
        %v475 = vadd.f32 0.0, %v474
        %476 = vmatmul.bf16.gmra.mxu0 %v376
        %v477 = vpop.f32.mrf.mxu0
        %v478 = vadd.f32 0.0, %v477
        %v479 = vpop.f32.mrf.mxu0
        %v480 = vadd.f32 0.0, %v479
        %481 = vmatmul.bf16.gmra.mxu0 %v377
        %v482 = vpop.f32.mrf.mxu0
        %v483 = vadd.f32 0.0, %v482
        %v484 = vpop.f32.mrf.mxu0
        %v485 = vadd.f32 0.0, %v484
        %486 = vmatmul.bf16.gmra.mxu0 %v378
        %v487 = vpop.f32.mrf.mxu0
        %v488 = vadd.f32 0.0, %v487
        %v489 = vpop.f32.mrf.mxu0
        %v490 = vadd.f32 0.0, %v489
        %491 = vdwg.mxu0
        %v492 = vld [vmem:[#allocation4] sm:$0x1]
        %v493 = vadd.f32 %v453, %v455
        %v494 = vadd.f32 %v493, %v458
        %v495 = vadd.f32 %v494, %v460
        %v496 = vadd.f32 %v495, %v463
        %v497 = vadd.f32 %v496, %v465
        %v498 = vadd.f32 %v497, %v468
        %v499 = vadd.f32 %v498, %v470
        %v500 = vadd.f32 %v499, %v473
        %v501 = vadd.f32 %v500, %v475
        %v502 = vadd.f32 %v501, %v478
        %v503 = vadd.f32 %v502, %v480
        %v504 = vadd.f32 %v503, %v483
        %v505 = vadd.f32 %v504, %v485
        %v506 = vadd.f32 %v505, %v488
        %v507 = vadd.f32 %v506, %v490
        %v508 = vrot.slane %v507, 4
        %v509 = vadd.f32 %v507, %v508
        %v510 = vrot.slane %v509, 2
        %v511 = vadd.f32 %v509, %v510
        %v512 = vrot.slane %v511, 1
        %v513 = vadd.f32 %v511, %v512
        %v514 = vadd.f32 %v492, %v513
        %515 = vst [vmem:[#allocation4] sm:$0x1] %v514
        %v516 = vld [vmem:[#allocation4 + $0x1] sm:$0x1]
        %v517 = vmul.f32 %v453, %v453
        %v518 = vmul.f32 %v455, %v455
        %v519 = vmul.f32 %v458, %v458
        %v520 = vmul.f32 %v460, %v460
        %v521 = vmul.f32 %v463, %v463
        %v522 = vmul.f32 %v465, %v465
        %v523 = vmul.f32 %v468, %v468
        %v524 = vmul.f32 %v470, %v470
        %v525 = vmul.f32 %v473, %v473
        %v526 = vmul.f32 %v475, %v475
        %v527 = vmul.f32 %v478, %v478
        %v528 = vmul.f32 %v480, %v480
        %v529 = vmul.f32 %v483, %v483
        %v530 = vmul.f32 %v485, %v485
        %v531 = vmul.f32 %v488, %v488
        %v532 = vmul.f32 %v490, %v490
        %v533 = vadd.f32 %v517, %v518
        %v534 = vadd.f32 %v533, %v519
        %v535 = vadd.f32 %v534, %v520
        %v536 = vadd.f32 %v535, %v521
        %v537 = vadd.f32 %v536, %v522
        %v538 = vadd.f32 %v537, %v523
        %v539 = vadd.f32 %v538, %v524
        %v540 = vadd.f32 %v539, %v525
        %v541 = vadd.f32 %v540, %v526
        %v542 = vadd.f32 %v541, %v527
        %v543 = vadd.f32 %v542, %v528
        %v544 = vadd.f32 %v543, %v529
        %v545 = vadd.f32 %v544, %v530
        %v546 = vadd.f32 %v545, %v531
        %v547 = vadd.f32 %v546, %v532
        %v548 = vrot.slane %v547, 4
        %v549 = vadd.f32 %v547, %v548
        %v550 = vrot.slane %v549, 2
        %v551 = vadd.f32 %v549, %v550
        %v552 = vrot.slane %v551, 1
        %v553 = vadd.f32 %v551, %v552
        %v554 = vadd.f32 %v516, %v553
        %555 = vst [vmem:[#allocation4 + $0x1] sm:$0x1] %v554
        %s556 = smul.u32 %s22, 256
        %s557 = scalar_lea.vmem [#allocation2], %s556
        %558 = vst [vmem:[%s557] sm:$0xff] %v453
        %559 = vst [vmem:[%s557 + $0x8] sm:$0xff] %v455
        %560 = vst [vmem:[%s557 + $0x10] sm:$0xff] %v458
        %561 = vst [vmem:[%s557 + $0x18] sm:$0xff] %v460
        %562 = vst [vmem:[%s557 + $0x20] sm:$0xff] %v463
        %563 = vst [vmem:[%s557 + $0x28] sm:$0xff] %v465
        %564 = vst [vmem:[%s557 + $0x30] sm:$0xff] %v468
        %565 = vst [vmem:[%s557 + $0x38] sm:$0xff] %v470
        %566 = vst [vmem:[%s557 + $0x40] sm:$0xff] %v473
        %567 = vst [vmem:[%s557 + $0x48] sm:$0xff] %v475
        %568 = vst [vmem:[%s557 + $0x50] sm:$0xff] %v478
        %569 = vst [vmem:[%s557 + $0x58] sm:$0xff] %v480
        %570 = vst [vmem:[%s557 + $0x60] sm:$0xff] %v483
        %571 = vst [vmem:[%s557 + $0x68] sm:$0xff] %v485
        %572 = vst [vmem:[%s557 + $0x70] sm:$0xff] %v488
        %573 = vst [vmem:[%s557 + $0x78] sm:$0xff] %v490
        %v574 = vld [vmem:[%s288 + $0x80] sm:$0xff]
        %v575 = vld [vmem:[%s288 + $0x88] sm:$0xff]
        %v576 = vld [vmem:[%s288 + $0x90] sm:$0xff]
        %v577 = vld [vmem:[%s288 + $0x98] sm:$0xff]
        %v578 = vld [vmem:[%s288 + $0xa0] sm:$0xff]
        %v579 = vld [vmem:[%s288 + $0xa8] sm:$0xff]
        %v580 = vld [vmem:[%s288 + $0xb0] sm:$0xff]
        %v581 = vld [vmem:[%s288 + $0xb8] sm:$0xff]
        %v582 = vld [vmem:[%s288 + $0xc0] sm:$0xff]
        %v583 = vld [vmem:[%s288 + $0xc8] sm:$0xff]
        %v584 = vld [vmem:[%s288 + $0xd0] sm:$0xff]
        %v585 = vld [vmem:[%s288 + $0xd8] sm:$0xff]
        %v586 = vld [vmem:[%s288 + $0xe0] sm:$0xff]
        %v587 = vld [vmem:[%s288 + $0xe8] sm:$0xff]
        %v588 = vld [vmem:[%s288 + $0xf0] sm:$0xff]
        %v589 = vld [vmem:[%s288 + $0xf8] sm:$0xff]
        %v590 = vpack.c.bf16 %v575, %v574
        %v591 = vpack.c.bf16 %v577, %v576
        %v592 = vpack.c.bf16 %v579, %v578
        %v593 = vpack.c.bf16 %v581, %v580
        %v594 = vpack.c.bf16 %v583, %v582
        %v595 = vpack.c.bf16 %v585, %v584
        %v596 = vpack.c.bf16 %v587, %v586
        %v597 = vpack.c.bf16 %v589, %v588
        %v598 = vld [vmem:[%s1] sm:$0xf]
        %v599 = vld [vmem:[%s1 + $0x4] sm:$0xf]
        %v600 = vld [vmem:[%s1 + $0x8] sm:$0xf]
        %v601 = vld [vmem:[%s1 + $0xc] sm:$0xf]
        %v602 = vld [vmem:[%s1 + $0x10] sm:$0xf]
        %v603 = vld [vmem:[%s1 + $0x14] sm:$0xf]
        %v604 = vld [vmem:[%s1 + $0x18] sm:$0xf]
        %v605 = vld [vmem:[%s1 + $0x1c] sm:$0xf]
        %v606 = vld [vmem:[%s1 + $0x20] sm:$0xf]
        %v607 = vld [vmem:[%s1 + $0x24] sm:$0xf]
        %v608 = vld [vmem:[%s1 + $0x28] sm:$0xf]
        %v609 = vld [vmem:[%s1 + $0x2c] sm:$0xf]
        %v610 = vld [vmem:[%s1 + $0x30] sm:$0xf]
        %v611 = vld [vmem:[%s1 + $0x34] sm:$0xf]
        %v612 = vld [vmem:[%s1 + $0x38] sm:$0xf]
        %v613 = vld [vmem:[%s1 + $0x3c] sm:$0xf]
        %v630 = vunpack.c.l.b16 %v598
        %v631 = vunpack.c.l.b16 %v599
        %v632 = vunpack.c.l.b16 %v600
        %v633 = vunpack.c.l.b16 %v601
        %v634 = vunpack.c.l.b16 %v602
        %v635 = vunpack.c.l.b16 %v603
        %v636 = vunpack.c.l.b16 %v604
        %v637 = vunpack.c.l.b16 %v605
        %v638 = vunpack.c.l.b16 %v606
        %v639 = vunpack.c.l.b16 %v607
        %v640 = vunpack.c.l.b16 %v608
        %v641 = vunpack.c.l.b16 %v609
        %v642 = vunpack.c.l.b16 %v610
        %v643 = vunpack.c.l.b16 %v611
        %v644 = vunpack.c.l.b16 %v612
        %v645 = vunpack.c.l.b16 %v613
        %v646 = vpack.c.b16 %v631, %v630
        %v647 = vpack.c.b16 %v633, %v632
        %v648 = vpack.c.b16 %v635, %v634
        %v649 = vpack.c.b16 %v637, %v636
        %v650 = vpack.c.b16 %v639, %v638
        %v651 = vpack.c.b16 %v641, %v640
        %v652 = vpack.c.b16 %v643, %v642
        %v653 = vpack.c.b16 %v645, %v644
        %662 = vmatpush.bf16.msra.mxu0 %v653
        %663 = vmatpush.bf16.msra.mxu0 %v652
        %664 = vmatpush.bf16.msra.mxu0 %v651
        %665 = vmatpush.bf16.msra.mxu0 %v650
        %666 = vmatpush.bf16.msra.mxu0 %v649
        %667 = vmatpush.bf16.msra.mxu0 %v648
        %668 = vmatpush.bf16.msra.mxu0 %v647
        %669 = vmatpush.bf16.msra.mxu0 %v646
        %670 = vmatmul.bf16.gmra.mxu0 %v590
        %v671 = vpop.f32.mrf.mxu0
        %v672 = vadd.f32 0.0, %v671
        %v673 = vpop.f32.mrf.mxu0
        %v674 = vadd.f32 0.0, %v673
        %675 = vmatmul.bf16.gmra.mxu0 %v591
        %v676 = vpop.f32.mrf.mxu0
        %v677 = vadd.f32 0.0, %v676
        %v678 = vpop.f32.mrf.mxu0
        %v679 = vadd.f32 0.0, %v678
        %680 = vmatmul.bf16.gmra.mxu0 %v592
        %v681 = vpop.f32.mrf.mxu0
        %v682 = vadd.f32 0.0, %v681
        %v683 = vpop.f32.mrf.mxu0
        %v684 = vadd.f32 0.0, %v683
        %685 = vmatmul.bf16.gmra.mxu0 %v593
        %v686 = vpop.f32.mrf.mxu0
        %v687 = vadd.f32 0.0, %v686
        %v688 = vpop.f32.mrf.mxu0
        %v689 = vadd.f32 0.0, %v688
        %690 = vmatmul.bf16.gmra.mxu0 %v594
        %v691 = vpop.f32.mrf.mxu0
        %v692 = vadd.f32 0.0, %v691
        %v693 = vpop.f32.mrf.mxu0
        %v694 = vadd.f32 0.0, %v693
        %695 = vmatmul.bf16.gmra.mxu0 %v595
        %v696 = vpop.f32.mrf.mxu0
        %v697 = vadd.f32 0.0, %v696
        %v698 = vpop.f32.mrf.mxu0
        %v699 = vadd.f32 0.0, %v698
        %700 = vmatmul.bf16.gmra.mxu0 %v596
        %v701 = vpop.f32.mrf.mxu0
        %v702 = vadd.f32 0.0, %v701
        %v703 = vpop.f32.mrf.mxu0
        %v704 = vadd.f32 0.0, %v703
        %705 = vmatmul.bf16.gmra.mxu0 %v597
        %v706 = vpop.f32.mrf.mxu0
        %v707 = vadd.f32 0.0, %v706
        %v708 = vpop.f32.mrf.mxu0
        %v709 = vadd.f32 0.0, %v708
        %710 = vdwg.mxu0
        %v711 = vld [vmem:[#allocation4] sm:$0x1]
        %v712 = vadd.f32 %v672, %v674
        %v713 = vadd.f32 %v712, %v677
        %v714 = vadd.f32 %v713, %v679
        %v715 = vadd.f32 %v714, %v682
        %v716 = vadd.f32 %v715, %v684
        %v717 = vadd.f32 %v716, %v687
        %v718 = vadd.f32 %v717, %v689
        %v719 = vadd.f32 %v718, %v692
        %v720 = vadd.f32 %v719, %v694
        %v721 = vadd.f32 %v720, %v697
        %v722 = vadd.f32 %v721, %v699
        %v723 = vadd.f32 %v722, %v702
        %v724 = vadd.f32 %v723, %v704
        %v725 = vadd.f32 %v724, %v707
        %v726 = vadd.f32 %v725, %v709
        %v727 = vrot.slane %v726, 4
        %v728 = vadd.f32 %v726, %v727
        %v729 = vrot.slane %v728, 2
        %v730 = vadd.f32 %v728, %v729
        %v731 = vrot.slane %v730, 1
        %v732 = vadd.f32 %v730, %v731
        %v733 = vadd.f32 %v711, %v732
        %734 = vst [vmem:[#allocation4] sm:$0x1] %v733
        %v735 = vld [vmem:[#allocation4 + $0x1] sm:$0x1]
        %v736 = vmul.f32 %v672, %v672
        %v737 = vmul.f32 %v674, %v674
        %v738 = vmul.f32 %v677, %v677
        %v739 = vmul.f32 %v679, %v679
        %v740 = vmul.f32 %v682, %v682
        %v741 = vmul.f32 %v684, %v684
        %v742 = vmul.f32 %v687, %v687
        %v743 = vmul.f32 %v689, %v689
        %v744 = vmul.f32 %v692, %v692
        %v745 = vmul.f32 %v694, %v694
        %v746 = vmul.f32 %v697, %v697
        %v747 = vmul.f32 %v699, %v699
        %v748 = vmul.f32 %v702, %v702
        %v749 = vmul.f32 %v704, %v704
        %v750 = vmul.f32 %v707, %v707
        %v751 = vmul.f32 %v709, %v709
        %v752 = vadd.f32 %v736, %v737
        %v753 = vadd.f32 %v752, %v738
        %v754 = vadd.f32 %v753, %v739
        %v755 = vadd.f32 %v754, %v740
        %v756 = vadd.f32 %v755, %v741
        %v757 = vadd.f32 %v756, %v742
        %v758 = vadd.f32 %v757, %v743
        %v759 = vadd.f32 %v758, %v744
        %v760 = vadd.f32 %v759, %v745
        %v761 = vadd.f32 %v760, %v746
        %v762 = vadd.f32 %v761, %v747
        %v763 = vadd.f32 %v762, %v748
        %v764 = vadd.f32 %v763, %v749
        %v765 = vadd.f32 %v764, %v750
        %v766 = vadd.f32 %v765, %v751
        %v767 = vrot.slane %v766, 4
        %v768 = vadd.f32 %v766, %v767
        %v769 = vrot.slane %v768, 2
        %v770 = vadd.f32 %v768, %v769
        %v771 = vrot.slane %v770, 1
        %v772 = vadd.f32 %v770, %v771
        %v773 = vadd.f32 %v735, %v772
        %774 = vst [vmem:[#allocation4 + $0x1] sm:$0x1] %v773
        %775 = vst [vmem:[%s557 + $0x80] sm:$0xff] %v672
        %776 = vst [vmem:[%s557 + $0x88] sm:$0xff] %v674
        %777 = vst [vmem:[%s557 + $0x90] sm:$0xff] %v677
        %778 = vst [vmem:[%s557 + $0x98] sm:$0xff] %v679
        %779 = vst [vmem:[%s557 + $0xa0] sm:$0xff] %v682
        %780 = vst [vmem:[%s557 + $0xa8] sm:$0xff] %v684
        %781 = vst [vmem:[%s557 + $0xb0] sm:$0xff] %v687
        %782 = vst [vmem:[%s557 + $0xb8] sm:$0xff] %v689
        %783 = vst [vmem:[%s557 + $0xc0] sm:$0xff] %v692
        %784 = vst [vmem:[%s557 + $0xc8] sm:$0xff] %v694
        %785 = vst [vmem:[%s557 + $0xd0] sm:$0xff] %v697
        %786 = vst [vmem:[%s557 + $0xd8] sm:$0xff] %v699
        %787 = vst [vmem:[%s557 + $0xe0] sm:$0xff] %v702
        %788 = vst [vmem:[%s557 + $0xe8] sm:$0xff] %v704
        %789 = vst [vmem:[%s557 + $0xf0] sm:$0xff] %v707
        %790 = vst [vmem:[%s557 + $0xf8] sm:$0xff] %v709
      $region52: #{bottleneck_forward.1} parent=43 // pred_fallthru
        _
      %p791 = scmp.eq.s32.totalorder %s21, 1
      // Predicated region
      $region53: #{bottleneck_forward.1} parent=43 // pred_check
        %p792 = pneg %p791
      $region54: #{bottleneck_forward.1} parent=43 // pred_check_branch
        %794 = sbr.rel (%p792) target = $region56
      $region55: #{bottleneck_forward.1} parent=43 // pred_region
        // Predicated region
        $region57: #{bottleneck_forward.1} parent=55 // pred_check
          %p795 = pneg %p306
        $region58: #{bottleneck_forward.1} parent=55 // pred_check_branch
          %797 = sbr.rel (%p795) target = $region60
        $region59: #{bottleneck_forward.1} parent=55 // pred_region
          %v798 = vld [vmem:[#allocation4] sm:$0x1]
          %v799 = vld [vmem:[#allocation4 + $0x1] sm:$0x1]
          %v800 = vmul.f32 %v798, 0.001953125
          %v801 = vmul.f32 %v799, 0.001953125
          %v802 = vmul.f32 %v800, %v800
          %v803 = vsub.f32 %v801, %v802
          %v804 = vmax.f32 %v803, 0.0
          %v805 = vld [vmem:[%s5] sm:$0x1]
          %v806 = vadd.f32 %v804, 1e-05
          %v807 = vrsqrt.pop %v806
          %v808 = vmul.f32 %v807, %v806
          %v809 = vmul.f32 %v808, %v807
          %v810 = vmul.f32 0.5, %v809
          %v811 = vsub.f32 1.5, %v810
          %v812 = vmul.f32 %v807, %v811
          %vm813 = vweird.f32 %v806
          %vm814 = vweird.f32 %v807
          %vm815 = vmor %vm813, %vm814
          %v816 = vsel %vm815, %v807, %v812
          %v817 = vmul.f32 %v805, %v816
          %818 = vst [vmem:[#allocation5] sm:$0x1] %v817
          %v819 = vld [vmem:[%s5 + $0x1] sm:$0x1]
          %v820 = vmul.f32 %v817, %v800
          %v821 = vsub.f32 %v819, %v820
          %822 = vst [vmem:[#allocation5 + $0x1] sm:$0x1] %v821
        $region60: #{bottleneck_forward.1} parent=55 // pred_fallthru
          _
        %v823 = vld [vmem:[#allocation5] sm:$0x1]
        %v824 = vld [vmem:[#allocation5 + $0x1] sm:$0x1]
        %s825 = smul.u32 %s22, 256
        %s826 = scalar_lea.vmem [#allocation2], %s825
        %v827 = vld [vmem:[%s826] sm:$0xff]
        %v828 = vld [vmem:[%s826 + $0x8] sm:$0xff]
        %v829 = vld [vmem:[%s826 + $0x10] sm:$0xff]
        %v830 = vld [vmem:[%s826 + $0x18] sm:$0xff]
        %v831 = vld [vmem:[%s826 + $0x20] sm:$0xff]
        %v832 = vld [vmem:[%s826 + $0x28] sm:$0xff]
        %v833 = vld [vmem:[%s826 + $0x30] sm:$0xff]
        %v834 = vld [vmem:[%s826 + $0x38] sm:$0xff]
        %v835 = vld [vmem:[%s826 + $0x40] sm:$0xff]
        %v836 = vld [vmem:[%s826 + $0x48] sm:$0xff]
        %v837 = vld [vmem:[%s826 + $0x50] sm:$0xff]
        %v838 = vld [vmem:[%s826 + $0x58] sm:$0xff]
        %v839 = vld [vmem:[%s826 + $0x60] sm:$0xff]
        %v840 = vld [vmem:[%s826 + $0x68] sm:$0xff]
        %v841 = vld [vmem:[%s826 + $0x70] sm:$0xff]
        %v842 = vld [vmem:[%s826 + $0x78] sm:$0xff]
        %v843 = vperm.slane %v823, 0
        %v844 = vmul.f32 %v827, %v843
        %v845 = vmul.f32 %v828, %v843
        %v846 = vmul.f32 %v829, %v843
        %v847 = vmul.f32 %v830, %v843
        %v848 = vmul.f32 %v831, %v843
        %v849 = vmul.f32 %v832, %v843
        %v850 = vmul.f32 %v833, %v843
        %v851 = vmul.f32 %v834, %v843
        %v852 = vmul.f32 %v835, %v843
        %v853 = vmul.f32 %v836, %v843
        %v854 = vmul.f32 %v837, %v843
        %v855 = vmul.f32 %v838, %v843
        %v856 = vmul.f32 %v839, %v843
        %v857 = vmul.f32 %v840, %v843
        %v858 = vmul.f32 %v841, %v843
        %v859 = vmul.f32 %v842, %v843
        %v860 = vperm.slane %v824, 0
        %v861 = vadd.f32 %v844, %v860
        %v862 = vadd.f32 %v845, %v860
        %v863 = vadd.f32 %v846, %v860
        %v864 = vadd.f32 %v847, %v860
        %v865 = vadd.f32 %v848, %v860
        %v866 = vadd.f32 %v849, %v860
        %v867 = vadd.f32 %v850, %v860
        %v868 = vadd.f32 %v851, %v860
        %v869 = vadd.f32 %v852, %v860
        %v870 = vadd.f32 %v853, %v860
        %v871 = vadd.f32 %v854, %v860
        %v872 = vadd.f32 %v855, %v860
        %v873 = vadd.f32 %v856, %v860
        %v874 = vadd.f32 %v857, %v860
        %v875 = vadd.f32 %v858, %v860
        %v876 = vadd.f32 %v859, %v860
        %v877 = vmax.f32 %v861, 0.0
        %v878 = vmax.f32 %v862, 0.0
        %v879 = vmax.f32 %v863, 0.0
        %v880 = vmax.f32 %v864, 0.0
        %v881 = vmax.f32 %v865, 0.0
        %v882 = vmax.f32 %v866, 0.0
        %v883 = vmax.f32 %v867, 0.0
        %v884 = vmax.f32 %v868, 0.0
        %v885 = vmax.f32 %v869, 0.0
        %v886 = vmax.f32 %v870, 0.0
        %v887 = vmax.f32 %v871, 0.0
        %v888 = vmax.f32 %v872, 0.0
        %v889 = vmax.f32 %v873, 0.0
        %v890 = vmax.f32 %v874, 0.0
        %v891 = vmax.f32 %v875, 0.0
        %v892 = vmax.f32 %v876, 0.0
        %v893 = vpack.c.bf16 %v877, %v877
        %v894 = vpack.c.bf16 %v878, %v878
        %v895 = vpack.c.bf16 %v879, %v879
        %v896 = vpack.c.bf16 %v880, %v880
        %v897 = vpack.c.bf16 %v881, %v881
        %v898 = vpack.c.bf16 %v882, %v882
        %v899 = vpack.c.bf16 %v883, %v883
        %v900 = vpack.c.bf16 %v884, %v884
        %v901 = vpack.c.bf16 %v885, %v885
        %v902 = vpack.c.bf16 %v886, %v886
        %v903 = vpack.c.bf16 %v887, %v887
        %v904 = vpack.c.bf16 %v888, %v888
        %v905 = vpack.c.bf16 %v889, %v889
        %v906 = vpack.c.bf16 %v890, %v890
        %v907 = vpack.c.bf16 %v891, %v891
        %v908 = vpack.c.bf16 %v892, %v892
        %909 = vst [vmem:[#allocation3 + $0x10] sm:$0xf] %v893
        %910 = vst [vmem:[#allocation3 + $0x14] sm:$0xf] %v894
        %911 = vst [vmem:[#allocation3 + $0x18] sm:$0xf] %v895
        %912 = vst [vmem:[#allocation3 + $0x1c] sm:$0xf] %v896
        %913 = vst [vmem:[#allocation3 + $0x20] sm:$0xf] %v897
        %914 = vst [vmem:[#allocation3 + $0x24] sm:$0xf] %v898
        %915 = vst [vmem:[#allocation3 + $0x28] sm:$0xf] %v899
        %916 = vst [vmem:[#allocation3 + $0x2c] sm:$0xf] %v900
        %917 = vst [vmem:[#allocation3 + $0x30] sm:$0xf] %v901
        %918 = vst [vmem:[#allocation3 + $0x34] sm:$0xf] %v902
        %919 = vst [vmem:[#allocation3 + $0x38] sm:$0xf] %v903
        %920 = vst [vmem:[#allocation3 + $0x3c] sm:$0xf] %v904
        %921 = vst [vmem:[#allocation3 + $0x40] sm:$0xf] %v905
        %922 = vst [vmem:[#allocation3 + $0x44] sm:$0xf] %v906
        %923 = vst [vmem:[#allocation3 + $0x48] sm:$0xf] %v907
        %924 = vst [vmem:[#allocation3 + $0x4c] sm:$0xf] %v908
        %v925 = vld [vmem:[%s826 + $0x80] sm:$0xff]
        %v926 = vld [vmem:[%s826 + $0x88] sm:$0xff]
        %v927 = vld [vmem:[%s826 + $0x90] sm:$0xff]
        %v928 = vld [vmem:[%s826 + $0x98] sm:$0xff]
        %v929 = vld [vmem:[%s826 + $0xa0] sm:$0xff]
        %v930 = vld [vmem:[%s826 + $0xa8] sm:$0xff]
        %v931 = vld [vmem:[%s826 + $0xb0] sm:$0xff]
        %v932 = vld [vmem:[%s826 + $0xb8] sm:$0xff]
        %v933 = vld [vmem:[%s826 + $0xc0] sm:$0xff]
        %v934 = vld [vmem:[%s826 + $0xc8] sm:$0xff]
        %v935 = vld [vmem:[%s826 + $0xd0] sm:$0xff]
        %v936 = vld [vmem:[%s826 + $0xd8] sm:$0xff]
        %v937 = vld [vmem:[%s826 + $0xe0] sm:$0xff]
        %v938 = vld [vmem:[%s826 + $0xe8] sm:$0xff]
        %v939 = vld [vmem:[%s826 + $0xf0] sm:$0xff]
        %v940 = vld [vmem:[%s826 + $0xf8] sm:$0xff]
        %v941 = vmul.f32 %v925, %v843
        %v942 = vmul.f32 %v926, %v843
        %v943 = vmul.f32 %v927, %v843
        %v944 = vmul.f32 %v928, %v843
        %v945 = vmul.f32 %v929, %v843
        %v946 = vmul.f32 %v930, %v843
        %v947 = vmul.f32 %v931, %v843
        %v948 = vmul.f32 %v932, %v843
        %v949 = vmul.f32 %v933, %v843
        %v950 = vmul.f32 %v934, %v843
        %v951 = vmul.f32 %v935, %v843
        %v952 = vmul.f32 %v936, %v843
        %v953 = vmul.f32 %v937, %v843
        %v954 = vmul.f32 %v938, %v843
        %v955 = vmul.f32 %v939, %v843
        %v956 = vmul.f32 %v940, %v843
        %v957 = vadd.f32 %v941, %v860
        %v958 = vadd.f32 %v942, %v860
        %v959 = vadd.f32 %v943, %v860
        %v960 = vadd.f32 %v944, %v860
        %v961 = vadd.f32 %v945, %v860
        %v962 = vadd.f32 %v946, %v860
        %v963 = vadd.f32 %v947, %v860
        %v964 = vadd.f32 %v948, %v860
        %v965 = vadd.f32 %v949, %v860
        %v966 = vadd.f32 %v950, %v860
        %v967 = vadd.f32 %v951, %v860
        %v968 = vadd.f32 %v952, %v860
        %v969 = vadd.f32 %v953, %v860
        %v970 = vadd.f32 %v954, %v860
        %v971 = vadd.f32 %v955, %v860
        %v972 = vadd.f32 %v956, %v860
        %v973 = vmax.f32 %v957, 0.0
        %v974 = vmax.f32 %v958, 0.0
        %v975 = vmax.f32 %v959, 0.0
        %v976 = vmax.f32 %v960, 0.0
        %v977 = vmax.f32 %v961, 0.0
        %v978 = vmax.f32 %v962, 0.0
        %v979 = vmax.f32 %v963, 0.0
        %v980 = vmax.f32 %v964, 0.0
        %v981 = vmax.f32 %v965, 0.0
        %v982 = vmax.f32 %v966, 0.0
        %v983 = vmax.f32 %v967, 0.0
        %v984 = vmax.f32 %v968, 0.0
        %v985 = vmax.f32 %v969, 0.0
        %v986 = vmax.f32 %v970, 0.0
        %v987 = vmax.f32 %v971, 0.0
        %v988 = vmax.f32 %v972, 0.0
        %v989 = vpack.c.bf16 %v973, %v973
        %v990 = vpack.c.bf16 %v974, %v974
        %v991 = vpack.c.bf16 %v975, %v975
        %v992 = vpack.c.bf16 %v976, %v976
        %v993 = vpack.c.bf16 %v977, %v977
        %v994 = vpack.c.bf16 %v978, %v978
        %v995 = vpack.c.bf16 %v979, %v979
        %v996 = vpack.c.bf16 %v980, %v980
        %v997 = vpack.c.bf16 %v981, %v981
        %v998 = vpack.c.bf16 %v982, %v982
        %v999 = vpack.c.bf16 %v983, %v983
        %v1000 = vpack.c.bf16 %v984, %v984
        %v1001 = vpack.c.bf16 %v985, %v985
        %v1002 = vpack.c.bf16 %v986, %v986
        %v1003 = vpack.c.bf16 %v987, %v987
        %v1004 = vpack.c.bf16 %v988, %v988
        %1005 = vst [vmem:[#allocation3 + $0x50] sm:$0xf] %v989
        %1006 = vst [vmem:[#allocation3 + $0x54] sm:$0xf] %v990
        %1007 = vst [vmem:[#allocation3 + $0x58] sm:$0xf] %v991
        %1008 = vst [vmem:[#allocation3 + $0x5c] sm:$0xf] %v992
        %1009 = vst [vmem:[#allocation3 + $0x60] sm:$0xf] %v993
        %1010 = vst [vmem:[#allocation3 + $0x64] sm:$0xf] %v994
        %1011 = vst [vmem:[#allocation3 + $0x68] sm:$0xf] %v995
        %1012 = vst [vmem:[#allocation3 + $0x6c] sm:$0xf] %v996
        %1013 = vst [vmem:[#allocation3 + $0x70] sm:$0xf] %v997
        %1014 = vst [vmem:[#allocation3 + $0x74] sm:$0xf] %v998
        %1015 = vst [vmem:[#allocation3 + $0x78] sm:$0xf] %v999
        %1016 = vst [vmem:[#allocation3 + $0x7c] sm:$0xf] %v1000
        %1017 = vst [vmem:[#allocation3 + $0x80] sm:$0xf] %v1001
        %1018 = vst [vmem:[#allocation3 + $0x84] sm:$0xf] %v1002
        %1019 = vst [vmem:[#allocation3 + $0x88] sm:$0xf] %v1003
        %1020 = vst [vmem:[#allocation3 + $0x8c] sm:$0xf] %v1004
        %v1021 = vlaneseq
        %v1022 = vshrl.u32 %v1021, 7
        %v1023 = vadd.s32 %v1022, 8
        %v1024 = vadd.s32 %v1022, 16
        %v1025 = vadd.s32 %v1022, 24
        %v1026 = vadd.s32 %v1022, 32
        %v1027 = vadd.s32 %v1022, 40
        %v1028 = vadd.s32 %v1022, 48
        %v1029 = vadd.s32 %v1022, 56
        %v1030 = vadd.s32 %v1022, 64
        %v1031 = vadd.s32 %v1022, 72
        %v1032 = vadd.s32 %v1022, 80
        %v1033 = vadd.s32 %v1022, 88
        %v1034 = vadd.s32 %v1022, 96
        %v1035 = vadd.s32 %v1022, 104
        %v1036 = vadd.s32 %v1022, 112
        %v1037 = vadd.s32 %v1022, 120
        %vm1038 = vcmp.lt.s32.totalorder %v1022, 0
        %v1039 = vsub.s32 0, %v1022
        %v1040 = vsel %vm1038, %v1039, %v1022
        %v1041 = vshrl.u32 %v1040, 4
        %v1042 = vand.u32 %v1040, 15
        %v1043 = vsub.s32 0, %v1042
        %v1044 = vsel %vm1038, %v1043, %v1042
        %vm1045 = vcmp.lt.s32.totalorder %v1023, 0
        %v1046 = vsub.s32 0, %v1023
        %v1047 = vsel %vm1045, %v1046, %v1023
        %v1048 = vshrl.u32 %v1047, 4
        %v1049 = vand.u32 %v1047, 15
        %v1050 = vsub.s32 0, %v1049
        %v1051 = vsel %vm1045, %v1050, %v1049
        %vm1052 = vcmp.lt.s32.totalorder %v1024, 0
        %v1053 = vsub.s32 0, %v1024
        %v1054 = vsel %vm1052, %v1053, %v1024
        %v1055 = vshrl.u32 %v1054, 4
        %v1056 = vand.u32 %v1054, 15
        %v1057 = vsub.s32 0, %v1056
        %v1058 = vsel %vm1052, %v1057, %v1056
        %vm1059 = vcmp.lt.s32.totalorder %v1025, 0
        %v1060 = vsub.s32 0, %v1025
        %v1061 = vsel %vm1059, %v1060, %v1025
        %v1062 = vshrl.u32 %v1061, 4
        %v1063 = vand.u32 %v1061, 15
        %v1064 = vsub.s32 0, %v1063
        %v1065 = vsel %vm1059, %v1064, %v1063
        %vm1066 = vcmp.lt.s32.totalorder %v1026, 0
        %v1067 = vsub.s32 0, %v1026
        %v1068 = vsel %vm1066, %v1067, %v1026
        %v1069 = vshrl.u32 %v1068, 4
        %v1070 = vand.u32 %v1068, 15
        %v1071 = vsub.s32 0, %v1070
        %v1072 = vsel %vm1066, %v1071, %v1070
        %vm1073 = vcmp.lt.s32.totalorder %v1027, 0
        %v1074 = vsub.s32 0, %v1027
        %v1075 = vsel %vm1073, %v1074, %v1027
        %v1076 = vshrl.u32 %v1075, 4
        %v1077 = vand.u32 %v1075, 15
        %v1078 = vsub.s32 0, %v1077
        %v1079 = vsel %vm1073, %v1078, %v1077
        %vm1080 = vcmp.lt.s32.totalorder %v1028, 0
        %v1081 = vsub.s32 0, %v1028
        %v1082 = vsel %vm1080, %v1081, %v1028
        %v1083 = vshrl.u32 %v1082, 4
        %v1084 = vand.u32 %v1082, 15
        %v1085 = vsub.s32 0, %v1084
        %v1086 = vsel %vm1080, %v1085, %v1084
        %vm1087 = vcmp.lt.s32.totalorder %v1029, 0
        %v1088 = vsub.s32 0, %v1029
        %v1089 = vsel %vm1087, %v1088, %v1029
        %v1090 = vshrl.u32 %v1089, 4
        %v1091 = vand.u32 %v1089, 15
        %v1092 = vsub.s32 0, %v1091
        %v1093 = vsel %vm1087, %v1092, %v1091
        %vm1094 = vcmp.lt.s32.totalorder %v1030, 0
        %v1095 = vsub.s32 0, %v1030
        %v1096 = vsel %vm1094, %v1095, %v1030
        %v1097 = vshrl.u32 %v1096, 4
        %v1098 = vand.u32 %v1096, 15
        %v1099 = vsub.s32 0, %v1098
        %v1100 = vsel %vm1094, %v1099, %v1098
        %vm1101 = vcmp.lt.s32.totalorder %v1031, 0
        %v1102 = vsub.s32 0, %v1031
        %v1103 = vsel %vm1101, %v1102, %v1031
        %v1104 = vshrl.u32 %v1103, 4
        %v1105 = vand.u32 %v1103, 15
        %v1106 = vsub.s32 0, %v1105
        %v1107 = vsel %vm1101, %v1106, %v1105
        %vm1108 = vcmp.lt.s32.totalorder %v1032, 0
        %v1109 = vsub.s32 0, %v1032
        %v1110 = vsel %vm1108, %v1109, %v1032
        %v1111 = vshrl.u32 %v1110, 4
        %v1112 = vand.u32 %v1110, 15
        %v1113 = vsub.s32 0, %v1112
        %v1114 = vsel %vm1108, %v1113, %v1112
        %vm1115 = vcmp.lt.s32.totalorder %v1033, 0
        %v1116 = vsub.s32 0, %v1033
        %v1117 = vsel %vm1115, %v1116, %v1033
        %v1118 = vshrl.u32 %v1117, 4
        %v1119 = vand.u32 %v1117, 15
        %v1120 = vsub.s32 0, %v1119
        %v1121 = vsel %vm1115, %v1120, %v1119
        %vm1122 = vcmp.lt.s32.totalorder %v1034, 0
        %v1123 = vsub.s32 0, %v1034
        %v1124 = vsel %vm1122, %v1123, %v1034
        %v1125 = vshrl.u32 %v1124, 4
        %v1126 = vand.u32 %v1124, 15
        %v1127 = vsub.s32 0, %v1126
        %v1128 = vsel %vm1122, %v1127, %v1126
        %vm1129 = vcmp.lt.s32.totalorder %v1035, 0
        %v1130 = vsub.s32 0, %v1035
        %v1131 = vsel %vm1129, %v1130, %v1035
        %v1132 = vshrl.u32 %v1131, 4
        %v1133 = vand.u32 %v1131, 15
        %v1134 = vsub.s32 0, %v1133
        %v1135 = vsel %vm1129, %v1134, %v1133
        %vm1136 = vcmp.lt.s32.totalorder %v1036, 0
        %v1137 = vsub.s32 0, %v1036
        %v1138 = vsel %vm1136, %v1137, %v1036
        %v1139 = vshrl.u32 %v1138, 4
        %v1140 = vand.u32 %v1138, 15
        %v1141 = vsub.s32 0, %v1140
        %v1142 = vsel %vm1136, %v1141, %v1140
        %vm1143 = vcmp.lt.s32.totalorder %v1037, 0
        %v1144 = vsub.s32 0, %v1037
        %v1145 = vsel %vm1143, %v1144, %v1037
        %v1146 = vshrl.u32 %v1145, 4
        %v1147 = vand.u32 %v1145, 15
        %v1148 = vsub.s32 0, %v1147
        %v1149 = vsel %vm1143, %v1148, %v1147
        %vm1150 = vcmp.ne.s32.totalorder %v1044, 0
        %vm1151 = vcmp.ne.s32.totalorder %v1051, 0
        %vm1152 = vcmp.ne.s32.totalorder %v1058, 0
        %vm1153 = vcmp.ne.s32.totalorder %v1065, 0
        %vm1154 = vcmp.ne.s32.totalorder %v1072, 0
        %vm1155 = vcmp.ne.s32.totalorder %v1079, 0
        %vm1156 = vcmp.ne.s32.totalorder %v1086, 0
        %vm1157 = vcmp.ne.s32.totalorder %v1093, 0
        %vm1158 = vcmp.ne.s32.totalorder %v1100, 0
        %vm1159 = vcmp.ne.s32.totalorder %v1107, 0
        %vm1160 = vcmp.ne.s32.totalorder %v1114, 0
        %vm1161 = vcmp.ne.s32.totalorder %v1121, 0
        %vm1162 = vcmp.ne.s32.totalorder %v1128, 0
        %vm1163 = vcmp.ne.s32.totalorder %v1135, 0
        %vm1164 = vcmp.ne.s32.totalorder %v1142, 0
        %vm1165 = vcmp.ne.s32.totalorder %v1149, 0
        %vm1166 = vcmp.lt.s32.totalorder %v1044, 0
        %vm1167 = vcmp.lt.s32.totalorder %v1051, 0
        %vm1168 = vcmp.lt.s32.totalorder %v1058, 0
        %vm1169 = vcmp.lt.s32.totalorder %v1065, 0
        %vm1170 = vcmp.lt.s32.totalorder %v1072, 0
        %vm1171 = vcmp.lt.s32.totalorder %v1079, 0
        %vm1172 = vcmp.lt.s32.totalorder %v1086, 0
        %vm1173 = vcmp.lt.s32.totalorder %v1093, 0
        %vm1174 = vcmp.lt.s32.totalorder %v1100, 0
        %vm1175 = vcmp.lt.s32.totalorder %v1107, 0
        %vm1176 = vcmp.lt.s32.totalorder %v1114, 0
        %vm1177 = vcmp.lt.s32.totalorder %v1121, 0
        %vm1178 = vcmp.lt.s32.totalorder %v1128, 0
        %vm1179 = vcmp.lt.s32.totalorder %v1135, 0
        %vm1180 = vcmp.lt.s32.totalorder %v1142, 0
        %vm1181 = vcmp.lt.s32.totalorder %v1149, 0
        %vm1182 = vmand %vm1166, %vm1150
        %vm1183 = vmand %vm1167, %vm1151
        %vm1184 = vmand %vm1168, %vm1152
        %vm1185 = vmand %vm1169, %vm1153
        %vm1186 = vmand %vm1170, %vm1154
        %vm1187 = vmand %vm1171, %vm1155
        %vm1188 = vmand %vm1172, %vm1156
        %vm1189 = vmand %vm1173, %vm1157
        %vm1190 = vmand %vm1174, %vm1158
        %vm1191 = vmand %vm1175, %vm1159
        %vm1192 = vmand %vm1176, %vm1160
        %vm1193 = vmand %vm1177, %vm1161
        %vm1194 = vmand %vm1178, %vm1162
        %vm1195 = vmand %vm1179, %vm1163
        %vm1196 = vmand %vm1180, %vm1164
        %vm1197 = vmand %vm1181, %vm1165
        %v1198 = vadd.s32 %v1044, 16
        %v1199 = vadd.s32 %v1051, 16
        %v1200 = vadd.s32 %v1058, 16
        %v1201 = vadd.s32 %v1065, 16
        %v1202 = vadd.s32 %v1072, 16
        %v1203 = vadd.s32 %v1079, 16
        %v1204 = vadd.s32 %v1086, 16
        %v1205 = vadd.s32 %v1093, 16
        %v1206 = vadd.s32 %v1100, 16
        %v1207 = vadd.s32 %v1107, 16
        %v1208 = vadd.s32 %v1114, 16
        %v1209 = vadd.s32 %v1121, 16
        %v1210 = vadd.s32 %v1128, 16
        %v1211 = vadd.s32 %v1135, 16
        %v1212 = vadd.s32 %v1142, 16
        %v1213 = vadd.s32 %v1149, 16
        %v1214 = vsel %vm1182, %v1198, %v1044
        %v1215 = vsel %vm1183, %v1199, %v1051
        %v1216 = vsel %vm1184, %v1200, %v1058
        %v1217 = vsel %vm1185, %v1201, %v1065
        %v1218 = vsel %vm1186, %v1202, %v1072
        %v1219 = vsel %vm1187, %v1203, %v1079
        %v1220 = vsel %vm1188, %v1204, %v1086
        %v1221 = vsel %vm1189, %v1205, %v1093
        %v1222 = vsel %vm1190, %v1206, %v1100
        %v1223 = vsel %vm1191, %v1207, %v1107
        %v1224 = vsel %vm1192, %v1208, %v1114
        %v1225 = vsel %vm1193, %v1209, %v1121
        %v1226 = vsel %vm1194, %v1210, %v1128
        %v1227 = vsel %vm1195, %v1211, %v1135
        %v1228 = vsel %vm1196, %v1212, %v1142
        %v1229 = vsel %vm1197, %v1213, %v1149
        %vm1230 = vcmp.gt.s32.totalorder %v1214, 0
        %vm1231 = vcmp.gt.s32.totalorder %v1215, 0
        %vm1232 = vcmp.gt.s32.totalorder %v1216, 0
        %vm1233 = vcmp.gt.s32.totalorder %v1217, 0
        %vm1234 = vcmp.gt.s32.totalorder %v1218, 0
        %vm1235 = vcmp.gt.s32.totalorder %v1219, 0
        %vm1236 = vcmp.gt.s32.totalorder %v1220, 0
        %vm1237 = vcmp.gt.s32.totalorder %v1221, 0
        %vm1238 = vcmp.gt.s32.totalorder %v1222, 0
        %vm1239 = vcmp.gt.s32.totalorder %v1223, 0
        %vm1240 = vcmp.gt.s32.totalorder %v1224, 0
        %vm1241 = vcmp.gt.s32.totalorder %v1225, 0
        %vm1242 = vcmp.gt.s32.totalorder %v1226, 0
        %vm1243 = vcmp.gt.s32.totalorder %v1227, 0
        %vm1244 = vcmp.gt.s32.totalorder %v1228, 0
        %vm1245 = vcmp.gt.s32.totalorder %v1229, 0
        %vm1246 = vcmp.lt.s32.totalorder %v1214, 15
        %vm1247 = vcmp.lt.s32.totalorder %v1215, 15
        %vm1248 = vcmp.lt.s32.totalorder %v1216, 15
        %vm1249 = vcmp.lt.s32.totalorder %v1217, 15
        %vm1250 = vcmp.lt.s32.totalorder %v1218, 15
        %vm1251 = vcmp.lt.s32.totalorder %v1219, 15
        %vm1252 = vcmp.lt.s32.totalorder %v1220, 15
        %vm1253 = vcmp.lt.s32.totalorder %v1221, 15
        %vm1254 = vcmp.lt.s32.totalorder %v1222, 15
        %vm1255 = vcmp.lt.s32.totalorder %v1223, 15
        %vm1256 = vcmp.lt.s32.totalorder %v1224, 15
        %vm1257 = vcmp.lt.s32.totalorder %v1225, 15
        %vm1258 = vcmp.lt.s32.totalorder %v1226, 15
        %vm1259 = vcmp.lt.s32.totalorder %v1227, 15
        %vm1260 = vcmp.lt.s32.totalorder %v1228, 15
        %vm1261 = vcmp.lt.s32.totalorder %v1229, 15
        %v1262 = vld [vmem:[#allocation3 + $0x10] sm:$0xf]
        %v1263 = vld [vmem:[#allocation3 + $0x14] sm:$0xf]
        %v1264 = vld [vmem:[#allocation3 + $0x18] sm:$0xf]
        %v1265 = vld [vmem:[#allocation3 + $0x1c] sm:$0xf]
        %v1266 = vld [vmem:[#allocation3 + $0x20] sm:$0xf]
        %v1267 = vld [vmem:[#allocation3 + $0x24] sm:$0xf]
        %v1268 = vld [vmem:[#allocation3 + $0x28] sm:$0xf]
        %v1269 = vld [vmem:[#allocation3 + $0x2c] sm:$0xf]
        %v1270 = vld [vmem:[#allocation3 + $0x30] sm:$0xf]
        %v1271 = vld [vmem:[#allocation3 + $0x34] sm:$0xf]
        %v1272 = vld [vmem:[#allocation3 + $0x38] sm:$0xf]
        %v1273 = vld [vmem:[#allocation3 + $0x3c] sm:$0xf]
        %v1274 = vld [vmem:[#allocation3 + $0x40] sm:$0xf]
        %v1275 = vld [vmem:[#allocation3 + $0x44] sm:$0xf]
        %v1276 = vld [vmem:[#allocation3 + $0x48] sm:$0xf]
        %v1277 = vld [vmem:[#allocation3 + $0x4c] sm:$0xf]
        %v1278 = vld [vmem:[%s3] sm:$0xf]
        %v1279 = vld [vmem:[%s3 + $0x4] sm:$0xf]
        %v1280 = vld [vmem:[%s3 + $0x8] sm:$0xf]
        %v1281 = vld [vmem:[%s3 + $0xc] sm:$0xf]
        %v1282 = vld [vmem:[%s3 + $0x10] sm:$0xf]
        %v1283 = vld [vmem:[%s3 + $0x14] sm:$0xf]
        %v1284 = vld [vmem:[%s3 + $0x18] sm:$0xf]
        %v1285 = vld [vmem:[%s3 + $0x1c] sm:$0xf]
        %v1286 = vld [vmem:[%s3 + $0x20] sm:$0xf]
        %v1287 = vld [vmem:[%s3 + $0x24] sm:$0xf]
        %v1288 = vld [vmem:[%s3 + $0x28] sm:$0xf]
        %v1289 = vld [vmem:[%s3 + $0x2c] sm:$0xf]
        %v1290 = vld [vmem:[%s3 + $0x30] sm:$0xf]
        %v1291 = vld [vmem:[%s3 + $0x34] sm:$0xf]
        %v1292 = vld [vmem:[%s3 + $0x38] sm:$0xf]
        %v1293 = vld [vmem:[%s3 + $0x3c] sm:$0xf]
        %v1294 = vld [vmem:[#allocation3 + $0x4] sm:$0x8]
        %v1295 = vld [vmem:[#allocation3 + $0x8] sm:$0xf]
        %v1296 = vld [vmem:[#allocation3 + $0xc] sm:$0xf]
        %v1297 = vsel %vm1230, 1, 0
        %v1298 = vsel %vm1231, 1, 0
        %v1299 = vsel %vm1232, 1, 0
        %v1300 = vsel %vm1233, 1, 0
        %v1301 = vsel %vm1234, 1, 0
        %v1302 = vsel %vm1235, 1, 0
        %v1303 = vsel %vm1236, 1, 0
        %v1304 = vsel %vm1237, 1, 0
        %v1305 = vsel %vm1238, 1, 0
        %v1306 = vsel %vm1239, 1, 0
        %v1307 = vsel %vm1240, 1, 0
        %v1308 = vsel %vm1241, 1, 0
        %v1309 = vsel %vm1242, 1, 0
        %v1310 = vsel %vm1243, 1, 0
        %v1311 = vsel %vm1244, 1, 0
        %v1312 = vsel %vm1245, 1, 0
        %vm1313 = vcmp.eq.s32.totalorder %v1297, 1
        %vm1314 = vcmp.eq.s32.totalorder %v1298, 1
        %vm1315 = vcmp.eq.s32.totalorder %v1299, 1
        %vm1316 = vcmp.eq.s32.totalorder %v1300, 1
        %vm1317 = vcmp.eq.s32.totalorder %v1301, 1
        %vm1318 = vcmp.eq.s32.totalorder %v1302, 1
        %vm1319 = vcmp.eq.s32.totalorder %v1303, 1
        %vm1320 = vcmp.eq.s32.totalorder %v1304, 1
        %vm1321 = vcmp.eq.s32.totalorder %v1305, 1
        %vm1322 = vcmp.eq.s32.totalorder %v1306, 1
        %vm1323 = vcmp.eq.s32.totalorder %v1307, 1
        %vm1324 = vcmp.eq.s32.totalorder %v1308, 1
        %vm1325 = vcmp.eq.s32.totalorder %v1309, 1
        %vm1326 = vcmp.eq.s32.totalorder %v1310, 1
        %vm1327 = vcmp.eq.s32.totalorder %v1311, 1
        %vm1328 = vcmp.eq.s32.totalorder %v1312, 1
        %vm1329 = vmpackc.low %vm1313, %vm1313
        %vm1330 = vmpackc.low %vm1314, %vm1314
        %vm1331 = vmpackc.low %vm1315, %vm1315
        %vm1332 = vmpackc.low %vm1316, %vm1316
        %vm1333 = vmpackc.low %vm1317, %vm1317
        %vm1334 = vmpackc.low %vm1318, %vm1318
        %vm1335 = vmpackc.low %vm1319, %vm1319
        %vm1336 = vmpackc.low %vm1320, %vm1320
        %vm1337 = vmpackc.low %vm1321, %vm1321
        %vm1338 = vmpackc.low %vm1322, %vm1322
        %vm1339 = vmpackc.low %vm1323, %vm1323
        %vm1340 = vmpackc.low %vm1324, %vm1324
        %vm1341 = vmpackc.low %vm1325, %vm1325
        %vm1342 = vmpackc.low %vm1326, %vm1326
        %vm1343 = vmpackc.low %vm1327, %vm1327
        %vm1344 = vmpackc.low %vm1328, %vm1328
        %v1345 = vsel %vm1329, 65537, 0
        %v1346 = vsel %vm1330, 65537, 0
        %v1347 = vsel %vm1331, 65537, 0
        %v1348 = vsel %vm1332, 65537, 0
        %v1349 = vsel %vm1333, 65537, 0
        %v1350 = vsel %vm1334, 65537, 0
        %v1351 = vsel %vm1335, 65537, 0
        %v1352 = vsel %vm1336, 65537, 0
        %v1353 = vsel %vm1337, 65537, 0
        %v1354 = vsel %vm1338, 65537, 0
        %v1355 = vsel %vm1339, 65537, 0
        %v1356 = vsel %vm1340, 65537, 0
        %v1357 = vsel %vm1341, 65537, 0
        %v1358 = vsel %vm1342, 65537, 0
        %v1359 = vsel %vm1343, 65537, 0
        %v1360 = vsel %vm1344, 65537, 0
        %vm1361 = vsmask.f32 3328
        %vm1362 = vsmask.f32 7440
        %vm1363 = vmor %vm1361, %vm1362
        %v1365 = vshll.u32 %v1345, 16
        %v1367 = vrot.slane %v1365, 5
        %v1368 = vshrl.u32 %v1345, 16
        %v1370 = vrot.slane %v1368, 4
        %v1371 = vor.u32 %v1370, %v1367
        %v1372 = vrot.slane %v1371, 4
        %v1374 = vshll.u32 %v1346, 16
        %v1376 = vrot.slane %v1374, 5
        %v1377 = vsel %vm1363, %v1372, %v1376
        %v1378 = vshrl.u32 %v1346, 16
        %v1380 = vrot.slane %v1378, 4
        %v1381 = vor.u32 %v1380, %v1376
        %v1382 = vrot.slane %v1381, 4
        %v1384 = vshll.u32 %v1347, 16
        %v1386 = vrot.slane %v1384, 5
        %v1387 = vsel %vm1363, %v1382, %v1386
        %v1388 = vshrl.u32 %v1347, 16
        %v1390 = vrot.slane %v1388, 4
        %v1391 = vor.u32 %v1390, %v1386
        %v1392 = vrot.slane %v1391, 4
        %v1394 = vshll.u32 %v1348, 16
        %v1396 = vrot.slane %v1394, 5
        %v1397 = vsel %vm1363, %v1392, %v1396
        %v1398 = vshrl.u32 %v1348, 16
        %v1400 = vrot.slane %v1398, 4
        %v1401 = vor.u32 %v1400, %v1396
        %v1402 = vrot.slane %v1401, 4
        %v1404 = vshll.u32 %v1349, 16
        %v1406 = vrot.slane %v1404, 5
        %v1407 = vsel %vm1363, %v1402, %v1406
        %v1408 = vshrl.u32 %v1349, 16
        %v1410 = vrot.slane %v1408, 4
        %v1411 = vor.u32 %v1410, %v1406
        %v1412 = vrot.slane %v1411, 4
        %v1414 = vshll.u32 %v1350, 16
        %v1416 = vrot.slane %v1414, 5
        %v1417 = vsel %vm1363, %v1412, %v1416
        %v1418 = vshrl.u32 %v1350, 16
        %v1420 = vrot.slane %v1418, 4
        %v1421 = vor.u32 %v1420, %v1416
        %v1422 = vrot.slane %v1421, 4
        %v1424 = vshll.u32 %v1351, 16
        %v1426 = vrot.slane %v1424, 5
        %v1427 = vsel %vm1363, %v1422, %v1426
        %v1428 = vshrl.u32 %v1351, 16
        %v1430 = vrot.slane %v1428, 4
        %v1431 = vor.u32 %v1430, %v1426
        %v1432 = vrot.slane %v1431, 4
        %v1434 = vshll.u32 %v1352, 16
        %v1436 = vrot.slane %v1434, 5
        %v1437 = vsel %vm1363, %v1432, %v1436
        %v1438 = vshrl.u32 %v1352, 16
        %v1440 = vrot.slane %v1438, 4
        %v1441 = vor.u32 %v1440, %v1436
        %v1442 = vrot.slane %v1441, 4
        %v1444 = vshll.u32 %v1353, 16
        %v1446 = vrot.slane %v1444, 5
        %v1447 = vsel %vm1363, %v1442, %v1446
        %v1448 = vshrl.u32 %v1353, 16
        %v1450 = vrot.slane %v1448, 4
        %v1451 = vor.u32 %v1450, %v1446
        %v1452 = vrot.slane %v1451, 4
        %v1454 = vshll.u32 %v1354, 16
        %v1456 = vrot.slane %v1454, 5
        %v1457 = vsel %vm1363, %v1452, %v1456
        %v1458 = vshrl.u32 %v1354, 16
        %v1460 = vrot.slane %v1458, 4
        %v1461 = vor.u32 %v1460, %v1456
        %v1462 = vrot.slane %v1461, 4
        %v1464 = vshll.u32 %v1355, 16
        %v1466 = vrot.slane %v1464, 5
        %v1467 = vsel %vm1363, %v1462, %v1466
        %v1468 = vshrl.u32 %v1355, 16
        %v1470 = vrot.slane %v1468, 4
        %v1471 = vor.u32 %v1470, %v1466
        %v1472 = vrot.slane %v1471, 4
        %v1474 = vshll.u32 %v1356, 16
        %v1476 = vrot.slane %v1474, 5
        %v1477 = vsel %vm1363, %v1472, %v1476
        %v1478 = vshrl.u32 %v1356, 16
        %v1480 = vrot.slane %v1478, 4
        %v1481 = vor.u32 %v1480, %v1476
        %v1482 = vrot.slane %v1481, 4
        %v1484 = vshll.u32 %v1357, 16
        %v1486 = vrot.slane %v1484, 5
        %v1487 = vsel %vm1363, %v1482, %v1486
        %v1488 = vshrl.u32 %v1357, 16
        %v1490 = vrot.slane %v1488, 4
        %v1491 = vor.u32 %v1490, %v1486
        %v1492 = vrot.slane %v1491, 4
        %v1494 = vshll.u32 %v1358, 16
        %v1496 = vrot.slane %v1494, 5
        %v1497 = vsel %vm1363, %v1492, %v1496
        %v1498 = vshrl.u32 %v1358, 16
        %v1500 = vrot.slane %v1498, 4
        %v1501 = vor.u32 %v1500, %v1496
        %v1502 = vrot.slane %v1501, 4
        %v1504 = vshll.u32 %v1359, 16
        %v1506 = vrot.slane %v1504, 5
        %v1507 = vsel %vm1363, %v1502, %v1506
        %v1508 = vshrl.u32 %v1359, 16
        %v1510 = vrot.slane %v1508, 4
        %v1511 = vor.u32 %v1510, %v1506
        %v1512 = vrot.slane %v1511, 4
        %v1514 = vshll.u32 %v1360, 16
        %v1516 = vrot.slane %v1514, 5
        %v1517 = vsel %vm1363, %v1512, %v1516
        %v1518 = vshrl.u32 %v1360, 16
        %v1520 = vrot.slane %v1518, 4
        %v1521 = vor.u32 %v1520, %v1516
        %v1522 = vrot.slane %v1521, 4
        %v1523 = vunpack.c.l.b16 %v1367
        %v1524 = vunpack.c.h.b16 %v1367
        %v1525 = vunpack.c.l.b16 0
        %v1526 = vunpack.c.h.b16 0
        %vm1527 = vcmp.ne.s32.totalorder %v1523, %v1525
        %vm1528 = vcmp.ne.s32.totalorder %v1524, %v1526
        %vm1529 = vmpackc.low %vm1528, %vm1527
        %v1530 = vunpack.c.l.b16 %v1377
        %v1531 = vunpack.c.h.b16 %v1377
        %v1532 = vunpack.c.l.b16 0
        %v1533 = vunpack.c.h.b16 0
        %vm1534 = vcmp.ne.s32.totalorder %v1530, %v1532
        %vm1535 = vcmp.ne.s32.totalorder %v1531, %v1533
        %vm1536 = vmpackc.low %vm1535, %vm1534
        %v1537 = vunpack.c.l.b16 %v1387
        %v1538 = vunpack.c.h.b16 %v1387
        %v1539 = vunpack.c.l.b16 0
        %v1540 = vunpack.c.h.b16 0
        %vm1541 = vcmp.ne.s32.totalorder %v1537, %v1539
        %vm1542 = vcmp.ne.s32.totalorder %v1538, %v1540
        %vm1543 = vmpackc.low %vm1542, %vm1541
        %v1544 = vunpack.c.l.b16 %v1397
        %v1545 = vunpack.c.h.b16 %v1397
        %v1546 = vunpack.c.l.b16 0
        %v1547 = vunpack.c.h.b16 0
        %vm1548 = vcmp.ne.s32.totalorder %v1544, %v1546
        %vm1549 = vcmp.ne.s32.totalorder %v1545, %v1547
        %vm1550 = vmpackc.low %vm1549, %vm1548
        %v1551 = vunpack.c.l.b16 %v1407
        %v1552 = vunpack.c.h.b16 %v1407
        %v1553 = vunpack.c.l.b16 0
        %v1554 = vunpack.c.h.b16 0
        %vm1555 = vcmp.ne.s32.totalorder %v1551, %v1553
        %vm1556 = vcmp.ne.s32.totalorder %v1552, %v1554
        %vm1557 = vmpackc.low %vm1556, %vm1555
        %v1558 = vunpack.c.l.b16 %v1417
        %v1559 = vunpack.c.h.b16 %v1417
        %v1560 = vunpack.c.l.b16 0
        %v1561 = vunpack.c.h.b16 0
        %vm1562 = vcmp.ne.s32.totalorder %v1558, %v1560
        %vm1563 = vcmp.ne.s32.totalorder %v1559, %v1561
        %vm1564 = vmpackc.low %vm1563, %vm1562
        %v1565 = vunpack.c.l.b16 %v1427
        %v1566 = vunpack.c.h.b16 %v1427
        %v1567 = vunpack.c.l.b16 0
        %v1568 = vunpack.c.h.b16 0
        %vm1569 = vcmp.ne.s32.totalorder %v1565, %v1567
        %vm1570 = vcmp.ne.s32.totalorder %v1566, %v1568
        %vm1571 = vmpackc.low %vm1570, %vm1569
        %v1572 = vunpack.c.l.b16 %v1437
        %v1573 = vunpack.c.h.b16 %v1437
        %v1574 = vunpack.c.l.b16 0
        %v1575 = vunpack.c.h.b16 0
        %vm1576 = vcmp.ne.s32.totalorder %v1572, %v1574
        %vm1577 = vcmp.ne.s32.totalorder %v1573, %v1575
        %vm1578 = vmpackc.low %vm1577, %vm1576
        %v1579 = vunpack.c.l.b16 %v1447
        %v1580 = vunpack.c.h.b16 %v1447
        %v1581 = vunpack.c.l.b16 0
        %v1582 = vunpack.c.h.b16 0
        %vm1583 = vcmp.ne.s32.totalorder %v1579, %v1581
        %vm1584 = vcmp.ne.s32.totalorder %v1580, %v1582
        %vm1585 = vmpackc.low %vm1584, %vm1583
        %v1586 = vunpack.c.l.b16 %v1457
        %v1587 = vunpack.c.h.b16 %v1457
        %v1588 = vunpack.c.l.b16 0
        %v1589 = vunpack.c.h.b16 0
        %vm1590 = vcmp.ne.s32.totalorder %v1586, %v1588
        %vm1591 = vcmp.ne.s32.totalorder %v1587, %v1589
        %vm1592 = vmpackc.low %vm1591, %vm1590
        %v1593 = vunpack.c.l.b16 %v1467
        %v1594 = vunpack.c.h.b16 %v1467
        %v1595 = vunpack.c.l.b16 0
        %v1596 = vunpack.c.h.b16 0
        %vm1597 = vcmp.ne.s32.totalorder %v1593, %v1595
        %vm1598 = vcmp.ne.s32.totalorder %v1594, %v1596
        %vm1599 = vmpackc.low %vm1598, %vm1597
        %v1600 = vunpack.c.l.b16 %v1477
        %v1601 = vunpack.c.h.b16 %v1477
        %v1602 = vunpack.c.l.b16 0
        %v1603 = vunpack.c.h.b16 0
        %vm1604 = vcmp.ne.s32.totalorder %v1600, %v1602
        %vm1605 = vcmp.ne.s32.totalorder %v1601, %v1603
        %vm1606 = vmpackc.low %vm1605, %vm1604
        %v1607 = vunpack.c.l.b16 %v1487
        %v1608 = vunpack.c.h.b16 %v1487
        %v1609 = vunpack.c.l.b16 0
        %v1610 = vunpack.c.h.b16 0
        %vm1611 = vcmp.ne.s32.totalorder %v1607, %v1609
        %vm1612 = vcmp.ne.s32.totalorder %v1608, %v1610
        %vm1613 = vmpackc.low %vm1612, %vm1611
        %v1614 = vunpack.c.l.b16 %v1497
        %v1615 = vunpack.c.h.b16 %v1497
        %v1616 = vunpack.c.l.b16 0
        %v1617 = vunpack.c.h.b16 0
        %vm1618 = vcmp.ne.s32.totalorder %v1614, %v1616
        %vm1619 = vcmp.ne.s32.totalorder %v1615, %v1617
        %vm1620 = vmpackc.low %vm1619, %vm1618
        %v1621 = vunpack.c.l.b16 %v1507
        %v1622 = vunpack.c.h.b16 %v1507
        %v1623 = vunpack.c.l.b16 0
        %v1624 = vunpack.c.h.b16 0
        %vm1625 = vcmp.ne.s32.totalorder %v1621, %v1623
        %vm1626 = vcmp.ne.s32.totalorder %v1622, %v1624
        %vm1627 = vmpackc.low %vm1626, %vm1625
        %v1628 = vunpack.c.l.b16 %v1517
        %v1629 = vunpack.c.h.b16 %v1517
        %v1630 = vunpack.c.l.b16 0
        %v1631 = vunpack.c.h.b16 0
        %vm1632 = vcmp.ne.s32.totalorder %v1628, %v1630
        %vm1633 = vcmp.ne.s32.totalorder %v1629, %v1631
        %vm1634 = vmpackc.low %vm1633, %vm1632
        %v1635 = vunpack.c.l.b16 %v1522
        %v1636 = vunpack.c.h.b16 %v1522
        %v1637 = vunpack.c.l.b16 0
        %v1638 = vunpack.c.h.b16 0
        %vm1639 = vcmp.ne.s32.totalorder %v1635, %v1637
        %vm1640 = vcmp.ne.s32.totalorder %v1636, %v1638
        %vm1641 = vmpackc.low %vm1640, %vm1639
        %v1642 = vsel %vm1529, %v1294, 0
        %v1643 = vsel %vm1536, %v1295, 0
        %v1644 = vsel %vm1543, %v1296, 0
        %v1645 = vsel %vm1550, %v1262, 0
        %v1646 = vsel %vm1557, %v1263, 0
        %v1647 = vsel %vm1564, %v1264, 0
        %v1648 = vsel %vm1571, %v1265, 0
        %v1649 = vsel %vm1578, %v1266, 0
        %v1650 = vsel %vm1585, %v1267, 0
        %v1651 = vsel %vm1592, %v1268, 0
        %v1652 = vsel %vm1599, %v1269, 0
        %v1653 = vsel %vm1606, %v1270, 0
        %v1654 = vsel %vm1613, %v1271, 0
        %v1655 = vsel %vm1620, %v1272, 0
        %v1656 = vsel %vm1627, %v1273, 0
        %v1657 = vsel %vm1634, %v1274, 0
        %v1658 = vsel %vm1641, %v1275, 0
        %v1676 = vunpack.c.l.b16 %v1642
        %v1677 = vunpack.c.l.b16 %v1643
        %v1678 = vunpack.c.l.b16 %v1644
        %v1679 = vunpack.c.l.b16 %v1645
        %v1680 = vunpack.c.l.b16 %v1646
        %v1681 = vunpack.c.l.b16 %v1647
        %v1682 = vunpack.c.l.b16 %v1648
        %v1683 = vunpack.c.l.b16 %v1649
        %v1684 = vunpack.c.l.b16 %v1650
        %v1685 = vunpack.c.l.b16 %v1651
        %v1686 = vunpack.c.l.b16 %v1652
        %v1687 = vunpack.c.l.b16 %v1653
        %v1688 = vunpack.c.l.b16 %v1654
        %v1689 = vunpack.c.l.b16 %v1655
        %v1690 = vunpack.c.l.b16 %v1656
        %v1691 = vunpack.c.l.b16 %v1657
        %v1692 = vunpack.c.l.b16 %v1658
        %v1693 = vpack.c.b16 %v1677, %v1676
        %v1694 = vpack.c.b16 %v1679, %v1678
        %v1695 = vpack.c.b16 %v1681, %v1680
        %v1696 = vpack.c.b16 %v1683, %v1682
        %v1697 = vpack.c.b16 %v1685, %v1684
        %v1698 = vpack.c.b16 %v1687, %v1686
        %v1699 = vpack.c.b16 %v1689, %v1688
        %v1700 = vpack.c.b16 %v1691, %v1690
        %v1701 = vpack.c.b16 %v1692, %v1692
        %v1718 = vunpack.c.l.b16 %v1295
        %v1719 = vunpack.c.l.b16 %v1296
        %v1720 = vunpack.c.l.b16 %v1262
        %v1721 = vunpack.c.l.b16 %v1263
        %v1722 = vunpack.c.l.b16 %v1264
        %v1723 = vunpack.c.l.b16 %v1265
        %v1724 = vunpack.c.l.b16 %v1266
        %v1725 = vunpack.c.l.b16 %v1267
        %v1726 = vunpack.c.l.b16 %v1268
        %v1727 = vunpack.c.l.b16 %v1269
        %v1728 = vunpack.c.l.b16 %v1270
        %v1729 = vunpack.c.l.b16 %v1271
        %v1730 = vunpack.c.l.b16 %v1272
        %v1731 = vunpack.c.l.b16 %v1273
        %v1732 = vunpack.c.l.b16 %v1274
        %v1733 = vunpack.c.l.b16 %v1275
        %v1734 = vpack.c.b16 %v1719, %v1718
        %v1735 = vpack.c.b16 %v1721, %v1720
        %v1736 = vpack.c.b16 %v1723, %v1722
        %v1737 = vpack.c.b16 %v1725, %v1724
        %v1738 = vpack.c.b16 %v1727, %v1726
        %v1739 = vpack.c.b16 %v1729, %v1728
        %v1740 = vpack.c.b16 %v1731, %v1730
        %v1741 = vpack.c.b16 %v1733, %v1732
        %v1743 = vshrl.u32 %v1734, 16
        %v1745 = vrot.slane %v1743, 4
        %v1746 = vshll.u32 %v1734, 16
        %v1748 = vrot.slane %v1746, 5
        %v1749 = vor.u32 %v1745, %v1748
        %v1751 = vshrl.u32 %v1735, 16
        %v1753 = vrot.slane %v1751, 4
        %v1754 = vshll.u32 %v1735, 16
        %v1756 = vrot.slane %v1754, 5
        %v1757 = vor.u32 %v1753, %v1756
        %v1758 = vsel %vm1361, %v1749, %v1757
        %v1760 = vshrl.u32 %v1736, 16
        %v1762 = vrot.slane %v1760, 4
        %v1763 = vshll.u32 %v1736, 16
        %v1765 = vrot.slane %v1763, 5
        %v1766 = vor.u32 %v1762, %v1765
        %v1767 = vsel %vm1361, %v1757, %v1766
        %v1769 = vshrl.u32 %v1737, 16
        %v1771 = vrot.slane %v1769, 4
        %v1772 = vshll.u32 %v1737, 16
        %v1774 = vrot.slane %v1772, 5
        %v1775 = vor.u32 %v1771, %v1774
        %v1776 = vsel %vm1361, %v1766, %v1775
        %v1778 = vshrl.u32 %v1738, 16
        %v1780 = vrot.slane %v1778, 4
        %v1781 = vshll.u32 %v1738, 16
        %v1783 = vrot.slane %v1781, 5
        %v1784 = vor.u32 %v1780, %v1783
        %v1785 = vsel %vm1361, %v1775, %v1784
        %v1787 = vshrl.u32 %v1739, 16
        %v1789 = vrot.slane %v1787, 4
        %v1790 = vshll.u32 %v1739, 16
        %v1792 = vrot.slane %v1790, 5
        %v1793 = vor.u32 %v1789, %v1792
        %v1794 = vsel %vm1361, %v1784, %v1793
        %v1796 = vshrl.u32 %v1740, 16
        %v1798 = vrot.slane %v1796, 4
        %v1799 = vshll.u32 %v1740, 16
        %v1801 = vrot.slane %v1799, 5
        %v1802 = vor.u32 %v1798, %v1801
        %v1803 = vsel %vm1361, %v1793, %v1802
        %v1805 = vshrl.u32 %v1741, 16
        %v1807 = vrot.slane %v1805, 4
        %v1808 = vshll.u32 %v1741, 16
        %v1810 = vrot.slane %v1808, 5
        %v1811 = vor.u32 %v1807, %v1810
        %v1812 = vsel %vm1361, %v1802, %v1811
        %v1813 = vld [vmem:[%s2] sm:$0xf]
        %v1814 = vld [vmem:[%s2 + $0x4] sm:$0xf]
        %v1815 = vld [vmem:[%s2 + $0x8] sm:$0xf]
        %v1816 = vld [vmem:[%s2 + $0xc] sm:$0xf]
        %v1817 = vld [vmem:[%s2 + $0x10] sm:$0xf]
        %v1818 = vld [vmem:[%s2 + $0x14] sm:$0xf]
        %v1819 = vld [vmem:[%s2 + $0x18] sm:$0xf]
        %v1820 = vld [vmem:[%s2 + $0x1c] sm:$0xf]
        %v1821 = vld [vmem:[%s2 + $0x20] sm:$0xf]
        %v1822 = vld [vmem:[%s2 + $0x24] sm:$0xf]
        %v1823 = vld [vmem:[%s2 + $0x28] sm:$0xf]
        %v1824 = vld [vmem:[%s2 + $0x2c] sm:$0xf]
        %v1825 = vld [vmem:[%s2 + $0x30] sm:$0xf]
        %v1826 = vld [vmem:[%s2 + $0x34] sm:$0xf]
        %v1827 = vld [vmem:[%s2 + $0x38] sm:$0xf]
        %v1828 = vld [vmem:[%s2 + $0x3c] sm:$0xf]
        %v1829 = vld [vmem:[%s2 + $0x40] sm:$0xf]
        %v1830 = vld [vmem:[%s2 + $0x44] sm:$0xf]
        %v1831 = vld [vmem:[%s2 + $0x48] sm:$0xf]
        %v1832 = vld [vmem:[%s2 + $0x4c] sm:$0xf]
        %v1833 = vld [vmem:[%s2 + $0x50] sm:$0xf]
        %v1834 = vld [vmem:[%s2 + $0x54] sm:$0xf]
        %v1835 = vld [vmem:[%s2 + $0x58] sm:$0xf]
        %v1836 = vld [vmem:[%s2 + $0x5c] sm:$0xf]
        %v1837 = vld [vmem:[%s2 + $0x60] sm:$0xf]
        %v1838 = vld [vmem:[%s2 + $0x64] sm:$0xf]
        %v1839 = vld [vmem:[%s2 + $0x68] sm:$0xf]
        %v1840 = vld [vmem:[%s2 + $0x6c] sm:$0xf]
        %v1841 = vld [vmem:[%s2 + $0x70] sm:$0xf]
        %v1842 = vld [vmem:[%s2 + $0x74] sm:$0xf]
        %v1843 = vld [vmem:[%s2 + $0x78] sm:$0xf]
        %v1844 = vld [vmem:[%s2 + $0x7c] sm:$0xf]
        %vm1845 = vsmask.f32 4352
        %v1847 = vshrl.u32 %v1693, 16
        %v1849 = vrot.slane %v1847, 3
        %v1850 = vshll.u32 %v1693, 16
        %v1852 = vrot.slane %v1850, 4
        %v1853 = vor.u32 %v1849, %v1852
        %v1855 = vshrl.u32 %v1694, 16
        %v1857 = vrot.slane %v1855, 3
        %v1858 = vshll.u32 %v1694, 16
        %v1860 = vrot.slane %v1858, 4
        %v1861 = vor.u32 %v1857, %v1860
        %v1862 = vsel %vm1845, %v1853, %v1861
        %v1864 = vshrl.u32 %v1749, 16
        %v1866 = vrot.slane %v1864, 3
        %v1867 = vshll.u32 %v1749, 16
        %v1869 = vrot.slane %v1867, 4
        %v1870 = vor.u32 %v1866, %v1869
        %v1872 = vshrl.u32 %v1758, 16
        %v1874 = vrot.slane %v1872, 3
        %v1875 = vshll.u32 %v1758, 16
        %v1877 = vrot.slane %v1875, 4
        %v1878 = vor.u32 %v1874, %v1877
        %v1879 = vsel %vm1845, %v1870, %v1878
        %v1881 = vshrl.u32 %v1695, 16
        %v1883 = vrot.slane %v1881, 3
        %v1884 = vshll.u32 %v1695, 16
        %v1886 = vrot.slane %v1884, 4
        %v1887 = vor.u32 %v1883, %v1886
        %v1888 = vsel %vm1845, %v1861, %v1887
        %v1890 = vshrl.u32 %v1767, 16
        %v1892 = vrot.slane %v1890, 3
        %v1893 = vshll.u32 %v1767, 16
        %v1895 = vrot.slane %v1893, 4
        %v1896 = vor.u32 %v1892, %v1895
        %v1897 = vsel %vm1845, %v1878, %v1896
        %v1899 = vshrl.u32 %v1696, 16
        %v1901 = vrot.slane %v1899, 3
        %v1902 = vshll.u32 %v1696, 16
        %v1904 = vrot.slane %v1902, 4
        %v1905 = vor.u32 %v1901, %v1904
        %v1906 = vsel %vm1845, %v1887, %v1905
        %v1908 = vshrl.u32 %v1776, 16
        %v1910 = vrot.slane %v1908, 3
        %v1911 = vshll.u32 %v1776, 16
        %v1913 = vrot.slane %v1911, 4
        %v1914 = vor.u32 %v1910, %v1913
        %v1915 = vsel %vm1845, %v1896, %v1914
        %v1917 = vshrl.u32 %v1697, 16
        %v1919 = vrot.slane %v1917, 3
        %v1920 = vshll.u32 %v1697, 16
        %v1922 = vrot.slane %v1920, 4
        %v1923 = vor.u32 %v1919, %v1922
        %v1924 = vsel %vm1845, %v1905, %v1923
        %v1926 = vshrl.u32 %v1785, 16
        %v1928 = vrot.slane %v1926, 3
        %v1929 = vshll.u32 %v1785, 16
        %v1931 = vrot.slane %v1929, 4
        %v1932 = vor.u32 %v1928, %v1931
        %v1933 = vsel %vm1845, %v1914, %v1932
        %v1935 = vshrl.u32 %v1698, 16
        %v1937 = vrot.slane %v1935, 3
        %v1938 = vshll.u32 %v1698, 16
        %v1940 = vrot.slane %v1938, 4
        %v1941 = vor.u32 %v1937, %v1940
        %v1942 = vsel %vm1845, %v1923, %v1941
        %v1944 = vshrl.u32 %v1794, 16
        %v1946 = vrot.slane %v1944, 3
        %v1947 = vshll.u32 %v1794, 16
        %v1949 = vrot.slane %v1947, 4
        %v1950 = vor.u32 %v1946, %v1949
        %v1951 = vsel %vm1845, %v1932, %v1950
        %v1953 = vshrl.u32 %v1699, 16
        %v1955 = vrot.slane %v1953, 3
        %v1956 = vshll.u32 %v1699, 16
        %v1958 = vrot.slane %v1956, 4
        %v1959 = vor.u32 %v1955, %v1958
        %v1960 = vsel %vm1845, %v1941, %v1959
        %v1962 = vshrl.u32 %v1803, 16
        %v1964 = vrot.slane %v1962, 3
        %v1965 = vshll.u32 %v1803, 16
        %v1967 = vrot.slane %v1965, 4
        %v1968 = vor.u32 %v1964, %v1967
        %v1969 = vsel %vm1845, %v1950, %v1968
        %v1971 = vshrl.u32 %v1700, 16
        %v1973 = vrot.slane %v1971, 3
        %v1974 = vshll.u32 %v1700, 16
        %v1976 = vrot.slane %v1974, 4
        %v1977 = vor.u32 %v1973, %v1976
        %v1978 = vsel %vm1845, %v1959, %v1977
        %v1980 = vshrl.u32 %v1812, 16
        %v1982 = vrot.slane %v1980, 3
        %v1983 = vshll.u32 %v1812, 16
        %v1985 = vrot.slane %v1983, 4
        %v1986 = vor.u32 %v1982, %v1985
        %v1987 = vsel %vm1845, %v1968, %v1986
        %v1989 = vshrl.u32 %v1701, 16
        %v1991 = vrot.slane %v1989, 3
        %v1992 = vshll.u32 %v1701, 16
        %v1994 = vrot.slane %v1992, 4
        %v1995 = vor.u32 %v1991, %v1994
        %v1996 = vsel %vm1845, %v1977, %v1995
        %v1998 = vshrl.u32 %v1811, 16
        %v2000 = vrot.slane %v1998, 3
        %v2001 = vshll.u32 %v1811, 16
        %v2003 = vrot.slane %v2001, 4
        %v2004 = vor.u32 %v2000, %v2003
        %v2005 = vsel %vm1845, %v1986, %v2004
        %v2054 = vunpack.c.l.b16 %v1813
        %v2055 = vunpack.c.l.b16 %v1814
        %v2056 = vunpack.c.l.b16 %v1815
        %v2057 = vunpack.c.l.b16 %v1816
        %v2058 = vunpack.c.l.b16 %v1817
        %v2059 = vunpack.c.l.b16 %v1818
        %v2060 = vunpack.c.l.b16 %v1819
        %v2061 = vunpack.c.l.b16 %v1820
        %v2062 = vunpack.c.l.b16 %v1821
        %v2063 = vunpack.c.l.b16 %v1822
        %v2064 = vunpack.c.l.b16 %v1823
        %v2065 = vunpack.c.l.b16 %v1824
        %v2066 = vunpack.c.l.b16 %v1825
        %v2067 = vunpack.c.l.b16 %v1826
        %v2068 = vunpack.c.l.b16 %v1827
        %v2069 = vunpack.c.l.b16 %v1828
        %v2070 = vunpack.c.l.b16 %v1829
        %v2071 = vunpack.c.l.b16 %v1830
        %v2072 = vunpack.c.l.b16 %v1831
        %v2073 = vunpack.c.l.b16 %v1832
        %v2074 = vunpack.c.l.b16 %v1833
        %v2075 = vunpack.c.l.b16 %v1834
        %v2076 = vunpack.c.l.b16 %v1835
        %v2077 = vunpack.c.l.b16 %v1836
        %v2078 = vunpack.c.l.b16 %v1837
        %v2079 = vunpack.c.l.b16 %v1838
        %v2080 = vunpack.c.l.b16 %v1839
        %v2081 = vunpack.c.l.b16 %v1840
        %v2082 = vunpack.c.l.b16 %v1841
        %v2083 = vunpack.c.l.b16 %v1842
        %v2084 = vunpack.c.l.b16 %v1843
        %v2085 = vunpack.c.l.b16 %v1844
        %v2086 = vpack.c.b16 %v2055, %v2054
        %v2087 = vpack.c.b16 %v2057, %v2056
        %v2088 = vpack.c.b16 %v2059, %v2058
        %v2089 = vpack.c.b16 %v2061, %v2060
        %v2090 = vpack.c.b16 %v2063, %v2062
        %v2091 = vpack.c.b16 %v2065, %v2064
        %v2092 = vpack.c.b16 %v2067, %v2066
        %v2093 = vpack.c.b16 %v2069, %v2068
        %v2094 = vpack.c.b16 %v2071, %v2070
        %v2095 = vpack.c.b16 %v2073, %v2072
        %v2096 = vpack.c.b16 %v2075, %v2074
        %v2097 = vpack.c.b16 %v2077, %v2076
        %v2098 = vpack.c.b16 %v2079, %v2078
        %v2099 = vpack.c.b16 %v2081, %v2080
        %v2100 = vpack.c.b16 %v2083, %v2082
        %v2101 = vpack.c.b16 %v2085, %v2084
        %2118 = vmatpush.bf16.msra.mxu0 %v2093
        %2119 = vmatpush.bf16.msra.mxu0 %v2092
        %2120 = vmatpush.bf16.msra.mxu0 %v2091
        %2121 = vmatpush.bf16.msra.mxu0 %v2090
        %2122 = vmatpush.bf16.msra.mxu0 %v2089
        %2123 = vmatpush.bf16.msra.mxu0 %v2088
        %2124 = vmatpush.bf16.msra.mxu0 %v2087
        %2125 = vmatpush.bf16.msra.mxu0 %v2086
        %2126 = vmatmul.bf16.gmra.mxu0 %v1862
        %v2127 = vpop.f32.mrf.mxu0
        %v2128 = vadd.f32 0.0, %v2127
        %v2129 = vpop.f32.mrf.mxu0
        %v2130 = vadd.f32 0.0, %v2129
        %2131 = vmatmul.bf16.gmra.mxu0 %v1888
        %v2132 = vpop.f32.mrf.mxu0
        %v2133 = vadd.f32 0.0, %v2132
        %v2134 = vpop.f32.mrf.mxu0
        %v2135 = vadd.f32 0.0, %v2134
        %2136 = vmatmul.bf16.gmra.mxu0 %v1906
        %v2137 = vpop.f32.mrf.mxu0
        %v2138 = vadd.f32 0.0, %v2137
        %v2139 = vpop.f32.mrf.mxu0
        %v2140 = vadd.f32 0.0, %v2139
        %2141 = vmatmul.bf16.gmra.mxu0 %v1924
        %v2142 = vpop.f32.mrf.mxu0
        %v2143 = vadd.f32 0.0, %v2142
        %v2144 = vpop.f32.mrf.mxu0
        %v2145 = vadd.f32 0.0, %v2144
        %2146 = vmatmul.bf16.gmra.mxu0 %v1942
        %v2147 = vpop.f32.mrf.mxu0
        %v2148 = vadd.f32 0.0, %v2147
        %v2149 = vpop.f32.mrf.mxu0
        %v2150 = vadd.f32 0.0, %v2149
        %2151 = vmatmul.bf16.gmra.mxu0 %v1960
        %v2152 = vpop.f32.mrf.mxu0
        %v2153 = vadd.f32 0.0, %v2152
        %v2154 = vpop.f32.mrf.mxu0
        %v2155 = vadd.f32 0.0, %v2154
        %2156 = vmatmul.bf16.gmra.mxu0 %v1978
        %v2157 = vpop.f32.mrf.mxu0
        %v2158 = vadd.f32 0.0, %v2157
        %v2159 = vpop.f32.mrf.mxu0
        %v2160 = vadd.f32 0.0, %v2159
        %2161 = vmatmul.bf16.gmra.mxu0 %v1996
        %v2162 = vpop.f32.mrf.mxu0
        %v2163 = vadd.f32 0.0, %v2162
        %v2164 = vpop.f32.mrf.mxu0
        %v2165 = vadd.f32 0.0, %v2164
        %2166 = vdwg.mxu0
        %2167 = vmatpush.bf16.msra.mxu0 %v2101
        %2168 = vmatpush.bf16.msra.mxu0 %v2100
        %2169 = vmatpush.bf16.msra.mxu0 %v2099
        %2170 = vmatpush.bf16.msra.mxu0 %v2098
        %2171 = vmatpush.bf16.msra.mxu0 %v2097
        %2172 = vmatpush.bf16.msra.mxu0 %v2096
        %2173 = vmatpush.bf16.msra.mxu0 %v2095
        %2174 = vmatpush.bf16.msra.mxu0 %v2094
        %2175 = vmatmul.bf16.gmra.mxu0 %v1879
        %v2176 = vpop.f32.mrf.mxu0
        %v2177 = vadd.f32 %v2128, %v2176
        %v2178 = vpop.f32.mrf.mxu0
        %v2179 = vadd.f32 %v2130, %v2178
        %2180 = vmatmul.bf16.gmra.mxu0 %v1897
        %v2181 = vpop.f32.mrf.mxu0
        %v2182 = vadd.f32 %v2133, %v2181
        %v2183 = vpop.f32.mrf.mxu0
        %v2184 = vadd.f32 %v2135, %v2183
        %2185 = vmatmul.bf16.gmra.mxu0 %v1915
        %v2186 = vpop.f32.mrf.mxu0
        %v2187 = vadd.f32 %v2138, %v2186
        %v2188 = vpop.f32.mrf.mxu0
        %v2189 = vadd.f32 %v2140, %v2188
        %2190 = vmatmul.bf16.gmra.mxu0 %v1933
        %v2191 = vpop.f32.mrf.mxu0
        %v2192 = vadd.f32 %v2143, %v2191
        %v2193 = vpop.f32.mrf.mxu0
        %v2194 = vadd.f32 %v2145, %v2193
        %2195 = vmatmul.bf16.gmra.mxu0 %v1951
        %v2196 = vpop.f32.mrf.mxu0
        %v2197 = vadd.f32 %v2148, %v2196
        %v2198 = vpop.f32.mrf.mxu0
        %v2199 = vadd.f32 %v2150, %v2198
        %2200 = vmatmul.bf16.gmra.mxu0 %v1969
        %v2201 = vpop.f32.mrf.mxu0
        %v2202 = vadd.f32 %v2153, %v2201
        %v2203 = vpop.f32.mrf.mxu0
        %v2204 = vadd.f32 %v2155, %v2203
        %2205 = vmatmul.bf16.gmra.mxu0 %v1987
        %v2206 = vpop.f32.mrf.mxu0
        %v2207 = vadd.f32 %v2158, %v2206
        %v2208 = vpop.f32.mrf.mxu0
        %v2209 = vadd.f32 %v2160, %v2208
        %2210 = vmatmul.bf16.gmra.mxu0 %v2005
        %v2211 = vpop.f32.mrf.mxu0
        %v2212 = vadd.f32 %v2163, %v2211
        %v2213 = vpop.f32.mrf.mxu0
        %v2214 = vadd.f32 %v2165, %v2213
        %2215 = vdwg.mxu0
        %v2218 = vunpack.c.l.b16 %v1276
        %v2219 = vunpack.c.l.b16 %v1277
        %v2220 = vpack.c.b16 %v2219, %v2218
        %v2245 = vunpack.c.l.b16 %v1278
        %v2246 = vunpack.c.l.b16 %v1279
        %v2247 = vunpack.c.l.b16 %v1280
        %v2248 = vunpack.c.l.b16 %v1281
        %v2249 = vunpack.c.l.b16 %v1282
        %v2250 = vunpack.c.l.b16 %v1283
        %v2251 = vunpack.c.l.b16 %v1284
        %v2252 = vunpack.c.l.b16 %v1285
        %v2253 = vunpack.c.l.b16 %v1286
        %v2254 = vunpack.c.l.b16 %v1287
        %v2255 = vunpack.c.l.b16 %v1288
        %v2256 = vunpack.c.l.b16 %v1289
        %v2257 = vunpack.c.l.b16 %v1290
        %v2258 = vunpack.c.l.b16 %v1291
        %v2259 = vunpack.c.l.b16 %v1292
        %v2260 = vunpack.c.l.b16 %v1293
        %v2261 = vpack.c.b16 %v2246, %v2245
        %v2262 = vpack.c.b16 %v2248, %v2247
        %v2263 = vpack.c.b16 %v2250, %v2249
        %v2264 = vpack.c.b16 %v2252, %v2251
        %v2265 = vpack.c.b16 %v2254, %v2253
        %v2266 = vpack.c.b16 %v2256, %v2255
        %v2267 = vpack.c.b16 %v2258, %v2257
        %v2268 = vpack.c.b16 %v2260, %v2259
        %2277 = vmatpush.bf16.msra.mxu0 %v2268
        %2278 = vmatpush.bf16.msra.mxu0 %v2267
        %2279 = vmatpush.bf16.msra.mxu0 %v2266
        %2280 = vmatpush.bf16.msra.mxu0 %v2265
        %2281 = vmatpush.bf16.msra.mxu0 %v2264
        %2282 = vmatpush.bf16.msra.mxu0 %v2263
        %2283 = vmatpush.bf16.msra.mxu0 %v2262
        %2284 = vmatpush.bf16.msra.mxu0 %v2261
        %2285 = vmatmul.bf16.gmra.mxu0 %v1735
        %v2286 = vpop.f32.mrf.mxu0
        %v2287 = vadd.f32 %v2177, %v2286
        %v2288 = vpop.f32.mrf.mxu0
        %v2289 = vadd.f32 %v2179, %v2288
        %2290 = vmatmul.bf16.gmra.mxu0 %v1736
        %v2291 = vpop.f32.mrf.mxu0
        %v2292 = vadd.f32 %v2182, %v2291
        %v2293 = vpop.f32.mrf.mxu0
        %v2294 = vadd.f32 %v2184, %v2293
        %2295 = vmatmul.bf16.gmra.mxu0 %v1737
        %v2296 = vpop.f32.mrf.mxu0
        %v2297 = vadd.f32 %v2187, %v2296
        %v2298 = vpop.f32.mrf.mxu0
        %v2299 = vadd.f32 %v2189, %v2298
        %2300 = vmatmul.bf16.gmra.mxu0 %v1738
        %v2301 = vpop.f32.mrf.mxu0
        %v2302 = vadd.f32 %v2192, %v2301
        %v2303 = vpop.f32.mrf.mxu0
        %v2304 = vadd.f32 %v2194, %v2303
        %2305 = vmatmul.bf16.gmra.mxu0 %v1739
        %v2306 = vpop.f32.mrf.mxu0
        %v2307 = vadd.f32 %v2197, %v2306
        %v2308 = vpop.f32.mrf.mxu0
        %v2309 = vadd.f32 %v2199, %v2308
        %2310 = vmatmul.bf16.gmra.mxu0 %v1740
        %v2311 = vpop.f32.mrf.mxu0
        %v2312 = vadd.f32 %v2202, %v2311
        %v2313 = vpop.f32.mrf.mxu0
        %v2314 = vadd.f32 %v2204, %v2313
        %2315 = vmatmul.bf16.gmra.mxu0 %v1741
        %v2316 = vpop.f32.mrf.mxu0
        %v2317 = vadd.f32 %v2207, %v2316
        %v2318 = vpop.f32.mrf.mxu0
        %v2319 = vadd.f32 %v2209, %v2318
        %2320 = vmatmul.bf16.gmra.mxu0 %v2220
        %v2321 = vpop.f32.mrf.mxu0
        %v2322 = vadd.f32 %v2212, %v2321
        %v2323 = vpop.f32.mrf.mxu0
        %v2324 = vadd.f32 %v2214, %v2323
        %2325 = vdwg.mxu0
        %v2326 = vld [vmem:[#allocation3 + $0x8] sm:$0xf]
        %v2327 = vld [vmem:[#allocation3 + $0xc] sm:$0xf]
        %v2328 = vld [vmem:[#allocation3 + $0x10] sm:$0xf]
        %v2329 = vld [vmem:[#allocation3 + $0x14] sm:$0xf]
        %v2330 = vld [vmem:[#allocation3 + $0x18] sm:$0xf]
        %v2331 = vld [vmem:[#allocation3 + $0x1c] sm:$0xf]
        %v2332 = vld [vmem:[#allocation3 + $0x20] sm:$0xf]
        %v2333 = vld [vmem:[#allocation3 + $0x24] sm:$0xf]
        %v2334 = vld [vmem:[#allocation3 + $0x28] sm:$0xf]
        %v2335 = vld [vmem:[#allocation3 + $0x2c] sm:$0xf]
        %v2336 = vld [vmem:[#allocation3 + $0x30] sm:$0xf]
        %v2337 = vld [vmem:[#allocation3 + $0x34] sm:$0xf]
        %v2338 = vld [vmem:[#allocation3 + $0x38] sm:$0xf]
        %v2339 = vld [vmem:[#allocation3 + $0x3c] sm:$0xf]
        %v2340 = vld [vmem:[#allocation3 + $0x40] sm:$0xf]
        %v2341 = vld [vmem:[#allocation3 + $0x44] sm:$0xf]
        %v2342 = vld [vmem:[#allocation3 + $0x48] sm:$0x1]
        %v2343 = vsel %vm1246, 1, 0
        %v2344 = vsel %vm1247, 1, 0
        %v2345 = vsel %vm1248, 1, 0
        %v2346 = vsel %vm1249, 1, 0
        %v2347 = vsel %vm1250, 1, 0
        %v2348 = vsel %vm1251, 1, 0
        %v2349 = vsel %vm1252, 1, 0
        %v2350 = vsel %vm1253, 1, 0
        %v2351 = vsel %vm1254, 1, 0
        %v2352 = vsel %vm1255, 1, 0
        %v2353 = vsel %vm1256, 1, 0
        %v2354 = vsel %vm1257, 1, 0
        %v2355 = vsel %vm1258, 1, 0
        %v2356 = vsel %vm1259, 1, 0
        %v2357 = vsel %vm1260, 1, 0
        %v2358 = vsel %vm1261, 1, 0
        %vm2359 = vcmp.eq.s32.totalorder %v2343, 1
        %vm2360 = vcmp.eq.s32.totalorder %v2344, 1
        %vm2361 = vcmp.eq.s32.totalorder %v2345, 1
        %vm2362 = vcmp.eq.s32.totalorder %v2346, 1
        %vm2363 = vcmp.eq.s32.totalorder %v2347, 1
        %vm2364 = vcmp.eq.s32.totalorder %v2348, 1
        %vm2365 = vcmp.eq.s32.totalorder %v2349, 1
        %vm2366 = vcmp.eq.s32.totalorder %v2350, 1
        %vm2367 = vcmp.eq.s32.totalorder %v2351, 1
        %vm2368 = vcmp.eq.s32.totalorder %v2352, 1
        %vm2369 = vcmp.eq.s32.totalorder %v2353, 1
        %vm2370 = vcmp.eq.s32.totalorder %v2354, 1
        %vm2371 = vcmp.eq.s32.totalorder %v2355, 1
        %vm2372 = vcmp.eq.s32.totalorder %v2356, 1
        %vm2373 = vcmp.eq.s32.totalorder %v2357, 1
        %vm2374 = vcmp.eq.s32.totalorder %v2358, 1
        %vm2375 = vmpackc.low %vm2359, %vm2359
        %vm2376 = vmpackc.low %vm2360, %vm2360
        %vm2377 = vmpackc.low %vm2361, %vm2361
        %vm2378 = vmpackc.low %vm2362, %vm2362
        %vm2379 = vmpackc.low %vm2363, %vm2363
        %vm2380 = vmpackc.low %vm2364, %vm2364
        %vm2381 = vmpackc.low %vm2365, %vm2365
        %vm2382 = vmpackc.low %vm2366, %vm2366
        %vm2383 = vmpackc.low %vm2367, %vm2367
        %vm2384 = vmpackc.low %vm2368, %vm2368
        %vm2385 = vmpackc.low %vm2369, %vm2369
        %vm2386 = vmpackc.low %vm2370, %vm2370
        %vm2387 = vmpackc.low %vm2371, %vm2371
        %vm2388 = vmpackc.low %vm2372, %vm2372
        %vm2389 = vmpackc.low %vm2373, %vm2373
        %vm2390 = vmpackc.low %vm2374, %vm2374
        %v2391 = vsel %vm2375, 65537, 0
        %v2392 = vsel %vm2376, 65537, 0
        %v2393 = vsel %vm2377, 65537, 0
        %v2394 = vsel %vm2378, 65537, 0
        %v2395 = vsel %vm2379, 65537, 0
        %v2396 = vsel %vm2380, 65537, 0
        %v2397 = vsel %vm2381, 65537, 0
        %v2398 = vsel %vm2382, 65537, 0
        %v2399 = vsel %vm2383, 65537, 0
        %v2400 = vsel %vm2384, 65537, 0
        %v2401 = vsel %vm2385, 65537, 0
        %v2402 = vsel %vm2386, 65537, 0
        %v2403 = vsel %vm2387, 65537, 0
        %v2404 = vsel %vm2388, 65537, 0
        %v2405 = vsel %vm2389, 65537, 0
        %v2406 = vsel %vm2390, 65537, 0
        %vm2407 = vsmask.f32 256
        %vm2408 = vsmask.f32 4368
        %vm2409 = vmor %vm2407, %vm2408
        %v2411 = vshrl.u32 %v2391, 16
        %v2413 = vrot.slane %v2411, 7
        %v2414 = vshll.u32 %v2391, 16
        %v2416 = vor.u32 %v2413, %v2414
        %v2417 = vrot.slane %v2413, 4
        %v2419 = vshrl.u32 %v2392, 16
        %v2421 = vrot.slane %v2419, 7
        %v2422 = vshll.u32 %v2392, 16
        %v2424 = vor.u32 %v2421, %v2422
        %v2425 = vsel %vm2409, %v2417, %v2424
        %v2426 = vrot.slane %v2421, 4
        %v2428 = vshrl.u32 %v2393, 16
        %v2430 = vrot.slane %v2428, 7
        %v2431 = vshll.u32 %v2393, 16
        %v2433 = vor.u32 %v2430, %v2431
        %v2434 = vsel %vm2409, %v2426, %v2433
        %v2435 = vrot.slane %v2430, 4
        %v2437 = vshrl.u32 %v2394, 16
        %v2439 = vrot.slane %v2437, 7
        %v2440 = vshll.u32 %v2394, 16
        %v2442 = vor.u32 %v2439, %v2440
        %v2443 = vsel %vm2409, %v2435, %v2442
        %v2444 = vrot.slane %v2439, 4
        %v2446 = vshrl.u32 %v2395, 16
        %v2448 = vrot.slane %v2446, 7
        %v2449 = vshll.u32 %v2395, 16
        %v2451 = vor.u32 %v2448, %v2449
        %v2452 = vsel %vm2409, %v2444, %v2451
        %v2453 = vrot.slane %v2448, 4
        %v2455 = vshrl.u32 %v2396, 16
        %v2457 = vrot.slane %v2455, 7
        %v2458 = vshll.u32 %v2396, 16
        %v2460 = vor.u32 %v2457, %v2458
        %v2461 = vsel %vm2409, %v2453, %v2460
        %v2462 = vrot.slane %v2457, 4
        %v2464 = vshrl.u32 %v2397, 16
        %v2466 = vrot.slane %v2464, 7
        %v2467 = vshll.u32 %v2397, 16
        %v2469 = vor.u32 %v2466, %v2467
        %v2470 = vsel %vm2409, %v2462, %v2469
        %v2471 = vrot.slane %v2466, 4
        %v2473 = vshrl.u32 %v2398, 16
        %v2475 = vrot.slane %v2473, 7
        %v2476 = vshll.u32 %v2398, 16
        %v2478 = vor.u32 %v2475, %v2476
        %v2479 = vsel %vm2409, %v2471, %v2478
        %v2480 = vrot.slane %v2475, 4
        %v2482 = vshrl.u32 %v2399, 16
        %v2484 = vrot.slane %v2482, 7
        %v2485 = vshll.u32 %v2399, 16
        %v2487 = vor.u32 %v2484, %v2485
        %v2488 = vsel %vm2409, %v2480, %v2487
        %v2489 = vrot.slane %v2484, 4
        %v2491 = vshrl.u32 %v2400, 16
        %v2493 = vrot.slane %v2491, 7
        %v2494 = vshll.u32 %v2400, 16
        %v2496 = vor.u32 %v2493, %v2494
        %v2497 = vsel %vm2409, %v2489, %v2496
        %v2498 = vrot.slane %v2493, 4
        %v2500 = vshrl.u32 %v2401, 16
        %v2502 = vrot.slane %v2500, 7
        %v2503 = vshll.u32 %v2401, 16
        %v2505 = vor.u32 %v2502, %v2503
        %v2506 = vsel %vm2409, %v2498, %v2505
        %v2507 = vrot.slane %v2502, 4
        %v2509 = vshrl.u32 %v2402, 16
        %v2511 = vrot.slane %v2509, 7
        %v2512 = vshll.u32 %v2402, 16
        %v2514 = vor.u32 %v2511, %v2512
        %v2515 = vsel %vm2409, %v2507, %v2514
        %v2516 = vrot.slane %v2511, 4
        %v2518 = vshrl.u32 %v2403, 16
        %v2520 = vrot.slane %v2518, 7
        %v2521 = vshll.u32 %v2403, 16
        %v2523 = vor.u32 %v2520, %v2521
        %v2524 = vsel %vm2409, %v2516, %v2523
        %v2525 = vrot.slane %v2520, 4
        %v2527 = vshrl.u32 %v2404, 16
        %v2529 = vrot.slane %v2527, 7
        %v2530 = vshll.u32 %v2404, 16
        %v2532 = vor.u32 %v2529, %v2530
        %v2533 = vsel %vm2409, %v2525, %v2532
        %v2534 = vrot.slane %v2529, 4
        %v2536 = vshrl.u32 %v2405, 16
        %v2538 = vrot.slane %v2536, 7
        %v2539 = vshll.u32 %v2405, 16
        %v2541 = vor.u32 %v2538, %v2539
        %v2542 = vsel %vm2409, %v2534, %v2541
        %v2543 = vrot.slane %v2538, 4
        %v2545 = vshrl.u32 %v2406, 16
        %v2547 = vrot.slane %v2545, 7
        %v2548 = vshll.u32 %v2406, 16
        %v2550 = vor.u32 %v2547, %v2548
        %v2551 = vsel %vm2409, %v2543, %v2550
        %v2552 = vrot.slane %v2547, 4
        %v2553 = vunpack.c.l.b16 %v2416
        %v2554 = vunpack.c.h.b16 %v2416
        %v2555 = vunpack.c.l.b16 0
        %v2556 = vunpack.c.h.b16 0
        %vm2557 = vcmp.ne.s32.totalorder %v2553, %v2555
        %vm2558 = vcmp.ne.s32.totalorder %v2554, %v2556
        %vm2559 = vmpackc.low %vm2558, %vm2557
        %v2560 = vunpack.c.l.b16 %v2425
        %v2561 = vunpack.c.h.b16 %v2425
        %v2562 = vunpack.c.l.b16 0
        %v2563 = vunpack.c.h.b16 0
        %vm2564 = vcmp.ne.s32.totalorder %v2560, %v2562
        %vm2565 = vcmp.ne.s32.totalorder %v2561, %v2563
        %vm2566 = vmpackc.low %vm2565, %vm2564
        %v2567 = vunpack.c.l.b16 %v2434
        %v2568 = vunpack.c.h.b16 %v2434
        %v2569 = vunpack.c.l.b16 0
        %v2570 = vunpack.c.h.b16 0
        %vm2571 = vcmp.ne.s32.totalorder %v2567, %v2569
        %vm2572 = vcmp.ne.s32.totalorder %v2568, %v2570
        %vm2573 = vmpackc.low %vm2572, %vm2571
        %v2574 = vunpack.c.l.b16 %v2443
        %v2575 = vunpack.c.h.b16 %v2443
        %v2576 = vunpack.c.l.b16 0
        %v2577 = vunpack.c.h.b16 0
        %vm2578 = vcmp.ne.s32.totalorder %v2574, %v2576
        %vm2579 = vcmp.ne.s32.totalorder %v2575, %v2577
        %vm2580 = vmpackc.low %vm2579, %vm2578
        %v2581 = vunpack.c.l.b16 %v2452
        %v2582 = vunpack.c.h.b16 %v2452
        %v2583 = vunpack.c.l.b16 0
        %v2584 = vunpack.c.h.b16 0
        %vm2585 = vcmp.ne.s32.totalorder %v2581, %v2583
        %vm2586 = vcmp.ne.s32.totalorder %v2582, %v2584
        %vm2587 = vmpackc.low %vm2586, %vm2585
        %v2588 = vunpack.c.l.b16 %v2461
        %v2589 = vunpack.c.h.b16 %v2461
        %v2590 = vunpack.c.l.b16 0
        %v2591 = vunpack.c.h.b16 0
        %vm2592 = vcmp.ne.s32.totalorder %v2588, %v2590
        %vm2593 = vcmp.ne.s32.totalorder %v2589, %v2591
        %vm2594 = vmpackc.low %vm2593, %vm2592
        %v2595 = vunpack.c.l.b16 %v2470
        %v2596 = vunpack.c.h.b16 %v2470
        %v2597 = vunpack.c.l.b16 0
        %v2598 = vunpack.c.h.b16 0
        %vm2599 = vcmp.ne.s32.totalorder %v2595, %v2597
        %vm2600 = vcmp.ne.s32.totalorder %v2596, %v2598
        %vm2601 = vmpackc.low %vm2600, %vm2599
        %v2602 = vunpack.c.l.b16 %v2479
        %v2603 = vunpack.c.h.b16 %v2479
        %v2604 = vunpack.c.l.b16 0
        %v2605 = vunpack.c.h.b16 0
        %vm2606 = vcmp.ne.s32.totalorder %v2602, %v2604
        %vm2607 = vcmp.ne.s32.totalorder %v2603, %v2605
        %vm2608 = vmpackc.low %vm2607, %vm2606
        %v2609 = vunpack.c.l.b16 %v2488
        %v2610 = vunpack.c.h.b16 %v2488
        %v2611 = vunpack.c.l.b16 0
        %v2612 = vunpack.c.h.b16 0
        %vm2613 = vcmp.ne.s32.totalorder %v2609, %v2611
        %vm2614 = vcmp.ne.s32.totalorder %v2610, %v2612
        %vm2615 = vmpackc.low %vm2614, %vm2613
        %v2616 = vunpack.c.l.b16 %v2497
        %v2617 = vunpack.c.h.b16 %v2497
        %v2618 = vunpack.c.l.b16 0
        %v2619 = vunpack.c.h.b16 0
        %vm2620 = vcmp.ne.s32.totalorder %v2616, %v2618
        %vm2621 = vcmp.ne.s32.totalorder %v2617, %v2619
        %vm2622 = vmpackc.low %vm2621, %vm2620
        %v2623 = vunpack.c.l.b16 %v2506
        %v2624 = vunpack.c.h.b16 %v2506
        %v2625 = vunpack.c.l.b16 0
        %v2626 = vunpack.c.h.b16 0
        %vm2627 = vcmp.ne.s32.totalorder %v2623, %v2625
        %vm2628 = vcmp.ne.s32.totalorder %v2624, %v2626
        %vm2629 = vmpackc.low %vm2628, %vm2627
        %v2630 = vunpack.c.l.b16 %v2515
        %v2631 = vunpack.c.h.b16 %v2515
        %v2632 = vunpack.c.l.b16 0
        %v2633 = vunpack.c.h.b16 0
        %vm2634 = vcmp.ne.s32.totalorder %v2630, %v2632
        %vm2635 = vcmp.ne.s32.totalorder %v2631, %v2633
        %vm2636 = vmpackc.low %vm2635, %vm2634
        %v2637 = vunpack.c.l.b16 %v2524
        %v2638 = vunpack.c.h.b16 %v2524
        %v2639 = vunpack.c.l.b16 0
        %v2640 = vunpack.c.h.b16 0
        %vm2641 = vcmp.ne.s32.totalorder %v2637, %v2639
        %vm2642 = vcmp.ne.s32.totalorder %v2638, %v2640
        %vm2643 = vmpackc.low %vm2642, %vm2641
        %v2644 = vunpack.c.l.b16 %v2533
        %v2645 = vunpack.c.h.b16 %v2533
        %v2646 = vunpack.c.l.b16 0
        %v2647 = vunpack.c.h.b16 0
        %vm2648 = vcmp.ne.s32.totalorder %v2644, %v2646
        %vm2649 = vcmp.ne.s32.totalorder %v2645, %v2647
        %vm2650 = vmpackc.low %vm2649, %vm2648
        %v2651 = vunpack.c.l.b16 %v2542
        %v2652 = vunpack.c.h.b16 %v2542
        %v2653 = vunpack.c.l.b16 0
        %v2654 = vunpack.c.h.b16 0
        %vm2655 = vcmp.ne.s32.totalorder %v2651, %v2653
        %vm2656 = vcmp.ne.s32.totalorder %v2652, %v2654
        %vm2657 = vmpackc.low %vm2656, %vm2655
        %v2658 = vunpack.c.l.b16 %v2551
        %v2659 = vunpack.c.h.b16 %v2551
        %v2660 = vunpack.c.l.b16 0
        %v2661 = vunpack.c.h.b16 0
        %vm2662 = vcmp.ne.s32.totalorder %v2658, %v2660
        %vm2663 = vcmp.ne.s32.totalorder %v2659, %v2661
        %vm2664 = vmpackc.low %vm2663, %vm2662
        %v2665 = vunpack.c.l.b16 %v2552
        %v2666 = vunpack.c.h.b16 %v2552
        %v2667 = vunpack.c.l.b16 0
        %v2668 = vunpack.c.h.b16 0
        %vm2669 = vcmp.ne.s32.totalorder %v2665, %v2667
        %vm2670 = vcmp.ne.s32.totalorder %v2666, %v2668
        %vm2671 = vmpackc.low %vm2670, %vm2669
        %v2672 = vsel %vm2559, %v2326, 0
        %v2673 = vsel %vm2566, %v2327, 0
        %v2674 = vsel %vm2573, %v2328, 0
        %v2675 = vsel %vm2580, %v2329, 0
        %v2676 = vsel %vm2587, %v2330, 0
        %v2677 = vsel %vm2594, %v2331, 0
        %v2678 = vsel %vm2601, %v2332, 0
        %v2679 = vsel %vm2608, %v2333, 0
        %v2680 = vsel %vm2615, %v2334, 0
        %v2681 = vsel %vm2622, %v2335, 0
        %v2682 = vsel %vm2629, %v2336, 0
        %v2683 = vsel %vm2636, %v2337, 0
        %v2684 = vsel %vm2643, %v2338, 0
        %v2685 = vsel %vm2650, %v2339, 0
        %v2686 = vsel %vm2657, %v2340, 0
        %v2687 = vsel %vm2664, %v2341, 0
        %v2688 = vsel %vm2671, %v2342, 0
        %v2689 = vld [vmem:[#allocation3 + $0xc] sm:$0x8]
        %v2690 = vsel %vm1529, %v2689, 0
        %v2691 = vsel %vm1536, %v1262, 0
        %v2692 = vsel %vm1543, %v1263, 0
        %v2693 = vsel %vm1550, %v1264, 0
        %v2694 = vsel %vm1557, %v1265, 0
        %v2695 = vsel %vm1564, %v1266, 0
        %v2696 = vsel %vm1571, %v1267, 0
        %v2697 = vsel %vm1578, %v1268, 0
        %v2698 = vsel %vm1585, %v1269, 0
        %v2699 = vsel %vm1592, %v1270, 0
        %v2700 = vsel %vm1599, %v1271, 0
        %v2701 = vsel %vm1606, %v1272, 0
        %v2702 = vsel %vm1613, %v1273, 0
        %v2703 = vsel %vm1620, %v1274, 0
        %v2704 = vsel %vm1627, %v1275, 0
        %v2705 = vsel %vm1634, %v1276, 0
        %v2706 = vsel %vm1641, %v1277, 0
        %v2724 = vunpack.c.l.b16 %v2672
        %v2725 = vunpack.c.l.b16 %v2673
        %v2726 = vunpack.c.l.b16 %v2674
        %v2727 = vunpack.c.l.b16 %v2675
        %v2728 = vunpack.c.l.b16 %v2676
        %v2729 = vunpack.c.l.b16 %v2677
        %v2730 = vunpack.c.l.b16 %v2678
        %v2731 = vunpack.c.l.b16 %v2679
        %v2732 = vunpack.c.l.b16 %v2680
        %v2733 = vunpack.c.l.b16 %v2681
        %v2734 = vunpack.c.l.b16 %v2682
        %v2735 = vunpack.c.l.b16 %v2683
        %v2736 = vunpack.c.l.b16 %v2684
        %v2737 = vunpack.c.l.b16 %v2685
        %v2738 = vunpack.c.l.b16 %v2686
        %v2739 = vunpack.c.l.b16 %v2687
        %v2740 = vunpack.c.l.b16 %v2688
        %v2741 = vpack.c.b16 %v2725, %v2724
        %v2742 = vpack.c.b16 %v2727, %v2726
        %v2743 = vpack.c.b16 %v2729, %v2728
        %v2744 = vpack.c.b16 %v2731, %v2730
        %v2745 = vpack.c.b16 %v2733, %v2732
        %v2746 = vpack.c.b16 %v2735, %v2734
        %v2747 = vpack.c.b16 %v2737, %v2736
        %v2748 = vpack.c.b16 %v2739, %v2738
        %v2749 = vpack.c.b16 %v2740, %v2740
        %v2767 = vunpack.c.l.b16 %v2690
        %v2768 = vunpack.c.l.b16 %v2691
        %v2769 = vunpack.c.l.b16 %v2692
        %v2770 = vunpack.c.l.b16 %v2693
        %v2771 = vunpack.c.l.b16 %v2694
        %v2772 = vunpack.c.l.b16 %v2695
        %v2773 = vunpack.c.l.b16 %v2696
        %v2774 = vunpack.c.l.b16 %v2697
        %v2775 = vunpack.c.l.b16 %v2698
        %v2776 = vunpack.c.l.b16 %v2699
        %v2777 = vunpack.c.l.b16 %v2700
        %v2778 = vunpack.c.l.b16 %v2701
        %v2779 = vunpack.c.l.b16 %v2702
        %v2780 = vunpack.c.l.b16 %v2703
        %v2781 = vunpack.c.l.b16 %v2704
        %v2782 = vunpack.c.l.b16 %v2705
        %v2783 = vunpack.c.l.b16 %v2706
        %v2784 = vpack.c.b16 %v2768, %v2767
        %v2785 = vpack.c.b16 %v2770, %v2769
        %v2786 = vpack.c.b16 %v2772, %v2771
        %v2787 = vpack.c.b16 %v2774, %v2773
        %v2788 = vpack.c.b16 %v2776, %v2775
        %v2789 = vpack.c.b16 %v2778, %v2777
        %v2790 = vpack.c.b16 %v2780, %v2779
        %v2791 = vpack.c.b16 %v2782, %v2781
        %v2792 = vpack.c.b16 %v2783, %v2783
        %vm2793 = vcmask 1044480
        %v2794 = vrot.slane %v2784, 3
        %v2795 = vrot.slane %v2785, 3
        %v2796 = vsel %vm2793, %v2794, %v2795
        %v2797 = vrot.slane %v2786, 3
        %v2798 = vsel %vm2793, %v2795, %v2797
        %v2799 = vrot.slane %v2787, 3
        %v2800 = vsel %vm2793, %v2797, %v2799
        %v2801 = vrot.slane %v2788, 3
        %v2802 = vsel %vm2793, %v2799, %v2801
        %v2803 = vrot.slane %v2789, 3
        %v2804 = vsel %vm2793, %v2801, %v2803
        %v2805 = vrot.slane %v2790, 3
        %v2806 = vsel %vm2793, %v2803, %v2805
        %v2807 = vrot.slane %v2791, 3
        %v2808 = vsel %vm2793, %v2805, %v2807
        %v2809 = vrot.slane %v2792, 3
        %v2810 = vsel %vm2793, %v2807, %v2809
        %s2811 = scalar_lea.vmem %s2, 128
        %v2812 = vld [vmem:[%s2811] sm:$0xf]
        %v2813 = vld [vmem:[%s2811 + $0x4] sm:$0xf]
        %v2814 = vld [vmem:[%s2811 + $0x8] sm:$0xf]
        %v2815 = vld [vmem:[%s2811 + $0xc] sm:$0xf]
        %v2816 = vld [vmem:[%s2811 + $0x10] sm:$0xf]
        %v2817 = vld [vmem:[%s2811 + $0x14] sm:$0xf]
        %v2818 = vld [vmem:[%s2811 + $0x18] sm:$0xf]
        %v2819 = vld [vmem:[%s2811 + $0x1c] sm:$0xf]
        %v2820 = vld [vmem:[%s2811 + $0x20] sm:$0xf]
        %v2821 = vld [vmem:[%s2811 + $0x24] sm:$0xf]
        %v2822 = vld [vmem:[%s2811 + $0x28] sm:$0xf]
        %v2823 = vld [vmem:[%s2811 + $0x2c] sm:$0xf]
        %v2824 = vld [vmem:[%s2811 + $0x30] sm:$0xf]
        %v2825 = vld [vmem:[%s2811 + $0x34] sm:$0xf]
        %v2826 = vld [vmem:[%s2811 + $0x38] sm:$0xf]
        %v2827 = vld [vmem:[%s2811 + $0x3c] sm:$0xf]
        %v2828 = vld [vmem:[%s2811 + $0x40] sm:$0xf]
        %v2829 = vld [vmem:[%s2811 + $0x44] sm:$0xf]
        %v2830 = vld [vmem:[%s2811 + $0x48] sm:$0xf]
        %v2831 = vld [vmem:[%s2811 + $0x4c] sm:$0xf]
        %v2832 = vld [vmem:[%s2811 + $0x50] sm:$0xf]
        %v2833 = vld [vmem:[%s2811 + $0x54] sm:$0xf]
        %v2834 = vld [vmem:[%s2811 + $0x58] sm:$0xf]
        %v2835 = vld [vmem:[%s2811 + $0x5c] sm:$0xf]
        %v2836 = vld [vmem:[%s2811 + $0x60] sm:$0xf]
        %v2837 = vld [vmem:[%s2811 + $0x64] sm:$0xf]
        %v2838 = vld [vmem:[%s2811 + $0x68] sm:$0xf]
        %v2839 = vld [vmem:[%s2811 + $0x6c] sm:$0xf]
        %v2840 = vld [vmem:[%s2811 + $0x70] sm:$0xf]
        %v2841 = vld [vmem:[%s2811 + $0x74] sm:$0xf]
        %v2842 = vld [vmem:[%s2811 + $0x78] sm:$0xf]
        %v2843 = vld [vmem:[%s2811 + $0x7c] sm:$0xf]
        %vm2844 = vsmask.f32 7424
        %v2846 = vshrl.u32 %v2741, 16
        %v2848 = vshll.u32 %v2741, 16
        %v2850 = vrot.slane %v2848, 1
        %v2851 = vor.u32 %v2846, %v2850
        %v2853 = vshll.u32 %v2742, 16
        %v2855 = vrot.slane %v2853, 1
        %v2856 = vsel %vm2844, %v2851, %v2855
        %v2858 = vshrl.u32 %v2796, 16
        %v2860 = vshll.u32 %v2796, 16
        %v2862 = vrot.slane %v2860, 1
        %v2863 = vor.u32 %v2858, %v2862
        %v2865 = vshll.u32 %v2798, 16
        %v2867 = vrot.slane %v2865, 1
        %v2868 = vsel %vm2844, %v2863, %v2867
        %v2869 = vshrl.u32 %v2742, 16
        %v2871 = vor.u32 %v2869, %v2855
        %v2873 = vshll.u32 %v2743, 16
        %v2875 = vrot.slane %v2873, 1
        %v2876 = vsel %vm2844, %v2871, %v2875
        %v2877 = vshrl.u32 %v2798, 16
        %v2879 = vor.u32 %v2877, %v2867
        %v2881 = vshll.u32 %v2800, 16
        %v2883 = vrot.slane %v2881, 1
        %v2884 = vsel %vm2844, %v2879, %v2883
        %v2885 = vshrl.u32 %v2743, 16
        %v2887 = vor.u32 %v2885, %v2875
        %v2889 = vshll.u32 %v2744, 16
        %v2891 = vrot.slane %v2889, 1
        %v2892 = vsel %vm2844, %v2887, %v2891
        %v2893 = vshrl.u32 %v2800, 16
        %v2895 = vor.u32 %v2893, %v2883
        %v2897 = vshll.u32 %v2802, 16
        %v2899 = vrot.slane %v2897, 1
        %v2900 = vsel %vm2844, %v2895, %v2899
        %v2901 = vshrl.u32 %v2744, 16
        %v2903 = vor.u32 %v2901, %v2891
        %v2905 = vshll.u32 %v2745, 16
        %v2907 = vrot.slane %v2905, 1
        %v2908 = vsel %vm2844, %v2903, %v2907
        %v2909 = vshrl.u32 %v2802, 16
        %v2911 = vor.u32 %v2909, %v2899
        %v2913 = vshll.u32 %v2804, 16
        %v2915 = vrot.slane %v2913, 1
        %v2916 = vsel %vm2844, %v2911, %v2915
        %v2917 = vshrl.u32 %v2745, 16
        %v2919 = vor.u32 %v2917, %v2907
        %v2921 = vshll.u32 %v2746, 16
        %v2923 = vrot.slane %v2921, 1
        %v2924 = vsel %vm2844, %v2919, %v2923
        %v2925 = vshrl.u32 %v2804, 16
        %v2927 = vor.u32 %v2925, %v2915
        %v2929 = vshll.u32 %v2806, 16
        %v2931 = vrot.slane %v2929, 1
        %v2932 = vsel %vm2844, %v2927, %v2931
        %v2933 = vshrl.u32 %v2746, 16
        %v2935 = vor.u32 %v2933, %v2923
        %v2937 = vshll.u32 %v2747, 16
        %v2939 = vrot.slane %v2937, 1
        %v2940 = vsel %vm2844, %v2935, %v2939
        %v2941 = vshrl.u32 %v2806, 16
        %v2943 = vor.u32 %v2941, %v2931
        %v2945 = vshll.u32 %v2808, 16
        %v2947 = vrot.slane %v2945, 1
        %v2948 = vsel %vm2844, %v2943, %v2947
        %v2949 = vshrl.u32 %v2747, 16
        %v2951 = vor.u32 %v2949, %v2939
        %v2953 = vshll.u32 %v2748, 16
        %v2955 = vrot.slane %v2953, 1
        %v2956 = vsel %vm2844, %v2951, %v2955
        %v2957 = vshrl.u32 %v2808, 16
        %v2959 = vor.u32 %v2957, %v2947
        %v2961 = vshll.u32 %v2810, 16
        %v2963 = vrot.slane %v2961, 1
        %v2964 = vsel %vm2844, %v2959, %v2963
        %v2965 = vshrl.u32 %v2748, 16
        %v2967 = vor.u32 %v2965, %v2955
        %v2969 = vshll.u32 %v2749, 16
        %v2971 = vrot.slane %v2969, 1
        %v2972 = vsel %vm2844, %v2967, %v2971
        %v2973 = vshrl.u32 %v2810, 16
        %v2975 = vor.u32 %v2973, %v2963
        %v2977 = vshll.u32 %v2809, 16
        %v2979 = vrot.slane %v2977, 1
        %v2980 = vsel %vm2844, %v2975, %v2979
        %v3029 = vunpack.c.l.b16 %v2812
        %v3030 = vunpack.c.l.b16 %v2813
        %v3031 = vunpack.c.l.b16 %v2814
        %v3032 = vunpack.c.l.b16 %v2815
        %v3033 = vunpack.c.l.b16 %v2816
        %v3034 = vunpack.c.l.b16 %v2817
        %v3035 = vunpack.c.l.b16 %v2818
        %v3036 = vunpack.c.l.b16 %v2819
        %v3037 = vunpack.c.l.b16 %v2820
        %v3038 = vunpack.c.l.b16 %v2821
        %v3039 = vunpack.c.l.b16 %v2822
        %v3040 = vunpack.c.l.b16 %v2823
        %v3041 = vunpack.c.l.b16 %v2824
        %v3042 = vunpack.c.l.b16 %v2825
        %v3043 = vunpack.c.l.b16 %v2826
        %v3044 = vunpack.c.l.b16 %v2827
        %v3045 = vunpack.c.l.b16 %v2828
        %v3046 = vunpack.c.l.b16 %v2829
        %v3047 = vunpack.c.l.b16 %v2830
        %v3048 = vunpack.c.l.b16 %v2831
        %v3049 = vunpack.c.l.b16 %v2832
        %v3050 = vunpack.c.l.b16 %v2833
        %v3051 = vunpack.c.l.b16 %v2834
        %v3052 = vunpack.c.l.b16 %v2835
        %v3053 = vunpack.c.l.b16 %v2836
        %v3054 = vunpack.c.l.b16 %v2837
        %v3055 = vunpack.c.l.b16 %v2838
        %v3056 = vunpack.c.l.b16 %v2839
        %v3057 = vunpack.c.l.b16 %v2840
        %v3058 = vunpack.c.l.b16 %v2841
        %v3059 = vunpack.c.l.b16 %v2842
        %v3060 = vunpack.c.l.b16 %v2843
        %v3061 = vpack.c.b16 %v3030, %v3029
        %v3062 = vpack.c.b16 %v3032, %v3031
        %v3063 = vpack.c.b16 %v3034, %v3033
        %v3064 = vpack.c.b16 %v3036, %v3035
        %v3065 = vpack.c.b16 %v3038, %v3037
        %v3066 = vpack.c.b16 %v3040, %v3039
        %v3067 = vpack.c.b16 %v3042, %v3041
        %v3068 = vpack.c.b16 %v3044, %v3043
        %v3069 = vpack.c.b16 %v3046, %v3045
        %v3070 = vpack.c.b16 %v3048, %v3047
        %v3071 = vpack.c.b16 %v3050, %v3049
        %v3072 = vpack.c.b16 %v3052, %v3051
        %v3073 = vpack.c.b16 %v3054, %v3053
        %v3074 = vpack.c.b16 %v3056, %v3055
        %v3075 = vpack.c.b16 %v3058, %v3057
        %v3076 = vpack.c.b16 %v3060, %v3059
        %3093 = vmatpush.bf16.msra.mxu0 %v3068
        %3094 = vmatpush.bf16.msra.mxu0 %v3067
        %3095 = vmatpush.bf16.msra.mxu0 %v3066
        %3096 = vmatpush.bf16.msra.mxu0 %v3065
        %3097 = vmatpush.bf16.msra.mxu0 %v3064
        %3098 = vmatpush.bf16.msra.mxu0 %v3063
        %3099 = vmatpush.bf16.msra.mxu0 %v3062
        %3100 = vmatpush.bf16.msra.mxu0 %v3061
        %3101 = vmatmul.bf16.gmra.mxu0 %v2856
        %v3102 = vpop.f32.mrf.mxu0
        %v3103 = vadd.f32 0.0, %v3102
        %v3104 = vpop.f32.mrf.mxu0
        %v3105 = vadd.f32 0.0, %v3104
        %3106 = vmatmul.bf16.gmra.mxu0 %v2876
        %v3107 = vpop.f32.mrf.mxu0
        %v3108 = vadd.f32 0.0, %v3107
        %v3109 = vpop.f32.mrf.mxu0
        %v3110 = vadd.f32 0.0, %v3109
        %3111 = vmatmul.bf16.gmra.mxu0 %v2892
        %v3112 = vpop.f32.mrf.mxu0
        %v3113 = vadd.f32 0.0, %v3112
        %v3114 = vpop.f32.mrf.mxu0
        %v3115 = vadd.f32 0.0, %v3114
        %3116 = vmatmul.bf16.gmra.mxu0 %v2908
        %v3117 = vpop.f32.mrf.mxu0
        %v3118 = vadd.f32 0.0, %v3117
        %v3119 = vpop.f32.mrf.mxu0
        %v3120 = vadd.f32 0.0, %v3119
        %3121 = vmatmul.bf16.gmra.mxu0 %v2924
        %v3122 = vpop.f32.mrf.mxu0
        %v3123 = vadd.f32 0.0, %v3122
        %v3124 = vpop.f32.mrf.mxu0
        %v3125 = vadd.f32 0.0, %v3124
        %3126 = vmatmul.bf16.gmra.mxu0 %v2940
        %v3127 = vpop.f32.mrf.mxu0
        %v3128 = vadd.f32 0.0, %v3127
        %v3129 = vpop.f32.mrf.mxu0
        %v3130 = vadd.f32 0.0, %v3129
        %3131 = vmatmul.bf16.gmra.mxu0 %v2956
        %v3132 = vpop.f32.mrf.mxu0
        %v3133 = vadd.f32 0.0, %v3132
        %v3134 = vpop.f32.mrf.mxu0
        %v3135 = vadd.f32 0.0, %v3134
        %3136 = vmatmul.bf16.gmra.mxu0 %v2972
        %v3137 = vpop.f32.mrf.mxu0
        %v3138 = vadd.f32 0.0, %v3137
        %v3139 = vpop.f32.mrf.mxu0
        %v3140 = vadd.f32 0.0, %v3139
        %3141 = vdwg.mxu0
        %3142 = vmatpush.bf16.msra.mxu0 %v3076
        %3143 = vmatpush.bf16.msra.mxu0 %v3075
        %3144 = vmatpush.bf16.msra.mxu0 %v3074
        %3145 = vmatpush.bf16.msra.mxu0 %v3073
        %3146 = vmatpush.bf16.msra.mxu0 %v3072
        %3147 = vmatpush.bf16.msra.mxu0 %v3071
        %3148 = vmatpush.bf16.msra.mxu0 %v3070
        %3149 = vmatpush.bf16.msra.mxu0 %v3069
        %3150 = vmatmul.bf16.gmra.mxu0 %v2868
        %v3151 = vpop.f32.mrf.mxu0
        %v3152 = vadd.f32 %v3103, %v3151
        %v3153 = vpop.f32.mrf.mxu0
        %v3154 = vadd.f32 %v3105, %v3153
        %3155 = vmatmul.bf16.gmra.mxu0 %v2884
        %v3156 = vpop.f32.mrf.mxu0
        %v3157 = vadd.f32 %v3108, %v3156
        %v3158 = vpop.f32.mrf.mxu0
        %v3159 = vadd.f32 %v3110, %v3158
        %3160 = vmatmul.bf16.gmra.mxu0 %v2900
        %v3161 = vpop.f32.mrf.mxu0
        %v3162 = vadd.f32 %v3113, %v3161
        %v3163 = vpop.f32.mrf.mxu0
        %v3164 = vadd.f32 %v3115, %v3163
        %3165 = vmatmul.bf16.gmra.mxu0 %v2916
        %v3166 = vpop.f32.mrf.mxu0
        %v3167 = vadd.f32 %v3118, %v3166
        %v3168 = vpop.f32.mrf.mxu0
        %v3169 = vadd.f32 %v3120, %v3168
        %3170 = vmatmul.bf16.gmra.mxu0 %v2932
        %v3171 = vpop.f32.mrf.mxu0
        %v3172 = vadd.f32 %v3123, %v3171
        %v3173 = vpop.f32.mrf.mxu0
        %v3174 = vadd.f32 %v3125, %v3173
        %3175 = vmatmul.bf16.gmra.mxu0 %v2948
        %v3176 = vpop.f32.mrf.mxu0
        %v3177 = vadd.f32 %v3128, %v3176
        %v3178 = vpop.f32.mrf.mxu0
        %v3179 = vadd.f32 %v3130, %v3178
        %3180 = vmatmul.bf16.gmra.mxu0 %v2964
        %v3181 = vpop.f32.mrf.mxu0
        %v3182 = vadd.f32 %v3133, %v3181
        %v3183 = vpop.f32.mrf.mxu0
        %v3184 = vadd.f32 %v3135, %v3183
        %3185 = vmatmul.bf16.gmra.mxu0 %v2980
        %v3186 = vpop.f32.mrf.mxu0
        %v3187 = vadd.f32 %v3138, %v3186
        %v3188 = vpop.f32.mrf.mxu0
        %v3189 = vadd.f32 %v3140, %v3188
        %3190 = vdwg.mxu0
        %v3191 = vadd.f32 %v2287, %v3152
        %v3192 = vadd.f32 %v2289, %v3154
        %v3193 = vadd.f32 %v2292, %v3157
        %v3194 = vadd.f32 %v2294, %v3159
        %v3195 = vadd.f32 %v2297, %v3162
        %v3196 = vadd.f32 %v2299, %v3164
        %v3197 = vadd.f32 %v2302, %v3167
        %v3198 = vadd.f32 %v2304, %v3169
        %v3199 = vadd.f32 %v2307, %v3172
        %v3200 = vadd.f32 %v2309, %v3174
        %v3201 = vadd.f32 %v2312, %v3177
        %v3202 = vadd.f32 %v2314, %v3179
        %v3203 = vadd.f32 %v2317, %v3182
        %v3204 = vadd.f32 %v2319, %v3184
        %v3205 = vadd.f32 %v2322, %v3187
        %v3206 = vadd.f32 %v2324, %v3189
        %v3207 = vld [vmem:[#allocation3 + $0x10] sm:$0xf]
        %v3208 = vld [vmem:[#allocation3 + $0x14] sm:$0xf]
        %v3209 = vld [vmem:[#allocation3 + $0x18] sm:$0xf]
        %v3210 = vld [vmem:[#allocation3 + $0x1c] sm:$0xf]
        %v3211 = vld [vmem:[#allocation3 + $0x20] sm:$0xf]
        %v3212 = vld [vmem:[#allocation3 + $0x24] sm:$0xf]
        %v3213 = vld [vmem:[#allocation3 + $0x28] sm:$0xf]
        %v3214 = vld [vmem:[#allocation3 + $0x2c] sm:$0xf]
        %v3215 = vld [vmem:[#allocation3 + $0x30] sm:$0xf]
        %v3216 = vld [vmem:[#allocation3 + $0x34] sm:$0xf]
        %v3217 = vld [vmem:[#allocation3 + $0x38] sm:$0xf]
        %v3218 = vld [vmem:[#allocation3 + $0x3c] sm:$0xf]
        %v3219 = vld [vmem:[#allocation3 + $0x40] sm:$0xf]
        %v3220 = vld [vmem:[#allocation3 + $0x44] sm:$0xf]
        %v3221 = vld [vmem:[#allocation3 + $0x48] sm:$0xf]
        %v3222 = vld [vmem:[#allocation3 + $0x4c] sm:$0xf]
        %v3223 = vld [vmem:[#allocation3 + $0x50] sm:$0x1]
        %v3224 = vsel %vm2559, %v3207, 0
        %v3225 = vsel %vm2566, %v3208, 0
        %v3226 = vsel %vm2573, %v3209, 0
        %v3227 = vsel %vm2580, %v3210, 0
        %v3228 = vsel %vm2587, %v3211, 0
        %v3229 = vsel %vm2594, %v3212, 0
        %v3230 = vsel %vm2601, %v3213, 0
        %v3231 = vsel %vm2608, %v3214, 0
        %v3232 = vsel %vm2615, %v3215, 0
        %v3233 = vsel %vm2622, %v3216, 0
        %v3234 = vsel %vm2629, %v3217, 0
        %v3235 = vsel %vm2636, %v3218, 0
        %v3236 = vsel %vm2643, %v3219, 0
        %v3237 = vsel %vm2650, %v3220, 0
        %v3238 = vsel %vm2657, %v3221, 0
        %v3239 = vsel %vm2664, %v3222, 0
        %v3240 = vsel %vm2671, %v3223, 0
        %v3241 = vld [vmem:[#allocation3 + $0x14] sm:$0x8]
        %v3242 = vld [vmem:[#allocation3 + $0x50] sm:$0xf]
        %v3243 = vld [vmem:[#allocation3 + $0x54] sm:$0xf]
        %v3244 = vsel %vm1529, %v3241, 0
        %v3245 = vsel %vm1536, %v3209, 0
        %v3246 = vsel %vm1543, %v3210, 0
        %v3247 = vsel %vm1550, %v3211, 0
        %v3248 = vsel %vm1557, %v3212, 0
        %v3249 = vsel %vm1564, %v3213, 0
        %v3250 = vsel %vm1571, %v3214, 0
        %v3251 = vsel %vm1578, %v3215, 0
        %v3252 = vsel %vm1585, %v3216, 0
        %v3253 = vsel %vm1592, %v3217, 0
        %v3254 = vsel %vm1599, %v3218, 0
        %v3255 = vsel %vm1606, %v3219, 0
        %v3256 = vsel %vm1613, %v3220, 0
        %v3257 = vsel %vm1620, %v3221, 0
        %v3258 = vsel %vm1627, %v3222, 0
        %v3259 = vsel %vm1634, %v3242, 0
        %v3260 = vsel %vm1641, %v3243, 0
        %v3278 = vunpack.c.l.b16 %v3224
        %v3279 = vunpack.c.l.b16 %v3225
        %v3280 = vunpack.c.l.b16 %v3226
        %v3281 = vunpack.c.l.b16 %v3227
        %v3282 = vunpack.c.l.b16 %v3228
        %v3283 = vunpack.c.l.b16 %v3229
        %v3284 = vunpack.c.l.b16 %v3230
        %v3285 = vunpack.c.l.b16 %v3231
        %v3286 = vunpack.c.l.b16 %v3232
        %v3287 = vunpack.c.l.b16 %v3233
        %v3288 = vunpack.c.l.b16 %v3234
        %v3289 = vunpack.c.l.b16 %v3235
        %v3290 = vunpack.c.l.b16 %v3236
        %v3291 = vunpack.c.l.b16 %v3237
        %v3292 = vunpack.c.l.b16 %v3238
        %v3293 = vunpack.c.l.b16 %v3239
        %v3294 = vunpack.c.l.b16 %v3240
        %v3295 = vpack.c.b16 %v3279, %v3278
        %v3296 = vpack.c.b16 %v3281, %v3280
        %v3297 = vpack.c.b16 %v3283, %v3282
        %v3298 = vpack.c.b16 %v3285, %v3284
        %v3299 = vpack.c.b16 %v3287, %v3286
        %v3300 = vpack.c.b16 %v3289, %v3288
        %v3301 = vpack.c.b16 %v3291, %v3290
        %v3302 = vpack.c.b16 %v3293, %v3292
        %v3303 = vpack.c.b16 %v3294, %v3294
        %v3321 = vunpack.c.l.b16 %v3244
        %v3322 = vunpack.c.l.b16 %v3245
        %v3323 = vunpack.c.l.b16 %v3246
        %v3324 = vunpack.c.l.b16 %v3247
        %v3325 = vunpack.c.l.b16 %v3248
        %v3326 = vunpack.c.l.b16 %v3249
        %v3327 = vunpack.c.l.b16 %v3250
        %v3328 = vunpack.c.l.b16 %v3251
        %v3329 = vunpack.c.l.b16 %v3252
        %v3330 = vunpack.c.l.b16 %v3253
        %v3331 = vunpack.c.l.b16 %v3254
        %v3332 = vunpack.c.l.b16 %v3255
        %v3333 = vunpack.c.l.b16 %v3256
        %v3334 = vunpack.c.l.b16 %v3257
        %v3335 = vunpack.c.l.b16 %v3258
        %v3336 = vunpack.c.l.b16 %v3259
        %v3337 = vunpack.c.l.b16 %v3260
        %v3338 = vpack.c.b16 %v3322, %v3321
        %v3339 = vpack.c.b16 %v3324, %v3323
        %v3340 = vpack.c.b16 %v3326, %v3325
        %v3341 = vpack.c.b16 %v3328, %v3327
        %v3342 = vpack.c.b16 %v3330, %v3329
        %v3343 = vpack.c.b16 %v3332, %v3331
        %v3344 = vpack.c.b16 %v3334, %v3333
        %v3345 = vpack.c.b16 %v3336, %v3335
        %v3346 = vpack.c.b16 %v3337, %v3337
        %v3347 = vrot.slane %v3338, 3
        %v3348 = vrot.slane %v3339, 3
        %v3349 = vsel %vm2793, %v3347, %v3348
        %v3350 = vrot.slane %v3340, 3
        %v3351 = vsel %vm2793, %v3348, %v3350
        %v3352 = vrot.slane %v3341, 3
        %v3353 = vsel %vm2793, %v3350, %v3352
        %v3354 = vrot.slane %v3342, 3
        %v3355 = vsel %vm2793, %v3352, %v3354
        %v3356 = vrot.slane %v3343, 3
        %v3357 = vsel %vm2793, %v3354, %v3356
        %v3358 = vrot.slane %v3344, 3
        %v3359 = vsel %vm2793, %v3356, %v3358
        %v3360 = vrot.slane %v3345, 3
        %v3361 = vsel %vm2793, %v3358, %v3360
        %v3362 = vrot.slane %v3346, 3
        %v3363 = vsel %vm2793, %v3360, %v3362
        %s3364 = scalar_lea.vmem %s2, 256
        %v3365 = vld [vmem:[%s3364] sm:$0xf]
        %v3366 = vld [vmem:[%s3364 + $0x4] sm:$0xf]
        %v3367 = vld [vmem:[%s3364 + $0x8] sm:$0xf]
        %v3368 = vld [vmem:[%s3364 + $0xc] sm:$0xf]
        %v3369 = vld [vmem:[%s3364 + $0x10] sm:$0xf]
        %v3370 = vld [vmem:[%s3364 + $0x14] sm:$0xf]
        %v3371 = vld [vmem:[%s3364 + $0x18] sm:$0xf]
        %v3372 = vld [vmem:[%s3364 + $0x1c] sm:$0xf]
        %v3373 = vld [vmem:[%s3364 + $0x20] sm:$0xf]
        %v3374 = vld [vmem:[%s3364 + $0x24] sm:$0xf]
        %v3375 = vld [vmem:[%s3364 + $0x28] sm:$0xf]
        %v3376 = vld [vmem:[%s3364 + $0x2c] sm:$0xf]
        %v3377 = vld [vmem:[%s3364 + $0x30] sm:$0xf]
        %v3378 = vld [vmem:[%s3364 + $0x34] sm:$0xf]
        %v3379 = vld [vmem:[%s3364 + $0x38] sm:$0xf]
        %v3380 = vld [vmem:[%s3364 + $0x3c] sm:$0xf]
        %v3381 = vld [vmem:[%s3364 + $0x40] sm:$0xf]
        %v3382 = vld [vmem:[%s3364 + $0x44] sm:$0xf]
        %v3383 = vld [vmem:[%s3364 + $0x48] sm:$0xf]
        %v3384 = vld [vmem:[%s3364 + $0x4c] sm:$0xf]
        %v3385 = vld [vmem:[%s3364 + $0x50] sm:$0xf]
        %v3386 = vld [vmem:[%s3364 + $0x54] sm:$0xf]
        %v3387 = vld [vmem:[%s3364 + $0x58] sm:$0xf]
        %v3388 = vld [vmem:[%s3364 + $0x5c] sm:$0xf]
        %v3389 = vld [vmem:[%s3364 + $0x60] sm:$0xf]
        %v3390 = vld [vmem:[%s3364 + $0x64] sm:$0xf]
        %v3391 = vld [vmem:[%s3364 + $0x68] sm:$0xf]
        %v3392 = vld [vmem:[%s3364 + $0x6c] sm:$0xf]
        %v3393 = vld [vmem:[%s3364 + $0x70] sm:$0xf]
        %v3394 = vld [vmem:[%s3364 + $0x74] sm:$0xf]
        %v3395 = vld [vmem:[%s3364 + $0x78] sm:$0xf]
        %v3396 = vld [vmem:[%s3364 + $0x7c] sm:$0xf]
        %v3398 = vshrl.u32 %v3295, 16
        %v3400 = vshll.u32 %v3295, 16
        %v3402 = vrot.slane %v3400, 1
        %v3403 = vor.u32 %v3398, %v3402
        %v3405 = vshll.u32 %v3296, 16
        %v3407 = vrot.slane %v3405, 1
        %v3408 = vsel %vm2844, %v3403, %v3407
        %v3410 = vshrl.u32 %v3349, 16
        %v3412 = vshll.u32 %v3349, 16
        %v3414 = vrot.slane %v3412, 1
        %v3415 = vor.u32 %v3410, %v3414
        %v3417 = vshll.u32 %v3351, 16
        %v3419 = vrot.slane %v3417, 1
        %v3420 = vsel %vm2844, %v3415, %v3419
        %v3421 = vshrl.u32 %v3296, 16
        %v3423 = vor.u32 %v3421, %v3407
        %v3425 = vshll.u32 %v3297, 16
        %v3427 = vrot.slane %v3425, 1
        %v3428 = vsel %vm2844, %v3423, %v3427
        %v3429 = vshrl.u32 %v3351, 16
        %v3431 = vor.u32 %v3429, %v3419
        %v3433 = vshll.u32 %v3353, 16
        %v3435 = vrot.slane %v3433, 1
        %v3436 = vsel %vm2844, %v3431, %v3435
        %v3437 = vshrl.u32 %v3297, 16
        %v3439 = vor.u32 %v3437, %v3427
        %v3441 = vshll.u32 %v3298, 16
        %v3443 = vrot.slane %v3441, 1
        %v3444 = vsel %vm2844, %v3439, %v3443
        %v3445 = vshrl.u32 %v3353, 16
        %v3447 = vor.u32 %v3445, %v3435
        %v3449 = vshll.u32 %v3355, 16
        %v3451 = vrot.slane %v3449, 1
        %v3452 = vsel %vm2844, %v3447, %v3451
        %v3453 = vshrl.u32 %v3298, 16
        %v3455 = vor.u32 %v3453, %v3443
        %v3457 = vshll.u32 %v3299, 16
        %v3459 = vrot.slane %v3457, 1
        %v3460 = vsel %vm2844, %v3455, %v3459
        %v3461 = vshrl.u32 %v3355, 16
        %v3463 = vor.u32 %v3461, %v3451
        %v3465 = vshll.u32 %v3357, 16
        %v3467 = vrot.slane %v3465, 1
        %v3468 = vsel %vm2844, %v3463, %v3467
        %v3469 = vshrl.u32 %v3299, 16
        %v3471 = vor.u32 %v3469, %v3459
        %v3473 = vshll.u32 %v3300, 16
        %v3475 = vrot.slane %v3473, 1
        %v3476 = vsel %vm2844, %v3471, %v3475
        %v3477 = vshrl.u32 %v3357, 16
        %v3479 = vor.u32 %v3477, %v3467
        %v3481 = vshll.u32 %v3359, 16
        %v3483 = vrot.slane %v3481, 1
        %v3484 = vsel %vm2844, %v3479, %v3483
        %v3485 = vshrl.u32 %v3300, 16
        %v3487 = vor.u32 %v3485, %v3475
        %v3489 = vshll.u32 %v3301, 16
        %v3491 = vrot.slane %v3489, 1
        %v3492 = vsel %vm2844, %v3487, %v3491
        %v3493 = vshrl.u32 %v3359, 16
        %v3495 = vor.u32 %v3493, %v3483
        %v3497 = vshll.u32 %v3361, 16
        %v3499 = vrot.slane %v3497, 1
        %v3500 = vsel %vm2844, %v3495, %v3499
        %v3501 = vshrl.u32 %v3301, 16
        %v3503 = vor.u32 %v3501, %v3491
        %v3505 = vshll.u32 %v3302, 16
        %v3507 = vrot.slane %v3505, 1
        %v3508 = vsel %vm2844, %v3503, %v3507
        %v3509 = vshrl.u32 %v3361, 16
        %v3511 = vor.u32 %v3509, %v3499
        %v3513 = vshll.u32 %v3363, 16
        %v3515 = vrot.slane %v3513, 1
        %v3516 = vsel %vm2844, %v3511, %v3515
        %v3517 = vshrl.u32 %v3302, 16
        %v3519 = vor.u32 %v3517, %v3507
        %v3521 = vshll.u32 %v3303, 16
        %v3523 = vrot.slane %v3521, 1
        %v3524 = vsel %vm2844, %v3519, %v3523
        %v3525 = vshrl.u32 %v3363, 16
        %v3527 = vor.u32 %v3525, %v3515
        %v3529 = vshll.u32 %v3362, 16
        %v3531 = vrot.slane %v3529, 1
        %v3532 = vsel %vm2844, %v3527, %v3531
        %v3581 = vunpack.c.l.b16 %v3365
        %v3582 = vunpack.c.l.b16 %v3366
        %v3583 = vunpack.c.l.b16 %v3367
        %v3584 = vunpack.c.l.b16 %v3368
        %v3585 = vunpack.c.l.b16 %v3369
        %v3586 = vunpack.c.l.b16 %v3370
        %v3587 = vunpack.c.l.b16 %v3371
        %v3588 = vunpack.c.l.b16 %v3372
        %v3589 = vunpack.c.l.b16 %v3373
        %v3590 = vunpack.c.l.b16 %v3374
        %v3591 = vunpack.c.l.b16 %v3375
        %v3592 = vunpack.c.l.b16 %v3376
        %v3593 = vunpack.c.l.b16 %v3377
        %v3594 = vunpack.c.l.b16 %v3378
        %v3595 = vunpack.c.l.b16 %v3379
        %v3596 = vunpack.c.l.b16 %v3380
        %v3597 = vunpack.c.l.b16 %v3381
        %v3598 = vunpack.c.l.b16 %v3382
        %v3599 = vunpack.c.l.b16 %v3383
        %v3600 = vunpack.c.l.b16 %v3384
        %v3601 = vunpack.c.l.b16 %v3385
        %v3602 = vunpack.c.l.b16 %v3386
        %v3603 = vunpack.c.l.b16 %v3387
        %v3604 = vunpack.c.l.b16 %v3388
        %v3605 = vunpack.c.l.b16 %v3389
        %v3606 = vunpack.c.l.b16 %v3390
        %v3607 = vunpack.c.l.b16 %v3391
        %v3608 = vunpack.c.l.b16 %v3392
        %v3609 = vunpack.c.l.b16 %v3393
        %v3610 = vunpack.c.l.b16 %v3394
        %v3611 = vunpack.c.l.b16 %v3395
        %v3612 = vunpack.c.l.b16 %v3396
        %v3613 = vpack.c.b16 %v3582, %v3581
        %v3614 = vpack.c.b16 %v3584, %v3583
        %v3615 = vpack.c.b16 %v3586, %v3585
        %v3616 = vpack.c.b16 %v3588, %v3587
        %v3617 = vpack.c.b16 %v3590, %v3589
        %v3618 = vpack.c.b16 %v3592, %v3591
        %v3619 = vpack.c.b16 %v3594, %v3593
        %v3620 = vpack.c.b16 %v3596, %v3595
        %v3621 = vpack.c.b16 %v3598, %v3597
        %v3622 = vpack.c.b16 %v3600, %v3599
        %v3623 = vpack.c.b16 %v3602, %v3601
        %v3624 = vpack.c.b16 %v3604, %v3603
        %v3625 = vpack.c.b16 %v3606, %v3605
        %v3626 = vpack.c.b16 %v3608, %v3607
        %v3627 = vpack.c.b16 %v3610, %v3609
        %v3628 = vpack.c.b16 %v3612, %v3611
        %3645 = vmatpush.bf16.msra.mxu0 %v3620
        %3646 = vmatpush.bf16.msra.mxu0 %v3619
        %3647 = vmatpush.bf16.msra.mxu0 %v3618
        %3648 = vmatpush.bf16.msra.mxu0 %v3617
        %3649 = vmatpush.bf16.msra.mxu0 %v3616
        %3650 = vmatpush.bf16.msra.mxu0 %v3615
        %3651 = vmatpush.bf16.msra.mxu0 %v3614
        %3652 = vmatpush.bf16.msra.mxu0 %v3613
        %3653 = vmatmul.bf16.gmra.mxu0 %v3408
        %v3654 = vpop.f32.mrf.mxu0
        %v3655 = vadd.f32 0.0, %v3654
        %v3656 = vpop.f32.mrf.mxu0
        %v3657 = vadd.f32 0.0, %v3656
        %3658 = vmatmul.bf16.gmra.mxu0 %v3428
        %v3659 = vpop.f32.mrf.mxu0
        %v3660 = vadd.f32 0.0, %v3659
        %v3661 = vpop.f32.mrf.mxu0
        %v3662 = vadd.f32 0.0, %v3661
        %3663 = vmatmul.bf16.gmra.mxu0 %v3444
        %v3664 = vpop.f32.mrf.mxu0
        %v3665 = vadd.f32 0.0, %v3664
        %v3666 = vpop.f32.mrf.mxu0
        %v3667 = vadd.f32 0.0, %v3666
        %3668 = vmatmul.bf16.gmra.mxu0 %v3460
        %v3669 = vpop.f32.mrf.mxu0
        %v3670 = vadd.f32 0.0, %v3669
        %v3671 = vpop.f32.mrf.mxu0
        %v3672 = vadd.f32 0.0, %v3671
        %3673 = vmatmul.bf16.gmra.mxu0 %v3476
        %v3674 = vpop.f32.mrf.mxu0
        %v3675 = vadd.f32 0.0, %v3674
        %v3676 = vpop.f32.mrf.mxu0
        %v3677 = vadd.f32 0.0, %v3676
        %3678 = vmatmul.bf16.gmra.mxu0 %v3492
        %v3679 = vpop.f32.mrf.mxu0
        %v3680 = vadd.f32 0.0, %v3679
        %v3681 = vpop.f32.mrf.mxu0
        %v3682 = vadd.f32 0.0, %v3681
        %3683 = vmatmul.bf16.gmra.mxu0 %v3508
        %v3684 = vpop.f32.mrf.mxu0
        %v3685 = vadd.f32 0.0, %v3684
        %v3686 = vpop.f32.mrf.mxu0
        %v3687 = vadd.f32 0.0, %v3686
        %3688 = vmatmul.bf16.gmra.mxu0 %v3524
        %v3689 = vpop.f32.mrf.mxu0
        %v3690 = vadd.f32 0.0, %v3689
        %v3691 = vpop.f32.mrf.mxu0
        %v3692 = vadd.f32 0.0, %v3691
        %3693 = vdwg.mxu0
        %3694 = vmatpush.bf16.msra.mxu0 %v3628
        %3695 = vmatpush.bf16.msra.mxu0 %v3627
        %3696 = vmatpush.bf16.msra.mxu0 %v3626
        %3697 = vmatpush.bf16.msra.mxu0 %v3625
        %3698 = vmatpush.bf16.msra.mxu0 %v3624
        %3699 = vmatpush.bf16.msra.mxu0 %v3623
        %3700 = vmatpush.bf16.msra.mxu0 %v3622
        %3701 = vmatpush.bf16.msra.mxu0 %v3621
        %3702 = vmatmul.bf16.gmra.mxu0 %v3420
        %v3703 = vpop.f32.mrf.mxu0
        %v3704 = vadd.f32 %v3655, %v3703
        %v3705 = vpop.f32.mrf.mxu0
        %v3706 = vadd.f32 %v3657, %v3705
        %3707 = vmatmul.bf16.gmra.mxu0 %v3436
        %v3708 = vpop.f32.mrf.mxu0
        %v3709 = vadd.f32 %v3660, %v3708
        %v3710 = vpop.f32.mrf.mxu0
        %v3711 = vadd.f32 %v3662, %v3710
        %3712 = vmatmul.bf16.gmra.mxu0 %v3452
        %v3713 = vpop.f32.mrf.mxu0
        %v3714 = vadd.f32 %v3665, %v3713
        %v3715 = vpop.f32.mrf.mxu0
        %v3716 = vadd.f32 %v3667, %v3715
        %3717 = vmatmul.bf16.gmra.mxu0 %v3468
        %v3718 = vpop.f32.mrf.mxu0
        %v3719 = vadd.f32 %v3670, %v3718
        %v3720 = vpop.f32.mrf.mxu0
        %v3721 = vadd.f32 %v3672, %v3720
        %3722 = vmatmul.bf16.gmra.mxu0 %v3484
        %v3723 = vpop.f32.mrf.mxu0
        %v3724 = vadd.f32 %v3675, %v3723
        %v3725 = vpop.f32.mrf.mxu0
        %v3726 = vadd.f32 %v3677, %v3725
        %3727 = vmatmul.bf16.gmra.mxu0 %v3500
        %v3728 = vpop.f32.mrf.mxu0
        %v3729 = vadd.f32 %v3680, %v3728
        %v3730 = vpop.f32.mrf.mxu0
        %v3731 = vadd.f32 %v3682, %v3730
        %3732 = vmatmul.bf16.gmra.mxu0 %v3516
        %v3733 = vpop.f32.mrf.mxu0
        %v3734 = vadd.f32 %v3685, %v3733
        %v3735 = vpop.f32.mrf.mxu0
        %v3736 = vadd.f32 %v3687, %v3735
        %3737 = vmatmul.bf16.gmra.mxu0 %v3532
        %v3738 = vpop.f32.mrf.mxu0
        %v3739 = vadd.f32 %v3690, %v3738
        %v3740 = vpop.f32.mrf.mxu0
        %v3741 = vadd.f32 %v3692, %v3740
        %3742 = vdwg.mxu0
        %v3743 = vadd.f32 %v3191, %v3704
        %v3744 = vadd.f32 %v3192, %v3706
        %v3745 = vadd.f32 %v3193, %v3709
        %v3746 = vadd.f32 %v3194, %v3711
        %v3747 = vadd.f32 %v3195, %v3714
        %v3748 = vadd.f32 %v3196, %v3716
        %v3749 = vadd.f32 %v3197, %v3719
        %v3750 = vadd.f32 %v3198, %v3721
        %v3751 = vadd.f32 %v3199, %v3724
        %v3752 = vadd.f32 %v3200, %v3726
        %v3753 = vadd.f32 %v3201, %v3729
        %v3754 = vadd.f32 %v3202, %v3731
        %v3755 = vadd.f32 %v3203, %v3734
        %v3756 = vadd.f32 %v3204, %v3736
        %v3757 = vadd.f32 %v3205, %v3739
        %v3758 = vadd.f32 %v3206, %v3741
        %v3759 = vld [vmem:[#allocation3 + $0x18] sm:$0xf]
        %v3760 = vld [vmem:[#allocation3 + $0x1c] sm:$0xf]
        %v3761 = vld [vmem:[#allocation3 + $0x20] sm:$0xf]
        %v3762 = vld [vmem:[#allocation3 + $0x24] sm:$0xf]
        %v3763 = vld [vmem:[#allocation3 + $0x28] sm:$0xf]
        %v3764 = vld [vmem:[#allocation3 + $0x2c] sm:$0xf]
        %v3765 = vld [vmem:[#allocation3 + $0x30] sm:$0xf]
        %v3766 = vld [vmem:[#allocation3 + $0x34] sm:$0xf]
        %v3767 = vld [vmem:[#allocation3 + $0x38] sm:$0xf]
        %v3768 = vld [vmem:[#allocation3 + $0x3c] sm:$0xf]
        %v3769 = vld [vmem:[#allocation3 + $0x40] sm:$0xf]
        %v3770 = vld [vmem:[#allocation3 + $0x44] sm:$0xf]
        %v3771 = vld [vmem:[#allocation3 + $0x48] sm:$0xf]
        %v3772 = vld [vmem:[#allocation3 + $0x4c] sm:$0xf]
        %v3773 = vld [vmem:[#allocation3 + $0x50] sm:$0xf]
        %v3774 = vld [vmem:[#allocation3 + $0x54] sm:$0xf]
        %v3775 = vld [vmem:[#allocation3 + $0x58] sm:$0x1]
        %v3776 = vsel %vm2559, %v3759, 0
        %v3777 = vsel %vm2566, %v3760, 0
        %v3778 = vsel %vm2573, %v3761, 0
        %v3779 = vsel %vm2580, %v3762, 0
        %v3780 = vsel %vm2587, %v3763, 0
        %v3781 = vsel %vm2594, %v3764, 0
        %v3782 = vsel %vm2601, %v3765, 0
        %v3783 = vsel %vm2608, %v3766, 0
        %v3784 = vsel %vm2615, %v3767, 0
        %v3785 = vsel %vm2622, %v3768, 0
        %v3786 = vsel %vm2629, %v3769, 0
        %v3787 = vsel %vm2636, %v3770, 0
        %v3788 = vsel %vm2643, %v3771, 0
        %v3789 = vsel %vm2650, %v3772, 0
        %v3790 = vsel %vm2657, %v3773, 0
        %v3791 = vsel %vm2664, %v3774, 0
        %v3792 = vsel %vm2671, %v3775, 0
        %v3809 = vunpack.c.l.b16 %v3209
        %v3810 = vunpack.c.l.b16 %v3210
        %v3811 = vunpack.c.l.b16 %v3211
        %v3812 = vunpack.c.l.b16 %v3212
        %v3813 = vunpack.c.l.b16 %v3213
        %v3814 = vunpack.c.l.b16 %v3214
        %v3815 = vunpack.c.l.b16 %v3215
        %v3816 = vunpack.c.l.b16 %v3216
        %v3817 = vunpack.c.l.b16 %v3217
        %v3818 = vunpack.c.l.b16 %v3218
        %v3819 = vunpack.c.l.b16 %v3219
        %v3820 = vunpack.c.l.b16 %v3220
        %v3821 = vunpack.c.l.b16 %v3221
        %v3822 = vunpack.c.l.b16 %v3222
        %v3823 = vunpack.c.l.b16 %v3242
        %v3824 = vunpack.c.l.b16 %v3243
        %v3825 = vpack.c.b16 %v3810, %v3809
        %v3826 = vpack.c.b16 %v3812, %v3811
        %v3827 = vpack.c.b16 %v3814, %v3813
        %v3828 = vpack.c.b16 %v3816, %v3815
        %v3829 = vpack.c.b16 %v3818, %v3817
        %v3830 = vpack.c.b16 %v3820, %v3819
        %v3831 = vpack.c.b16 %v3822, %v3821
        %v3832 = vpack.c.b16 %v3824, %v3823
        %v3858 = vunpack.c.l.b16 %v3776
        %v3859 = vunpack.c.l.b16 %v3777
        %v3860 = vunpack.c.l.b16 %v3778
        %v3861 = vunpack.c.l.b16 %v3779
        %v3862 = vunpack.c.l.b16 %v3780
        %v3863 = vunpack.c.l.b16 %v3781
        %v3864 = vunpack.c.l.b16 %v3782
        %v3865 = vunpack.c.l.b16 %v3783
        %v3866 = vunpack.c.l.b16 %v3784
        %v3867 = vunpack.c.l.b16 %v3785
        %v3868 = vunpack.c.l.b16 %v3786
        %v3869 = vunpack.c.l.b16 %v3787
        %v3870 = vunpack.c.l.b16 %v3788
        %v3871 = vunpack.c.l.b16 %v3789
        %v3872 = vunpack.c.l.b16 %v3790
        %v3873 = vunpack.c.l.b16 %v3791
        %v3874 = vunpack.c.l.b16 %v3792
        %v3875 = vpack.c.b16 %v3859, %v3858
        %v3876 = vpack.c.b16 %v3861, %v3860
        %v3877 = vpack.c.b16 %v3863, %v3862
        %v3878 = vpack.c.b16 %v3865, %v3864
        %v3879 = vpack.c.b16 %v3867, %v3866
        %v3880 = vpack.c.b16 %v3869, %v3868
        %v3881 = vpack.c.b16 %v3871, %v3870
        %v3882 = vpack.c.b16 %v3873, %v3872
        %v3883 = vpack.c.b16 %v3874, %v3874
        %v3885 = vshrl.u32 %v3875, 16
        %v3887 = vshll.u32 %v3875, 16
        %v3889 = vrot.slane %v3887, 1
        %v3890 = vor.u32 %v3885, %v3889
        %v3892 = vshll.u32 %v3876, 16
        %v3894 = vrot.slane %v3892, 1
        %v3895 = vsel %vm2844, %v3890, %v3894
        %v3896 = vshrl.u32 %v3876, 16
        %v3898 = vor.u32 %v3896, %v3894
        %v3900 = vshll.u32 %v3877, 16
        %v3902 = vrot.slane %v3900, 1
        %v3903 = vsel %vm2844, %v3898, %v3902
        %v3904 = vshrl.u32 %v3877, 16
        %v3906 = vor.u32 %v3904, %v3902
        %v3908 = vshll.u32 %v3878, 16
        %v3910 = vrot.slane %v3908, 1
        %v3911 = vsel %vm2844, %v3906, %v3910
        %v3912 = vshrl.u32 %v3878, 16
        %v3914 = vor.u32 %v3912, %v3910
        %v3916 = vshll.u32 %v3879, 16
        %v3918 = vrot.slane %v3916, 1
        %v3919 = vsel %vm2844, %v3914, %v3918
        %v3920 = vshrl.u32 %v3879, 16
        %v3922 = vor.u32 %v3920, %v3918
        %v3924 = vshll.u32 %v3880, 16
        %v3926 = vrot.slane %v3924, 1
        %v3927 = vsel %vm2844, %v3922, %v3926
        %v3928 = vshrl.u32 %v3880, 16
        %v3930 = vor.u32 %v3928, %v3926
        %v3932 = vshll.u32 %v3881, 16
        %v3934 = vrot.slane %v3932, 1
        %v3935 = vsel %vm2844, %v3930, %v3934
        %v3936 = vshrl.u32 %v3881, 16
        %v3938 = vor.u32 %v3936, %v3934
        %v3940 = vshll.u32 %v3882, 16
        %v3942 = vrot.slane %v3940, 1
        %v3943 = vsel %vm2844, %v3938, %v3942
        %v3944 = vshrl.u32 %v3882, 16
        %v3946 = vor.u32 %v3944, %v3942
        %v3948 = vshll.u32 %v3883, 16
        %v3950 = vrot.slane %v3948, 1
        %v3951 = vsel %vm2844, %v3946, %v3950
        %s3960 = scalar_lea.vmem %s2, 384
        %v3961 = vld [vmem:[%s3960] sm:$0xf]
        %v3962 = vld [vmem:[%s3960 + $0x4] sm:$0xf]
        %v3963 = vld [vmem:[%s3960 + $0x8] sm:$0xf]
        %v3964 = vld [vmem:[%s3960 + $0xc] sm:$0xf]
        %v3965 = vld [vmem:[%s3960 + $0x10] sm:$0xf]
        %v3966 = vld [vmem:[%s3960 + $0x14] sm:$0xf]
        %v3967 = vld [vmem:[%s3960 + $0x18] sm:$0xf]
        %v3968 = vld [vmem:[%s3960 + $0x1c] sm:$0xf]
        %v3969 = vld [vmem:[%s3960 + $0x20] sm:$0xf]
        %v3970 = vld [vmem:[%s3960 + $0x24] sm:$0xf]
        %v3971 = vld [vmem:[%s3960 + $0x28] sm:$0xf]
        %v3972 = vld [vmem:[%s3960 + $0x2c] sm:$0xf]
        %v3973 = vld [vmem:[%s3960 + $0x30] sm:$0xf]
        %v3974 = vld [vmem:[%s3960 + $0x34] sm:$0xf]
        %v3975 = vld [vmem:[%s3960 + $0x38] sm:$0xf]
        %v3976 = vld [vmem:[%s3960 + $0x3c] sm:$0xf]
        %v3977 = vld [vmem:[%s3960 + $0x40] sm:$0xf]
        %v3978 = vld [vmem:[%s3960 + $0x44] sm:$0xf]
        %v3979 = vld [vmem:[%s3960 + $0x48] sm:$0xf]
        %v3980 = vld [vmem:[%s3960 + $0x4c] sm:$0xf]
        %v3981 = vld [vmem:[%s3960 + $0x50] sm:$0xf]
        %v3982 = vld [vmem:[%s3960 + $0x54] sm:$0xf]
        %v3983 = vld [vmem:[%s3960 + $0x58] sm:$0xf]
        %v3984 = vld [vmem:[%s3960 + $0x5c] sm:$0xf]
        %v3985 = vld [vmem:[%s3960 + $0x60] sm:$0xf]
        %v3986 = vld [vmem:[%s3960 + $0x64] sm:$0xf]
        %v3987 = vld [vmem:[%s3960 + $0x68] sm:$0xf]
        %v3988 = vld [vmem:[%s3960 + $0x6c] sm:$0xf]
        %v3989 = vld [vmem:[%s3960 + $0x70] sm:$0xf]
        %v3990 = vld [vmem:[%s3960 + $0x74] sm:$0xf]
        %v3991 = vld [vmem:[%s3960 + $0x78] sm:$0xf]
        %v3992 = vld [vmem:[%s3960 + $0x7c] sm:$0xf]
        %v4025 = vunpack.c.l.b16 %v3961
        %v4026 = vunpack.c.l.b16 %v3962
        %v4027 = vunpack.c.l.b16 %v3963
        %v4028 = vunpack.c.l.b16 %v3964
        %v4029 = vunpack.c.l.b16 %v3965
        %v4030 = vunpack.c.l.b16 %v3966
        %v4031 = vunpack.c.l.b16 %v3967
        %v4032 = vunpack.c.l.b16 %v3968
        %v4033 = vunpack.c.l.b16 %v3969
        %v4034 = vunpack.c.l.b16 %v3970
        %v4035 = vunpack.c.l.b16 %v3971
        %v4036 = vunpack.c.l.b16 %v3972
        %v4037 = vunpack.c.l.b16 %v3973
        %v4038 = vunpack.c.l.b16 %v3974
        %v4039 = vunpack.c.l.b16 %v3975
        %v4040 = vunpack.c.l.b16 %v3976
        %v4041 = vunpack.c.l.b16 %v3977
        %v4042 = vunpack.c.l.b16 %v3978
        %v4043 = vunpack.c.l.b16 %v3979
        %v4044 = vunpack.c.l.b16 %v3980
        %v4045 = vunpack.c.l.b16 %v3981
        %v4046 = vunpack.c.l.b16 %v3982
        %v4047 = vunpack.c.l.b16 %v3983
        %v4048 = vunpack.c.l.b16 %v3984
        %v4049 = vunpack.c.l.b16 %v3985
        %v4050 = vunpack.c.l.b16 %v3986
        %v4051 = vunpack.c.l.b16 %v3987
        %v4052 = vunpack.c.l.b16 %v3988
        %v4053 = vunpack.c.l.b16 %v3989
        %v4054 = vunpack.c.l.b16 %v3990
        %v4055 = vunpack.c.l.b16 %v3991
        %v4056 = vunpack.c.l.b16 %v3992
        %v4057 = vpack.c.b16 %v4026, %v4025
        %v4058 = vpack.c.b16 %v4028, %v4027
        %v4059 = vpack.c.b16 %v4030, %v4029
        %v4060 = vpack.c.b16 %v4032, %v4031
        %v4061 = vpack.c.b16 %v4034, %v4033
        %v4062 = vpack.c.b16 %v4036, %v4035
        %v4063 = vpack.c.b16 %v4038, %v4037
        %v4064 = vpack.c.b16 %v4040, %v4039
        %v4065 = vpack.c.b16 %v4042, %v4041
        %v4066 = vpack.c.b16 %v4044, %v4043
        %v4067 = vpack.c.b16 %v4046, %v4045
        %v4068 = vpack.c.b16 %v4048, %v4047
        %v4069 = vpack.c.b16 %v4050, %v4049
        %v4070 = vpack.c.b16 %v4052, %v4051
        %v4071 = vpack.c.b16 %v4054, %v4053
        %v4072 = vpack.c.b16 %v4056, %v4055
        %4089 = vmatpush.bf16.msra.mxu0 %v4064
        %4090 = vmatpush.bf16.msra.mxu0 %v4063
        %4091 = vmatpush.bf16.msra.mxu0 %v4062
        %4092 = vmatpush.bf16.msra.mxu0 %v4061
        %4093 = vmatpush.bf16.msra.mxu0 %v4060
        %4094 = vmatpush.bf16.msra.mxu0 %v4059
        %4095 = vmatpush.bf16.msra.mxu0 %v4058
        %4096 = vmatpush.bf16.msra.mxu0 %v4057
        %4097 = vmatmul.bf16.gmra.mxu0 %v3825
        %v4098 = vpop.f32.mrf.mxu0
        %v4099 = vadd.f32 0.0, %v4098
        %v4100 = vpop.f32.mrf.mxu0
        %v4101 = vadd.f32 0.0, %v4100
        %4102 = vmatmul.bf16.gmra.mxu0 %v3826
        %v4103 = vpop.f32.mrf.mxu0
        %v4104 = vadd.f32 0.0, %v4103
        %v4105 = vpop.f32.mrf.mxu0
        %v4106 = vadd.f32 0.0, %v4105
        %4107 = vmatmul.bf16.gmra.mxu0 %v3827
        %v4108 = vpop.f32.mrf.mxu0
        %v4109 = vadd.f32 0.0, %v4108
        %v4110 = vpop.f32.mrf.mxu0
        %v4111 = vadd.f32 0.0, %v4110
        %4112 = vmatmul.bf16.gmra.mxu0 %v3828
        %v4113 = vpop.f32.mrf.mxu0
        %v4114 = vadd.f32 0.0, %v4113
        %v4115 = vpop.f32.mrf.mxu0
        %v4116 = vadd.f32 0.0, %v4115
        %4117 = vmatmul.bf16.gmra.mxu0 %v3829
        %v4118 = vpop.f32.mrf.mxu0
        %v4119 = vadd.f32 0.0, %v4118
        %v4120 = vpop.f32.mrf.mxu0
        %v4121 = vadd.f32 0.0, %v4120
        %4122 = vmatmul.bf16.gmra.mxu0 %v3830
        %v4123 = vpop.f32.mrf.mxu0
        %v4124 = vadd.f32 0.0, %v4123
        %v4125 = vpop.f32.mrf.mxu0
        %v4126 = vadd.f32 0.0, %v4125
        %4127 = vmatmul.bf16.gmra.mxu0 %v3831
        %v4128 = vpop.f32.mrf.mxu0
        %v4129 = vadd.f32 0.0, %v4128
        %v4130 = vpop.f32.mrf.mxu0
        %v4131 = vadd.f32 0.0, %v4130
        %4132 = vmatmul.bf16.gmra.mxu0 %v3832
        %v4133 = vpop.f32.mrf.mxu0
        %v4134 = vadd.f32 0.0, %v4133
        %v4135 = vpop.f32.mrf.mxu0
        %v4136 = vadd.f32 0.0, %v4135
        %4137 = vdwg.mxu0
        %4138 = vmatpush.bf16.msra.mxu0 %v4072
        %4139 = vmatpush.bf16.msra.mxu0 %v4071
        %4140 = vmatpush.bf16.msra.mxu0 %v4070
        %4141 = vmatpush.bf16.msra.mxu0 %v4069
        %4142 = vmatpush.bf16.msra.mxu0 %v4068
        %4143 = vmatpush.bf16.msra.mxu0 %v4067
        %4144 = vmatpush.bf16.msra.mxu0 %v4066
        %4145 = vmatpush.bf16.msra.mxu0 %v4065
        %4146 = vmatmul.bf16.gmra.mxu0 %v3895
        %v4147 = vpop.f32.mrf.mxu0
        %v4148 = vadd.f32 %v4099, %v4147
        %v4149 = vpop.f32.mrf.mxu0
        %v4150 = vadd.f32 %v4101, %v4149
        %4151 = vmatmul.bf16.gmra.mxu0 %v3903
        %v4152 = vpop.f32.mrf.mxu0
        %v4153 = vadd.f32 %v4104, %v4152
        %v4154 = vpop.f32.mrf.mxu0
        %v4155 = vadd.f32 %v4106, %v4154
        %4156 = vmatmul.bf16.gmra.mxu0 %v3911
        %v4157 = vpop.f32.mrf.mxu0
        %v4158 = vadd.f32 %v4109, %v4157
        %v4159 = vpop.f32.mrf.mxu0
        %v4160 = vadd.f32 %v4111, %v4159
        %4161 = vmatmul.bf16.gmra.mxu0 %v3919
        %v4162 = vpop.f32.mrf.mxu0
        %v4163 = vadd.f32 %v4114, %v4162
        %v4164 = vpop.f32.mrf.mxu0
        %v4165 = vadd.f32 %v4116, %v4164
        %4166 = vmatmul.bf16.gmra.mxu0 %v3927
        %v4167 = vpop.f32.mrf.mxu0
        %v4168 = vadd.f32 %v4119, %v4167
        %v4169 = vpop.f32.mrf.mxu0
        %v4170 = vadd.f32 %v4121, %v4169
        %4171 = vmatmul.bf16.gmra.mxu0 %v3935
        %v4172 = vpop.f32.mrf.mxu0
        %v4173 = vadd.f32 %v4124, %v4172
        %v4174 = vpop.f32.mrf.mxu0
        %v4175 = vadd.f32 %v4126, %v4174
        %4176 = vmatmul.bf16.gmra.mxu0 %v3943
        %v4177 = vpop.f32.mrf.mxu0
        %v4178 = vadd.f32 %v4129, %v4177
        %v4179 = vpop.f32.mrf.mxu0
        %v4180 = vadd.f32 %v4131, %v4179
        %4181 = vmatmul.bf16.gmra.mxu0 %v3951
        %v4182 = vpop.f32.mrf.mxu0
        %v4183 = vadd.f32 %v4134, %v4182
        %v4184 = vpop.f32.mrf.mxu0
        %v4185 = vadd.f32 %v4136, %v4184
        %4186 = vdwg.mxu0
        %v4187 = vadd.f32 %v3743, %v4148
        %v4188 = vadd.f32 %v3744, %v4150
        %v4189 = vadd.f32 %v3745, %v4153
        %v4190 = vadd.f32 %v3746, %v4155
        %v4191 = vadd.f32 %v3747, %v4158
        %v4192 = vadd.f32 %v3748, %v4160
        %v4193 = vadd.f32 %v3749, %v4163
        %v4194 = vadd.f32 %v3750, %v4165
        %v4195 = vadd.f32 %v3751, %v4168
        %v4196 = vadd.f32 %v3752, %v4170
        %v4197 = vadd.f32 %v3753, %v4173
        %v4198 = vadd.f32 %v3754, %v4175
        %v4199 = vadd.f32 %v3755, %v4178
        %v4200 = vadd.f32 %v3756, %v4180
        %v4201 = vadd.f32 %v3757, %v4183
        %v4202 = vadd.f32 %v3758, %v4185
        %v4203 = vld [vmem:[#allocation4 + $0x2] sm:$0x1]
        %v4204 = vadd.f32 %v4187, %v4188
        %v4205 = vadd.f32 %v4204, %v4189
        %v4206 = vadd.f32 %v4205, %v4190
        %v4207 = vadd.f32 %v4206, %v4191
        %v4208 = vadd.f32 %v4207, %v4192
        %v4209 = vadd.f32 %v4208, %v4193
        %v4210 = vadd.f32 %v4209, %v4194
        %v4211 = vadd.f32 %v4210, %v4195
        %v4212 = vadd.f32 %v4211, %v4196
        %v4213 = vadd.f32 %v4212, %v4197
        %v4214 = vadd.f32 %v4213, %v4198
        %v4215 = vadd.f32 %v4214, %v4199
        %v4216 = vadd.f32 %v4215, %v4200
        %v4217 = vadd.f32 %v4216, %v4201
        %v4218 = vadd.f32 %v4217, %v4202
        %v4219 = vrot.slane %v4218, 4
        %v4220 = vadd.f32 %v4218, %v4219
        %v4221 = vrot.slane %v4220, 2
        %v4222 = vadd.f32 %v4220, %v4221
        %v4223 = vrot.slane %v4222, 1
        %v4224 = vadd.f32 %v4222, %v4223
        %v4225 = vadd.f32 %v4203, %v4224
        %4226 = vst [vmem:[#allocation4 + $0x2] sm:$0x1] %v4225
        %v4227 = vld [vmem:[#allocation4 + $0x3] sm:$0x1]
        %v4228 = vmul.f32 %v4187, %v4187
        %v4229 = vmul.f32 %v4188, %v4188
        %v4230 = vmul.f32 %v4189, %v4189
        %v4231 = vmul.f32 %v4190, %v4190
        %v4232 = vmul.f32 %v4191, %v4191
        %v4233 = vmul.f32 %v4192, %v4192
        %v4234 = vmul.f32 %v4193, %v4193
        %v4235 = vmul.f32 %v4194, %v4194
        %v4236 = vmul.f32 %v4195, %v4195
        %v4237 = vmul.f32 %v4196, %v4196
        %v4238 = vmul.f32 %v4197, %v4197
        %v4239 = vmul.f32 %v4198, %v4198
        %v4240 = vmul.f32 %v4199, %v4199
        %v4241 = vmul.f32 %v4200, %v4200
        %v4242 = vmul.f32 %v4201, %v4201
        %v4243 = vmul.f32 %v4202, %v4202
        %v4244 = vadd.f32 %v4228, %v4229
        %v4245 = vadd.f32 %v4244, %v4230
        %v4246 = vadd.f32 %v4245, %v4231
        %v4247 = vadd.f32 %v4246, %v4232
        %v4248 = vadd.f32 %v4247, %v4233
        %v4249 = vadd.f32 %v4248, %v4234
        %v4250 = vadd.f32 %v4249, %v4235
        %v4251 = vadd.f32 %v4250, %v4236
        %v4252 = vadd.f32 %v4251, %v4237
        %v4253 = vadd.f32 %v4252, %v4238
        %v4254 = vadd.f32 %v4253, %v4239
        %v4255 = vadd.f32 %v4254, %v4240
        %v4256 = vadd.f32 %v4255, %v4241
        %v4257 = vadd.f32 %v4256, %v4242
        %v4258 = vadd.f32 %v4257, %v4243
        %v4259 = vrot.slane %v4258, 4
        %v4260 = vadd.f32 %v4258, %v4259
        %v4261 = vrot.slane %v4260, 2
        %v4262 = vadd.f32 %v4260, %v4261
        %v4263 = vrot.slane %v4262, 1
        %v4264 = vadd.f32 %v4262, %v4263
        %v4265 = vadd.f32 %v4227, %v4264
        %4266 = vst [vmem:[#allocation4 + $0x3] sm:$0x1] %v4265
        %4267 = vst [vmem:[%s826] sm:$0xff] %v4187
        %4268 = vst [vmem:[%s826 + $0x8] sm:$0xff] %v4188
        %4269 = vst [vmem:[%s826 + $0x10] sm:$0xff] %v4189
        %4270 = vst [vmem:[%s826 + $0x18] sm:$0xff] %v4190
        %4271 = vst [vmem:[%s826 + $0x20] sm:$0xff] %v4191
        %4272 = vst [vmem:[%s826 + $0x28] sm:$0xff] %v4192
        %4273 = vst [vmem:[%s826 + $0x30] sm:$0xff] %v4193
        %4274 = vst [vmem:[%s826 + $0x38] sm:$0xff] %v4194
        %4275 = vst [vmem:[%s826 + $0x40] sm:$0xff] %v4195
        %4276 = vst [vmem:[%s826 + $0x48] sm:$0xff] %v4196
        %4277 = vst [vmem:[%s826 + $0x50] sm:$0xff] %v4197
        %4278 = vst [vmem:[%s826 + $0x58] sm:$0xff] %v4198
        %4279 = vst [vmem:[%s826 + $0x60] sm:$0xff] %v4199
        %4280 = vst [vmem:[%s826 + $0x68] sm:$0xff] %v4200
        %4281 = vst [vmem:[%s826 + $0x70] sm:$0xff] %v4201
        %4282 = vst [vmem:[%s826 + $0x78] sm:$0xff] %v4202
        %v4283 = vld [vmem:[#allocation3 + $0x50] sm:$0xf]
        %v4284 = vld [vmem:[#allocation3 + $0x54] sm:$0xf]
        %v4285 = vld [vmem:[#allocation3 + $0x58] sm:$0xf]
        %v4286 = vld [vmem:[#allocation3 + $0x5c] sm:$0xf]
        %v4287 = vld [vmem:[#allocation3 + $0x60] sm:$0xf]
        %v4288 = vld [vmem:[#allocation3 + $0x64] sm:$0xf]
        %v4289 = vld [vmem:[#allocation3 + $0x68] sm:$0xf]
        %v4290 = vld [vmem:[#allocation3 + $0x6c] sm:$0xf]
        %v4291 = vld [vmem:[#allocation3 + $0x70] sm:$0xf]
        %v4292 = vld [vmem:[#allocation3 + $0x74] sm:$0xf]
        %v4293 = vld [vmem:[#allocation3 + $0x78] sm:$0xf]
        %v4294 = vld [vmem:[#allocation3 + $0x7c] sm:$0xf]
        %v4295 = vld [vmem:[#allocation3 + $0x80] sm:$0xf]
        %v4296 = vld [vmem:[#allocation3 + $0x84] sm:$0xf]
        %v4297 = vld [vmem:[#allocation3 + $0x88] sm:$0xf]
        %v4298 = vld [vmem:[#allocation3 + $0x8c] sm:$0xf]
        %v4299 = vld [vmem:[%s3] sm:$0xf]
        %v4300 = vld [vmem:[%s3 + $0x4] sm:$0xf]
        %v4301 = vld [vmem:[%s3 + $0x8] sm:$0xf]
        %v4302 = vld [vmem:[%s3 + $0xc] sm:$0xf]
        %v4303 = vld [vmem:[%s3 + $0x10] sm:$0xf]
        %v4304 = vld [vmem:[%s3 + $0x14] sm:$0xf]
        %v4305 = vld [vmem:[%s3 + $0x18] sm:$0xf]
        %v4306 = vld [vmem:[%s3 + $0x1c] sm:$0xf]
        %v4307 = vld [vmem:[%s3 + $0x20] sm:$0xf]
        %v4308 = vld [vmem:[%s3 + $0x24] sm:$0xf]
        %v4309 = vld [vmem:[%s3 + $0x28] sm:$0xf]
        %v4310 = vld [vmem:[%s3 + $0x2c] sm:$0xf]
        %v4311 = vld [vmem:[%s3 + $0x30] sm:$0xf]
        %v4312 = vld [vmem:[%s3 + $0x34] sm:$0xf]
        %v4313 = vld [vmem:[%s3 + $0x38] sm:$0xf]
        %v4314 = vld [vmem:[%s3 + $0x3c] sm:$0xf]
        %v4315 = vld [vmem:[#allocation3 + $0x44] sm:$0x8]
        %v4316 = vld [vmem:[#allocation3 + $0x48] sm:$0xf]
        %v4317 = vld [vmem:[#allocation3 + $0x4c] sm:$0xf]
        %v4318 = vsel %vm1529, %v4315, 0
        %v4319 = vsel %vm1536, %v4316, 0
        %v4320 = vsel %vm1543, %v4317, 0
        %v4321 = vsel %vm1550, %v4283, 0
        %v4322 = vsel %vm1557, %v4284, 0
        %v4323 = vsel %vm1564, %v4285, 0
        %v4324 = vsel %vm1571, %v4286, 0
        %v4325 = vsel %vm1578, %v4287, 0
        %v4326 = vsel %vm1585, %v4288, 0
        %v4327 = vsel %vm1592, %v4289, 0
        %v4328 = vsel %vm1599, %v4290, 0
        %v4329 = vsel %vm1606, %v4291, 0
        %v4330 = vsel %vm1613, %v4292, 0
        %v4331 = vsel %vm1620, %v4293, 0
        %v4332 = vsel %vm1627, %v4294, 0
        %v4333 = vsel %vm1634, %v4295, 0
        %v4334 = vsel %vm1641, %v4296, 0
        %v4352 = vunpack.c.l.b16 %v4318
        %v4353 = vunpack.c.l.b16 %v4319
        %v4354 = vunpack.c.l.b16 %v4320
        %v4355 = vunpack.c.l.b16 %v4321
        %v4356 = vunpack.c.l.b16 %v4322
        %v4357 = vunpack.c.l.b16 %v4323
        %v4358 = vunpack.c.l.b16 %v4324
        %v4359 = vunpack.c.l.b16 %v4325
        %v4360 = vunpack.c.l.b16 %v4326
        %v4361 = vunpack.c.l.b16 %v4327
        %v4362 = vunpack.c.l.b16 %v4328
        %v4363 = vunpack.c.l.b16 %v4329
        %v4364 = vunpack.c.l.b16 %v4330
        %v4365 = vunpack.c.l.b16 %v4331
        %v4366 = vunpack.c.l.b16 %v4332
        %v4367 = vunpack.c.l.b16 %v4333
        %v4368 = vunpack.c.l.b16 %v4334
        %v4369 = vpack.c.b16 %v4353, %v4352
        %v4370 = vpack.c.b16 %v4355, %v4354
        %v4371 = vpack.c.b16 %v4357, %v4356
        %v4372 = vpack.c.b16 %v4359, %v4358
        %v4373 = vpack.c.b16 %v4361, %v4360
        %v4374 = vpack.c.b16 %v4363, %v4362
        %v4375 = vpack.c.b16 %v4365, %v4364
        %v4376 = vpack.c.b16 %v4367, %v4366
        %v4377 = vpack.c.b16 %v4368, %v4368
        %v4394 = vunpack.c.l.b16 %v4316
        %v4395 = vunpack.c.l.b16 %v4317
        %v4396 = vunpack.c.l.b16 %v4283
        %v4397 = vunpack.c.l.b16 %v4284
        %v4398 = vunpack.c.l.b16 %v4285
        %v4399 = vunpack.c.l.b16 %v4286
        %v4400 = vunpack.c.l.b16 %v4287
        %v4401 = vunpack.c.l.b16 %v4288
        %v4402 = vunpack.c.l.b16 %v4289
        %v4403 = vunpack.c.l.b16 %v4290
        %v4404 = vunpack.c.l.b16 %v4291
        %v4405 = vunpack.c.l.b16 %v4292
        %v4406 = vunpack.c.l.b16 %v4293
        %v4407 = vunpack.c.l.b16 %v4294
        %v4408 = vunpack.c.l.b16 %v4295
        %v4409 = vunpack.c.l.b16 %v4296
        %v4410 = vpack.c.b16 %v4395, %v4394
        %v4411 = vpack.c.b16 %v4397, %v4396
        %v4412 = vpack.c.b16 %v4399, %v4398
        %v4413 = vpack.c.b16 %v4401, %v4400
        %v4414 = vpack.c.b16 %v4403, %v4402
        %v4415 = vpack.c.b16 %v4405, %v4404
        %v4416 = vpack.c.b16 %v4407, %v4406
        %v4417 = vpack.c.b16 %v4409, %v4408
        %v4419 = vshrl.u32 %v4410, 16
        %v4421 = vrot.slane %v4419, 4
        %v4422 = vshll.u32 %v4410, 16
        %v4424 = vrot.slane %v4422, 5
        %v4425 = vor.u32 %v4421, %v4424
        %v4427 = vshrl.u32 %v4411, 16
        %v4429 = vrot.slane %v4427, 4
        %v4430 = vshll.u32 %v4411, 16
        %v4432 = vrot.slane %v4430, 5
        %v4433 = vor.u32 %v4429, %v4432
        %v4434 = vsel %vm1361, %v4425, %v4433
        %v4436 = vshrl.u32 %v4412, 16
        %v4438 = vrot.slane %v4436, 4
        %v4439 = vshll.u32 %v4412, 16
        %v4441 = vrot.slane %v4439, 5
        %v4442 = vor.u32 %v4438, %v4441
        %v4443 = vsel %vm1361, %v4433, %v4442
        %v4445 = vshrl.u32 %v4413, 16
        %v4447 = vrot.slane %v4445, 4
        %v4448 = vshll.u32 %v4413, 16
        %v4450 = vrot.slane %v4448, 5
        %v4451 = vor.u32 %v4447, %v4450
        %v4452 = vsel %vm1361, %v4442, %v4451
        %v4454 = vshrl.u32 %v4414, 16
        %v4456 = vrot.slane %v4454, 4
        %v4457 = vshll.u32 %v4414, 16
        %v4459 = vrot.slane %v4457, 5
        %v4460 = vor.u32 %v4456, %v4459
        %v4461 = vsel %vm1361, %v4451, %v4460
        %v4463 = vshrl.u32 %v4415, 16
        %v4465 = vrot.slane %v4463, 4
        %v4466 = vshll.u32 %v4415, 16
        %v4468 = vrot.slane %v4466, 5
        %v4469 = vor.u32 %v4465, %v4468
        %v4470 = vsel %vm1361, %v4460, %v4469
        %v4472 = vshrl.u32 %v4416, 16
        %v4474 = vrot.slane %v4472, 4
        %v4475 = vshll.u32 %v4416, 16
        %v4477 = vrot.slane %v4475, 5
        %v4478 = vor.u32 %v4474, %v4477
        %v4479 = vsel %vm1361, %v4469, %v4478
        %v4481 = vshrl.u32 %v4417, 16
        %v4483 = vrot.slane %v4481, 4
        %v4484 = vshll.u32 %v4417, 16
        %v4486 = vrot.slane %v4484, 5
        %v4487 = vor.u32 %v4483, %v4486
        %v4488 = vsel %vm1361, %v4478, %v4487
        %v4489 = vld [vmem:[%s2] sm:$0xf]
        %v4490 = vld [vmem:[%s2 + $0x4] sm:$0xf]
        %v4491 = vld [vmem:[%s2 + $0x8] sm:$0xf]
        %v4492 = vld [vmem:[%s2 + $0xc] sm:$0xf]
        %v4493 = vld [vmem:[%s2 + $0x10] sm:$0xf]
        %v4494 = vld [vmem:[%s2 + $0x14] sm:$0xf]
        %v4495 = vld [vmem:[%s2 + $0x18] sm:$0xf]
        %v4496 = vld [vmem:[%s2 + $0x1c] sm:$0xf]
        %v4497 = vld [vmem:[%s2 + $0x20] sm:$0xf]
        %v4498 = vld [vmem:[%s2 + $0x24] sm:$0xf]
        %v4499 = vld [vmem:[%s2 + $0x28] sm:$0xf]
        %v4500 = vld [vmem:[%s2 + $0x2c] sm:$0xf]
        %v4501 = vld [vmem:[%s2 + $0x30] sm:$0xf]
        %v4502 = vld [vmem:[%s2 + $0x34] sm:$0xf]
        %v4503 = vld [vmem:[%s2 + $0x38] sm:$0xf]
        %v4504 = vld [vmem:[%s2 + $0x3c] sm:$0xf]
        %v4505 = vld [vmem:[%s2 + $0x40] sm:$0xf]
        %v4506 = vld [vmem:[%s2 + $0x44] sm:$0xf]
        %v4507 = vld [vmem:[%s2 + $0x48] sm:$0xf]
        %v4508 = vld [vmem:[%s2 + $0x4c] sm:$0xf]
        %v4509 = vld [vmem:[%s2 + $0x50] sm:$0xf]
        %v4510 = vld [vmem:[%s2 + $0x54] sm:$0xf]
        %v4511 = vld [vmem:[%s2 + $0x58] sm:$0xf]
        %v4512 = vld [vmem:[%s2 + $0x5c] sm:$0xf]
        %v4513 = vld [vmem:[%s2 + $0x60] sm:$0xf]
        %v4514 = vld [vmem:[%s2 + $0x64] sm:$0xf]
        %v4515 = vld [vmem:[%s2 + $0x68] sm:$0xf]
        %v4516 = vld [vmem:[%s2 + $0x6c] sm:$0xf]
        %v4517 = vld [vmem:[%s2 + $0x70] sm:$0xf]
        %v4518 = vld [vmem:[%s2 + $0x74] sm:$0xf]
        %v4519 = vld [vmem:[%s2 + $0x78] sm:$0xf]
        %v4520 = vld [vmem:[%s2 + $0x7c] sm:$0xf]
        %v4522 = vshrl.u32 %v4369, 16
        %v4524 = vrot.slane %v4522, 3
        %v4525 = vshll.u32 %v4369, 16
        %v4527 = vrot.slane %v4525, 4
        %v4528 = vor.u32 %v4524, %v4527
        %v4530 = vshrl.u32 %v4370, 16
        %v4532 = vrot.slane %v4530, 3
        %v4533 = vshll.u32 %v4370, 16
        %v4535 = vrot.slane %v4533, 4
        %v4536 = vor.u32 %v4532, %v4535
        %v4537 = vsel %vm1845, %v4528, %v4536
        %v4539 = vshrl.u32 %v4425, 16
        %v4541 = vrot.slane %v4539, 3
        %v4542 = vshll.u32 %v4425, 16
        %v4544 = vrot.slane %v4542, 4
        %v4545 = vor.u32 %v4541, %v4544
        %v4547 = vshrl.u32 %v4434, 16
        %v4549 = vrot.slane %v4547, 3
        %v4550 = vshll.u32 %v4434, 16
        %v4552 = vrot.slane %v4550, 4
        %v4553 = vor.u32 %v4549, %v4552
        %v4554 = vsel %vm1845, %v4545, %v4553
        %v4556 = vshrl.u32 %v4371, 16
        %v4558 = vrot.slane %v4556, 3
        %v4559 = vshll.u32 %v4371, 16
        %v4561 = vrot.slane %v4559, 4
        %v4562 = vor.u32 %v4558, %v4561
        %v4563 = vsel %vm1845, %v4536, %v4562
        %v4565 = vshrl.u32 %v4443, 16
        %v4567 = vrot.slane %v4565, 3
        %v4568 = vshll.u32 %v4443, 16
        %v4570 = vrot.slane %v4568, 4
        %v4571 = vor.u32 %v4567, %v4570
        %v4572 = vsel %vm1845, %v4553, %v4571
        %v4574 = vshrl.u32 %v4372, 16
        %v4576 = vrot.slane %v4574, 3
        %v4577 = vshll.u32 %v4372, 16
        %v4579 = vrot.slane %v4577, 4
        %v4580 = vor.u32 %v4576, %v4579
        %v4581 = vsel %vm1845, %v4562, %v4580
        %v4583 = vshrl.u32 %v4452, 16
        %v4585 = vrot.slane %v4583, 3
        %v4586 = vshll.u32 %v4452, 16
        %v4588 = vrot.slane %v4586, 4
        %v4589 = vor.u32 %v4585, %v4588
        %v4590 = vsel %vm1845, %v4571, %v4589
        %v4592 = vshrl.u32 %v4373, 16
        %v4594 = vrot.slane %v4592, 3
        %v4595 = vshll.u32 %v4373, 16
        %v4597 = vrot.slane %v4595, 4
        %v4598 = vor.u32 %v4594, %v4597
        %v4599 = vsel %vm1845, %v4580, %v4598
        %v4601 = vshrl.u32 %v4461, 16
        %v4603 = vrot.slane %v4601, 3
        %v4604 = vshll.u32 %v4461, 16
        %v4606 = vrot.slane %v4604, 4
        %v4607 = vor.u32 %v4603, %v4606
        %v4608 = vsel %vm1845, %v4589, %v4607
        %v4610 = vshrl.u32 %v4374, 16
        %v4612 = vrot.slane %v4610, 3
        %v4613 = vshll.u32 %v4374, 16
        %v4615 = vrot.slane %v4613, 4
        %v4616 = vor.u32 %v4612, %v4615
        %v4617 = vsel %vm1845, %v4598, %v4616
        %v4619 = vshrl.u32 %v4470, 16
        %v4621 = vrot.slane %v4619, 3
        %v4622 = vshll.u32 %v4470, 16
        %v4624 = vrot.slane %v4622, 4
        %v4625 = vor.u32 %v4621, %v4624
        %v4626 = vsel %vm1845, %v4607, %v4625
        %v4628 = vshrl.u32 %v4375, 16
        %v4630 = vrot.slane %v4628, 3
        %v4631 = vshll.u32 %v4375, 16
        %v4633 = vrot.slane %v4631, 4
        %v4634 = vor.u32 %v4630, %v4633
        %v4635 = vsel %vm1845, %v4616, %v4634
        %v4637 = vshrl.u32 %v4479, 16
        %v4639 = vrot.slane %v4637, 3
        %v4640 = vshll.u32 %v4479, 16
        %v4642 = vrot.slane %v4640, 4
        %v4643 = vor.u32 %v4639, %v4642
        %v4644 = vsel %vm1845, %v4625, %v4643
        %v4646 = vshrl.u32 %v4376, 16
        %v4648 = vrot.slane %v4646, 3
        %v4649 = vshll.u32 %v4376, 16
        %v4651 = vrot.slane %v4649, 4
        %v4652 = vor.u32 %v4648, %v4651
        %v4653 = vsel %vm1845, %v4634, %v4652
        %v4655 = vshrl.u32 %v4488, 16
        %v4657 = vrot.slane %v4655, 3
        %v4658 = vshll.u32 %v4488, 16
        %v4660 = vrot.slane %v4658, 4
        %v4661 = vor.u32 %v4657, %v4660
        %v4662 = vsel %vm1845, %v4643, %v4661
        %v4664 = vshrl.u32 %v4377, 16
        %v4666 = vrot.slane %v4664, 3
        %v4667 = vshll.u32 %v4377, 16
        %v4669 = vrot.slane %v4667, 4
        %v4670 = vor.u32 %v4666, %v4669
        %v4671 = vsel %vm1845, %v4652, %v4670
        %v4673 = vshrl.u32 %v4487, 16
        %v4675 = vrot.slane %v4673, 3
        %v4676 = vshll.u32 %v4487, 16
        %v4678 = vrot.slane %v4676, 4
        %v4679 = vor.u32 %v4675, %v4678
        %v4680 = vsel %vm1845, %v4661, %v4679
        %v4729 = vunpack.c.l.b16 %v4489
        %v4730 = vunpack.c.l.b16 %v4490
        %v4731 = vunpack.c.l.b16 %v4491
        %v4732 = vunpack.c.l.b16 %v4492
        %v4733 = vunpack.c.l.b16 %v4493
        %v4734 = vunpack.c.l.b16 %v4494
        %v4735 = vunpack.c.l.b16 %v4495
        %v4736 = vunpack.c.l.b16 %v4496
        %v4737 = vunpack.c.l.b16 %v4497
        %v4738 = vunpack.c.l.b16 %v4498
        %v4739 = vunpack.c.l.b16 %v4499
        %v4740 = vunpack.c.l.b16 %v4500
        %v4741 = vunpack.c.l.b16 %v4501
        %v4742 = vunpack.c.l.b16 %v4502
        %v4743 = vunpack.c.l.b16 %v4503
        %v4744 = vunpack.c.l.b16 %v4504
        %v4745 = vunpack.c.l.b16 %v4505
        %v4746 = vunpack.c.l.b16 %v4506
        %v4747 = vunpack.c.l.b16 %v4507
        %v4748 = vunpack.c.l.b16 %v4508
        %v4749 = vunpack.c.l.b16 %v4509
        %v4750 = vunpack.c.l.b16 %v4510
        %v4751 = vunpack.c.l.b16 %v4511
        %v4752 = vunpack.c.l.b16 %v4512
        %v4753 = vunpack.c.l.b16 %v4513
        %v4754 = vunpack.c.l.b16 %v4514
        %v4755 = vunpack.c.l.b16 %v4515
        %v4756 = vunpack.c.l.b16 %v4516
        %v4757 = vunpack.c.l.b16 %v4517
        %v4758 = vunpack.c.l.b16 %v4518
        %v4759 = vunpack.c.l.b16 %v4519
        %v4760 = vunpack.c.l.b16 %v4520
        %v4761 = vpack.c.b16 %v4730, %v4729
        %v4762 = vpack.c.b16 %v4732, %v4731
        %v4763 = vpack.c.b16 %v4734, %v4733
        %v4764 = vpack.c.b16 %v4736, %v4735
        %v4765 = vpack.c.b16 %v4738, %v4737
        %v4766 = vpack.c.b16 %v4740, %v4739
        %v4767 = vpack.c.b16 %v4742, %v4741
        %v4768 = vpack.c.b16 %v4744, %v4743
        %v4769 = vpack.c.b16 %v4746, %v4745
        %v4770 = vpack.c.b16 %v4748, %v4747
        %v4771 = vpack.c.b16 %v4750, %v4749
        %v4772 = vpack.c.b16 %v4752, %v4751
        %v4773 = vpack.c.b16 %v4754, %v4753
        %v4774 = vpack.c.b16 %v4756, %v4755
        %v4775 = vpack.c.b16 %v4758, %v4757
        %v4776 = vpack.c.b16 %v4760, %v4759
        %4793 = vmatpush.bf16.msra.mxu0 %v4768
        %4794 = vmatpush.bf16.msra.mxu0 %v4767
        %4795 = vmatpush.bf16.msra.mxu0 %v4766
        %4796 = vmatpush.bf16.msra.mxu0 %v4765
        %4797 = vmatpush.bf16.msra.mxu0 %v4764
        %4798 = vmatpush.bf16.msra.mxu0 %v4763
        %4799 = vmatpush.bf16.msra.mxu0 %v4762
        %4800 = vmatpush.bf16.msra.mxu0 %v4761
        %4801 = vmatmul.bf16.gmra.mxu0 %v4537
        %v4802 = vpop.f32.mrf.mxu0
        %v4803 = vadd.f32 0.0, %v4802
        %v4804 = vpop.f32.mrf.mxu0
        %v4805 = vadd.f32 0.0, %v4804
        %4806 = vmatmul.bf16.gmra.mxu0 %v4563
        %v4807 = vpop.f32.mrf.mxu0
        %v4808 = vadd.f32 0.0, %v4807
        %v4809 = vpop.f32.mrf.mxu0
        %v4810 = vadd.f32 0.0, %v4809
        %4811 = vmatmul.bf16.gmra.mxu0 %v4581
        %v4812 = vpop.f32.mrf.mxu0
        %v4813 = vadd.f32 0.0, %v4812
        %v4814 = vpop.f32.mrf.mxu0
        %v4815 = vadd.f32 0.0, %v4814
        %4816 = vmatmul.bf16.gmra.mxu0 %v4599
        %v4817 = vpop.f32.mrf.mxu0
        %v4818 = vadd.f32 0.0, %v4817
        %v4819 = vpop.f32.mrf.mxu0
        %v4820 = vadd.f32 0.0, %v4819
        %4821 = vmatmul.bf16.gmra.mxu0 %v4617
        %v4822 = vpop.f32.mrf.mxu0
        %v4823 = vadd.f32 0.0, %v4822
        %v4824 = vpop.f32.mrf.mxu0
        %v4825 = vadd.f32 0.0, %v4824
        %4826 = vmatmul.bf16.gmra.mxu0 %v4635
        %v4827 = vpop.f32.mrf.mxu0
        %v4828 = vadd.f32 0.0, %v4827
        %v4829 = vpop.f32.mrf.mxu0
        %v4830 = vadd.f32 0.0, %v4829
        %4831 = vmatmul.bf16.gmra.mxu0 %v4653
        %v4832 = vpop.f32.mrf.mxu0
        %v4833 = vadd.f32 0.0, %v4832
        %v4834 = vpop.f32.mrf.mxu0
        %v4835 = vadd.f32 0.0, %v4834
        %4836 = vmatmul.bf16.gmra.mxu0 %v4671
        %v4837 = vpop.f32.mrf.mxu0
        %v4838 = vadd.f32 0.0, %v4837
        %v4839 = vpop.f32.mrf.mxu0
        %v4840 = vadd.f32 0.0, %v4839
        %4841 = vdwg.mxu0
        %4842 = vmatpush.bf16.msra.mxu0 %v4776
        %4843 = vmatpush.bf16.msra.mxu0 %v4775
        %4844 = vmatpush.bf16.msra.mxu0 %v4774
        %4845 = vmatpush.bf16.msra.mxu0 %v4773
        %4846 = vmatpush.bf16.msra.mxu0 %v4772
        %4847 = vmatpush.bf16.msra.mxu0 %v4771
        %4848 = vmatpush.bf16.msra.mxu0 %v4770
        %4849 = vmatpush.bf16.msra.mxu0 %v4769
        %4850 = vmatmul.bf16.gmra.mxu0 %v4554
        %v4851 = vpop.f32.mrf.mxu0
        %v4852 = vadd.f32 %v4803, %v4851
        %v4853 = vpop.f32.mrf.mxu0
        %v4854 = vadd.f32 %v4805, %v4853
        %4855 = vmatmul.bf16.gmra.mxu0 %v4572
        %v4856 = vpop.f32.mrf.mxu0
        %v4857 = vadd.f32 %v4808, %v4856
        %v4858 = vpop.f32.mrf.mxu0
        %v4859 = vadd.f32 %v4810, %v4858
        %4860 = vmatmul.bf16.gmra.mxu0 %v4590
        %v4861 = vpop.f32.mrf.mxu0
        %v4862 = vadd.f32 %v4813, %v4861
        %v4863 = vpop.f32.mrf.mxu0
        %v4864 = vadd.f32 %v4815, %v4863
        %4865 = vmatmul.bf16.gmra.mxu0 %v4608
        %v4866 = vpop.f32.mrf.mxu0
        %v4867 = vadd.f32 %v4818, %v4866
        %v4868 = vpop.f32.mrf.mxu0
        %v4869 = vadd.f32 %v4820, %v4868
        %4870 = vmatmul.bf16.gmra.mxu0 %v4626
        %v4871 = vpop.f32.mrf.mxu0
        %v4872 = vadd.f32 %v4823, %v4871
        %v4873 = vpop.f32.mrf.mxu0
        %v4874 = vadd.f32 %v4825, %v4873
        %4875 = vmatmul.bf16.gmra.mxu0 %v4644
        %v4876 = vpop.f32.mrf.mxu0
        %v4877 = vadd.f32 %v4828, %v4876
        %v4878 = vpop.f32.mrf.mxu0
        %v4879 = vadd.f32 %v4830, %v4878
        %4880 = vmatmul.bf16.gmra.mxu0 %v4662
        %v4881 = vpop.f32.mrf.mxu0
        %v4882 = vadd.f32 %v4833, %v4881
        %v4883 = vpop.f32.mrf.mxu0
        %v4884 = vadd.f32 %v4835, %v4883
        %4885 = vmatmul.bf16.gmra.mxu0 %v4680
        %v4886 = vpop.f32.mrf.mxu0
        %v4887 = vadd.f32 %v4838, %v4886
        %v4888 = vpop.f32.mrf.mxu0
        %v4889 = vadd.f32 %v4840, %v4888
        %4890 = vdwg.mxu0
        %v4893 = vunpack.c.l.b16 %v4297
        %v4894 = vunpack.c.l.b16 %v4298
        %v4895 = vpack.c.b16 %v4894, %v4893
        %v4920 = vunpack.c.l.b16 %v4299
        %v4921 = vunpack.c.l.b16 %v4300
        %v4922 = vunpack.c.l.b16 %v4301
        %v4923 = vunpack.c.l.b16 %v4302
        %v4924 = vunpack.c.l.b16 %v4303
        %v4925 = vunpack.c.l.b16 %v4304
        %v4926 = vunpack.c.l.b16 %v4305
        %v4927 = vunpack.c.l.b16 %v4306
        %v4928 = vunpack.c.l.b16 %v4307
        %v4929 = vunpack.c.l.b16 %v4308
        %v4930 = vunpack.c.l.b16 %v4309
        %v4931 = vunpack.c.l.b16 %v4310
        %v4932 = vunpack.c.l.b16 %v4311
        %v4933 = vunpack.c.l.b16 %v4312
        %v4934 = vunpack.c.l.b16 %v4313
        %v4935 = vunpack.c.l.b16 %v4314
        %v4936 = vpack.c.b16 %v4921, %v4920
        %v4937 = vpack.c.b16 %v4923, %v4922
        %v4938 = vpack.c.b16 %v4925, %v4924
        %v4939 = vpack.c.b16 %v4927, %v4926
        %v4940 = vpack.c.b16 %v4929, %v4928
        %v4941 = vpack.c.b16 %v4931, %v4930
        %v4942 = vpack.c.b16 %v4933, %v4932
        %v4943 = vpack.c.b16 %v4935, %v4934
        %4952 = vmatpush.bf16.msra.mxu0 %v4943
        %4953 = vmatpush.bf16.msra.mxu0 %v4942
        %4954 = vmatpush.bf16.msra.mxu0 %v4941
        %4955 = vmatpush.bf16.msra.mxu0 %v4940
        %4956 = vmatpush.bf16.msra.mxu0 %v4939
        %4957 = vmatpush.bf16.msra.mxu0 %v4938
        %4958 = vmatpush.bf16.msra.mxu0 %v4937
        %4959 = vmatpush.bf16.msra.mxu0 %v4936
        %4960 = vmatmul.bf16.gmra.mxu0 %v4411
        %v4961 = vpop.f32.mrf.mxu0
        %v4962 = vadd.f32 %v4852, %v4961
        %v4963 = vpop.f32.mrf.mxu0
        %v4964 = vadd.f32 %v4854, %v4963
        %4965 = vmatmul.bf16.gmra.mxu0 %v4412
        %v4966 = vpop.f32.mrf.mxu0
        %v4967 = vadd.f32 %v4857, %v4966
        %v4968 = vpop.f32.mrf.mxu0
        %v4969 = vadd.f32 %v4859, %v4968
        %4970 = vmatmul.bf16.gmra.mxu0 %v4413
        %v4971 = vpop.f32.mrf.mxu0
        %v4972 = vadd.f32 %v4862, %v4971
        %v4973 = vpop.f32.mrf.mxu0
        %v4974 = vadd.f32 %v4864, %v4973
        %4975 = vmatmul.bf16.gmra.mxu0 %v4414
        %v4976 = vpop.f32.mrf.mxu0
        %v4977 = vadd.f32 %v4867, %v4976
        %v4978 = vpop.f32.mrf.mxu0
        %v4979 = vadd.f32 %v4869, %v4978
        %4980 = vmatmul.bf16.gmra.mxu0 %v4415
        %v4981 = vpop.f32.mrf.mxu0
        %v4982 = vadd.f32 %v4872, %v4981
        %v4983 = vpop.f32.mrf.mxu0
        %v4984 = vadd.f32 %v4874, %v4983
        %4985 = vmatmul.bf16.gmra.mxu0 %v4416
        %v4986 = vpop.f32.mrf.mxu0
        %v4987 = vadd.f32 %v4877, %v4986
        %v4988 = vpop.f32.mrf.mxu0
        %v4989 = vadd.f32 %v4879, %v4988
        %4990 = vmatmul.bf16.gmra.mxu0 %v4417
        %v4991 = vpop.f32.mrf.mxu0
        %v4992 = vadd.f32 %v4882, %v4991
        %v4993 = vpop.f32.mrf.mxu0
        %v4994 = vadd.f32 %v4884, %v4993
        %4995 = vmatmul.bf16.gmra.mxu0 %v4895
        %v4996 = vpop.f32.mrf.mxu0
        %v4997 = vadd.f32 %v4887, %v4996
        %v4998 = vpop.f32.mrf.mxu0
        %v4999 = vadd.f32 %v4889, %v4998
        %5000 = vdwg.mxu0
        %v5001 = vld [vmem:[#allocation3 + $0x48] sm:$0xf]
        %v5002 = vld [vmem:[#allocation3 + $0x4c] sm:$0xf]
        %v5003 = vld [vmem:[#allocation3 + $0x50] sm:$0xf]
        %v5004 = vld [vmem:[#allocation3 + $0x54] sm:$0xf]
        %v5005 = vld [vmem:[#allocation3 + $0x58] sm:$0xf]
        %v5006 = vld [vmem:[#allocation3 + $0x5c] sm:$0xf]
        %v5007 = vld [vmem:[#allocation3 + $0x60] sm:$0xf]
        %v5008 = vld [vmem:[#allocation3 + $0x64] sm:$0xf]
        %v5009 = vld [vmem:[#allocation3 + $0x68] sm:$0xf]
        %v5010 = vld [vmem:[#allocation3 + $0x6c] sm:$0xf]
        %v5011 = vld [vmem:[#allocation3 + $0x70] sm:$0xf]
        %v5012 = vld [vmem:[#allocation3 + $0x74] sm:$0xf]
        %v5013 = vld [vmem:[#allocation3 + $0x78] sm:$0xf]
        %v5014 = vld [vmem:[#allocation3 + $0x7c] sm:$0xf]
        %v5015 = vld [vmem:[#allocation3 + $0x80] sm:$0xf]
        %v5016 = vld [vmem:[#allocation3 + $0x84] sm:$0xf]
        %v5017 = vld [vmem:[#allocation3 + $0x88] sm:$0x1]
        %v5018 = vsel %vm2559, %v5001, 0
        %v5019 = vsel %vm2566, %v5002, 0
        %v5020 = vsel %vm2573, %v5003, 0
        %v5021 = vsel %vm2580, %v5004, 0
        %v5022 = vsel %vm2587, %v5005, 0
        %v5023 = vsel %vm2594, %v5006, 0
        %v5024 = vsel %vm2601, %v5007, 0
        %v5025 = vsel %vm2608, %v5008, 0
        %v5026 = vsel %vm2615, %v5009, 0
        %v5027 = vsel %vm2622, %v5010, 0
        %v5028 = vsel %vm2629, %v5011, 0
        %v5029 = vsel %vm2636, %v5012, 0
        %v5030 = vsel %vm2643, %v5013, 0
        %v5031 = vsel %vm2650, %v5014, 0
        %v5032 = vsel %vm2657, %v5015, 0
        %v5033 = vsel %vm2664, %v5016, 0
        %v5034 = vsel %vm2671, %v5017, 0
        %v5035 = vld [vmem:[#allocation3 + $0x4c] sm:$0x8]
        %v5036 = vsel %vm1529, %v5035, 0
        %v5037 = vsel %vm1536, %v4283, 0
        %v5038 = vsel %vm1543, %v4284, 0
        %v5039 = vsel %vm1550, %v4285, 0
        %v5040 = vsel %vm1557, %v4286, 0
        %v5041 = vsel %vm1564, %v4287, 0
        %v5042 = vsel %vm1571, %v4288, 0
        %v5043 = vsel %vm1578, %v4289, 0
        %v5044 = vsel %vm1585, %v4290, 0
        %v5045 = vsel %vm1592, %v4291, 0
        %v5046 = vsel %vm1599, %v4292, 0
        %v5047 = vsel %vm1606, %v4293, 0
        %v5048 = vsel %vm1613, %v4294, 0
        %v5049 = vsel %vm1620, %v4295, 0
        %v5050 = vsel %vm1627, %v4296, 0
        %v5051 = vsel %vm1634, %v4297, 0
        %v5052 = vsel %vm1641, %v4298, 0
        %v5070 = vunpack.c.l.b16 %v5018
        %v5071 = vunpack.c.l.b16 %v5019
        %v5072 = vunpack.c.l.b16 %v5020
        %v5073 = vunpack.c.l.b16 %v5021
        %v5074 = vunpack.c.l.b16 %v5022
        %v5075 = vunpack.c.l.b16 %v5023
        %v5076 = vunpack.c.l.b16 %v5024
        %v5077 = vunpack.c.l.b16 %v5025
        %v5078 = vunpack.c.l.b16 %v5026
        %v5079 = vunpack.c.l.b16 %v5027
        %v5080 = vunpack.c.l.b16 %v5028
        %v5081 = vunpack.c.l.b16 %v5029
        %v5082 = vunpack.c.l.b16 %v5030
        %v5083 = vunpack.c.l.b16 %v5031
        %v5084 = vunpack.c.l.b16 %v5032
        %v5085 = vunpack.c.l.b16 %v5033
        %v5086 = vunpack.c.l.b16 %v5034
        %v5087 = vpack.c.b16 %v5071, %v5070
        %v5088 = vpack.c.b16 %v5073, %v5072
        %v5089 = vpack.c.b16 %v5075, %v5074
        %v5090 = vpack.c.b16 %v5077, %v5076
        %v5091 = vpack.c.b16 %v5079, %v5078
        %v5092 = vpack.c.b16 %v5081, %v5080
        %v5093 = vpack.c.b16 %v5083, %v5082
        %v5094 = vpack.c.b16 %v5085, %v5084
        %v5095 = vpack.c.b16 %v5086, %v5086
        %v5113 = vunpack.c.l.b16 %v5036
        %v5114 = vunpack.c.l.b16 %v5037
        %v5115 = vunpack.c.l.b16 %v5038
        %v5116 = vunpack.c.l.b16 %v5039
        %v5117 = vunpack.c.l.b16 %v5040
        %v5118 = vunpack.c.l.b16 %v5041
        %v5119 = vunpack.c.l.b16 %v5042
        %v5120 = vunpack.c.l.b16 %v5043
        %v5121 = vunpack.c.l.b16 %v5044
        %v5122 = vunpack.c.l.b16 %v5045
        %v5123 = vunpack.c.l.b16 %v5046
        %v5124 = vunpack.c.l.b16 %v5047
        %v5125 = vunpack.c.l.b16 %v5048
        %v5126 = vunpack.c.l.b16 %v5049
        %v5127 = vunpack.c.l.b16 %v5050
        %v5128 = vunpack.c.l.b16 %v5051
        %v5129 = vunpack.c.l.b16 %v5052
        %v5130 = vpack.c.b16 %v5114, %v5113
        %v5131 = vpack.c.b16 %v5116, %v5115
        %v5132 = vpack.c.b16 %v5118, %v5117
        %v5133 = vpack.c.b16 %v5120, %v5119
        %v5134 = vpack.c.b16 %v5122, %v5121
        %v5135 = vpack.c.b16 %v5124, %v5123
        %v5136 = vpack.c.b16 %v5126, %v5125
        %v5137 = vpack.c.b16 %v5128, %v5127
        %v5138 = vpack.c.b16 %v5129, %v5129
        %v5139 = vrot.slane %v5130, 3
        %v5140 = vrot.slane %v5131, 3
        %v5141 = vsel %vm2793, %v5139, %v5140
        %v5142 = vrot.slane %v5132, 3
        %v5143 = vsel %vm2793, %v5140, %v5142
        %v5144 = vrot.slane %v5133, 3
        %v5145 = vsel %vm2793, %v5142, %v5144
        %v5146 = vrot.slane %v5134, 3
        %v5147 = vsel %vm2793, %v5144, %v5146
        %v5148 = vrot.slane %v5135, 3
        %v5149 = vsel %vm2793, %v5146, %v5148
        %v5150 = vrot.slane %v5136, 3
        %v5151 = vsel %vm2793, %v5148, %v5150
        %v5152 = vrot.slane %v5137, 3
        %v5153 = vsel %vm2793, %v5150, %v5152
        %v5154 = vrot.slane %v5138, 3
        %v5155 = vsel %vm2793, %v5152, %v5154
        %v5156 = vld [vmem:[%s2811] sm:$0xf]
        %v5157 = vld [vmem:[%s2811 + $0x4] sm:$0xf]
        %v5158 = vld [vmem:[%s2811 + $0x8] sm:$0xf]
        %v5159 = vld [vmem:[%s2811 + $0xc] sm:$0xf]
        %v5160 = vld [vmem:[%s2811 + $0x10] sm:$0xf]
        %v5161 = vld [vmem:[%s2811 + $0x14] sm:$0xf]
        %v5162 = vld [vmem:[%s2811 + $0x18] sm:$0xf]
        %v5163 = vld [vmem:[%s2811 + $0x1c] sm:$0xf]
        %v5164 = vld [vmem:[%s2811 + $0x20] sm:$0xf]
        %v5165 = vld [vmem:[%s2811 + $0x24] sm:$0xf]
        %v5166 = vld [vmem:[%s2811 + $0x28] sm:$0xf]
        %v5167 = vld [vmem:[%s2811 + $0x2c] sm:$0xf]
        %v5168 = vld [vmem:[%s2811 + $0x30] sm:$0xf]
        %v5169 = vld [vmem:[%s2811 + $0x34] sm:$0xf]
        %v5170 = vld [vmem:[%s2811 + $0x38] sm:$0xf]
        %v5171 = vld [vmem:[%s2811 + $0x3c] sm:$0xf]
        %v5172 = vld [vmem:[%s2811 + $0x40] sm:$0xf]
        %v5173 = vld [vmem:[%s2811 + $0x44] sm:$0xf]
        %v5174 = vld [vmem:[%s2811 + $0x48] sm:$0xf]
        %v5175 = vld [vmem:[%s2811 + $0x4c] sm:$0xf]
        %v5176 = vld [vmem:[%s2811 + $0x50] sm:$0xf]
        %v5177 = vld [vmem:[%s2811 + $0x54] sm:$0xf]
        %v5178 = vld [vmem:[%s2811 + $0x58] sm:$0xf]
        %v5179 = vld [vmem:[%s2811 + $0x5c] sm:$0xf]
        %v5180 = vld [vmem:[%s2811 + $0x60] sm:$0xf]
        %v5181 = vld [vmem:[%s2811 + $0x64] sm:$0xf]
        %v5182 = vld [vmem:[%s2811 + $0x68] sm:$0xf]
        %v5183 = vld [vmem:[%s2811 + $0x6c] sm:$0xf]
        %v5184 = vld [vmem:[%s2811 + $0x70] sm:$0xf]
        %v5185 = vld [vmem:[%s2811 + $0x74] sm:$0xf]
        %v5186 = vld [vmem:[%s2811 + $0x78] sm:$0xf]
        %v5187 = vld [vmem:[%s2811 + $0x7c] sm:$0xf]
        %v5189 = vshrl.u32 %v5087, 16
        %v5191 = vshll.u32 %v5087, 16
        %v5193 = vrot.slane %v5191, 1
        %v5194 = vor.u32 %v5189, %v5193
        %v5196 = vshll.u32 %v5088, 16
        %v5198 = vrot.slane %v5196, 1
        %v5199 = vsel %vm2844, %v5194, %v5198
        %v5201 = vshrl.u32 %v5141, 16
        %v5203 = vshll.u32 %v5141, 16
        %v5205 = vrot.slane %v5203, 1
        %v5206 = vor.u32 %v5201, %v5205
        %v5208 = vshll.u32 %v5143, 16
        %v5210 = vrot.slane %v5208, 1
        %v5211 = vsel %vm2844, %v5206, %v5210
        %v5212 = vshrl.u32 %v5088, 16
        %v5214 = vor.u32 %v5212, %v5198
        %v5216 = vshll.u32 %v5089, 16
        %v5218 = vrot.slane %v5216, 1
        %v5219 = vsel %vm2844, %v5214, %v5218
        %v5220 = vshrl.u32 %v5143, 16
        %v5222 = vor.u32 %v5220, %v5210
        %v5224 = vshll.u32 %v5145, 16
        %v5226 = vrot.slane %v5224, 1
        %v5227 = vsel %vm2844, %v5222, %v5226
        %v5228 = vshrl.u32 %v5089, 16
        %v5230 = vor.u32 %v5228, %v5218
        %v5232 = vshll.u32 %v5090, 16
        %v5234 = vrot.slane %v5232, 1
        %v5235 = vsel %vm2844, %v5230, %v5234
        %v5236 = vshrl.u32 %v5145, 16
        %v5238 = vor.u32 %v5236, %v5226
        %v5240 = vshll.u32 %v5147, 16
        %v5242 = vrot.slane %v5240, 1
        %v5243 = vsel %vm2844, %v5238, %v5242
        %v5244 = vshrl.u32 %v5090, 16
        %v5246 = vor.u32 %v5244, %v5234
        %v5248 = vshll.u32 %v5091, 16
        %v5250 = vrot.slane %v5248, 1
        %v5251 = vsel %vm2844, %v5246, %v5250
        %v5252 = vshrl.u32 %v5147, 16
        %v5254 = vor.u32 %v5252, %v5242
        %v5256 = vshll.u32 %v5149, 16
        %v5258 = vrot.slane %v5256, 1
        %v5259 = vsel %vm2844, %v5254, %v5258
        %v5260 = vshrl.u32 %v5091, 16
        %v5262 = vor.u32 %v5260, %v5250
        %v5264 = vshll.u32 %v5092, 16
        %v5266 = vrot.slane %v5264, 1
        %v5267 = vsel %vm2844, %v5262, %v5266
        %v5268 = vshrl.u32 %v5149, 16
        %v5270 = vor.u32 %v5268, %v5258
        %v5272 = vshll.u32 %v5151, 16
        %v5274 = vrot.slane %v5272, 1
        %v5275 = vsel %vm2844, %v5270, %v5274
        %v5276 = vshrl.u32 %v5092, 16
        %v5278 = vor.u32 %v5276, %v5266
        %v5280 = vshll.u32 %v5093, 16
        %v5282 = vrot.slane %v5280, 1
        %v5283 = vsel %vm2844, %v5278, %v5282
        %v5284 = vshrl.u32 %v5151, 16
        %v5286 = vor.u32 %v5284, %v5274
        %v5288 = vshll.u32 %v5153, 16
        %v5290 = vrot.slane %v5288, 1
        %v5291 = vsel %vm2844, %v5286, %v5290
        %v5292 = vshrl.u32 %v5093, 16
        %v5294 = vor.u32 %v5292, %v5282
        %v5296 = vshll.u32 %v5094, 16
        %v5298 = vrot.slane %v5296, 1
        %v5299 = vsel %vm2844, %v5294, %v5298
        %v5300 = vshrl.u32 %v5153, 16
        %v5302 = vor.u32 %v5300, %v5290
        %v5304 = vshll.u32 %v5155, 16
        %v5306 = vrot.slane %v5304, 1
        %v5307 = vsel %vm2844, %v5302, %v5306
        %v5308 = vshrl.u32 %v5094, 16
        %v5310 = vor.u32 %v5308, %v5298
        %v5312 = vshll.u32 %v5095, 16
        %v5314 = vrot.slane %v5312, 1
        %v5315 = vsel %vm2844, %v5310, %v5314
        %v5316 = vshrl.u32 %v5155, 16
        %v5318 = vor.u32 %v5316, %v5306
        %v5320 = vshll.u32 %v5154, 16
        %v5322 = vrot.slane %v5320, 1
        %v5323 = vsel %vm2844, %v5318, %v5322
        %v5372 = vunpack.c.l.b16 %v5156
        %v5373 = vunpack.c.l.b16 %v5157
        %v5374 = vunpack.c.l.b16 %v5158
        %v5375 = vunpack.c.l.b16 %v5159
        %v5376 = vunpack.c.l.b16 %v5160
        %v5377 = vunpack.c.l.b16 %v5161
        %v5378 = vunpack.c.l.b16 %v5162
        %v5379 = vunpack.c.l.b16 %v5163
        %v5380 = vunpack.c.l.b16 %v5164
        %v5381 = vunpack.c.l.b16 %v5165
        %v5382 = vunpack.c.l.b16 %v5166
        %v5383 = vunpack.c.l.b16 %v5167
        %v5384 = vunpack.c.l.b16 %v5168
        %v5385 = vunpack.c.l.b16 %v5169
        %v5386 = vunpack.c.l.b16 %v5170
        %v5387 = vunpack.c.l.b16 %v5171
        %v5388 = vunpack.c.l.b16 %v5172
        %v5389 = vunpack.c.l.b16 %v5173
        %v5390 = vunpack.c.l.b16 %v5174
        %v5391 = vunpack.c.l.b16 %v5175
        %v5392 = vunpack.c.l.b16 %v5176
        %v5393 = vunpack.c.l.b16 %v5177
        %v5394 = vunpack.c.l.b16 %v5178
        %v5395 = vunpack.c.l.b16 %v5179
        %v5396 = vunpack.c.l.b16 %v5180
        %v5397 = vunpack.c.l.b16 %v5181
        %v5398 = vunpack.c.l.b16 %v5182
        %v5399 = vunpack.c.l.b16 %v5183
        %v5400 = vunpack.c.l.b16 %v5184
        %v5401 = vunpack.c.l.b16 %v5185
        %v5402 = vunpack.c.l.b16 %v5186
        %v5403 = vunpack.c.l.b16 %v5187
        %v5404 = vpack.c.b16 %v5373, %v5372
        %v5405 = vpack.c.b16 %v5375, %v5374
        %v5406 = vpack.c.b16 %v5377, %v5376
        %v5407 = vpack.c.b16 %v5379, %v5378
        %v5408 = vpack.c.b16 %v5381, %v5380
        %v5409 = vpack.c.b16 %v5383, %v5382
        %v5410 = vpack.c.b16 %v5385, %v5384
        %v5411 = vpack.c.b16 %v5387, %v5386
        %v5412 = vpack.c.b16 %v5389, %v5388
        %v5413 = vpack.c.b16 %v5391, %v5390
        %v5414 = vpack.c.b16 %v5393, %v5392
        %v5415 = vpack.c.b16 %v5395, %v5394
        %v5416 = vpack.c.b16 %v5397, %v5396
        %v5417 = vpack.c.b16 %v5399, %v5398
        %v5418 = vpack.c.b16 %v5401, %v5400
        %v5419 = vpack.c.b16 %v5403, %v5402
        %5436 = vmatpush.bf16.msra.mxu0 %v5411
        %5437 = vmatpush.bf16.msra.mxu0 %v5410
        %5438 = vmatpush.bf16.msra.mxu0 %v5409
        %5439 = vmatpush.bf16.msra.mxu0 %v5408
        %5440 = vmatpush.bf16.msra.mxu0 %v5407
        %5441 = vmatpush.bf16.msra.mxu0 %v5406
        %5442 = vmatpush.bf16.msra.mxu0 %v5405
        %5443 = vmatpush.bf16.msra.mxu0 %v5404
        %5444 = vmatmul.bf16.gmra.mxu0 %v5199
        %v5445 = vpop.f32.mrf.mxu0
        %v5446 = vadd.f32 0.0, %v5445
        %v5447 = vpop.f32.mrf.mxu0
        %v5448 = vadd.f32 0.0, %v5447
        %5449 = vmatmul.bf16.gmra.mxu0 %v5219
        %v5450 = vpop.f32.mrf.mxu0
        %v5451 = vadd.f32 0.0, %v5450
        %v5452 = vpop.f32.mrf.mxu0
        %v5453 = vadd.f32 0.0, %v5452
        %5454 = vmatmul.bf16.gmra.mxu0 %v5235
        %v5455 = vpop.f32.mrf.mxu0
        %v5456 = vadd.f32 0.0, %v5455
        %v5457 = vpop.f32.mrf.mxu0
        %v5458 = vadd.f32 0.0, %v5457
        %5459 = vmatmul.bf16.gmra.mxu0 %v5251
        %v5460 = vpop.f32.mrf.mxu0
        %v5461 = vadd.f32 0.0, %v5460
        %v5462 = vpop.f32.mrf.mxu0
        %v5463 = vadd.f32 0.0, %v5462
        %5464 = vmatmul.bf16.gmra.mxu0 %v5267
        %v5465 = vpop.f32.mrf.mxu0
        %v5466 = vadd.f32 0.0, %v5465
        %v5467 = vpop.f32.mrf.mxu0
        %v5468 = vadd.f32 0.0, %v5467
        %5469 = vmatmul.bf16.gmra.mxu0 %v5283
        %v5470 = vpop.f32.mrf.mxu0
        %v5471 = vadd.f32 0.0, %v5470
        %v5472 = vpop.f32.mrf.mxu0
        %v5473 = vadd.f32 0.0, %v5472
        %5474 = vmatmul.bf16.gmra.mxu0 %v5299
        %v5475 = vpop.f32.mrf.mxu0
        %v5476 = vadd.f32 0.0, %v5475
        %v5477 = vpop.f32.mrf.mxu0
        %v5478 = vadd.f32 0.0, %v5477
        %5479 = vmatmul.bf16.gmra.mxu0 %v5315
        %v5480 = vpop.f32.mrf.mxu0
        %v5481 = vadd.f32 0.0, %v5480
        %v5482 = vpop.f32.mrf.mxu0
        %v5483 = vadd.f32 0.0, %v5482
        %5484 = vdwg.mxu0
        %5485 = vmatpush.bf16.msra.mxu0 %v5419
        %5486 = vmatpush.bf16.msra.mxu0 %v5418
        %5487 = vmatpush.bf16.msra.mxu0 %v5417
        %5488 = vmatpush.bf16.msra.mxu0 %v5416
        %5489 = vmatpush.bf16.msra.mxu0 %v5415
        %5490 = vmatpush.bf16.msra.mxu0 %v5414
        %5491 = vmatpush.bf16.msra.mxu0 %v5413
        %5492 = vmatpush.bf16.msra.mxu0 %v5412
        %5493 = vmatmul.bf16.gmra.mxu0 %v5211
        %v5494 = vpop.f32.mrf.mxu0
        %v5495 = vadd.f32 %v5446, %v5494
        %v5496 = vpop.f32.mrf.mxu0
        %v5497 = vadd.f32 %v5448, %v5496
        %5498 = vmatmul.bf16.gmra.mxu0 %v5227
        %v5499 = vpop.f32.mrf.mxu0
        %v5500 = vadd.f32 %v5451, %v5499
        %v5501 = vpop.f32.mrf.mxu0
        %v5502 = vadd.f32 %v5453, %v5501
        %5503 = vmatmul.bf16.gmra.mxu0 %v5243
        %v5504 = vpop.f32.mrf.mxu0
        %v5505 = vadd.f32 %v5456, %v5504
        %v5506 = vpop.f32.mrf.mxu0
        %v5507 = vadd.f32 %v5458, %v5506
        %5508 = vmatmul.bf16.gmra.mxu0 %v5259
        %v5509 = vpop.f32.mrf.mxu0
        %v5510 = vadd.f32 %v5461, %v5509
        %v5511 = vpop.f32.mrf.mxu0
        %v5512 = vadd.f32 %v5463, %v5511
        %5513 = vmatmul.bf16.gmra.mxu0 %v5275
        %v5514 = vpop.f32.mrf.mxu0
        %v5515 = vadd.f32 %v5466, %v5514
        %v5516 = vpop.f32.mrf.mxu0
        %v5517 = vadd.f32 %v5468, %v5516
        %5518 = vmatmul.bf16.gmra.mxu0 %v5291
        %v5519 = vpop.f32.mrf.mxu0
        %v5520 = vadd.f32 %v5471, %v5519
        %v5521 = vpop.f32.mrf.mxu0
        %v5522 = vadd.f32 %v5473, %v5521
        %5523 = vmatmul.bf16.gmra.mxu0 %v5307
        %v5524 = vpop.f32.mrf.mxu0
        %v5525 = vadd.f32 %v5476, %v5524
        %v5526 = vpop.f32.mrf.mxu0
        %v5527 = vadd.f32 %v5478, %v5526
        %5528 = vmatmul.bf16.gmra.mxu0 %v5323
        %v5529 = vpop.f32.mrf.mxu0
        %v5530 = vadd.f32 %v5481, %v5529
        %v5531 = vpop.f32.mrf.mxu0
        %v5532 = vadd.f32 %v5483, %v5531
        %5533 = vdwg.mxu0
        %v5534 = vadd.f32 %v4962, %v5495
        %v5535 = vadd.f32 %v4964, %v5497
        %v5536 = vadd.f32 %v4967, %v5500
        %v5537 = vadd.f32 %v4969, %v5502
        %v5538 = vadd.f32 %v4972, %v5505
        %v5539 = vadd.f32 %v4974, %v5507
        %v5540 = vadd.f32 %v4977, %v5510
        %v5541 = vadd.f32 %v4979, %v5512
        %v5542 = vadd.f32 %v4982, %v5515
        %v5543 = vadd.f32 %v4984, %v5517
        %v5544 = vadd.f32 %v4987, %v5520
        %v5545 = vadd.f32 %v4989, %v5522
        %v5546 = vadd.f32 %v4992, %v5525
        %v5547 = vadd.f32 %v4994, %v5527
        %v5548 = vadd.f32 %v4997, %v5530
        %v5549 = vadd.f32 %v4999, %v5532
        %v5550 = vld [vmem:[#allocation3 + $0x50] sm:$0xf]
        %v5551 = vld [vmem:[#allocation3 + $0x54] sm:$0xf]
        %v5552 = vld [vmem:[#allocation3 + $0x58] sm:$0xf]
        %v5553 = vld [vmem:[#allocation3 + $0x5c] sm:$0xf]
        %v5554 = vld [vmem:[#allocation3 + $0x60] sm:$0xf]
        %v5555 = vld [vmem:[#allocation3 + $0x64] sm:$0xf]
        %v5556 = vld [vmem:[#allocation3 + $0x68] sm:$0xf]
        %v5557 = vld [vmem:[#allocation3 + $0x6c] sm:$0xf]
        %v5558 = vld [vmem:[#allocation3 + $0x70] sm:$0xf]
        %v5559 = vld [vmem:[#allocation3 + $0x74] sm:$0xf]
        %v5560 = vld [vmem:[#allocation3 + $0x78] sm:$0xf]
        %v5561 = vld [vmem:[#allocation3 + $0x7c] sm:$0xf]
        %v5562 = vld [vmem:[#allocation3 + $0x80] sm:$0xf]
        %v5563 = vld [vmem:[#allocation3 + $0x84] sm:$0xf]
        %v5564 = vld [vmem:[#allocation3 + $0x88] sm:$0xf]
        %v5565 = vld [vmem:[#allocation3 + $0x8c] sm:$0xf]
        %v5566 = vld [vmem:[#allocation3 + $0x90] sm:$0x1]
        %v5567 = vsel %vm2559, %v5550, 0
        %v5568 = vsel %vm2566, %v5551, 0
        %v5569 = vsel %vm2573, %v5552, 0
        %v5570 = vsel %vm2580, %v5553, 0
        %v5571 = vsel %vm2587, %v5554, 0
        %v5572 = vsel %vm2594, %v5555, 0
        %v5573 = vsel %vm2601, %v5556, 0
        %v5574 = vsel %vm2608, %v5557, 0
        %v5575 = vsel %vm2615, %v5558, 0
        %v5576 = vsel %vm2622, %v5559, 0
        %v5577 = vsel %vm2629, %v5560, 0
        %v5578 = vsel %vm2636, %v5561, 0
        %v5579 = vsel %vm2643, %v5562, 0
        %v5580 = vsel %vm2650, %v5563, 0
        %v5581 = vsel %vm2657, %v5564, 0
        %v5582 = vsel %vm2664, %v5565, 0
        %v5583 = vsel %vm2671, %v5566, 0
        %v5584 = vld [vmem:[#allocation3 + $0x54] sm:$0x8]
        %v5585 = vld [vmem:[#allocation3 + $0x90] sm:$0xf]
        %v5586 = vld [vmem:[#allocation3 + $0x94] sm:$0xf]
        %v5587 = vsel %vm1529, %v5584, 0
        %v5588 = vsel %vm1536, %v5552, 0
        %v5589 = vsel %vm1543, %v5553, 0
        %v5590 = vsel %vm1550, %v5554, 0
        %v5591 = vsel %vm1557, %v5555, 0
        %v5592 = vsel %vm1564, %v5556, 0
        %v5593 = vsel %vm1571, %v5557, 0
        %v5594 = vsel %vm1578, %v5558, 0
        %v5595 = vsel %vm1585, %v5559, 0
        %v5596 = vsel %vm1592, %v5560, 0
        %v5597 = vsel %vm1599, %v5561, 0
        %v5598 = vsel %vm1606, %v5562, 0
        %v5599 = vsel %vm1613, %v5563, 0
        %v5600 = vsel %vm1620, %v5564, 0
        %v5601 = vsel %vm1627, %v5565, 0
        %v5602 = vsel %vm1634, %v5585, 0
        %v5603 = vsel %vm1641, %v5586, 0
        %v5621 = vunpack.c.l.b16 %v5567
        %v5622 = vunpack.c.l.b16 %v5568
        %v5623 = vunpack.c.l.b16 %v5569
        %v5624 = vunpack.c.l.b16 %v5570
        %v5625 = vunpack.c.l.b16 %v5571
        %v5626 = vunpack.c.l.b16 %v5572
        %v5627 = vunpack.c.l.b16 %v5573
        %v5628 = vunpack.c.l.b16 %v5574
        %v5629 = vunpack.c.l.b16 %v5575
        %v5630 = vunpack.c.l.b16 %v5576
        %v5631 = vunpack.c.l.b16 %v5577
        %v5632 = vunpack.c.l.b16 %v5578
        %v5633 = vunpack.c.l.b16 %v5579
        %v5634 = vunpack.c.l.b16 %v5580
        %v5635 = vunpack.c.l.b16 %v5581
        %v5636 = vunpack.c.l.b16 %v5582
        %v5637 = vunpack.c.l.b16 %v5583
        %v5638 = vpack.c.b16 %v5622, %v5621
        %v5639 = vpack.c.b16 %v5624, %v5623
        %v5640 = vpack.c.b16 %v5626, %v5625
        %v5641 = vpack.c.b16 %v5628, %v5627
        %v5642 = vpack.c.b16 %v5630, %v5629
        %v5643 = vpack.c.b16 %v5632, %v5631
        %v5644 = vpack.c.b16 %v5634, %v5633
        %v5645 = vpack.c.b16 %v5636, %v5635
        %v5646 = vpack.c.b16 %v5637, %v5637
        %v5664 = vunpack.c.l.b16 %v5587
        %v5665 = vunpack.c.l.b16 %v5588
        %v5666 = vunpack.c.l.b16 %v5589
        %v5667 = vunpack.c.l.b16 %v5590
        %v5668 = vunpack.c.l.b16 %v5591
        %v5669 = vunpack.c.l.b16 %v5592
        %v5670 = vunpack.c.l.b16 %v5593
        %v5671 = vunpack.c.l.b16 %v5594
        %v5672 = vunpack.c.l.b16 %v5595
        %v5673 = vunpack.c.l.b16 %v5596
        %v5674 = vunpack.c.l.b16 %v5597
        %v5675 = vunpack.c.l.b16 %v5598
        %v5676 = vunpack.c.l.b16 %v5599
        %v5677 = vunpack.c.l.b16 %v5600
        %v5678 = vunpack.c.l.b16 %v5601
        %v5679 = vunpack.c.l.b16 %v5602
        %v5680 = vunpack.c.l.b16 %v5603
        %v5681 = vpack.c.b16 %v5665, %v5664
        %v5682 = vpack.c.b16 %v5667, %v5666
        %v5683 = vpack.c.b16 %v5669, %v5668
        %v5684 = vpack.c.b16 %v5671, %v5670
        %v5685 = vpack.c.b16 %v5673, %v5672
        %v5686 = vpack.c.b16 %v5675, %v5674
        %v5687 = vpack.c.b16 %v5677, %v5676
        %v5688 = vpack.c.b16 %v5679, %v5678
        %v5689 = vpack.c.b16 %v5680, %v5680
        %v5690 = vrot.slane %v5681, 3
        %v5691 = vrot.slane %v5682, 3
        %v5692 = vsel %vm2793, %v5690, %v5691
        %v5693 = vrot.slane %v5683, 3
        %v5694 = vsel %vm2793, %v5691, %v5693
        %v5695 = vrot.slane %v5684, 3
        %v5696 = vsel %vm2793, %v5693, %v5695
        %v5697 = vrot.slane %v5685, 3
        %v5698 = vsel %vm2793, %v5695, %v5697
        %v5699 = vrot.slane %v5686, 3
        %v5700 = vsel %vm2793, %v5697, %v5699
        %v5701 = vrot.slane %v5687, 3
        %v5702 = vsel %vm2793, %v5699, %v5701
        %v5703 = vrot.slane %v5688, 3
        %v5704 = vsel %vm2793, %v5701, %v5703
        %v5705 = vrot.slane %v5689, 3
        %v5706 = vsel %vm2793, %v5703, %v5705
        %v5707 = vld [vmem:[%s3364] sm:$0xf]
        %v5708 = vld [vmem:[%s3364 + $0x4] sm:$0xf]
        %v5709 = vld [vmem:[%s3364 + $0x8] sm:$0xf]
        %v5710 = vld [vmem:[%s3364 + $0xc] sm:$0xf]
        %v5711 = vld [vmem:[%s3364 + $0x10] sm:$0xf]
        %v5712 = vld [vmem:[%s3364 + $0x14] sm:$0xf]
        %v5713 = vld [vmem:[%s3364 + $0x18] sm:$0xf]
        %v5714 = vld [vmem:[%s3364 + $0x1c] sm:$0xf]
        %v5715 = vld [vmem:[%s3364 + $0x20] sm:$0xf]
        %v5716 = vld [vmem:[%s3364 + $0x24] sm:$0xf]
        %v5717 = vld [vmem:[%s3364 + $0x28] sm:$0xf]
        %v5718 = vld [vmem:[%s3364 + $0x2c] sm:$0xf]
        %v5719 = vld [vmem:[%s3364 + $0x30] sm:$0xf]
        %v5720 = vld [vmem:[%s3364 + $0x34] sm:$0xf]
        %v5721 = vld [vmem:[%s3364 + $0x38] sm:$0xf]
        %v5722 = vld [vmem:[%s3364 + $0x3c] sm:$0xf]
        %v5723 = vld [vmem:[%s3364 + $0x40] sm:$0xf]
        %v5724 = vld [vmem:[%s3364 + $0x44] sm:$0xf]
        %v5725 = vld [vmem:[%s3364 + $0x48] sm:$0xf]
        %v5726 = vld [vmem:[%s3364 + $0x4c] sm:$0xf]
        %v5727 = vld [vmem:[%s3364 + $0x50] sm:$0xf]
        %v5728 = vld [vmem:[%s3364 + $0x54] sm:$0xf]
        %v5729 = vld [vmem:[%s3364 + $0x58] sm:$0xf]
        %v5730 = vld [vmem:[%s3364 + $0x5c] sm:$0xf]
        %v5731 = vld [vmem:[%s3364 + $0x60] sm:$0xf]
        %v5732 = vld [vmem:[%s3364 + $0x64] sm:$0xf]
        %v5733 = vld [vmem:[%s3364 + $0x68] sm:$0xf]
        %v5734 = vld [vmem:[%s3364 + $0x6c] sm:$0xf]
        %v5735 = vld [vmem:[%s3364 + $0x70] sm:$0xf]
        %v5736 = vld [vmem:[%s3364 + $0x74] sm:$0xf]
        %v5737 = vld [vmem:[%s3364 + $0x78] sm:$0xf]
        %v5738 = vld [vmem:[%s3364 + $0x7c] sm:$0xf]
        %v5740 = vshrl.u32 %v5638, 16
        %v5742 = vshll.u32 %v5638, 16
        %v5744 = vrot.slane %v5742, 1
        %v5745 = vor.u32 %v5740, %v5744
        %v5747 = vshll.u32 %v5639, 16
        %v5749 = vrot.slane %v5747, 1
        %v5750 = vsel %vm2844, %v5745, %v5749
        %v5752 = vshrl.u32 %v5692, 16
        %v5754 = vshll.u32 %v5692, 16
        %v5756 = vrot.slane %v5754, 1
        %v5757 = vor.u32 %v5752, %v5756
        %v5759 = vshll.u32 %v5694, 16
        %v5761 = vrot.slane %v5759, 1
        %v5762 = vsel %vm2844, %v5757, %v5761
        %v5763 = vshrl.u32 %v5639, 16
        %v5765 = vor.u32 %v5763, %v5749
        %v5767 = vshll.u32 %v5640, 16
        %v5769 = vrot.slane %v5767, 1
        %v5770 = vsel %vm2844, %v5765, %v5769
        %v5771 = vshrl.u32 %v5694, 16
        %v5773 = vor.u32 %v5771, %v5761
        %v5775 = vshll.u32 %v5696, 16
        %v5777 = vrot.slane %v5775, 1
        %v5778 = vsel %vm2844, %v5773, %v5777
        %v5779 = vshrl.u32 %v5640, 16
        %v5781 = vor.u32 %v5779, %v5769
        %v5783 = vshll.u32 %v5641, 16
        %v5785 = vrot.slane %v5783, 1
        %v5786 = vsel %vm2844, %v5781, %v5785
        %v5787 = vshrl.u32 %v5696, 16
        %v5789 = vor.u32 %v5787, %v5777
        %v5791 = vshll.u32 %v5698, 16
        %v5793 = vrot.slane %v5791, 1
        %v5794 = vsel %vm2844, %v5789, %v5793
        %v5795 = vshrl.u32 %v5641, 16
        %v5797 = vor.u32 %v5795, %v5785
        %v5799 = vshll.u32 %v5642, 16
        %v5801 = vrot.slane %v5799, 1
        %v5802 = vsel %vm2844, %v5797, %v5801
        %v5803 = vshrl.u32 %v5698, 16
        %v5805 = vor.u32 %v5803, %v5793
        %v5807 = vshll.u32 %v5700, 16
        %v5809 = vrot.slane %v5807, 1
        %v5810 = vsel %vm2844, %v5805, %v5809
        %v5811 = vshrl.u32 %v5642, 16
        %v5813 = vor.u32 %v5811, %v5801
        %v5815 = vshll.u32 %v5643, 16
        %v5817 = vrot.slane %v5815, 1
        %v5818 = vsel %vm2844, %v5813, %v5817
        %v5819 = vshrl.u32 %v5700, 16
        %v5821 = vor.u32 %v5819, %v5809
        %v5823 = vshll.u32 %v5702, 16
        %v5825 = vrot.slane %v5823, 1
        %v5826 = vsel %vm2844, %v5821, %v5825
        %v5827 = vshrl.u32 %v5643, 16
        %v5829 = vor.u32 %v5827, %v5817
        %v5831 = vshll.u32 %v5644, 16
        %v5833 = vrot.slane %v5831, 1
        %v5834 = vsel %vm2844, %v5829, %v5833
        %v5835 = vshrl.u32 %v5702, 16
        %v5837 = vor.u32 %v5835, %v5825
        %v5839 = vshll.u32 %v5704, 16
        %v5841 = vrot.slane %v5839, 1
        %v5842 = vsel %vm2844, %v5837, %v5841
        %v5843 = vshrl.u32 %v5644, 16
        %v5845 = vor.u32 %v5843, %v5833
        %v5847 = vshll.u32 %v5645, 16
        %v5849 = vrot.slane %v5847, 1
        %v5850 = vsel %vm2844, %v5845, %v5849
        %v5851 = vshrl.u32 %v5704, 16
        %v5853 = vor.u32 %v5851, %v5841
        %v5855 = vshll.u32 %v5706, 16
        %v5857 = vrot.slane %v5855, 1
        %v5858 = vsel %vm2844, %v5853, %v5857
        %v5859 = vshrl.u32 %v5645, 16
        %v5861 = vor.u32 %v5859, %v5849
        %v5863 = vshll.u32 %v5646, 16
        %v5865 = vrot.slane %v5863, 1
        %v5866 = vsel %vm2844, %v5861, %v5865
        %v5867 = vshrl.u32 %v5706, 16
        %v5869 = vor.u32 %v5867, %v5857
        %v5871 = vshll.u32 %v5705, 16
        %v5873 = vrot.slane %v5871, 1
        %v5874 = vsel %vm2844, %v5869, %v5873
        %v5923 = vunpack.c.l.b16 %v5707
        %v5924 = vunpack.c.l.b16 %v5708
        %v5925 = vunpack.c.l.b16 %v5709
        %v5926 = vunpack.c.l.b16 %v5710
        %v5927 = vunpack.c.l.b16 %v5711
        %v5928 = vunpack.c.l.b16 %v5712
        %v5929 = vunpack.c.l.b16 %v5713
        %v5930 = vunpack.c.l.b16 %v5714
        %v5931 = vunpack.c.l.b16 %v5715
        %v5932 = vunpack.c.l.b16 %v5716
        %v5933 = vunpack.c.l.b16 %v5717
        %v5934 = vunpack.c.l.b16 %v5718
        %v5935 = vunpack.c.l.b16 %v5719
        %v5936 = vunpack.c.l.b16 %v5720
        %v5937 = vunpack.c.l.b16 %v5721
        %v5938 = vunpack.c.l.b16 %v5722
        %v5939 = vunpack.c.l.b16 %v5723
        %v5940 = vunpack.c.l.b16 %v5724
        %v5941 = vunpack.c.l.b16 %v5725
        %v5942 = vunpack.c.l.b16 %v5726
        %v5943 = vunpack.c.l.b16 %v5727
        %v5944 = vunpack.c.l.b16 %v5728
        %v5945 = vunpack.c.l.b16 %v5729
        %v5946 = vunpack.c.l.b16 %v5730
        %v5947 = vunpack.c.l.b16 %v5731
        %v5948 = vunpack.c.l.b16 %v5732
        %v5949 = vunpack.c.l.b16 %v5733
        %v5950 = vunpack.c.l.b16 %v5734
        %v5951 = vunpack.c.l.b16 %v5735
        %v5952 = vunpack.c.l.b16 %v5736
        %v5953 = vunpack.c.l.b16 %v5737
        %v5954 = vunpack.c.l.b16 %v5738
        %v5955 = vpack.c.b16 %v5924, %v5923
        %v5956 = vpack.c.b16 %v5926, %v5925
        %v5957 = vpack.c.b16 %v5928, %v5927
        %v5958 = vpack.c.b16 %v5930, %v5929
        %v5959 = vpack.c.b16 %v5932, %v5931
        %v5960 = vpack.c.b16 %v5934, %v5933
        %v5961 = vpack.c.b16 %v5936, %v5935
        %v5962 = vpack.c.b16 %v5938, %v5937
        %v5963 = vpack.c.b16 %v5940, %v5939
        %v5964 = vpack.c.b16 %v5942, %v5941
        %v5965 = vpack.c.b16 %v5944, %v5943
        %v5966 = vpack.c.b16 %v5946, %v5945
        %v5967 = vpack.c.b16 %v5948, %v5947
        %v5968 = vpack.c.b16 %v5950, %v5949
        %v5969 = vpack.c.b16 %v5952, %v5951
        %v5970 = vpack.c.b16 %v5954, %v5953
        %5987 = vmatpush.bf16.msra.mxu0 %v5962
        %5988 = vmatpush.bf16.msra.mxu0 %v5961
        %5989 = vmatpush.bf16.msra.mxu0 %v5960
        %5990 = vmatpush.bf16.msra.mxu0 %v5959
        %5991 = vmatpush.bf16.msra.mxu0 %v5958
        %5992 = vmatpush.bf16.msra.mxu0 %v5957
        %5993 = vmatpush.bf16.msra.mxu0 %v5956
        %5994 = vmatpush.bf16.msra.mxu0 %v5955
        %5995 = vmatmul.bf16.gmra.mxu0 %v5750
        %v5996 = vpop.f32.mrf.mxu0
        %v5997 = vadd.f32 0.0, %v5996
        %v5998 = vpop.f32.mrf.mxu0
        %v5999 = vadd.f32 0.0, %v5998
        %6000 = vmatmul.bf16.gmra.mxu0 %v5770
        %v6001 = vpop.f32.mrf.mxu0
        %v6002 = vadd.f32 0.0, %v6001
        %v6003 = vpop.f32.mrf.mxu0
        %v6004 = vadd.f32 0.0, %v6003
        %6005 = vmatmul.bf16.gmra.mxu0 %v5786
        %v6006 = vpop.f32.mrf.mxu0
        %v6007 = vadd.f32 0.0, %v6006
        %v6008 = vpop.f32.mrf.mxu0
        %v6009 = vadd.f32 0.0, %v6008
        %6010 = vmatmul.bf16.gmra.mxu0 %v5802
        %v6011 = vpop.f32.mrf.mxu0
        %v6012 = vadd.f32 0.0, %v6011
        %v6013 = vpop.f32.mrf.mxu0
        %v6014 = vadd.f32 0.0, %v6013
        %6015 = vmatmul.bf16.gmra.mxu0 %v5818
        %v6016 = vpop.f32.mrf.mxu0
        %v6017 = vadd.f32 0.0, %v6016
        %v6018 = vpop.f32.mrf.mxu0
        %v6019 = vadd.f32 0.0, %v6018
        %6020 = vmatmul.bf16.gmra.mxu0 %v5834
        %v6021 = vpop.f32.mrf.mxu0
        %v6022 = vadd.f32 0.0, %v6021
        %v6023 = vpop.f32.mrf.mxu0
        %v6024 = vadd.f32 0.0, %v6023
        %6025 = vmatmul.bf16.gmra.mxu0 %v5850
        %v6026 = vpop.f32.mrf.mxu0
        %v6027 = vadd.f32 0.0, %v6026
        %v6028 = vpop.f32.mrf.mxu0
        %v6029 = vadd.f32 0.0, %v6028
        %6030 = vmatmul.bf16.gmra.mxu0 %v5866
        %v6031 = vpop.f32.mrf.mxu0
        %v6032 = vadd.f32 0.0, %v6031
        %v6033 = vpop.f32.mrf.mxu0
        %v6034 = vadd.f32 0.0, %v6033
        %6035 = vdwg.mxu0
        %6036 = vmatpush.bf16.msra.mxu0 %v5970
        %6037 = vmatpush.bf16.msra.mxu0 %v5969
        %6038 = vmatpush.bf16.msra.mxu0 %v5968
        %6039 = vmatpush.bf16.msra.mxu0 %v5967
        %6040 = vmatpush.bf16.msra.mxu0 %v5966
        %6041 = vmatpush.bf16.msra.mxu0 %v5965
        %6042 = vmatpush.bf16.msra.mxu0 %v5964
        %6043 = vmatpush.bf16.msra.mxu0 %v5963
        %6044 = vmatmul.bf16.gmra.mxu0 %v5762
        %v6045 = vpop.f32.mrf.mxu0
        %v6046 = vadd.f32 %v5997, %v6045
        %v6047 = vpop.f32.mrf.mxu0
        %v6048 = vadd.f32 %v5999, %v6047
        %6049 = vmatmul.bf16.gmra.mxu0 %v5778
        %v6050 = vpop.f32.mrf.mxu0
        %v6051 = vadd.f32 %v6002, %v6050
        %v6052 = vpop.f32.mrf.mxu0
        %v6053 = vadd.f32 %v6004, %v6052
        %6054 = vmatmul.bf16.gmra.mxu0 %v5794
        %v6055 = vpop.f32.mrf.mxu0
        %v6056 = vadd.f32 %v6007, %v6055
        %v6057 = vpop.f32.mrf.mxu0
        %v6058 = vadd.f32 %v6009, %v6057
        %6059 = vmatmul.bf16.gmra.mxu0 %v5810
        %v6060 = vpop.f32.mrf.mxu0
        %v6061 = vadd.f32 %v6012, %v6060
        %v6062 = vpop.f32.mrf.mxu0
        %v6063 = vadd.f32 %v6014, %v6062
        %6064 = vmatmul.bf16.gmra.mxu0 %v5826
        %v6065 = vpop.f32.mrf.mxu0
        %v6066 = vadd.f32 %v6017, %v6065
        %v6067 = vpop.f32.mrf.mxu0
        %v6068 = vadd.f32 %v6019, %v6067
        %6069 = vmatmul.bf16.gmra.mxu0 %v5842
        %v6070 = vpop.f32.mrf.mxu0
        %v6071 = vadd.f32 %v6022, %v6070
        %v6072 = vpop.f32.mrf.mxu0
        %v6073 = vadd.f32 %v6024, %v6072
        %6074 = vmatmul.bf16.gmra.mxu0 %v5858
        %v6075 = vpop.f32.mrf.mxu0
        %v6076 = vadd.f32 %v6027, %v6075
        %v6077 = vpop.f32.mrf.mxu0
        %v6078 = vadd.f32 %v6029, %v6077
        %6079 = vmatmul.bf16.gmra.mxu0 %v5874
        %v6080 = vpop.f32.mrf.mxu0
        %v6081 = vadd.f32 %v6032, %v6080
        %v6082 = vpop.f32.mrf.mxu0
        %v6083 = vadd.f32 %v6034, %v6082
        %6084 = vdwg.mxu0
        %v6085 = vadd.f32 %v5534, %v6046
        %v6086 = vadd.f32 %v5535, %v6048
        %v6087 = vadd.f32 %v5536, %v6051
        %v6088 = vadd.f32 %v5537, %v6053
        %v6089 = vadd.f32 %v5538, %v6056
        %v6090 = vadd.f32 %v5539, %v6058
        %v6091 = vadd.f32 %v5540, %v6061
        %v6092 = vadd.f32 %v5541, %v6063
        %v6093 = vadd.f32 %v5542, %v6066
        %v6094 = vadd.f32 %v5543, %v6068
        %v6095 = vadd.f32 %v5544, %v6071
        %v6096 = vadd.f32 %v5545, %v6073
        %v6097 = vadd.f32 %v5546, %v6076
        %v6098 = vadd.f32 %v5547, %v6078
        %v6099 = vadd.f32 %v5548, %v6081
        %v6100 = vadd.f32 %v5549, %v6083
        %v6101 = vld [vmem:[#allocation3 + $0x58] sm:$0xf]
        %v6102 = vld [vmem:[#allocation3 + $0x5c] sm:$0xf]
        %v6103 = vld [vmem:[#allocation3 + $0x60] sm:$0xf]
        %v6104 = vld [vmem:[#allocation3 + $0x64] sm:$0xf]
        %v6105 = vld [vmem:[#allocation3 + $0x68] sm:$0xf]
        %v6106 = vld [vmem:[#allocation3 + $0x6c] sm:$0xf]
        %v6107 = vld [vmem:[#allocation3 + $0x70] sm:$0xf]
        %v6108 = vld [vmem:[#allocation3 + $0x74] sm:$0xf]
        %v6109 = vld [vmem:[#allocation3 + $0x78] sm:$0xf]
        %v6110 = vld [vmem:[#allocation3 + $0x7c] sm:$0xf]
        %v6111 = vld [vmem:[#allocation3 + $0x80] sm:$0xf]
        %v6112 = vld [vmem:[#allocation3 + $0x84] sm:$0xf]
        %v6113 = vld [vmem:[#allocation3 + $0x88] sm:$0xf]
        %v6114 = vld [vmem:[#allocation3 + $0x8c] sm:$0xf]
        %v6115 = vld [vmem:[#allocation3 + $0x90] sm:$0xf]
        %v6116 = vld [vmem:[#allocation3 + $0x94] sm:$0xf]
        %v6117 = vld [vmem:[#allocation3 + $0x98] sm:$0x1]
        %v6118 = vsel %vm2559, %v6101, 0
        %v6119 = vsel %vm2566, %v6102, 0
        %v6120 = vsel %vm2573, %v6103, 0
        %v6121 = vsel %vm2580, %v6104, 0
        %v6122 = vsel %vm2587, %v6105, 0
        %v6123 = vsel %vm2594, %v6106, 0
        %v6124 = vsel %vm2601, %v6107, 0
        %v6125 = vsel %vm2608, %v6108, 0
        %v6126 = vsel %vm2615, %v6109, 0
        %v6127 = vsel %vm2622, %v6110, 0
        %v6128 = vsel %vm2629, %v6111, 0
        %v6129 = vsel %vm2636, %v6112, 0
        %v6130 = vsel %vm2643, %v6113, 0
        %v6131 = vsel %vm2650, %v6114, 0
        %v6132 = vsel %vm2657, %v6115, 0
        %v6133 = vsel %vm2664, %v6116, 0
        %v6134 = vsel %vm2671, %v6117, 0
        %v6151 = vunpack.c.l.b16 %v5552
        %v6152 = vunpack.c.l.b16 %v5553
        %v6153 = vunpack.c.l.b16 %v5554
        %v6154 = vunpack.c.l.b16 %v5555
        %v6155 = vunpack.c.l.b16 %v5556
        %v6156 = vunpack.c.l.b16 %v5557
        %v6157 = vunpack.c.l.b16 %v5558
        %v6158 = vunpack.c.l.b16 %v5559
        %v6159 = vunpack.c.l.b16 %v5560
        %v6160 = vunpack.c.l.b16 %v5561
        %v6161 = vunpack.c.l.b16 %v5562
        %v6162 = vunpack.c.l.b16 %v5563
        %v6163 = vunpack.c.l.b16 %v5564
        %v6164 = vunpack.c.l.b16 %v5565
        %v6165 = vunpack.c.l.b16 %v5585
        %v6166 = vunpack.c.l.b16 %v5586
        %v6167 = vpack.c.b16 %v6152, %v6151
        %v6168 = vpack.c.b16 %v6154, %v6153
        %v6169 = vpack.c.b16 %v6156, %v6155
        %v6170 = vpack.c.b16 %v6158, %v6157
        %v6171 = vpack.c.b16 %v6160, %v6159
        %v6172 = vpack.c.b16 %v6162, %v6161
        %v6173 = vpack.c.b16 %v6164, %v6163
        %v6174 = vpack.c.b16 %v6166, %v6165
        %v6200 = vunpack.c.l.b16 %v6118
        %v6201 = vunpack.c.l.b16 %v6119
        %v6202 = vunpack.c.l.b16 %v6120
        %v6203 = vunpack.c.l.b16 %v6121
        %v6204 = vunpack.c.l.b16 %v6122
        %v6205 = vunpack.c.l.b16 %v6123
        %v6206 = vunpack.c.l.b16 %v6124
        %v6207 = vunpack.c.l.b16 %v6125
        %v6208 = vunpack.c.l.b16 %v6126
        %v6209 = vunpack.c.l.b16 %v6127
        %v6210 = vunpack.c.l.b16 %v6128
        %v6211 = vunpack.c.l.b16 %v6129
        %v6212 = vunpack.c.l.b16 %v6130
        %v6213 = vunpack.c.l.b16 %v6131
        %v6214 = vunpack.c.l.b16 %v6132
        %v6215 = vunpack.c.l.b16 %v6133
        %v6216 = vunpack.c.l.b16 %v6134
        %v6217 = vpack.c.b16 %v6201, %v6200
        %v6218 = vpack.c.b16 %v6203, %v6202
        %v6219 = vpack.c.b16 %v6205, %v6204
        %v6220 = vpack.c.b16 %v6207, %v6206
        %v6221 = vpack.c.b16 %v6209, %v6208
        %v6222 = vpack.c.b16 %v6211, %v6210
        %v6223 = vpack.c.b16 %v6213, %v6212
        %v6224 = vpack.c.b16 %v6215, %v6214
        %v6225 = vpack.c.b16 %v6216, %v6216
        %v6227 = vshrl.u32 %v6217, 16
        %v6229 = vshll.u32 %v6217, 16
        %v6231 = vrot.slane %v6229, 1
        %v6232 = vor.u32 %v6227, %v6231
        %v6234 = vshll.u32 %v6218, 16
        %v6236 = vrot.slane %v6234, 1
        %v6237 = vsel %vm2844, %v6232, %v6236
        %v6238 = vshrl.u32 %v6218, 16
        %v6240 = vor.u32 %v6238, %v6236
        %v6242 = vshll.u32 %v6219, 16
        %v6244 = vrot.slane %v6242, 1
        %v6245 = vsel %vm2844, %v6240, %v6244
        %v6246 = vshrl.u32 %v6219, 16
        %v6248 = vor.u32 %v6246, %v6244
        %v6250 = vshll.u32 %v6220, 16
        %v6252 = vrot.slane %v6250, 1
        %v6253 = vsel %vm2844, %v6248, %v6252
        %v6254 = vshrl.u32 %v6220, 16
        %v6256 = vor.u32 %v6254, %v6252
        %v6258 = vshll.u32 %v6221, 16
        %v6260 = vrot.slane %v6258, 1
        %v6261 = vsel %vm2844, %v6256, %v6260
        %v6262 = vshrl.u32 %v6221, 16
        %v6264 = vor.u32 %v6262, %v6260
        %v6266 = vshll.u32 %v6222, 16
        %v6268 = vrot.slane %v6266, 1
        %v6269 = vsel %vm2844, %v6264, %v6268
        %v6270 = vshrl.u32 %v6222, 16
        %v6272 = vor.u32 %v6270, %v6268
        %v6274 = vshll.u32 %v6223, 16
        %v6276 = vrot.slane %v6274, 1
        %v6277 = vsel %vm2844, %v6272, %v6276
        %v6278 = vshrl.u32 %v6223, 16
        %v6280 = vor.u32 %v6278, %v6276
        %v6282 = vshll.u32 %v6224, 16
        %v6284 = vrot.slane %v6282, 1
        %v6285 = vsel %vm2844, %v6280, %v6284
        %v6286 = vshrl.u32 %v6224, 16
        %v6288 = vor.u32 %v6286, %v6284
        %v6290 = vshll.u32 %v6225, 16
        %v6292 = vrot.slane %v6290, 1
        %v6293 = vsel %vm2844, %v6288, %v6292
        %v6302 = vld [vmem:[%s3960] sm:$0xf]
        %v6303 = vld [vmem:[%s3960 + $0x4] sm:$0xf]
        %v6304 = vld [vmem:[%s3960 + $0x8] sm:$0xf]
        %v6305 = vld [vmem:[%s3960 + $0xc] sm:$0xf]
        %v6306 = vld [vmem:[%s3960 + $0x10] sm:$0xf]
        %v6307 = vld [vmem:[%s3960 + $0x14] sm:$0xf]
        %v6308 = vld [vmem:[%s3960 + $0x18] sm:$0xf]
        %v6309 = vld [vmem:[%s3960 + $0x1c] sm:$0xf]
        %v6310 = vld [vmem:[%s3960 + $0x20] sm:$0xf]
        %v6311 = vld [vmem:[%s3960 + $0x24] sm:$0xf]
        %v6312 = vld [vmem:[%s3960 + $0x28] sm:$0xf]
        %v6313 = vld [vmem:[%s3960 + $0x2c] sm:$0xf]
        %v6314 = vld [vmem:[%s3960 + $0x30] sm:$0xf]
        %v6315 = vld [vmem:[%s3960 + $0x34] sm:$0xf]
        %v6316 = vld [vmem:[%s3960 + $0x38] sm:$0xf]
        %v6317 = vld [vmem:[%s3960 + $0x3c] sm:$0xf]
        %v6318 = vld [vmem:[%s3960 + $0x40] sm:$0xf]
        %v6319 = vld [vmem:[%s3960 + $0x44] sm:$0xf]
        %v6320 = vld [vmem:[%s3960 + $0x48] sm:$0xf]
        %v6321 = vld [vmem:[%s3960 + $0x4c] sm:$0xf]
        %v6322 = vld [vmem:[%s3960 + $0x50] sm:$0xf]
        %v6323 = vld [vmem:[%s3960 + $0x54] sm:$0xf]
        %v6324 = vld [vmem:[%s3960 + $0x58] sm:$0xf]
        %v6325 = vld [vmem:[%s3960 + $0x5c] sm:$0xf]
        %v6326 = vld [vmem:[%s3960 + $0x60] sm:$0xf]
        %v6327 = vld [vmem:[%s3960 + $0x64] sm:$0xf]
        %v6328 = vld [vmem:[%s3960 + $0x68] sm:$0xf]
        %v6329 = vld [vmem:[%s3960 + $0x6c] sm:$0xf]
        %v6330 = vld [vmem:[%s3960 + $0x70] sm:$0xf]
        %v6331 = vld [vmem:[%s3960 + $0x74] sm:$0xf]
        %v6332 = vld [vmem:[%s3960 + $0x78] sm:$0xf]
        %v6333 = vld [vmem:[%s3960 + $0x7c] sm:$0xf]
        %v6366 = vunpack.c.l.b16 %v6302
        %v6367 = vunpack.c.l.b16 %v6303
        %v6368 = vunpack.c.l.b16 %v6304
        %v6369 = vunpack.c.l.b16 %v6305
        %v6370 = vunpack.c.l.b16 %v6306
        %v6371 = vunpack.c.l.b16 %v6307
        %v6372 = vunpack.c.l.b16 %v6308
        %v6373 = vunpack.c.l.b16 %v6309
        %v6374 = vunpack.c.l.b16 %v6310
        %v6375 = vunpack.c.l.b16 %v6311
        %v6376 = vunpack.c.l.b16 %v6312
        %v6377 = vunpack.c.l.b16 %v6313
        %v6378 = vunpack.c.l.b16 %v6314
        %v6379 = vunpack.c.l.b16 %v6315
        %v6380 = vunpack.c.l.b16 %v6316
        %v6381 = vunpack.c.l.b16 %v6317
        %v6382 = vunpack.c.l.b16 %v6318
        %v6383 = vunpack.c.l.b16 %v6319
        %v6384 = vunpack.c.l.b16 %v6320
        %v6385 = vunpack.c.l.b16 %v6321
        %v6386 = vunpack.c.l.b16 %v6322
        %v6387 = vunpack.c.l.b16 %v6323
        %v6388 = vunpack.c.l.b16 %v6324
        %v6389 = vunpack.c.l.b16 %v6325
        %v6390 = vunpack.c.l.b16 %v6326
        %v6391 = vunpack.c.l.b16 %v6327
        %v6392 = vunpack.c.l.b16 %v6328
        %v6393 = vunpack.c.l.b16 %v6329
        %v6394 = vunpack.c.l.b16 %v6330
        %v6395 = vunpack.c.l.b16 %v6331
        %v6396 = vunpack.c.l.b16 %v6332
        %v6397 = vunpack.c.l.b16 %v6333
        %v6398 = vpack.c.b16 %v6367, %v6366
        %v6399 = vpack.c.b16 %v6369, %v6368
        %v6400 = vpack.c.b16 %v6371, %v6370
        %v6401 = vpack.c.b16 %v6373, %v6372
        %v6402 = vpack.c.b16 %v6375, %v6374
        %v6403 = vpack.c.b16 %v6377, %v6376
        %v6404 = vpack.c.b16 %v6379, %v6378
        %v6405 = vpack.c.b16 %v6381, %v6380
        %v6406 = vpack.c.b16 %v6383, %v6382
        %v6407 = vpack.c.b16 %v6385, %v6384
        %v6408 = vpack.c.b16 %v6387, %v6386
        %v6409 = vpack.c.b16 %v6389, %v6388
        %v6410 = vpack.c.b16 %v6391, %v6390
        %v6411 = vpack.c.b16 %v6393, %v6392
        %v6412 = vpack.c.b16 %v6395, %v6394
        %v6413 = vpack.c.b16 %v6397, %v6396
        %6430 = vmatpush.bf16.msra.mxu0 %v6405
        %6431 = vmatpush.bf16.msra.mxu0 %v6404
        %6432 = vmatpush.bf16.msra.mxu0 %v6403
        %6433 = vmatpush.bf16.msra.mxu0 %v6402
        %6434 = vmatpush.bf16.msra.mxu0 %v6401
        %6435 = vmatpush.bf16.msra.mxu0 %v6400
        %6436 = vmatpush.bf16.msra.mxu0 %v6399
        %6437 = vmatpush.bf16.msra.mxu0 %v6398
        %6438 = vmatmul.bf16.gmra.mxu0 %v6167
        %v6439 = vpop.f32.mrf.mxu0
        %v6440 = vadd.f32 0.0, %v6439
        %v6441 = vpop.f32.mrf.mxu0
        %v6442 = vadd.f32 0.0, %v6441
        %6443 = vmatmul.bf16.gmra.mxu0 %v6168
        %v6444 = vpop.f32.mrf.mxu0
        %v6445 = vadd.f32 0.0, %v6444
        %v6446 = vpop.f32.mrf.mxu0
        %v6447 = vadd.f32 0.0, %v6446
        %6448 = vmatmul.bf16.gmra.mxu0 %v6169
        %v6449 = vpop.f32.mrf.mxu0
        %v6450 = vadd.f32 0.0, %v6449
        %v6451 = vpop.f32.mrf.mxu0
        %v6452 = vadd.f32 0.0, %v6451
        %6453 = vmatmul.bf16.gmra.mxu0 %v6170
        %v6454 = vpop.f32.mrf.mxu0
        %v6455 = vadd.f32 0.0, %v6454
        %v6456 = vpop.f32.mrf.mxu0
        %v6457 = vadd.f32 0.0, %v6456
        %6458 = vmatmul.bf16.gmra.mxu0 %v6171
        %v6459 = vpop.f32.mrf.mxu0
        %v6460 = vadd.f32 0.0, %v6459
        %v6461 = vpop.f32.mrf.mxu0
        %v6462 = vadd.f32 0.0, %v6461
        %6463 = vmatmul.bf16.gmra.mxu0 %v6172
        %v6464 = vpop.f32.mrf.mxu0
        %v6465 = vadd.f32 0.0, %v6464
        %v6466 = vpop.f32.mrf.mxu0
        %v6467 = vadd.f32 0.0, %v6466
        %6468 = vmatmul.bf16.gmra.mxu0 %v6173
        %v6469 = vpop.f32.mrf.mxu0
        %v6470 = vadd.f32 0.0, %v6469
        %v6471 = vpop.f32.mrf.mxu0
        %v6472 = vadd.f32 0.0, %v6471
        %6473 = vmatmul.bf16.gmra.mxu0 %v6174
        %v6474 = vpop.f32.mrf.mxu0
        %v6475 = vadd.f32 0.0, %v6474
        %v6476 = vpop.f32.mrf.mxu0
        %v6477 = vadd.f32 0.0, %v6476
        %6478 = vdwg.mxu0
        %6479 = vmatpush.bf16.msra.mxu0 %v6413
        %6480 = vmatpush.bf16.msra.mxu0 %v6412
        %6481 = vmatpush.bf16.msra.mxu0 %v6411
        %6482 = vmatpush.bf16.msra.mxu0 %v6410
        %6483 = vmatpush.bf16.msra.mxu0 %v6409
        %6484 = vmatpush.bf16.msra.mxu0 %v6408
        %6485 = vmatpush.bf16.msra.mxu0 %v6407
        %6486 = vmatpush.bf16.msra.mxu0 %v6406
        %6487 = vmatmul.bf16.gmra.mxu0 %v6237
        %v6488 = vpop.f32.mrf.mxu0
        %v6489 = vadd.f32 %v6440, %v6488
        %v6490 = vpop.f32.mrf.mxu0
        %v6491 = vadd.f32 %v6442, %v6490
        %6492 = vmatmul.bf16.gmra.mxu0 %v6245
        %v6493 = vpop.f32.mrf.mxu0
        %v6494 = vadd.f32 %v6445, %v6493
        %v6495 = vpop.f32.mrf.mxu0
        %v6496 = vadd.f32 %v6447, %v6495
        %6497 = vmatmul.bf16.gmra.mxu0 %v6253
        %v6498 = vpop.f32.mrf.mxu0
        %v6499 = vadd.f32 %v6450, %v6498
        %v6500 = vpop.f32.mrf.mxu0
        %v6501 = vadd.f32 %v6452, %v6500
        %6502 = vmatmul.bf16.gmra.mxu0 %v6261
        %v6503 = vpop.f32.mrf.mxu0
        %v6504 = vadd.f32 %v6455, %v6503
        %v6505 = vpop.f32.mrf.mxu0
        %v6506 = vadd.f32 %v6457, %v6505
        %6507 = vmatmul.bf16.gmra.mxu0 %v6269
        %v6508 = vpop.f32.mrf.mxu0
        %v6509 = vadd.f32 %v6460, %v6508
        %v6510 = vpop.f32.mrf.mxu0
        %v6511 = vadd.f32 %v6462, %v6510
        %6512 = vmatmul.bf16.gmra.mxu0 %v6277
        %v6513 = vpop.f32.mrf.mxu0
        %v6514 = vadd.f32 %v6465, %v6513
        %v6515 = vpop.f32.mrf.mxu0
        %v6516 = vadd.f32 %v6467, %v6515
        %6517 = vmatmul.bf16.gmra.mxu0 %v6285
        %v6518 = vpop.f32.mrf.mxu0
        %v6519 = vadd.f32 %v6470, %v6518
        %v6520 = vpop.f32.mrf.mxu0
        %v6521 = vadd.f32 %v6472, %v6520
        %6522 = vmatmul.bf16.gmra.mxu0 %v6293
        %v6523 = vpop.f32.mrf.mxu0
        %v6524 = vadd.f32 %v6475, %v6523
        %v6525 = vpop.f32.mrf.mxu0
        %v6526 = vadd.f32 %v6477, %v6525
        %6527 = vdwg.mxu0
        %v6528 = vadd.f32 %v6085, %v6489
        %v6529 = vadd.f32 %v6086, %v6491
        %v6530 = vadd.f32 %v6087, %v6494
        %v6531 = vadd.f32 %v6088, %v6496
        %v6532 = vadd.f32 %v6089, %v6499
        %v6533 = vadd.f32 %v6090, %v6501
        %v6534 = vadd.f32 %v6091, %v6504
        %v6535 = vadd.f32 %v6092, %v6506
        %v6536 = vadd.f32 %v6093, %v6509
        %v6537 = vadd.f32 %v6094, %v6511
        %v6538 = vadd.f32 %v6095, %v6514
        %v6539 = vadd.f32 %v6096, %v6516
        %v6540 = vadd.f32 %v6097, %v6519
        %v6541 = vadd.f32 %v6098, %v6521
        %v6542 = vadd.f32 %v6099, %v6524
        %v6543 = vadd.f32 %v6100, %v6526
        %v6544 = vld [vmem:[#allocation4 + $0x2] sm:$0x1]
        %v6545 = vadd.f32 %v6528, %v6529
        %v6546 = vadd.f32 %v6545, %v6530
        %v6547 = vadd.f32 %v6546, %v6531
        %v6548 = vadd.f32 %v6547, %v6532
        %v6549 = vadd.f32 %v6548, %v6533
        %v6550 = vadd.f32 %v6549, %v6534
        %v6551 = vadd.f32 %v6550, %v6535
        %v6552 = vadd.f32 %v6551, %v6536
        %v6553 = vadd.f32 %v6552, %v6537
        %v6554 = vadd.f32 %v6553, %v6538
        %v6555 = vadd.f32 %v6554, %v6539
        %v6556 = vadd.f32 %v6555, %v6540
        %v6557 = vadd.f32 %v6556, %v6541
        %v6558 = vadd.f32 %v6557, %v6542
        %v6559 = vadd.f32 %v6558, %v6543
        %v6560 = vrot.slane %v6559, 4
        %v6561 = vadd.f32 %v6559, %v6560
        %v6562 = vrot.slane %v6561, 2
        %v6563 = vadd.f32 %v6561, %v6562
        %v6564 = vrot.slane %v6563, 1
        %v6565 = vadd.f32 %v6563, %v6564
        %v6566 = vadd.f32 %v6544, %v6565
        %6567 = vst [vmem:[#allocation4 + $0x2] sm:$0x1] %v6566
        %v6568 = vld [vmem:[#allocation4 + $0x3] sm:$0x1]
        %v6569 = vmul.f32 %v6528, %v6528
        %v6570 = vmul.f32 %v6529, %v6529
        %v6571 = vmul.f32 %v6530, %v6530
        %v6572 = vmul.f32 %v6531, %v6531
        %v6573 = vmul.f32 %v6532, %v6532
        %v6574 = vmul.f32 %v6533, %v6533
        %v6575 = vmul.f32 %v6534, %v6534
        %v6576 = vmul.f32 %v6535, %v6535
        %v6577 = vmul.f32 %v6536, %v6536
        %v6578 = vmul.f32 %v6537, %v6537
        %v6579 = vmul.f32 %v6538, %v6538
        %v6580 = vmul.f32 %v6539, %v6539
        %v6581 = vmul.f32 %v6540, %v6540
        %v6582 = vmul.f32 %v6541, %v6541
        %v6583 = vmul.f32 %v6542, %v6542
        %v6584 = vmul.f32 %v6543, %v6543
        %v6585 = vadd.f32 %v6569, %v6570
        %v6586 = vadd.f32 %v6585, %v6571
        %v6587 = vadd.f32 %v6586, %v6572
        %v6588 = vadd.f32 %v6587, %v6573
        %v6589 = vadd.f32 %v6588, %v6574
        %v6590 = vadd.f32 %v6589, %v6575
        %v6591 = vadd.f32 %v6590, %v6576
        %v6592 = vadd.f32 %v6591, %v6577
        %v6593 = vadd.f32 %v6592, %v6578
        %v6594 = vadd.f32 %v6593, %v6579
        %v6595 = vadd.f32 %v6594, %v6580
        %v6596 = vadd.f32 %v6595, %v6581
        %v6597 = vadd.f32 %v6596, %v6582
        %v6598 = vadd.f32 %v6597, %v6583
        %v6599 = vadd.f32 %v6598, %v6584
        %v6600 = vrot.slane %v6599, 4
        %v6601 = vadd.f32 %v6599, %v6600
        %v6602 = vrot.slane %v6601, 2
        %v6603 = vadd.f32 %v6601, %v6602
        %v6604 = vrot.slane %v6603, 1
        %v6605 = vadd.f32 %v6603, %v6604
        %v6606 = vadd.f32 %v6568, %v6605
        %6607 = vst [vmem:[#allocation4 + $0x3] sm:$0x1] %v6606
        %6608 = vst [vmem:[%s826 + $0x80] sm:$0xff] %v6528
        %6609 = vst [vmem:[%s826 + $0x88] sm:$0xff] %v6529
        %6610 = vst [vmem:[%s826 + $0x90] sm:$0xff] %v6530
        %6611 = vst [vmem:[%s826 + $0x98] sm:$0xff] %v6531
        %6612 = vst [vmem:[%s826 + $0xa0] sm:$0xff] %v6532
        %6613 = vst [vmem:[%s826 + $0xa8] sm:$0xff] %v6533
        %6614 = vst [vmem:[%s826 + $0xb0] sm:$0xff] %v6534
        %6615 = vst [vmem:[%s826 + $0xb8] sm:$0xff] %v6535
        %6616 = vst [vmem:[%s826 + $0xc0] sm:$0xff] %v6536
        %6617 = vst [vmem:[%s826 + $0xc8] sm:$0xff] %v6537
        %6618 = vst [vmem:[%s826 + $0xd0] sm:$0xff] %v6538
        %6619 = vst [vmem:[%s826 + $0xd8] sm:$0xff] %v6539
        %6620 = vst [vmem:[%s826 + $0xe0] sm:$0xff] %v6540
        %6621 = vst [vmem:[%s826 + $0xe8] sm:$0xff] %v6541
        %6622 = vst [vmem:[%s826 + $0xf0] sm:$0xff] %v6542
        %6623 = vst [vmem:[%s826 + $0xf8] sm:$0xff] %v6543
      $region56: #{bottleneck_forward.1} parent=43 // pred_fallthru
        _
      %p6624 = scmp.eq.s32.totalorder %s21, 2
      // Predicated region
      $region61: #{bottleneck_forward.1} parent=43 // pred_check
        %p6625 = pneg %p6624
      $region62: #{bottleneck_forward.1} parent=43 // pred_check_branch
        %6627 = sbr.rel (%p6625) target = $region64
      $region63: #{bottleneck_forward.1} parent=43 // pred_region
        // Predicated region
        $region65: #{bottleneck_forward.1} parent=63 // pred_check
          %p6628 = pneg %p306
        $region66: #{bottleneck_forward.1} parent=63 // pred_check_branch
          %6630 = sbr.rel (%p6628) target = $region68
        $region67: #{bottleneck_forward.1} parent=63 // pred_region
          %v6631 = vld [vmem:[#allocation4 + $0x2] sm:$0x1]
          %v6632 = vld [vmem:[#allocation4 + $0x3] sm:$0x1]
          %v6633 = vmul.f32 %v6631, 0.001953125
          %v6634 = vmul.f32 %v6632, 0.001953125
          %v6635 = vmul.f32 %v6633, %v6633
          %v6636 = vsub.f32 %v6634, %v6635
          %v6637 = vmax.f32 %v6636, 0.0
          %v6638 = vld [vmem:[%s5 + $0x2] sm:$0x1]
          %v6639 = vadd.f32 %v6637, 1e-05
          %v6640 = vrsqrt.pop %v6639
          %v6641 = vmul.f32 %v6640, %v6639
          %v6642 = vmul.f32 %v6641, %v6640
          %v6643 = vmul.f32 0.5, %v6642
          %v6644 = vsub.f32 1.5, %v6643
          %v6645 = vmul.f32 %v6640, %v6644
          %vm6646 = vweird.f32 %v6639
          %vm6647 = vweird.f32 %v6640
          %vm6648 = vmor %vm6646, %vm6647
          %v6649 = vsel %vm6648, %v6640, %v6645
          %v6650 = vmul.f32 %v6638, %v6649
          %6651 = vst [vmem:[#allocation5 + $0x2] sm:$0x1] %v6650
          %v6652 = vld [vmem:[%s5 + $0x3] sm:$0x1]
          %v6653 = vmul.f32 %v6650, %v6633
          %v6654 = vsub.f32 %v6652, %v6653
          %6655 = vst [vmem:[#allocation5 + $0x3] sm:$0x1] %v6654
        $region68: #{bottleneck_forward.1} parent=63 // pred_fallthru
          _
        %v6656 = vld [vmem:[#allocation5 + $0x2] sm:$0x1]
        %v6657 = vld [vmem:[#allocation5 + $0x3] sm:$0x1]
        %s6658 = smul.u32 %s22, 256
        %s6659 = scalar_lea.vmem [#allocation2], %s6658
        %v6660 = vld [vmem:[%s6659] sm:$0xff]
        %v6661 = vld [vmem:[%s6659 + $0x8] sm:$0xff]
        %v6662 = vld [vmem:[%s6659 + $0x10] sm:$0xff]
        %v6663 = vld [vmem:[%s6659 + $0x18] sm:$0xff]
        %v6664 = vld [vmem:[%s6659 + $0x20] sm:$0xff]
        %v6665 = vld [vmem:[%s6659 + $0x28] sm:$0xff]
        %v6666 = vld [vmem:[%s6659 + $0x30] sm:$0xff]
        %v6667 = vld [vmem:[%s6659 + $0x38] sm:$0xff]
        %v6668 = vld [vmem:[%s6659 + $0x40] sm:$0xff]
        %v6669 = vld [vmem:[%s6659 + $0x48] sm:$0xff]
        %v6670 = vld [vmem:[%s6659 + $0x50] sm:$0xff]
        %v6671 = vld [vmem:[%s6659 + $0x58] sm:$0xff]
        %v6672 = vld [vmem:[%s6659 + $0x60] sm:$0xff]
        %v6673 = vld [vmem:[%s6659 + $0x68] sm:$0xff]
        %v6674 = vld [vmem:[%s6659 + $0x70] sm:$0xff]
        %v6675 = vld [vmem:[%s6659 + $0x78] sm:$0xff]
        %v6676 = vperm.slane %v6656, 0
        %v6677 = vmul.f32 %v6660, %v6676
        %v6678 = vmul.f32 %v6661, %v6676
        %v6679 = vmul.f32 %v6662, %v6676
        %v6680 = vmul.f32 %v6663, %v6676
        %v6681 = vmul.f32 %v6664, %v6676
        %v6682 = vmul.f32 %v6665, %v6676
        %v6683 = vmul.f32 %v6666, %v6676
        %v6684 = vmul.f32 %v6667, %v6676
        %v6685 = vmul.f32 %v6668, %v6676
        %v6686 = vmul.f32 %v6669, %v6676
        %v6687 = vmul.f32 %v6670, %v6676
        %v6688 = vmul.f32 %v6671, %v6676
        %v6689 = vmul.f32 %v6672, %v6676
        %v6690 = vmul.f32 %v6673, %v6676
        %v6691 = vmul.f32 %v6674, %v6676
        %v6692 = vmul.f32 %v6675, %v6676
        %v6693 = vperm.slane %v6657, 0
        %v6694 = vadd.f32 %v6677, %v6693
        %v6695 = vadd.f32 %v6678, %v6693
        %v6696 = vadd.f32 %v6679, %v6693
        %v6697 = vadd.f32 %v6680, %v6693
        %v6698 = vadd.f32 %v6681, %v6693
        %v6699 = vadd.f32 %v6682, %v6693
        %v6700 = vadd.f32 %v6683, %v6693
        %v6701 = vadd.f32 %v6684, %v6693
        %v6702 = vadd.f32 %v6685, %v6693
        %v6703 = vadd.f32 %v6686, %v6693
        %v6704 = vadd.f32 %v6687, %v6693
        %v6705 = vadd.f32 %v6688, %v6693
        %v6706 = vadd.f32 %v6689, %v6693
        %v6707 = vadd.f32 %v6690, %v6693
        %v6708 = vadd.f32 %v6691, %v6693
        %v6709 = vadd.f32 %v6692, %v6693
        %v6710 = vmax.f32 %v6694, 0.0
        %v6711 = vmax.f32 %v6695, 0.0
        %v6712 = vmax.f32 %v6696, 0.0
        %v6713 = vmax.f32 %v6697, 0.0
        %v6714 = vmax.f32 %v6698, 0.0
        %v6715 = vmax.f32 %v6699, 0.0
        %v6716 = vmax.f32 %v6700, 0.0
        %v6717 = vmax.f32 %v6701, 0.0
        %v6718 = vmax.f32 %v6702, 0.0
        %v6719 = vmax.f32 %v6703, 0.0
        %v6720 = vmax.f32 %v6704, 0.0
        %v6721 = vmax.f32 %v6705, 0.0
        %v6722 = vmax.f32 %v6706, 0.0
        %v6723 = vmax.f32 %v6707, 0.0
        %v6724 = vmax.f32 %v6708, 0.0
        %v6725 = vmax.f32 %v6709, 0.0
        %v6726 = vpack.c.bf16 %v6711, %v6710
        %v6727 = vpack.c.bf16 %v6713, %v6712
        %v6728 = vpack.c.bf16 %v6715, %v6714
        %v6729 = vpack.c.bf16 %v6717, %v6716
        %v6730 = vpack.c.bf16 %v6719, %v6718
        %v6731 = vpack.c.bf16 %v6721, %v6720
        %v6732 = vpack.c.bf16 %v6723, %v6722
        %v6733 = vpack.c.bf16 %v6725, %v6724
        %v6734 = vld [vmem:[%s4] sm:$0xf]
        %v6735 = vld [vmem:[%s4 + $0x4] sm:$0xf]
        %v6736 = vld [vmem:[%s4 + $0x8] sm:$0xf]
        %v6737 = vld [vmem:[%s4 + $0xc] sm:$0xf]
        %v6738 = vld [vmem:[%s4 + $0x10] sm:$0xf]
        %v6739 = vld [vmem:[%s4 + $0x14] sm:$0xf]
        %v6740 = vld [vmem:[%s4 + $0x18] sm:$0xf]
        %v6741 = vld [vmem:[%s4 + $0x1c] sm:$0xf]
        %v6742 = vld [vmem:[%s4 + $0x20] sm:$0xf]
        %v6743 = vld [vmem:[%s4 + $0x24] sm:$0xf]
        %v6744 = vld [vmem:[%s4 + $0x28] sm:$0xf]
        %v6745 = vld [vmem:[%s4 + $0x2c] sm:$0xf]
        %v6746 = vld [vmem:[%s4 + $0x30] sm:$0xf]
        %v6747 = vld [vmem:[%s4 + $0x34] sm:$0xf]
        %v6748 = vld [vmem:[%s4 + $0x38] sm:$0xf]
        %v6749 = vld [vmem:[%s4 + $0x3c] sm:$0xf]
        %v6766 = vunpack.c.l.b16 %v6734
        %v6767 = vunpack.c.l.b16 %v6735
        %v6768 = vunpack.c.l.b16 %v6736
        %v6769 = vunpack.c.l.b16 %v6737
        %v6770 = vunpack.c.l.b16 %v6738
        %v6771 = vunpack.c.l.b16 %v6739
        %v6772 = vunpack.c.l.b16 %v6740
        %v6773 = vunpack.c.l.b16 %v6741
        %v6774 = vunpack.c.l.b16 %v6742
        %v6775 = vunpack.c.l.b16 %v6743
        %v6776 = vunpack.c.l.b16 %v6744
        %v6777 = vunpack.c.l.b16 %v6745
        %v6778 = vunpack.c.l.b16 %v6746
        %v6779 = vunpack.c.l.b16 %v6747
        %v6780 = vunpack.c.l.b16 %v6748
        %v6781 = vunpack.c.l.b16 %v6749
        %v6782 = vpack.c.b16 %v6767, %v6766
        %v6783 = vpack.c.b16 %v6769, %v6768
        %v6784 = vpack.c.b16 %v6771, %v6770
        %v6785 = vpack.c.b16 %v6773, %v6772
        %v6786 = vpack.c.b16 %v6775, %v6774
        %v6787 = vpack.c.b16 %v6777, %v6776
        %v6788 = vpack.c.b16 %v6779, %v6778
        %v6789 = vpack.c.b16 %v6781, %v6780
        %6798 = vmatpush.bf16.msra.mxu0 %v6789
        %6799 = vmatpush.bf16.msra.mxu0 %v6788
        %6800 = vmatpush.bf16.msra.mxu0 %v6787
        %6801 = vmatpush.bf16.msra.mxu0 %v6786
        %6802 = vmatpush.bf16.msra.mxu0 %v6785
        %6803 = vmatpush.bf16.msra.mxu0 %v6784
        %6804 = vmatpush.bf16.msra.mxu0 %v6783
        %6805 = vmatpush.bf16.msra.mxu0 %v6782
        %6806 = vmatmul.bf16.gmra.mxu0 %v6726
        %v6807 = vpop.f32.mrf.mxu0
        %v6808 = vadd.f32 0.0, %v6807
        %v6809 = vpop.f32.mrf.mxu0
        %v6810 = vadd.f32 0.0, %v6809
        %6811 = vmatmul.bf16.gmra.mxu0 %v6727
        %v6812 = vpop.f32.mrf.mxu0
        %v6813 = vadd.f32 0.0, %v6812
        %v6814 = vpop.f32.mrf.mxu0
        %v6815 = vadd.f32 0.0, %v6814
        %6816 = vmatmul.bf16.gmra.mxu0 %v6728
        %v6817 = vpop.f32.mrf.mxu0
        %v6818 = vadd.f32 0.0, %v6817
        %v6819 = vpop.f32.mrf.mxu0
        %v6820 = vadd.f32 0.0, %v6819
        %6821 = vmatmul.bf16.gmra.mxu0 %v6729
        %v6822 = vpop.f32.mrf.mxu0
        %v6823 = vadd.f32 0.0, %v6822
        %v6824 = vpop.f32.mrf.mxu0
        %v6825 = vadd.f32 0.0, %v6824
        %6826 = vmatmul.bf16.gmra.mxu0 %v6730
        %v6827 = vpop.f32.mrf.mxu0
        %v6828 = vadd.f32 0.0, %v6827
        %v6829 = vpop.f32.mrf.mxu0
        %v6830 = vadd.f32 0.0, %v6829
        %6831 = vmatmul.bf16.gmra.mxu0 %v6731
        %v6832 = vpop.f32.mrf.mxu0
        %v6833 = vadd.f32 0.0, %v6832
        %v6834 = vpop.f32.mrf.mxu0
        %v6835 = vadd.f32 0.0, %v6834
        %6836 = vmatmul.bf16.gmra.mxu0 %v6732
        %v6837 = vpop.f32.mrf.mxu0
        %v6838 = vadd.f32 0.0, %v6837
        %v6839 = vpop.f32.mrf.mxu0
        %v6840 = vadd.f32 0.0, %v6839
        %6841 = vmatmul.bf16.gmra.mxu0 %v6733
        %v6842 = vpop.f32.mrf.mxu0
        %v6843 = vadd.f32 0.0, %v6842
        %v6844 = vpop.f32.mrf.mxu0
        %v6845 = vadd.f32 0.0, %v6844
        %6846 = vdwg.mxu0
        %v6847 = vld [vmem:[#allocation4 + $0x4] sm:$0x1]
        %v6848 = vadd.f32 %v6808, %v6810
        %v6849 = vadd.f32 %v6848, %v6813
        %v6850 = vadd.f32 %v6849, %v6815
        %v6851 = vadd.f32 %v6850, %v6818
        %v6852 = vadd.f32 %v6851, %v6820
        %v6853 = vadd.f32 %v6852, %v6823
        %v6854 = vadd.f32 %v6853, %v6825
        %v6855 = vadd.f32 %v6854, %v6828
        %v6856 = vadd.f32 %v6855, %v6830
        %v6857 = vadd.f32 %v6856, %v6833
        %v6858 = vadd.f32 %v6857, %v6835
        %v6859 = vadd.f32 %v6858, %v6838
        %v6860 = vadd.f32 %v6859, %v6840
        %v6861 = vadd.f32 %v6860, %v6843
        %v6862 = vadd.f32 %v6861, %v6845
        %v6863 = vrot.slane %v6862, 4
        %v6864 = vadd.f32 %v6862, %v6863
        %v6865 = vrot.slane %v6864, 2
        %v6866 = vadd.f32 %v6864, %v6865
        %v6867 = vrot.slane %v6866, 1
        %v6868 = vadd.f32 %v6866, %v6867
        %v6869 = vadd.f32 %v6847, %v6868
        %6870 = vst [vmem:[#allocation4 + $0x4] sm:$0x1] %v6869
        %v6871 = vld [vmem:[#allocation4 + $0x5] sm:$0x1]
        %v6872 = vmul.f32 %v6808, %v6808
        %v6873 = vmul.f32 %v6810, %v6810
        %v6874 = vmul.f32 %v6813, %v6813
        %v6875 = vmul.f32 %v6815, %v6815
        %v6876 = vmul.f32 %v6818, %v6818
        %v6877 = vmul.f32 %v6820, %v6820
        %v6878 = vmul.f32 %v6823, %v6823
        %v6879 = vmul.f32 %v6825, %v6825
        %v6880 = vmul.f32 %v6828, %v6828
        %v6881 = vmul.f32 %v6830, %v6830
        %v6882 = vmul.f32 %v6833, %v6833
        %v6883 = vmul.f32 %v6835, %v6835
        %v6884 = vmul.f32 %v6838, %v6838
        %v6885 = vmul.f32 %v6840, %v6840
        %v6886 = vmul.f32 %v6843, %v6843
        %v6887 = vmul.f32 %v6845, %v6845
        %v6888 = vadd.f32 %v6872, %v6873
        %v6889 = vadd.f32 %v6888, %v6874
        %v6890 = vadd.f32 %v6889, %v6875
        %v6891 = vadd.f32 %v6890, %v6876
        %v6892 = vadd.f32 %v6891, %v6877
        %v6893 = vadd.f32 %v6892, %v6878
        %v6894 = vadd.f32 %v6893, %v6879
        %v6895 = vadd.f32 %v6894, %v6880
        %v6896 = vadd.f32 %v6895, %v6881
        %v6897 = vadd.f32 %v6896, %v6882
        %v6898 = vadd.f32 %v6897, %v6883
        %v6899 = vadd.f32 %v6898, %v6884
        %v6900 = vadd.f32 %v6899, %v6885
        %v6901 = vadd.f32 %v6900, %v6886
        %v6902 = vadd.f32 %v6901, %v6887
        %v6903 = vrot.slane %v6902, 4
        %v6904 = vadd.f32 %v6902, %v6903
        %v6905 = vrot.slane %v6904, 2
        %v6906 = vadd.f32 %v6904, %v6905
        %v6907 = vrot.slane %v6906, 1
        %v6908 = vadd.f32 %v6906, %v6907
        %v6909 = vadd.f32 %v6871, %v6908
        %6910 = vst [vmem:[#allocation4 + $0x5] sm:$0x1] %v6909
        %6911 = vst [vmem:[%s6659] sm:$0xff] %v6808
        %6912 = vst [vmem:[%s6659 + $0x8] sm:$0xff] %v6810
        %6913 = vst [vmem:[%s6659 + $0x10] sm:$0xff] %v6813
        %6914 = vst [vmem:[%s6659 + $0x18] sm:$0xff] %v6815
        %6915 = vst [vmem:[%s6659 + $0x20] sm:$0xff] %v6818
        %6916 = vst [vmem:[%s6659 + $0x28] sm:$0xff] %v6820
        %6917 = vst [vmem:[%s6659 + $0x30] sm:$0xff] %v6823
        %6918 = vst [vmem:[%s6659 + $0x38] sm:$0xff] %v6825
        %6919 = vst [vmem:[%s6659 + $0x40] sm:$0xff] %v6828
        %6920 = vst [vmem:[%s6659 + $0x48] sm:$0xff] %v6830
        %6921 = vst [vmem:[%s6659 + $0x50] sm:$0xff] %v6833
        %6922 = vst [vmem:[%s6659 + $0x58] sm:$0xff] %v6835
        %6923 = vst [vmem:[%s6659 + $0x60] sm:$0xff] %v6838
        %6924 = vst [vmem:[%s6659 + $0x68] sm:$0xff] %v6840
        %6925 = vst [vmem:[%s6659 + $0x70] sm:$0xff] %v6843
        %6926 = vst [vmem:[%s6659 + $0x78] sm:$0xff] %v6845
        %v6927 = vld [vmem:[%s6659 + $0x80] sm:$0xff]
        %v6928 = vld [vmem:[%s6659 + $0x88] sm:$0xff]
        %v6929 = vld [vmem:[%s6659 + $0x90] sm:$0xff]
        %v6930 = vld [vmem:[%s6659 + $0x98] sm:$0xff]
        %v6931 = vld [vmem:[%s6659 + $0xa0] sm:$0xff]
        %v6932 = vld [vmem:[%s6659 + $0xa8] sm:$0xff]
        %v6933 = vld [vmem:[%s6659 + $0xb0] sm:$0xff]
        %v6934 = vld [vmem:[%s6659 + $0xb8] sm:$0xff]
        %v6935 = vld [vmem:[%s6659 + $0xc0] sm:$0xff]
        %v6936 = vld [vmem:[%s6659 + $0xc8] sm:$0xff]
        %v6937 = vld [vmem:[%s6659 + $0xd0] sm:$0xff]
        %v6938 = vld [vmem:[%s6659 + $0xd8] sm:$0xff]
        %v6939 = vld [vmem:[%s6659 + $0xe0] sm:$0xff]
        %v6940 = vld [vmem:[%s6659 + $0xe8] sm:$0xff]
        %v6941 = vld [vmem:[%s6659 + $0xf0] sm:$0xff]
        %v6942 = vld [vmem:[%s6659 + $0xf8] sm:$0xff]
        %v6943 = vmul.f32 %v6927, %v6676
        %v6944 = vmul.f32 %v6928, %v6676
        %v6945 = vmul.f32 %v6929, %v6676
        %v6946 = vmul.f32 %v6930, %v6676
        %v6947 = vmul.f32 %v6931, %v6676
        %v6948 = vmul.f32 %v6932, %v6676
        %v6949 = vmul.f32 %v6933, %v6676
        %v6950 = vmul.f32 %v6934, %v6676
        %v6951 = vmul.f32 %v6935, %v6676
        %v6952 = vmul.f32 %v6936, %v6676
        %v6953 = vmul.f32 %v6937, %v6676
        %v6954 = vmul.f32 %v6938, %v6676
        %v6955 = vmul.f32 %v6939, %v6676
        %v6956 = vmul.f32 %v6940, %v6676
        %v6957 = vmul.f32 %v6941, %v6676
        %v6958 = vmul.f32 %v6942, %v6676
        %v6959 = vadd.f32 %v6943, %v6693
        %v6960 = vadd.f32 %v6944, %v6693
        %v6961 = vadd.f32 %v6945, %v6693
        %v6962 = vadd.f32 %v6946, %v6693
        %v6963 = vadd.f32 %v6947, %v6693
        %v6964 = vadd.f32 %v6948, %v6693
        %v6965 = vadd.f32 %v6949, %v6693
        %v6966 = vadd.f32 %v6950, %v6693
        %v6967 = vadd.f32 %v6951, %v6693
        %v6968 = vadd.f32 %v6952, %v6693
        %v6969 = vadd.f32 %v6953, %v6693
        %v6970 = vadd.f32 %v6954, %v6693
        %v6971 = vadd.f32 %v6955, %v6693
        %v6972 = vadd.f32 %v6956, %v6693
        %v6973 = vadd.f32 %v6957, %v6693
        %v6974 = vadd.f32 %v6958, %v6693
        %v6975 = vmax.f32 %v6959, 0.0
        %v6976 = vmax.f32 %v6960, 0.0
        %v6977 = vmax.f32 %v6961, 0.0
        %v6978 = vmax.f32 %v6962, 0.0
        %v6979 = vmax.f32 %v6963, 0.0
        %v6980 = vmax.f32 %v6964, 0.0
        %v6981 = vmax.f32 %v6965, 0.0
        %v6982 = vmax.f32 %v6966, 0.0
        %v6983 = vmax.f32 %v6967, 0.0
        %v6984 = vmax.f32 %v6968, 0.0
        %v6985 = vmax.f32 %v6969, 0.0
        %v6986 = vmax.f32 %v6970, 0.0
        %v6987 = vmax.f32 %v6971, 0.0
        %v6988 = vmax.f32 %v6972, 0.0
        %v6989 = vmax.f32 %v6973, 0.0
        %v6990 = vmax.f32 %v6974, 0.0
        %v6991 = vpack.c.bf16 %v6976, %v6975
        %v6992 = vpack.c.bf16 %v6978, %v6977
        %v6993 = vpack.c.bf16 %v6980, %v6979
        %v6994 = vpack.c.bf16 %v6982, %v6981
        %v6995 = vpack.c.bf16 %v6984, %v6983
        %v6996 = vpack.c.bf16 %v6986, %v6985
        %v6997 = vpack.c.bf16 %v6988, %v6987
        %v6998 = vpack.c.bf16 %v6990, %v6989
        %v6999 = vld [vmem:[%s4] sm:$0xf]
        %v7000 = vld [vmem:[%s4 + $0x4] sm:$0xf]
        %v7001 = vld [vmem:[%s4 + $0x8] sm:$0xf]
        %v7002 = vld [vmem:[%s4 + $0xc] sm:$0xf]
        %v7003 = vld [vmem:[%s4 + $0x10] sm:$0xf]
        %v7004 = vld [vmem:[%s4 + $0x14] sm:$0xf]
        %v7005 = vld [vmem:[%s4 + $0x18] sm:$0xf]
        %v7006 = vld [vmem:[%s4 + $0x1c] sm:$0xf]
        %v7007 = vld [vmem:[%s4 + $0x20] sm:$0xf]
        %v7008 = vld [vmem:[%s4 + $0x24] sm:$0xf]
        %v7009 = vld [vmem:[%s4 + $0x28] sm:$0xf]
        %v7010 = vld [vmem:[%s4 + $0x2c] sm:$0xf]
        %v7011 = vld [vmem:[%s4 + $0x30] sm:$0xf]
        %v7012 = vld [vmem:[%s4 + $0x34] sm:$0xf]
        %v7013 = vld [vmem:[%s4 + $0x38] sm:$0xf]
        %v7014 = vld [vmem:[%s4 + $0x3c] sm:$0xf]
        %v7031 = vunpack.c.l.b16 %v6999
        %v7032 = vunpack.c.l.b16 %v7000
        %v7033 = vunpack.c.l.b16 %v7001
        %v7034 = vunpack.c.l.b16 %v7002
        %v7035 = vunpack.c.l.b16 %v7003
        %v7036 = vunpack.c.l.b16 %v7004
        %v7037 = vunpack.c.l.b16 %v7005
        %v7038 = vunpack.c.l.b16 %v7006
        %v7039 = vunpack.c.l.b16 %v7007
        %v7040 = vunpack.c.l.b16 %v7008
        %v7041 = vunpack.c.l.b16 %v7009
        %v7042 = vunpack.c.l.b16 %v7010
        %v7043 = vunpack.c.l.b16 %v7011
        %v7044 = vunpack.c.l.b16 %v7012
        %v7045 = vunpack.c.l.b16 %v7013
        %v7046 = vunpack.c.l.b16 %v7014
        %v7047 = vpack.c.b16 %v7032, %v7031
        %v7048 = vpack.c.b16 %v7034, %v7033
        %v7049 = vpack.c.b16 %v7036, %v7035
        %v7050 = vpack.c.b16 %v7038, %v7037
        %v7051 = vpack.c.b16 %v7040, %v7039
        %v7052 = vpack.c.b16 %v7042, %v7041
        %v7053 = vpack.c.b16 %v7044, %v7043
        %v7054 = vpack.c.b16 %v7046, %v7045
        %7063 = vmatpush.bf16.msra.mxu0 %v7054
        %7064 = vmatpush.bf16.msra.mxu0 %v7053
        %7065 = vmatpush.bf16.msra.mxu0 %v7052
        %7066 = vmatpush.bf16.msra.mxu0 %v7051
        %7067 = vmatpush.bf16.msra.mxu0 %v7050
        %7068 = vmatpush.bf16.msra.mxu0 %v7049
        %7069 = vmatpush.bf16.msra.mxu0 %v7048
        %7070 = vmatpush.bf16.msra.mxu0 %v7047
        %7071 = vmatmul.bf16.gmra.mxu0 %v6991
        %v7072 = vpop.f32.mrf.mxu0
        %v7073 = vadd.f32 0.0, %v7072
        %v7074 = vpop.f32.mrf.mxu0
        %v7075 = vadd.f32 0.0, %v7074
        %7076 = vmatmul.bf16.gmra.mxu0 %v6992
        %v7077 = vpop.f32.mrf.mxu0
        %v7078 = vadd.f32 0.0, %v7077
        %v7079 = vpop.f32.mrf.mxu0
        %v7080 = vadd.f32 0.0, %v7079
        %7081 = vmatmul.bf16.gmra.mxu0 %v6993
        %v7082 = vpop.f32.mrf.mxu0
        %v7083 = vadd.f32 0.0, %v7082
        %v7084 = vpop.f32.mrf.mxu0
        %v7085 = vadd.f32 0.0, %v7084
        %7086 = vmatmul.bf16.gmra.mxu0 %v6994
        %v7087 = vpop.f32.mrf.mxu0
        %v7088 = vadd.f32 0.0, %v7087
        %v7089 = vpop.f32.mrf.mxu0
        %v7090 = vadd.f32 0.0, %v7089
        %7091 = vmatmul.bf16.gmra.mxu0 %v6995
        %v7092 = vpop.f32.mrf.mxu0
        %v7093 = vadd.f32 0.0, %v7092
        %v7094 = vpop.f32.mrf.mxu0
        %v7095 = vadd.f32 0.0, %v7094
        %7096 = vmatmul.bf16.gmra.mxu0 %v6996
        %v7097 = vpop.f32.mrf.mxu0
        %v7098 = vadd.f32 0.0, %v7097
        %v7099 = vpop.f32.mrf.mxu0
        %v7100 = vadd.f32 0.0, %v7099
        %7101 = vmatmul.bf16.gmra.mxu0 %v6997
        %v7102 = vpop.f32.mrf.mxu0
        %v7103 = vadd.f32 0.0, %v7102
        %v7104 = vpop.f32.mrf.mxu0
        %v7105 = vadd.f32 0.0, %v7104
        %7106 = vmatmul.bf16.gmra.mxu0 %v6998
        %v7107 = vpop.f32.mrf.mxu0
        %v7108 = vadd.f32 0.0, %v7107
        %v7109 = vpop.f32.mrf.mxu0
        %v7110 = vadd.f32 0.0, %v7109
        %7111 = vdwg.mxu0
        %v7112 = vld [vmem:[#allocation4 + $0x4] sm:$0x1]
        %v7113 = vadd.f32 %v7073, %v7075
        %v7114 = vadd.f32 %v7113, %v7078
        %v7115 = vadd.f32 %v7114, %v7080
        %v7116 = vadd.f32 %v7115, %v7083
        %v7117 = vadd.f32 %v7116, %v7085
        %v7118 = vadd.f32 %v7117, %v7088
        %v7119 = vadd.f32 %v7118, %v7090
        %v7120 = vadd.f32 %v7119, %v7093
        %v7121 = vadd.f32 %v7120, %v7095
        %v7122 = vadd.f32 %v7121, %v7098
        %v7123 = vadd.f32 %v7122, %v7100
        %v7124 = vadd.f32 %v7123, %v7103
        %v7125 = vadd.f32 %v7124, %v7105
        %v7126 = vadd.f32 %v7125, %v7108
        %v7127 = vadd.f32 %v7126, %v7110
        %v7128 = vrot.slane %v7127, 4
        %v7129 = vadd.f32 %v7127, %v7128
        %v7130 = vrot.slane %v7129, 2
        %v7131 = vadd.f32 %v7129, %v7130
        %v7132 = vrot.slane %v7131, 1
        %v7133 = vadd.f32 %v7131, %v7132
        %v7134 = vadd.f32 %v7112, %v7133
        %7135 = vst [vmem:[#allocation4 + $0x4] sm:$0x1] %v7134
        %v7136 = vld [vmem:[#allocation4 + $0x5] sm:$0x1]
        %v7137 = vmul.f32 %v7073, %v7073
        %v7138 = vmul.f32 %v7075, %v7075
        %v7139 = vmul.f32 %v7078, %v7078
        %v7140 = vmul.f32 %v7080, %v7080
        %v7141 = vmul.f32 %v7083, %v7083
        %v7142 = vmul.f32 %v7085, %v7085
        %v7143 = vmul.f32 %v7088, %v7088
        %v7144 = vmul.f32 %v7090, %v7090
        %v7145 = vmul.f32 %v7093, %v7093
        %v7146 = vmul.f32 %v7095, %v7095
        %v7147 = vmul.f32 %v7098, %v7098
        %v7148 = vmul.f32 %v7100, %v7100
        %v7149 = vmul.f32 %v7103, %v7103
        %v7150 = vmul.f32 %v7105, %v7105
        %v7151 = vmul.f32 %v7108, %v7108
        %v7152 = vmul.f32 %v7110, %v7110
        %v7153 = vadd.f32 %v7137, %v7138
        %v7154 = vadd.f32 %v7153, %v7139
        %v7155 = vadd.f32 %v7154, %v7140
        %v7156 = vadd.f32 %v7155, %v7141
        %v7157 = vadd.f32 %v7156, %v7142
        %v7158 = vadd.f32 %v7157, %v7143
        %v7159 = vadd.f32 %v7158, %v7144
        %v7160 = vadd.f32 %v7159, %v7145
        %v7161 = vadd.f32 %v7160, %v7146
        %v7162 = vadd.f32 %v7161, %v7147
        %v7163 = vadd.f32 %v7162, %v7148
        %v7164 = vadd.f32 %v7163, %v7149
        %v7165 = vadd.f32 %v7164, %v7150
        %v7166 = vadd.f32 %v7165, %v7151
        %v7167 = vadd.f32 %v7166, %v7152
        %v7168 = vrot.slane %v7167, 4
        %v7169 = vadd.f32 %v7167, %v7168
        %v7170 = vrot.slane %v7169, 2
        %v7171 = vadd.f32 %v7169, %v7170
        %v7172 = vrot.slane %v7171, 1
        %v7173 = vadd.f32 %v7171, %v7172
        %v7174 = vadd.f32 %v7136, %v7173
        %7175 = vst [vmem:[#allocation4 + $0x5] sm:$0x1] %v7174
        %7176 = vst [vmem:[%s6659 + $0x80] sm:$0xff] %v7073
        %7177 = vst [vmem:[%s6659 + $0x88] sm:$0xff] %v7075
        %7178 = vst [vmem:[%s6659 + $0x90] sm:$0xff] %v7078
        %7179 = vst [vmem:[%s6659 + $0x98] sm:$0xff] %v7080
        %7180 = vst [vmem:[%s6659 + $0xa0] sm:$0xff] %v7083
        %7181 = vst [vmem:[%s6659 + $0xa8] sm:$0xff] %v7085
        %7182 = vst [vmem:[%s6659 + $0xb0] sm:$0xff] %v7088
        %7183 = vst [vmem:[%s6659 + $0xb8] sm:$0xff] %v7090
        %7184 = vst [vmem:[%s6659 + $0xc0] sm:$0xff] %v7093
        %7185 = vst [vmem:[%s6659 + $0xc8] sm:$0xff] %v7095
        %7186 = vst [vmem:[%s6659 + $0xd0] sm:$0xff] %v7098
        %7187 = vst [vmem:[%s6659 + $0xd8] sm:$0xff] %v7100
        %7188 = vst [vmem:[%s6659 + $0xe0] sm:$0xff] %v7103
        %7189 = vst [vmem:[%s6659 + $0xe8] sm:$0xff] %v7105
        %7190 = vst [vmem:[%s6659 + $0xf0] sm:$0xff] %v7108
        %7191 = vst [vmem:[%s6659 + $0xf8] sm:$0xff] %v7110
      $region64: #{bottleneck_forward.1} parent=43 // pred_fallthru
        _
      %p7192 = scmp.eq.s32.totalorder %s21, 3
      // Predicated region
      $region69: #{bottleneck_forward.1} parent=43 // pred_check
        %p7193 = pneg %p7192
      $region70: #{bottleneck_forward.1} parent=43 // pred_check_branch
        %7195 = sbr.rel (%p7193) target = $region72
      $region71: #{bottleneck_forward.1} parent=43 // pred_region
        // Predicated region
        $region73: #{bottleneck_forward.1} parent=71 // pred_check
          %p7196 = pneg %p306
        $region74: #{bottleneck_forward.1} parent=71 // pred_check_branch
          %7198 = sbr.rel (%p7196) target = $region76
        $region75: #{bottleneck_forward.1} parent=71 // pred_region
          %v7199 = vld [vmem:[#allocation4 + $0x4] sm:$0x1]
          %v7200 = vld [vmem:[#allocation4 + $0x5] sm:$0x1]
          %v7201 = vmul.f32 %v7199, 0.001953125
          %v7202 = vmul.f32 %v7200, 0.001953125
          %v7203 = vmul.f32 %v7201, %v7201
          %v7204 = vsub.f32 %v7202, %v7203
          %v7205 = vmax.f32 %v7204, 0.0
          %v7206 = vld [vmem:[%s5 + $0x4] sm:$0x1]
          %v7207 = vadd.f32 %v7205, 1e-05
          %v7208 = vrsqrt.pop %v7207
          %v7209 = vmul.f32 %v7208, %v7207
          %v7210 = vmul.f32 %v7209, %v7208
          %v7211 = vmul.f32 0.5, %v7210
          %v7212 = vsub.f32 1.5, %v7211
          %v7213 = vmul.f32 %v7208, %v7212
          %vm7214 = vweird.f32 %v7207
          %vm7215 = vweird.f32 %v7208
          %vm7216 = vmor %vm7214, %vm7215
          %v7217 = vsel %vm7216, %v7208, %v7213
          %v7218 = vmul.f32 %v7206, %v7217
          %7219 = vst [vmem:[#allocation5 + $0x4] sm:$0x1] %v7218
          %v7220 = vld [vmem:[%s5 + $0x5] sm:$0x1]
          %v7221 = vmul.f32 %v7218, %v7201
          %v7222 = vsub.f32 %v7220, %v7221
          %7223 = vst [vmem:[#allocation5 + $0x5] sm:$0x1] %v7222
        $region76: #{bottleneck_forward.1} parent=71 // pred_fallthru
          _
        %v7224 = vld [vmem:[#allocation5 + $0x4] sm:$0x1]
        %v7225 = vld [vmem:[#allocation5 + $0x5] sm:$0x1]
        %s7226 = smul.u32 %s22, 256
        %s7227 = scalar_lea.vmem [#allocation2], %s7226
        %v7228 = vld [vmem:[%s7227] sm:$0xff]
        %v7229 = vld [vmem:[%s7227 + $0x8] sm:$0xff]
        %v7230 = vld [vmem:[%s7227 + $0x10] sm:$0xff]
        %v7231 = vld [vmem:[%s7227 + $0x18] sm:$0xff]
        %v7232 = vld [vmem:[%s7227 + $0x20] sm:$0xff]
        %v7233 = vld [vmem:[%s7227 + $0x28] sm:$0xff]
        %v7234 = vld [vmem:[%s7227 + $0x30] sm:$0xff]
        %v7235 = vld [vmem:[%s7227 + $0x38] sm:$0xff]
        %v7236 = vld [vmem:[%s7227 + $0x40] sm:$0xff]
        %v7237 = vld [vmem:[%s7227 + $0x48] sm:$0xff]
        %v7238 = vld [vmem:[%s7227 + $0x50] sm:$0xff]
        %v7239 = vld [vmem:[%s7227 + $0x58] sm:$0xff]
        %v7240 = vld [vmem:[%s7227 + $0x60] sm:$0xff]
        %v7241 = vld [vmem:[%s7227 + $0x68] sm:$0xff]
        %v7242 = vld [vmem:[%s7227 + $0x70] sm:$0xff]
        %v7243 = vld [vmem:[%s7227 + $0x78] sm:$0xff]
        %v7244 = vperm.slane %v7224, 0
        %v7245 = vmul.f32 %v7228, %v7244
        %v7246 = vmul.f32 %v7229, %v7244
        %v7247 = vmul.f32 %v7230, %v7244
        %v7248 = vmul.f32 %v7231, %v7244
        %v7249 = vmul.f32 %v7232, %v7244
        %v7250 = vmul.f32 %v7233, %v7244
        %v7251 = vmul.f32 %v7234, %v7244
        %v7252 = vmul.f32 %v7235, %v7244
        %v7253 = vmul.f32 %v7236, %v7244
        %v7254 = vmul.f32 %v7237, %v7244
        %v7255 = vmul.f32 %v7238, %v7244
        %v7256 = vmul.f32 %v7239, %v7244
        %v7257 = vmul.f32 %v7240, %v7244
        %v7258 = vmul.f32 %v7241, %v7244
        %v7259 = vmul.f32 %v7242, %v7244
        %v7260 = vmul.f32 %v7243, %v7244
        %v7261 = vperm.slane %v7225, 0
        %v7262 = vadd.f32 %v7245, %v7261
        %v7263 = vadd.f32 %v7246, %v7261
        %v7264 = vadd.f32 %v7247, %v7261
        %v7265 = vadd.f32 %v7248, %v7261
        %v7266 = vadd.f32 %v7249, %v7261
        %v7267 = vadd.f32 %v7250, %v7261
        %v7268 = vadd.f32 %v7251, %v7261
        %v7269 = vadd.f32 %v7252, %v7261
        %v7270 = vadd.f32 %v7253, %v7261
        %v7271 = vadd.f32 %v7254, %v7261
        %v7272 = vadd.f32 %v7255, %v7261
        %v7273 = vadd.f32 %v7256, %v7261
        %v7274 = vadd.f32 %v7257, %v7261
        %v7275 = vadd.f32 %v7258, %v7261
        %v7276 = vadd.f32 %v7259, %v7261
        %v7277 = vadd.f32 %v7260, %v7261
        %v7278 = vld [vmem:[%s288] sm:$0xff]
        %v7279 = vld [vmem:[%s288 + $0x8] sm:$0xff]
        %v7280 = vld [vmem:[%s288 + $0x10] sm:$0xff]
        %v7281 = vld [vmem:[%s288 + $0x18] sm:$0xff]
        %v7282 = vld [vmem:[%s288 + $0x20] sm:$0xff]
        %v7283 = vld [vmem:[%s288 + $0x28] sm:$0xff]
        %v7284 = vld [vmem:[%s288 + $0x30] sm:$0xff]
        %v7285 = vld [vmem:[%s288 + $0x38] sm:$0xff]
        %v7286 = vld [vmem:[%s288 + $0x40] sm:$0xff]
        %v7287 = vld [vmem:[%s288 + $0x48] sm:$0xff]
        %v7288 = vld [vmem:[%s288 + $0x50] sm:$0xff]
        %v7289 = vld [vmem:[%s288 + $0x58] sm:$0xff]
        %v7290 = vld [vmem:[%s288 + $0x60] sm:$0xff]
        %v7291 = vld [vmem:[%s288 + $0x68] sm:$0xff]
        %v7292 = vld [vmem:[%s288 + $0x70] sm:$0xff]
        %v7293 = vld [vmem:[%s288 + $0x78] sm:$0xff]
        %v7294 = vadd.f32 %v7262, %v7278
        %v7295 = vadd.f32 %v7263, %v7279
        %v7296 = vadd.f32 %v7264, %v7280
        %v7297 = vadd.f32 %v7265, %v7281
        %v7298 = vadd.f32 %v7266, %v7282
        %v7299 = vadd.f32 %v7267, %v7283
        %v7300 = vadd.f32 %v7268, %v7284
        %v7301 = vadd.f32 %v7269, %v7285
        %v7302 = vadd.f32 %v7270, %v7286
        %v7303 = vadd.f32 %v7271, %v7287
        %v7304 = vadd.f32 %v7272, %v7288
        %v7305 = vadd.f32 %v7273, %v7289
        %v7306 = vadd.f32 %v7274, %v7290
        %v7307 = vadd.f32 %v7275, %v7291
        %v7308 = vadd.f32 %v7276, %v7292
        %v7309 = vadd.f32 %v7277, %v7293
        %v7310 = vmax.f32 %v7294, 0.0
        %v7311 = vmax.f32 %v7295, 0.0
        %v7312 = vmax.f32 %v7296, 0.0
        %v7313 = vmax.f32 %v7297, 0.0
        %v7314 = vmax.f32 %v7298, 0.0
        %v7315 = vmax.f32 %v7299, 0.0
        %v7316 = vmax.f32 %v7300, 0.0
        %v7317 = vmax.f32 %v7301, 0.0
        %v7318 = vmax.f32 %v7302, 0.0
        %v7319 = vmax.f32 %v7303, 0.0
        %v7320 = vmax.f32 %v7304, 0.0
        %v7321 = vmax.f32 %v7305, 0.0
        %v7322 = vmax.f32 %v7306, 0.0
        %v7323 = vmax.f32 %v7307, 0.0
        %v7324 = vmax.f32 %v7308, 0.0
        %v7325 = vmax.f32 %v7309, 0.0
        %7326 = vst [vmem:[%s299] sm:$0xff] %v7310
        %7327 = vst [vmem:[%s299 + $0x8] sm:$0xff] %v7311
        %7328 = vst [vmem:[%s299 + $0x10] sm:$0xff] %v7312
        %7329 = vst [vmem:[%s299 + $0x18] sm:$0xff] %v7313
        %7330 = vst [vmem:[%s299 + $0x20] sm:$0xff] %v7314
        %7331 = vst [vmem:[%s299 + $0x28] sm:$0xff] %v7315
        %7332 = vst [vmem:[%s299 + $0x30] sm:$0xff] %v7316
        %7333 = vst [vmem:[%s299 + $0x38] sm:$0xff] %v7317
        %7334 = vst [vmem:[%s299 + $0x40] sm:$0xff] %v7318
        %7335 = vst [vmem:[%s299 + $0x48] sm:$0xff] %v7319
        %7336 = vst [vmem:[%s299 + $0x50] sm:$0xff] %v7320
        %7337 = vst [vmem:[%s299 + $0x58] sm:$0xff] %v7321
        %7338 = vst [vmem:[%s299 + $0x60] sm:$0xff] %v7322
        %7339 = vst [vmem:[%s299 + $0x68] sm:$0xff] %v7323
        %7340 = vst [vmem:[%s299 + $0x70] sm:$0xff] %v7324
        %7341 = vst [vmem:[%s299 + $0x78] sm:$0xff] %v7325
        %v7342 = vld [vmem:[%s7227 + $0x80] sm:$0xff]
        %v7343 = vld [vmem:[%s7227 + $0x88] sm:$0xff]
        %v7344 = vld [vmem:[%s7227 + $0x90] sm:$0xff]
        %v7345 = vld [vmem:[%s7227 + $0x98] sm:$0xff]
        %v7346 = vld [vmem:[%s7227 + $0xa0] sm:$0xff]
        %v7347 = vld [vmem:[%s7227 + $0xa8] sm:$0xff]
        %v7348 = vld [vmem:[%s7227 + $0xb0] sm:$0xff]
        %v7349 = vld [vmem:[%s7227 + $0xb8] sm:$0xff]
        %v7350 = vld [vmem:[%s7227 + $0xc0] sm:$0xff]
        %v7351 = vld [vmem:[%s7227 + $0xc8] sm:$0xff]
        %v7352 = vld [vmem:[%s7227 + $0xd0] sm:$0xff]
        %v7353 = vld [vmem:[%s7227 + $0xd8] sm:$0xff]
        %v7354 = vld [vmem:[%s7227 + $0xe0] sm:$0xff]
        %v7355 = vld [vmem:[%s7227 + $0xe8] sm:$0xff]
        %v7356 = vld [vmem:[%s7227 + $0xf0] sm:$0xff]
        %v7357 = vld [vmem:[%s7227 + $0xf8] sm:$0xff]
        %v7358 = vmul.f32 %v7342, %v7244
        %v7359 = vmul.f32 %v7343, %v7244
        %v7360 = vmul.f32 %v7344, %v7244
        %v7361 = vmul.f32 %v7345, %v7244
        %v7362 = vmul.f32 %v7346, %v7244
        %v7363 = vmul.f32 %v7347, %v7244
        %v7364 = vmul.f32 %v7348, %v7244
        %v7365 = vmul.f32 %v7349, %v7244
        %v7366 = vmul.f32 %v7350, %v7244
        %v7367 = vmul.f32 %v7351, %v7244
        %v7368 = vmul.f32 %v7352, %v7244
        %v7369 = vmul.f32 %v7353, %v7244
        %v7370 = vmul.f32 %v7354, %v7244
        %v7371 = vmul.f32 %v7355, %v7244
        %v7372 = vmul.f32 %v7356, %v7244
        %v7373 = vmul.f32 %v7357, %v7244
        %v7374 = vadd.f32 %v7358, %v7261
        %v7375 = vadd.f32 %v7359, %v7261
        %v7376 = vadd.f32 %v7360, %v7261
        %v7377 = vadd.f32 %v7361, %v7261
        %v7378 = vadd.f32 %v7362, %v7261
        %v7379 = vadd.f32 %v7363, %v7261
        %v7380 = vadd.f32 %v7364, %v7261
        %v7381 = vadd.f32 %v7365, %v7261
        %v7382 = vadd.f32 %v7366, %v7261
        %v7383 = vadd.f32 %v7367, %v7261
        %v7384 = vadd.f32 %v7368, %v7261
        %v7385 = vadd.f32 %v7369, %v7261
        %v7386 = vadd.f32 %v7370, %v7261
        %v7387 = vadd.f32 %v7371, %v7261
        %v7388 = vadd.f32 %v7372, %v7261
        %v7389 = vadd.f32 %v7373, %v7261
        %v7390 = vld [vmem:[%s288 + $0x80] sm:$0xff]
        %v7391 = vld [vmem:[%s288 + $0x88] sm:$0xff]
        %v7392 = vld [vmem:[%s288 + $0x90] sm:$0xff]
        %v7393 = vld [vmem:[%s288 + $0x98] sm:$0xff]
        %v7394 = vld [vmem:[%s288 + $0xa0] sm:$0xff]
        %v7395 = vld [vmem:[%s288 + $0xa8] sm:$0xff]
        %v7396 = vld [vmem:[%s288 + $0xb0] sm:$0xff]
        %v7397 = vld [vmem:[%s288 + $0xb8] sm:$0xff]
        %v7398 = vld [vmem:[%s288 + $0xc0] sm:$0xff]
        %v7399 = vld [vmem:[%s288 + $0xc8] sm:$0xff]
        %v7400 = vld [vmem:[%s288 + $0xd0] sm:$0xff]
        %v7401 = vld [vmem:[%s288 + $0xd8] sm:$0xff]
        %v7402 = vld [vmem:[%s288 + $0xe0] sm:$0xff]
        %v7403 = vld [vmem:[%s288 + $0xe8] sm:$0xff]
        %v7404 = vld [vmem:[%s288 + $0xf0] sm:$0xff]
        %v7405 = vld [vmem:[%s288 + $0xf8] sm:$0xff]
        %v7406 = vadd.f32 %v7374, %v7390
        %v7407 = vadd.f32 %v7375, %v7391
        %v7408 = vadd.f32 %v7376, %v7392
        %v7409 = vadd.f32 %v7377, %v7393
        %v7410 = vadd.f32 %v7378, %v7394
        %v7411 = vadd.f32 %v7379, %v7395
        %v7412 = vadd.f32 %v7380, %v7396
        %v7413 = vadd.f32 %v7381, %v7397
        %v7414 = vadd.f32 %v7382, %v7398
        %v7415 = vadd.f32 %v7383, %v7399
        %v7416 = vadd.f32 %v7384, %v7400
        %v7417 = vadd.f32 %v7385, %v7401
        %v7418 = vadd.f32 %v7386, %v7402
        %v7419 = vadd.f32 %v7387, %v7403
        %v7420 = vadd.f32 %v7388, %v7404
        %v7421 = vadd.f32 %v7389, %v7405
        %v7422 = vmax.f32 %v7406, 0.0
        %v7423 = vmax.f32 %v7407, 0.0
        %v7424 = vmax.f32 %v7408, 0.0
        %v7425 = vmax.f32 %v7409, 0.0
        %v7426 = vmax.f32 %v7410, 0.0
        %v7427 = vmax.f32 %v7411, 0.0
        %v7428 = vmax.f32 %v7412, 0.0
        %v7429 = vmax.f32 %v7413, 0.0
        %v7430 = vmax.f32 %v7414, 0.0
        %v7431 = vmax.f32 %v7415, 0.0
        %v7432 = vmax.f32 %v7416, 0.0
        %v7433 = vmax.f32 %v7417, 0.0
        %v7434 = vmax.f32 %v7418, 0.0
        %v7435 = vmax.f32 %v7419, 0.0
        %v7436 = vmax.f32 %v7420, 0.0
        %v7437 = vmax.f32 %v7421, 0.0
        %7438 = vst [vmem:[%s299 + $0x80] sm:$0xff] %v7422
        %7439 = vst [vmem:[%s299 + $0x88] sm:$0xff] %v7423
        %7440 = vst [vmem:[%s299 + $0x90] sm:$0xff] %v7424
        %7441 = vst [vmem:[%s299 + $0x98] sm:$0xff] %v7425
        %7442 = vst [vmem:[%s299 + $0xa0] sm:$0xff] %v7426
        %7443 = vst [vmem:[%s299 + $0xa8] sm:$0xff] %v7427
        %7444 = vst [vmem:[%s299 + $0xb0] sm:$0xff] %v7428
        %7445 = vst [vmem:[%s299 + $0xb8] sm:$0xff] %v7429
        %7446 = vst [vmem:[%s299 + $0xc0] sm:$0xff] %v7430
        %7447 = vst [vmem:[%s299 + $0xc8] sm:$0xff] %v7431
        %7448 = vst [vmem:[%s299 + $0xd0] sm:$0xff] %v7432
        %7449 = vst [vmem:[%s299 + $0xd8] sm:$0xff] %v7433
        %7450 = vst [vmem:[%s299 + $0xe0] sm:$0xff] %v7434
        %7451 = vst [vmem:[%s299 + $0xe8] sm:$0xff] %v7435
        %7452 = vst [vmem:[%s299 + $0xf0] sm:$0xff] %v7436
        %7453 = vst [vmem:[%s299 + $0xf8] sm:$0xff] %v7437
      $region72: #{bottleneck_forward.1} parent=43 // pred_fallthru
        _
      %p7454 = scmp.eq.s32.totalorder %s21, 3
      %s7455 = scalar_select %p7454, %s22, 0
      %p7456 = scmp.lt.s32.totalorder %s7455, 1
      %s7457 = scalar_select %p7456, %s7455, 1
      %s7458 = smul.addr %s7457, 32
      %s7459 = smul.addr %s7458, 8
      %s7460 = scalar_lea.vmem %s6, %s7459
      // Predicated region
      $region77: #{bottleneck_forward.1} parent=43 // pred_check
        %p7461 = pneg %p190
      $region78: #{bottleneck_forward.1} parent=43 // pred_check_branch
        %7463 = sbr.rel (%p7461) target = $region80
      $region79: #{bottleneck_forward.1} parent=43 // pred_region
        %p7464 = scmp.eq.s32.totalorder %s21, 3
        %s7465 = scalar_select %p7464, %s22, 0
      $region80: #{bottleneck_forward.1} parent=43 // pred_fallthru
        _
    $region44: #{bottleneck_forward.1} parent=5 // pred_fallthru
      _
    %p7466 = scmp.le.s32.totalorder 2, %s12
    // Predicated region
    $region81: #{bottleneck_forward.1} parent=5 // pred_check
      %p7467 = pneg %p7466
    $region82: #{bottleneck_forward.1} parent=5 // pred_check_branch
      %7469 = sbr.rel (%p7467) target = $region84
    $region83: #{bottleneck_forward.1} parent=5 // pred_region
      %s7470 = ssub.s32 %s12, 2
      // Predicated region
      $region85: #{bottleneck_forward.1} parent=83 // pred_check
        %p7471 = pneg %p196
      $region86: #{bottleneck_forward.1} parent=83 // pred_check_branch
        %7473 = sbr.rel (%p7471) target = $region88
      $region87: #{bottleneck_forward.1} parent=83 // pred_region
        %p7474 = scmp.eq.s32.totalorder %s23, 3
        %s7475 = scalar_select %p7474, %s24, 0
        %p7476 = scmp.lt.s32.totalorder %s7475, 1
        %s7477 = scalar_select %p7476, %s7475, 1
        %s7478 = smul.addr %s7477, 32
        %s7479 = smul.addr %s7478, 8
        %s7480 = scalar_lea.vmem %s6, %s7479
      $region88: #{bottleneck_forward.1} parent=83 // pred_fallthru
        _
    $region84: #{bottleneck_forward.1} parent=5 // pred_fallthru
      _
  $region6: #{bottleneck_forward.1} parent=0 // loop_footer
    %s16 = sadd.s32 1, %s12
  $region7: #{bottleneck_forward.1} parent=0 // loop_footer_branch
    %11 = sbr.rel target = $region3
  $region8: #{bottleneck_forward.1} parent=0 // loop_exit
    _

</llo_original>
